<compile_context>
chip_gen: v7x
topology: tpu7x:2x2x1
jax: 0.10.0
libtpu: 0.0.40
codegen_flags: <defaults>
</compile_context>

<pallas_src>
import numpy as np
import jax
import jax.numpy as jnp
from jax import lax
from jax.experimental import pallas as pl
from jax.experimental.pallas import tpu as pltpu

# ---- spatial layout constants -------------------------------------------------
PW = 30                   # 28x28 image + 1-pixel zero frame -> 30x30 plane
NPIX = PW * PW            # 900 lanes per (batch, channel) row
HALO = 32                 # lane halo so all shifted conv reads stay in bounds
LANES = HALO + NPIX + HALO  # 964
C1, C2 = 8, 16
FLAT = 784                # 16 * 7 * 7
FLAT_PAD = 896            # 7 * 128

_TAPS = tuple((dy, dx) for dy in (-1, 0, 1) for dx in (-1, 0, 1))


# ---- kernel A: conv1 -> relu -> conv2 -> relu -> BN -> maxpool -> avgpool+compact
def conv_pool_kernel(x_ref, w1_ref, b1_ref, w2_ref, b2_ref, bn_s_ref, bn_b_ref,
                     border_ref, pool_ref, out_ref, a1_ref, a2_ref):
    # Zero the halo strips of the activation scratches (interiors are fully
    # overwritten below; the halos must read back as exact zero padding).
    a1_ref[:, :HALO] = jnp.zeros((a1_ref.shape[0], HALO), jnp.float32)
    a1_ref[:, HALO + NPIX:] = jnp.zeros((a1_ref.shape[0], HALO), jnp.float32)
    a2_ref[:, :HALO] = jnp.zeros((a2_ref.shape[0], HALO), jnp.float32)
    a2_ref[:, HALO + NPIX:] = jnp.zeros((a2_ref.shape[0], HALO), jnp.float32)

    # ---- conv1 (1->8) + bias + ReLU, written into halo'd scratch ----
    acc1 = jnp.zeros((a1_ref.shape[0], NPIX), jnp.float32)
    for t, (dy, dx) in enumerate(_TAPS):
        k = dy * PW + dx
        acc1 = acc1 + jnp.dot(w1_ref[t], x_ref[:, HALO + k:HALO + k + NPIX],
                              preferred_element_type=jnp.float32)
    a1 = jnp.maximum(acc1 + b1_ref[...], 0.0) * border_ref[...]   # re-zero frame
    a1_ref[:, HALO:HALO + NPIX] = a1

    # ---- conv2 (8->16) + bias + ReLU + BatchNorm (inference scale/shift) ----
    acc2 = jnp.zeros((a2_ref.shape[0], NPIX), jnp.float32)
    for t, (dy, dx) in enumerate(_TAPS):
        k = dy * PW + dx
        acc2 = acc2 + jnp.dot(w2_ref[t], a1_ref[:, HALO + k:HALO + k + NPIX],
                              preferred_element_type=jnp.float32)
    a2 = jnp.maximum(acc2 + b2_ref[...], 0.0)
    a2 = a2 * bn_s_ref[...] + bn_b_ref[...]
    a2_ref[:, HALO:HALO + NPIX] = a2

    # ---- MaxPool2d(2,2) via 3 lane shifts; AvgPool2d(2,2) + 7x7 compaction as
    #      a single (900 x 128) matmul -> lane-dense 128-aligned output block ----
    m = jnp.maximum(
        jnp.maximum(a2_ref[:, HALO:HALO + NPIX],
                    a2_ref[:, HALO + 1:HALO + 1 + NPIX]),
        jnp.maximum(a2_ref[:, HALO + PW:HALO + PW + NPIX],
                    a2_ref[:, HALO + PW + 1:HALO + PW + 1 + NPIX]))
    out_ref[...] = jnp.dot(m, pool_ref[...], preferred_element_type=jnp.float32)


# ---- kernel B: branch = x_flat @ y (bf16 operands, f32 accumulate) + concat ----
def matmul_concat_kernel(xflat_ref, y_ref, out_ref):
    xf = xflat_ref[...]                                    # (B, 896) f32
    out_ref[:, :FLAT_PAD] = xf                             # cat half 1 (aligned store)
    out_ref[:, FLAT_PAD:] = jnp.dot(xf.astype(jnp.bfloat16), y_ref[...],
                                    preferred_element_type=jnp.float32)


def _pool_and_border():
    """Constant (1,900) interior mask and (900,128) avgpool+compaction matrix."""
    frame = np.zeros((PW, PW), np.float32)
    frame[1:29, 1:29] = 1.0
    border = frame.reshape(1, NPIX)

    pool = np.zeros((NPIX, 128), np.float32)
    for i in range(7):
        for j in range(7):
            s = i * 7 + j
            base = (4 * i + 1) * PW + (4 * j + 1)
            for off in (0, 2, 2 * PW, 2 * PW + 2):
                pool[base + off, s] = 0.25
    return jnp.asarray(border), jnp.asarray(pool)


def conv2_forward(x, params, y_mat):
    """x: (B, 1, 28, 28) float32.  Returns (B, 1568) like the PyTorch module."""
    w1, b1, w2, b2, gamma, beta, rmean, rvar = params
    B = x.shape[0]
    assert x.shape[1:] == (1, 28, 28)

    # --- layout prep (one-time / jit-hoistable; all tiny) ---
    x30 = jnp.pad(x[:, 0].astype(jnp.float32), ((0, 0), (1, 1), (1, 1)))   # (B,30,30)
    x_lanes = jnp.pad(x30.reshape(B, NPIX), ((0, 0), (HALO, HALO)))        # (B,964)

    eye_b = jnp.eye(B, dtype=jnp.float32)
    w1_bd = jnp.stack([jnp.kron(eye_b, w1[:, :, dy + 1, dx + 1]) for dy, dx in _TAPS])
    w2_bd = jnp.stack([jnp.kron(eye_b, w2[:, :, dy + 1, dx + 1]) for dy, dx in _TAPS])
    b1_t = jnp.tile(b1, B).reshape(B * C1, 1)
    b2_t = jnp.tile(b2, B).reshape(B * C2, 1)
    bn_scale = gamma / jnp.sqrt(rvar + 1e-5)
    bn_shift = beta - rmean * bn_scale
    bn_s = jnp.tile(bn_scale, B).reshape(B * C2, 1)
    bn_b = jnp.tile(bn_shift, B).reshape(B * C2, 1)
    border, pool = _pool_and_border()

    vmem = pl.BlockSpec(memory_space=pltpu.MemorySpace.VMEM)

    feats = pl.pallas_call(
        conv_pool_kernel,
        out_shape=jax.ShapeDtypeStruct((B * C2, 128), jnp.float32),
        in_specs=[vmem] * 9,
        out_specs=vmem,
        scratch_shapes=[pltpu.VMEM((B * C1, LANES), jnp.float32),
                        pltpu.VMEM((B * C2, LANES), jnp.float32)],
    )(x_lanes, w1_bd, b1_t, w2_bd, b2_t, bn_s, bn_b, border, pool)

    # Flatten to PyTorch's channel-major (B, 784) order; zero-pad lanes to 896.
    x_flat = feats[:, :49].reshape(B, C2 * 49)
    x_flat_pad = jnp.pad(x_flat, ((0, 0), (0, FLAT_PAD - FLAT)))
    y_pad = jnp.pad(y_mat, ((0, FLAT_PAD - FLAT), (0, FLAT_PAD - FLAT))
                    ).astype(jnp.bfloat16)

    # NOTE: at large batch this call would take a 1-D "parallel" grid over batch
    # rows with y resident; at toy batch a single block is fastest.
    out_pad = pl.pallas_call(
        matmul_concat_kernel,
        out_shape=jax.ShapeDtypeStruct((B, 2 * FLAT_PAD), jnp.float32),
        in_specs=[vmem, vmem],
        out_specs=vmem,
    )(x_flat_pad, y_pad)

    return jnp.concatenate(
        [out_pad[:, :FLAT], out_pad[:, FLAT_PAD:FLAT_PAD + FLAT]], axis=1)


def init_params(key):
    """PyTorch-default-style init for conv layers; non-trivial BN running stats."""
    k1, k1b, k2, k2b, kg, kb, km, kv = jax.random.split(key, 8)
    bound1 = 1.0 / np.sqrt(1 * 3 * 3)
    w1 = jax.random.uniform(k1, (C1, 1, 3, 3), jnp.float32, -bound1, bound1)
    b1 = jax.random.uniform(k1b, (C1,), jnp.float32, -bound1, bound1)
    bound2 = 1.0 / np.sqrt(C1 * 3 * 3)
    w2 = jax.random.uniform(k2, (C2, C1, 3, 3), jnp.float32, -bound2, bound2)
    b2 = jax.random.uniform(k2b, (C2,), jnp.float32, -bound2, bound2)
    gamma = jax.random.uniform(kg, (C2,), jnp.float32, 0.8, 1.2)
    beta = jax.random.uniform(kb, (C2,), jnp.float32, -0.1, 0.1)
    rmean = 0.1 * jax.random.normal(km, (C2,), jnp.float32)
    rvar = jax.random.uniform(kv, (C2,), jnp.float32, 0.5, 1.5)
    return (w1, b1, w2, b2, gamma, beta, rmean, rvar)


def reference_forward(x, params, y_mat):
    """Pure-JAX (XLA) reference with the module's inference semantics."""
    w1, b1, w2, b2, gamma, beta, rmean, rvar = params
    B = x.shape[0]
    dn = ('NCHW', 'OIHW', 'NCHW')
    h = lax.conv_general_dilated(x, w1, (1, 1), ((1, 1), (1, 1)),
                                 dimension_numbers=dn,
                                 precision=lax.Precision.HIGHEST)
    h = jnp.maximum(h + b1[None, :, None, None], 0.0)
    h = lax.conv_general_dilated(h, w2, (1, 1), ((1, 1), (1, 1)),
                                 dimension_numbers=dn,
                                 precision=lax.Precision.HIGHEST)
    h = jnp.maximum(h + b2[None, :, None, None], 0.0)
    scale = gamma / jnp.sqrt(rvar + 1e-5)
    shift = beta - rmean * scale
    h = h * scale[None, :, None, None] + shift[None, :, None, None]
    h = lax.reduce_window(h, -jnp.inf, lax.max, (1, 1, 2, 2), (1, 1, 2, 2), 'VALID')
    h = lax.reduce_window(h, 0.0, lax.add, (1, 1, 2, 2), (1, 1, 2, 2), 'VALID') * 0.25
    # dropout (eval) and x + x - x are identities
    x_flat = h.reshape(B, -1)
    branch = jnp.dot(x_flat.astype(jnp.bfloat16), y_mat.astype(jnp.bfloat16),
                     preferred_element_type=jnp.float32)
    return jnp.concatenate([x_flat, branch], axis=1)


if __name__ == "__main__":
    key = jax.random.PRNGKey(0)
    k_x, k_p, k_y = jax.random.split(key, 3)

    B = 2
    x = jax.random.normal(k_x, (B, 1, 28, 28), jnp.float32)   # MNIST-like input
    params = init_params(k_p)
    y_mat = jax.random.uniform(k_y, (FLAT, FLAT), jnp.float32)  # torch.rand(784, 784)

    out = jax.jit(conv2_forward)(x, params, y_mat)
    out = jax.block_until_ready(out)
    ref = reference_forward(x, params, y_mat)

    assert out.shape == (B, 2 * FLAT), out.shape
    scale = float(jnp.max(jnp.abs(ref)))
    err = float(jnp.max(jnp.abs(out - ref)))
    assert err <= 3e-2 * scale + 1e-2, (err, scale)

    print("KERNEL_OK")
</pallas_src>

<mosaic_0001>
module attributes {stable_mosaic.version = 11 : i64} {
  func.func @conv_pool_kernel(%arg0: memref<2x964xf32, #tpu.memory_space<vmem>>, %arg1: memref<9x16x2xf32, #tpu.memory_space<vmem>>, %arg2: memref<16x1xf32, #tpu.memory_space<vmem>>, %arg3: memref<9x32x16xf32, #tpu.memory_space<vmem>>, %arg4: memref<32x1xf32, #tpu.memory_space<vmem>>, %arg5: memref<32x1xf32, #tpu.memory_space<vmem>>, %arg6: memref<32x1xf32, #tpu.memory_space<vmem>>, %arg7: memref<1x900xf32, #tpu.memory_space<vmem>>, %arg8: memref<900x128xf32, #tpu.memory_space<vmem>>, %arg9: memref<32x128xf32, #tpu.memory_space<vmem>>, %arg10: memref<16x964xf32, #tpu.memory_space<vmem>>, %arg11: memref<32x964xf32, #tpu.memory_space<vmem>>) attributes {dimension_semantics = [], scalar_prefetch = 0 : i64, scratch_operands = 2 : i64, tpu.core_type = #tpu.core_type<tc>} {
    %cst = arith.constant 0.000000e+00 : f32
    %0 = vector.broadcast %cst : f32 to vector<16x32xf32>
    %c0 = arith.constant 0 : index
    %c0_0 = arith.constant 0 : index
    %1 = vector.load %arg10[%c0, %c0_0] : memref<16x964xf32, #tpu.memory_space<vmem>>, vector<16x32xf32>
    tpu.vector_store %arg10[%c0, %c0_0], %0 {strides = array<i32>} : memref<16x964xf32, #tpu.memory_space<vmem>>, vector<16x32xf32>,
    %cst_1 = arith.constant 0.000000e+00 : f32
    %2 = vector.broadcast %cst_1 : f32 to vector<16x32xf32>
    %c0_2 = arith.constant 0 : index
    %c932 = arith.constant 932 : index
    %3 = vector.load %arg10[%c0_2, %c932] : memref<16x964xf32, #tpu.memory_space<vmem>>, vector<16x32xf32>
    tpu.vector_store %arg10[%c0_2, %c932], %2 {strides = array<i32>} : memref<16x964xf32, #tpu.memory_space<vmem>>, vector<16x32xf32>,
    %cst_3 = arith.constant 0.000000e+00 : f32
    %4 = vector.broadcast %cst_3 : f32 to vector<32x32xf32>
    %c0_4 = arith.constant 0 : index
    %c0_5 = arith.constant 0 : index
    %5 = vector.load %arg11[%c0_4, %c0_5] : memref<32x964xf32, #tpu.memory_space<vmem>>, vector<32x32xf32>
    tpu.vector_store %arg11[%c0_4, %c0_5], %4 {strides = array<i32>} : memref<32x964xf32, #tpu.memory_space<vmem>>, vector<32x32xf32>,
    %cst_6 = arith.constant 0.000000e+00 : f32
    %6 = vector.broadcast %cst_6 : f32 to vector<32x32xf32>
    %c0_7 = arith.constant 0 : index
    %c932_8 = arith.constant 932 : index
    %7 = vector.load %arg11[%c0_7, %c932_8] : memref<32x964xf32, #tpu.memory_space<vmem>>, vector<32x32xf32>
    tpu.vector_store %arg11[%c0_7, %c932_8], %6 {strides = array<i32>} : memref<32x964xf32, #tpu.memory_space<vmem>>, vector<32x32xf32>,
    %cst_9 = arith.constant 0.000000e+00 : f32
    %8 = vector.broadcast %cst_9 : f32 to vector<16x900xf32>
    %c0_10 = arith.constant 0 : index
    %c0_11 = arith.constant 0 : index
    %c0_12 = arith.constant 0 : index
    %9 = vector.load %arg1[%c0_10, %c0_11, %c0_12] : memref<9x16x2xf32, #tpu.memory_space<vmem>>, vector<1x16x2xf32>
    %10 = vector.shape_cast %9 : vector<1x16x2xf32> to vector<16x2xf32>
    %c0_13 = arith.constant 0 : index
    %c1 = arith.constant 1 : index
    %11 = vector.load %arg0[%c0_13, %c1] : memref<2x964xf32, #tpu.memory_space<vmem>>, vector<2x900xf32>
    %cst_14 = arith.constant dense<0.000000e+00> : vector<16x900xf32>
    %12 = tpu.matmul %10, %11, %cst_14 {dimension_numbers = #tpu.dot_dimension_numbers<[1], [0], [0], [1], [0, 0, 1, 1], [], []>} : vector<16x2xf32>, vector<2x900xf32>, vector<16x900xf32> -> vector<16x900xf32>
    %13 = arith.addf %8, %12 : vector<16x900xf32>
    %c1_15 = arith.constant 1 : index
    %c0_16 = arith.constant 0 : index
    %c0_17 = arith.constant 0 : index
    %14 = vector.load %arg1[%c1_15, %c0_16, %c0_17] : memref<9x16x2xf32, #tpu.memory_space<vmem>>, vector<1x16x2xf32>
    %15 = vector.shape_cast %14 : vector<1x16x2xf32> to vector<16x2xf32>
    %c0_18 = arith.constant 0 : index
    %c2 = arith.constant 2 : index
    %16 = vector.load %arg0[%c0_18, %c2] : memref<2x964xf32, #tpu.memory_space<vmem>>, vector<2x900xf32>
    %cst_19 = arith.constant dense<0.000000e+00> : vector<16x900xf32>
    %17 = tpu.matmul %15, %16, %cst_19 {dimension_numbers = #tpu.dot_dimension_numbers<[1], [0], [0], [1], [0, 0, 1, 1], [], []>} : vector<16x2xf32>, vector<2x900xf32>, vector<16x900xf32> -> vector<16x900xf32>
    %18 = arith.addf %13, %17 : vector<16x900xf32>
    %c2_20 = arith.constant 2 : index
    %c0_21 = arith.constant 0 : index
    %c0_22 = arith.constant 0 : index
    %19 = vector.load %arg1[%c2_20, %c0_21, %c0_22] : memref<9x16x2xf32, #tpu.memory_space<vmem>>, vector<1x16x2xf32>
    %20 = vector.shape_cast %19 : vector<1x16x2xf32> to vector<16x2xf32>
    %c0_23 = arith.constant 0 : index
    %c3 = arith.constant 3 : index
    %21 = vector.load %arg0[%c0_23, %c3] : memref<2x964xf32, #tpu.memory_space<vmem>>, vector<2x900xf32>
    %cst_24 = arith.constant dense<0.000000e+00> : vector<16x900xf32>
    %22 = tpu.matmul %20, %21, %cst_24 {dimension_numbers = #tpu.dot_dimension_numbers<[1], [0], [0], [1], [0, 0, 1, 1], [], []>} : vector<16x2xf32>, vector<2x900xf32>, vector<16x900xf32> -> vector<16x900xf32>
    %23 = arith.addf %18, %22 : vector<16x900xf32>
    %c3_25 = arith.constant 3 : index
    %c0_26 = arith.constant 0 : index
    %c0_27 = arith.constant 0 : index
    %24 = vector.load %arg1[%c3_25, %c0_26, %c0_27] : memref<9x16x2xf32, #tpu.memory_space<vmem>>, vector<1x16x2xf32>
    %25 = vector.shape_cast %24 : vector<1x16x2xf32> to vector<16x2xf32>
    %c0_28 = arith.constant 0 : index
    %c31 = arith.constant 31 : index
    %26 = vector.load %arg0[%c0_28, %c31] : memref<2x964xf32, #tpu.memory_space<vmem>>, vector<2x900xf32>
    %cst_29 = arith.constant dense<0.000000e+00> : vector<16x900xf32>
    %27 = tpu.matmul %25, %26, %cst_29 {dimension_numbers = #tpu.dot_dimension_numbers<[1], [0], [0], [1], [0, 0, 1, 1], [], []>} : vector<16x2xf32>, vector<2x900xf32>, vector<16x900xf32> -> vector<16x900xf32>
    %28 = arith.addf %23, %27 : vector<16x900xf32>
    %c4 = arith.constant 4 : index
    %c0_30 = arith.constant 0 : index
    %c0_31 = arith.constant 0 : index
    %29 = vector.load %arg1[%c4, %c0_30, %c0_31] : memref<9x16x2xf32, #tpu.memory_space<vmem>>, vector<1x16x2xf32>
    %30 = vector.shape_cast %29 : vector<1x16x2xf32> to vector<16x2xf32>
    %c0_32 = arith.constant 0 : index
    %c32 = arith.constant 32 : index
    %31 = vector.load %arg0[%c0_32, %c32] : memref<2x964xf32, #tpu.memory_space<vmem>>, vector<2x900xf32>
    %cst_33 = arith.constant dense<0.000000e+00> : vector<16x900xf32>
    %32 = tpu.matmul %30, %31, %cst_33 {dimension_numbers = #tpu.dot_dimension_numbers<[1], [0], [0], [1], [0, 0, 1, 1], [], []>} : vector<16x2xf32>, vector<2x900xf32>, vector<16x900xf32> -> vector<16x900xf32>
    %33 = arith.addf %28, %32 : vector<16x900xf32>
    %c5 = arith.constant 5 : index
    %c0_34 = arith.constant 0 : index
    %c0_35 = arith.constant 0 : index
    %34 = vector.load %arg1[%c5, %c0_34, %c0_35] : memref<9x16x2xf32, #tpu.memory_space<vmem>>, vector<1x16x2xf32>
    %35 = vector.shape_cast %34 : vector<1x16x2xf32> to vector<16x2xf32>
    %c0_36 = arith.constant 0 : index
    %c33 = arith.constant 33 : index
    %36 = vector.load %arg0[%c0_36, %c33] : memref<2x964xf32, #tpu.memory_space<vmem>>, vector<2x900xf32>
    %cst_37 = arith.constant dense<0.000000e+00> : vector<16x900xf32>
    %37 = tpu.matmul %35, %36, %cst_37 {dimension_numbers = #tpu.dot_dimension_numbers<[1], [0], [0], [1], [0, 0, 1, 1], [], []>} : vector<16x2xf32>, vector<2x900xf32>, vector<16x900xf32> -> vector<16x900xf32>
    %38 = arith.addf %33, %37 : vector<16x900xf32>
    %c6 = arith.constant 6 : index
    %c0_38 = arith.constant 0 : index
    %c0_39 = arith.constant 0 : index
    %39 = vector.load %arg1[%c6, %c0_38, %c0_39] : memref<9x16x2xf32, #tpu.memory_space<vmem>>, vector<1x16x2xf32>
    %40 = vector.shape_cast %39 : vector<1x16x2xf32> to vector<16x2xf32>
    %c0_40 = arith.constant 0 : index
    %c61 = arith.constant 61 : index
    %41 = vector.load %arg0[%c0_40, %c61] : memref<2x964xf32, #tpu.memory_space<vmem>>, vector<2x900xf32>
    %cst_41 = arith.constant dense<0.000000e+00> : vector<16x900xf32>
    %42 = tpu.matmul %40, %41, %cst_41 {dimension_numbers = #tpu.dot_dimension_numbers<[1], [0], [0], [1], [0, 0, 1, 1], [], []>} : vector<16x2xf32>, vector<2x900xf32>, vector<16x900xf32> -> vector<16x900xf32>
    %43 = arith.addf %38, %42 : vector<16x900xf32>
    %c7 = arith.constant 7 : index
    %c0_42 = arith.constant 0 : index
    %c0_43 = arith.constant 0 : index
    %44 = vector.load %arg1[%c7, %c0_42, %c0_43] : memref<9x16x2xf32, #tpu.memory_space<vmem>>, vector<1x16x2xf32>
    %45 = vector.shape_cast %44 : vector<1x16x2xf32> to vector<16x2xf32>
    %c0_44 = arith.constant 0 : index
    %c62 = arith.constant 62 : index
    %46 = vector.load %arg0[%c0_44, %c62] : memref<2x964xf32, #tpu.memory_space<vmem>>, vector<2x900xf32>
    %cst_45 = arith.constant dense<0.000000e+00> : vector<16x900xf32>
    %47 = tpu.matmul %45, %46, %cst_45 {dimension_numbers = #tpu.dot_dimension_numbers<[1], [0], [0], [1], [0, 0, 1, 1], [], []>} : vector<16x2xf32>, vector<2x900xf32>, vector<16x900xf32> -> vector<16x900xf32>
    %48 = arith.addf %43, %47 : vector<16x900xf32>
    %c8 = arith.constant 8 : index
    %c0_46 = arith.constant 0 : index
    %c0_47 = arith.constant 0 : index
    %49 = vector.load %arg1[%c8, %c0_46, %c0_47] : memref<9x16x2xf32, #tpu.memory_space<vmem>>, vector<1x16x2xf32>
    %50 = vector.shape_cast %49 : vector<1x16x2xf32> to vector<16x2xf32>
    %c0_48 = arith.constant 0 : index
    %c63 = arith.constant 63 : index
    %51 = vector.load %arg0[%c0_48, %c63] : memref<2x964xf32, #tpu.memory_space<vmem>>, vector<2x900xf32>
    %cst_49 = arith.constant dense<0.000000e+00> : vector<16x900xf32>
    %52 = tpu.matmul %50, %51, %cst_49 {dimension_numbers = #tpu.dot_dimension_numbers<[1], [0], [0], [1], [0, 0, 1, 1], [], []>} : vector<16x2xf32>, vector<2x900xf32>, vector<16x900xf32> -> vector<16x900xf32>
    %53 = arith.addf %48, %52 : vector<16x900xf32>
    %c0_50 = arith.constant 0 : index
    %c0_51 = arith.constant 0 : index
    %54 = vector.load %arg2[%c0_50, %c0_51] : memref<16x1xf32, #tpu.memory_space<vmem>>, vector<16x1xf32>
    %55 = vector.broadcast %54 : vector<16x1xf32> to vector<16x900xf32>
    %56 = arith.addf %53, %55 : vector<16x900xf32>
    %cst_52 = arith.constant 0.000000e+00 : f32
    %57 = vector.broadcast %cst_52 : f32 to vector<16x900xf32>
    %58 = arith.maximumf %56, %57 : vector<16x900xf32>
    %c0_53 = arith.constant 0 : index
    %c0_54 = arith.constant 0 : index
    %59 = vector.load %arg7[%c0_53, %c0_54] : memref<1x900xf32, #tpu.memory_space<vmem>>, vector<1x900xf32>
    %60 = vector.broadcast %59 : vector<1x900xf32> to vector<16x900xf32>
    %61 = arith.mulf %58, %60 : vector<16x900xf32>
    %c0_55 = arith.constant 0 : index
    %c32_56 = arith.constant 32 : index
    %62 = vector.load %arg10[%c0_55, %c32_56] : memref<16x964xf32, #tpu.memory_space<vmem>>, vector<16x900xf32>
    tpu.vector_store %arg10[%c0_55, %c32_56], %61 {strides = array<i32>} : memref<16x964xf32, #tpu.memory_space<vmem>>, vector<16x900xf32>,
    %cst_57 = arith.constant 0.000000e+00 : f32
    %63 = vector.broadcast %cst_57 : f32 to vector<32x900xf32>
    %c0_58 = arith.constant 0 : index
    %c0_59 = arith.constant 0 : index
    %c0_60 = arith.constant 0 : index
    %64 = vector.load %arg3[%c0_58, %c0_59, %c0_60] : memref<9x32x16xf32, #tpu.memory_space<vmem>>, vector<1x32x16xf32>
    %65 = vector.shape_cast %64 : vector<1x32x16xf32> to vector<32x16xf32>
    %c0_61 = arith.constant 0 : index
    %c1_62 = arith.constant 1 : index
    %66 = vector.load %arg10[%c0_61, %c1_62] : memref<16x964xf32, #tpu.memory_space<vmem>>, vector<16x900xf32>
    %cst_63 = arith.constant dense<0.000000e+00> : vector<32x900xf32>
    %67 = tpu.matmul %65, %66, %cst_63 {dimension_numbers = #tpu.dot_dimension_numbers<[1], [0], [0], [1], [0, 0, 1, 1], [], []>} : vector<32x16xf32>, vector<16x900xf32>, vector<32x900xf32> -> vector<32x900xf32>
    %68 = arith.addf %63, %67 : vector<32x900xf32>
    %c1_64 = arith.constant 1 : index
    %c0_65 = arith.constant 0 : index
    %c0_66 = arith.constant 0 : index
    %69 = vector.load %arg3[%c1_64, %c0_65, %c0_66] : memref<9x32x16xf32, #tpu.memory_space<vmem>>, vector<1x32x16xf32>
    %70 = vector.shape_cast %69 : vector<1x32x16xf32> to vector<32x16xf32>
    %c0_67 = arith.constant 0 : index
    %c2_68 = arith.constant 2 : index
    %71 = vector.load %arg10[%c0_67, %c2_68] : memref<16x964xf32, #tpu.memory_space<vmem>>, vector<16x900xf32>
    %cst_69 = arith.constant dense<0.000000e+00> : vector<32x900xf32>
    %72 = tpu.matmul %70, %71, %cst_69 {dimension_numbers = #tpu.dot_dimension_numbers<[1], [0], [0], [1], [0, 0, 1, 1], [], []>} : vector<32x16xf32>, vector<16x900xf32>, vector<32x900xf32> -> vector<32x900xf32>
    %73 = arith.addf %68, %72 : vector<32x900xf32>
    %c2_70 = arith.constant 2 : index
    %c0_71 = arith.constant 0 : index
    %c0_72 = arith.constant 0 : index
    %74 = vector.load %arg3[%c2_70, %c0_71, %c0_72] : memref<9x32x16xf32, #tpu.memory_space<vmem>>, vector<1x32x16xf32>
    %75 = vector.shape_cast %74 : vector<1x32x16xf32> to vector<32x16xf32>
    %c0_73 = arith.constant 0 : index
    %c3_74 = arith.constant 3 : index
    %76 = vector.load %arg10[%c0_73, %c3_74] : memref<16x964xf32, #tpu.memory_space<vmem>>, vector<16x900xf32>
    %cst_75 = arith.constant dense<0.000000e+00> : vector<32x900xf32>
    %77 = tpu.matmul %75, %76, %cst_75 {dimension_numbers = #tpu.dot_dimension_numbers<[1], [0], [0], [1], [0, 0, 1, 1], [], []>} : vector<32x16xf32>, vector<16x900xf32>, vector<32x900xf32> -> vector<32x900xf32>
    %78 = arith.addf %73, %77 : vector<32x900xf32>
    %c3_76 = arith.constant 3 : index
    %c0_77 = arith.constant 0 : index
    %c0_78 = arith.constant 0 : index
    %79 = vector.load %arg3[%c3_76, %c0_77, %c0_78] : memref<9x32x16xf32, #tpu.memory_space<vmem>>, vector<1x32x16xf32>
    %80 = vector.shape_cast %79 : vector<1x32x16xf32> to vector<32x16xf32>
    %c0_79 = arith.constant 0 : index
    %c31_80 = arith.constant 31 : index
    %81 = vector.load %arg10[%c0_79, %c31_80] : memref<16x964xf32, #tpu.memory_space<vmem>>, vector<16x900xf32>
    %cst_81 = arith.constant dense<0.000000e+00> : vector<32x900xf32>
    %82 = tpu.matmul %80, %81, %cst_81 {dimension_numbers = #tpu.dot_dimension_numbers<[1], [0], [0], [1], [0, 0, 1, 1], [], []>} : vector<32x16xf32>, vector<16x900xf32>, vector<32x900xf32> -> vector<32x900xf32>
    %83 = arith.addf %78, %82 : vector<32x900xf32>
    %c4_82 = arith.constant 4 : index
    %c0_83 = arith.constant 0 : index
    %c0_84 = arith.constant 0 : index
    %84 = vector.load %arg3[%c4_82, %c0_83, %c0_84] : memref<9x32x16xf32, #tpu.memory_space<vmem>>, vector<1x32x16xf32>
    %85 = vector.shape_cast %84 : vector<1x32x16xf32> to vector<32x16xf32>
    %c0_85 = arith.constant 0 : index
    %c32_86 = arith.constant 32 : index
    %86 = vector.load %arg10[%c0_85, %c32_86] : memref<16x964xf32, #tpu.memory_space<vmem>>, vector<16x900xf32>
    %cst_87 = arith.constant dense<0.000000e+00> : vector<32x900xf32>
    %87 = tpu.matmul %85, %86, %cst_87 {dimension_numbers = #tpu.dot_dimension_numbers<[1], [0], [0], [1], [0, 0, 1, 1], [], []>} : vector<32x16xf32>, vector<16x900xf32>, vector<32x900xf32> -> vector<32x900xf32>
    %88 = arith.addf %83, %87 : vector<32x900xf32>
    %c5_88 = arith.constant 5 : index
    %c0_89 = arith.constant 0 : index
    %c0_90 = arith.constant 0 : index
    %89 = vector.load %arg3[%c5_88, %c0_89, %c0_90] : memref<9x32x16xf32, #tpu.memory_space<vmem>>, vector<1x32x16xf32>
    %90 = vector.shape_cast %89 : vector<1x32x16xf32> to vector<32x16xf32>
    %c0_91 = arith.constant 0 : index
    %c33_92 = arith.constant 33 : index
    %91 = vector.load %arg10[%c0_91, %c33_92] : memref<16x964xf32, #tpu.memory_space<vmem>>, vector<16x900xf32>
    %cst_93 = arith.constant dense<0.000000e+00> : vector<32x900xf32>
    %92 = tpu.matmul %90, %91, %cst_93 {dimension_numbers = #tpu.dot_dimension_numbers<[1], [0], [0], [1], [0, 0, 1, 1], [], []>} : vector<32x16xf32>, vector<16x900xf32>, vector<32x900xf32> -> vector<32x900xf32>
    %93 = arith.addf %88, %92 : vector<32x900xf32>
    %c6_94 = arith.constant 6 : index
    %c0_95 = arith.constant 0 : index
    %c0_96 = arith.constant 0 : index
    %94 = vector.load %arg3[%c6_94, %c0_95, %c0_96] : memref<9x32x16xf32, #tpu.memory_space<vmem>>, vector<1x32x16xf32>
    %95 = vector.shape_cast %94 : vector<1x32x16xf32> to vector<32x16xf32>
    %c0_97 = arith.constant 0 : index
    %c61_98 = arith.constant 61 : index
    %96 = vector.load %arg10[%c0_97, %c61_98] : memref<16x964xf32, #tpu.memory_space<vmem>>, vector<16x900xf32>
    %cst_99 = arith.constant dense<0.000000e+00> : vector<32x900xf32>
    %97 = tpu.matmul %95, %96, %cst_99 {dimension_numbers = #tpu.dot_dimension_numbers<[1], [0], [0], [1], [0, 0, 1, 1], [], []>} : vector<32x16xf32>, vector<16x900xf32>, vector<32x900xf32> -> vector<32x900xf32>
    %98 = arith.addf %93, %97 : vector<32x900xf32>
    %c7_100 = arith.constant 7 : index
    %c0_101 = arith.constant 0 : index
    %c0_102 = arith.constant 0 : index
    %99 = vector.load %arg3[%c7_100, %c0_101, %c0_102] : memref<9x32x16xf32, #tpu.memory_space<vmem>>, vector<1x32x16xf32>
    %100 = vector.shape_cast %99 : vector<1x32x16xf32> to vector<32x16xf32>
    %c0_103 = arith.constant 0 : index
    %c62_104 = arith.constant 62 : index
    %101 = vector.load %arg10[%c0_103, %c62_104] : memref<16x964xf32, #tpu.memory_space<vmem>>, vector<16x900xf32>
    %cst_105 = arith.constant dense<0.000000e+00> : vector<32x900xf32>
    %102 = tpu.matmul %100, %101, %cst_105 {dimension_numbers = #tpu.dot_dimension_numbers<[1], [0], [0], [1], [0, 0, 1, 1], [], []>} : vector<32x16xf32>, vector<16x900xf32>, vector<32x900xf32> -> vector<32x900xf32>
    %103 = arith.addf %98, %102 : vector<32x900xf32>
    %c8_106 = arith.constant 8 : index
    %c0_107 = arith.constant 0 : index
    %c0_108 = arith.constant 0 : index
    %104 = vector.load %arg3[%c8_106, %c0_107, %c0_108] : memref<9x32x16xf32, #tpu.memory_space<vmem>>, vector<1x32x16xf32>
    %105 = vector.shape_cast %104 : vector<1x32x16xf32> to vector<32x16xf32>
    %c0_109 = arith.constant 0 : index
    %c63_110 = arith.constant 63 : index
    %106 = vector.load %arg10[%c0_109, %c63_110] : memref<16x964xf32, #tpu.memory_space<vmem>>, vector<16x900xf32>
    %cst_111 = arith.constant dense<0.000000e+00> : vector<32x900xf32>
    %107 = tpu.matmul %105, %106, %cst_111 {dimension_numbers = #tpu.dot_dimension_numbers<[1], [0], [0], [1], [0, 0, 1, 1], [], []>} : vector<32x16xf32>, vector<16x900xf32>, vector<32x900xf32> -> vector<32x900xf32>
    %108 = arith.addf %103, %107 : vector<32x900xf32>
    %c0_112 = arith.constant 0 : index
    %c0_113 = arith.constant 0 : index
    %109 = vector.load %arg4[%c0_112, %c0_113] : memref<32x1xf32, #tpu.memory_space<vmem>>, vector<32x1xf32>
    %110 = vector.broadcast %109 : vector<32x1xf32> to vector<32x900xf32>
    %111 = arith.addf %108, %110 : vector<32x900xf32>
    %cst_114 = arith.constant 0.000000e+00 : f32
    %112 = vector.broadcast %cst_114 : f32 to vector<32x900xf32>
    %113 = arith.maximumf %111, %112 : vector<32x900xf32>
    %c0_115 = arith.constant 0 : index
    %c0_116 = arith.constant 0 : index
    %114 = vector.load %arg5[%c0_115, %c0_116] : memref<32x1xf32, #tpu.memory_space<vmem>>, vector<32x1xf32>
    %115 = vector.broadcast %114 : vector<32x1xf32> to vector<32x900xf32>
    %116 = arith.mulf %113, %115 : vector<32x900xf32>
    %c0_117 = arith.constant 0 : index
    %c0_118 = arith.constant 0 : index
    %117 = vector.load %arg6[%c0_117, %c0_118] : memref<32x1xf32, #tpu.memory_space<vmem>>, vector<32x1xf32>
    %118 = vector.broadcast %117 : vector<32x1xf32> to vector<32x900xf32>
    %119 = arith.addf %116, %118 : vector<32x900xf32>
    %c0_119 = arith.constant 0 : index
    %c32_120 = arith.constant 32 : index
    %120 = vector.load %arg11[%c0_119, %c32_120] : memref<32x964xf32, #tpu.memory_space<vmem>>, vector<32x900xf32>
    tpu.vector_store %arg11[%c0_119, %c32_120], %119 {strides = array<i32>} : memref<32x964xf32, #tpu.memory_space<vmem>>, vector<32x900xf32>,
    %c0_121 = arith.constant 0 : index
    %c32_122 = arith.constant 32 : index
    %121 = vector.load %arg11[%c0_121, %c32_122] : memref<32x964xf32, #tpu.memory_space<vmem>>, vector<32x900xf32>
    %c0_123 = arith.constant 0 : index
    %c33_124 = arith.constant 33 : index
    %122 = vector.load %arg11[%c0_123, %c33_124] : memref<32x964xf32, #tpu.memory_space<vmem>>, vector<32x900xf32>
    %123 = arith.maximumf %121, %122 : vector<32x900xf32>
    %c0_125 = arith.constant 0 : index
    %c62_126 = arith.constant 62 : index
    %124 = vector.load %arg11[%c0_125, %c62_126] : memref<32x964xf32, #tpu.memory_space<vmem>>, vector<32x900xf32>
    %c0_127 = arith.constant 0 : index
    %c63_128 = arith.constant 63 : index
    %125 = vector.load %arg11[%c0_127, %c63_128] : memref<32x964xf32, #tpu.memory_space<vmem>>, vector<32x900xf32>
    %126 = arith.maximumf %124, %125 : vector<32x900xf32>
    %127 = arith.maximumf %123, %126 : vector<32x900xf32>
    %c0_129 = arith.constant 0 : index
    %c0_130 = arith.constant 0 : index
    %128 = vector.load %arg8[%c0_129, %c0_130] : memref<900x128xf32, #tpu.memory_space<vmem>>, vector<900x128xf32>
    %cst_131 = arith.constant dense<0.000000e+00> : vector<32x128xf32>
    %129 = tpu.matmul %127, %128, %cst_131 {dimension_numbers = #tpu.dot_dimension_numbers<[1], [0], [0], [1], [0, 0, 1, 1], [], []>} : vector<32x900xf32>, vector<900x128xf32>, vector<32x128xf32> -> vector<32x128xf32>
    %c0_132 = arith.constant 0 : index
    %c0_133 = arith.constant 0 : index
    %130 = vector.load %arg9[%c0_132, %c0_133] : memref<32x128xf32, #tpu.memory_space<vmem>>, vector<32x128xf32>
    tpu.vector_store %arg9[%c0_132, %c0_133], %129 {strides = array<i32>} : memref<32x128xf32, #tpu.memory_space<vmem>>, vector<32x128xf32>,
    return
  }
}

module attributes {stable_mosaic.version = 11 : i64} {
  func.func @matmul_concat_kernel(%arg0: memref<2x896xf32, #tpu.memory_space<vmem>>, %arg1: memref<896x896xbf16, #tpu.memory_space<vmem>>, %arg2: memref<2x1792xf32, #tpu.memory_space<vmem>>) attributes {dimension_semantics = [], scalar_prefetch = 0 : i64, scratch_operands = 0 : i64, tpu.core_type = #tpu.core_type<tc>} {
    %c0 = arith.constant 0 : index
    %c0_0 = arith.constant 0 : index
    %0 = vector.load %arg0[%c0, %c0_0] : memref<2x896xf32, #tpu.memory_space<vmem>>, vector<2x896xf32>
    %c0_1 = arith.constant 0 : index
    %c0_2 = arith.constant 0 : index
    %1 = vector.load %arg2[%c0_1, %c0_2] : memref<2x1792xf32, #tpu.memory_space<vmem>>, vector<2x896xf32>
    tpu.vector_store %arg2[%c0_1, %c0_2], %0 {strides = array<i32>} : memref<2x1792xf32, #tpu.memory_space<vmem>>, vector<2x896xf32>,
    %2 = arith.truncf %0 : vector<2x896xf32> to vector<2x896xbf16>
    %c0_3 = arith.constant 0 : index
    %c0_4 = arith.constant 0 : index
    %3 = vector.load %arg1[%c0_3, %c0_4] : memref<896x896xbf16, #tpu.memory_space<vmem>>, vector<896x896xbf16>
    %cst = arith.constant dense<0.000000e+00> : vector<2x896xf32>
    %4 = tpu.matmul %2, %3, %cst {dimension_numbers = #tpu.dot_dimension_numbers<[1], [0], [0], [1], [0, 0, 1, 1], [], []>} : vector<2x896xbf16>, vector<896x896xbf16>, vector<2x896xf32> -> vector<2x896xf32>
    %c0_5 = arith.constant 0 : index
    %c896 = arith.constant 896 : index
    %5 = vector.load %arg2[%c0_5, %c896] : memref<2x1792xf32, #tpu.memory_space<vmem>>, vector<2x896xf32>
    tpu.vector_store %arg2[%c0_5, %c896], %4 {strides = array<i32>} : memref<2x1792xf32, #tpu.memory_space<vmem>>, vector<2x896xf32>,
    return
  }
}

</mosaic_0001>

<llo_original>
// kernel: tile.23
$region0: #{tile.23}
  #allocation2 [shape = 's32[1]{0}', space=sflag, size = 0x4, scoped, tag = 'scoped memory for tile.23']
  %s0 = inlined_call_operand.hbm [shape: f32[8], index: 0, kind: input, shape index: {}]
  %s1 = inlined_call_operand.vmem [shape: f32[2,8], index: 1, kind: output, shape index: {}]
  $region1: #{tile.23} parent=0
    #allocation0 [shape = 'u8[512]{0}', space=vmem, size = 0x400, scoped, tag = 'operand span for operand 0']
    #allocation1 [shape = 's32[1]{0}', space=sflag, size = 0x4, scoped, tag = 'scoped memory for tile.23']
    %2 = vsyncpa [#allocation1], 0
    // Predicated region
    $region2: #{tile.23} parent=1 // pred_check
      _
    $region3: #{tile.23} parent=1 // pred_check_branch
      %4 = sbr.rel (0) target = $region5
    $region4: #{tile.23} parent=1 // pred_region
      %s6 = ssub.s32 16, 16
      %7 = vsyncadd [#allocation1], %s6
      %s9 = sshll.u32 [#allocation0], 4
      %s10 = int_to_ptr.vmem [resolvable:$true] %s9
      %12 = dma.hbm_to_vmem [thread:$0]  %s0, 16, %s10, [#allocation1]
    $region5: #{tile.23} parent=1 // pred_fallthru
      _
    // Predicated region
    $region6: #{tile.23} parent=1 // pred_check
      _
    $region7: #{tile.23} parent=1 // pred_check_branch
      %14 = sbr.rel (0) target = $region9
    $region8: #{tile.23} parent=1 // pred_region
      %15 = dma.done [#allocation1], 16
    $region9: #{tile.23} parent=1 // pred_fallthru
      _
    %v16 = vld [vmem:[#allocation0] ss:$0 sm:$0xff]
    %17 = vst [vmem:[%s1] sm:$0x3] %v16
    %18 = vsyncpa [#allocation1], 1

// kernel: tile.28
$region0: #{tile.28}
  #allocation2 [shape = 's32[1]{0}', space=sflag, size = 0x4, scoped, tag = 'scoped memory for tile.28']
  %s0 = inlined_call_operand.hbm [shape: f32[16], index: 0, kind: input, shape index: {}]
  %s1 = inlined_call_operand.vmem [shape: f32[2,16], index: 1, kind: output, shape index: {}]
  $region1: #{tile.28} parent=0
    #allocation0 [shape = 'u8[512]{0}', space=vmem, size = 0x400, scoped, tag = 'operand span for operand 0']
    #allocation1 [shape = 's32[1]{0}', space=sflag, size = 0x4, scoped, tag = 'scoped memory for tile.28']
    %2 = vsyncpa [#allocation1], 0
    // Predicated region
    $region2: #{tile.28} parent=1 // pred_check
      _
    $region3: #{tile.28} parent=1 // pred_check_branch
      %4 = sbr.rel (0) target = $region5
    $region4: #{tile.28} parent=1 // pred_region
      %s6 = ssub.s32 16, 16
      %7 = vsyncadd [#allocation1], %s6
      %s9 = sshll.u32 [#allocation0], 4
      %s10 = int_to_ptr.vmem [resolvable:$true] %s9
      %12 = dma.hbm_to_vmem [thread:$0]  %s0, 16, %s10, [#allocation1]
    $region5: #{tile.28} parent=1 // pred_fallthru
      _
    // Predicated region
    $region6: #{tile.28} parent=1 // pred_check
      _
    $region7: #{tile.28} parent=1 // pred_check_branch
      %14 = sbr.rel (0) target = $region9
    $region8: #{tile.28} parent=1 // pred_region
      %15 = dma.done [#allocation1], 16
    $region9: #{tile.28} parent=1 // pred_fallthru
      _
    %v16 = vld [vmem:[#allocation0] ss:$0 sm:$0xff]
    %17 = vst [vmem:[%s1] sm:$0x3] %v16
    %18 = vsyncpa [#allocation1], 1

// kernel: tile.38
$region0: #{tile.38}
  #allocation0 [shape = 's32[1]{0}', space=sflag, size = 0x4, scoped, tag = 'scoped memory for tile.38']
  %s0 = inlined_call_operand.vmem [shape: f32[16], index: 0, kind: input, shape index: {}]
  %s1 = inlined_call_operand.vmem [shape: f32[2,16], index: 1, kind: output, shape index: {}]
  // Predicated region
  $region2: #{tile.38} parent=0 // pred_check
    _
  $region3: #{tile.38} parent=0 // pred_check_branch
    %3 = sbr.rel (0) target = $region5
  $region4: #{tile.38} parent=0 // pred_region
    _
  $region5: #{tile.38} parent=0 // pred_fallthru
    _
  %v4 = vld [vmem:[%s0] ss:$0 sm:$0xff]
  %5 = vst [vmem:[%s1] sm:$0x3] %v4

// kernel: tile.0
$region0: #{tile.0}
  %s0 = inlined_call_operand.vmem [shape: f32[2,8], index: 0, kind: input, shape index: {}]
  %s1 = inlined_call_operand.vmem [shape: f32[16,1], index: 1, kind: output, shape index: {}]
  $region1: #{tile.0} parent=0
    #allocation0 [shape = 'u8[4096]{0}', space=vmem, size = 0x1000, scoped, tag = 'scoped mem for input reshape']
    %s3 = sshllo.u32 0, 2
    %v4 = vld [vmem:[%s0] sm:%s3]
    %5 = vst [vmem:[#allocation0] sm:%s3] %v4
    %v6 = vld [vmem:[#allocation0] sm:$0x3]
    %vm7 = vcmask 7168
    %8 = vst.msk [vmem:[%s1] ss:$8 sm:$0x3] %vm7, %v6
    %v9 = vld [vmem:[#allocation0] sm:$0x3]
    %10 = vrot.lane.b32.xlu0 %v9, 127
    %v11 = vpop.permute.xlu0 %10
    %vm12 = vcmask 7168
    %s13 = scalar_lea.vmem %s1, 1
    %14 = vst.msk [vmem:[%s13] ss:$8 sm:$0x3] %vm12, %v11
    %v15 = vld [vmem:[#allocation0] sm:$0x3]
    %16 = vrot.lane.b32.xlu0 %v15, 126
    %v17 = vpop.permute.xlu0 %16
    %vm18 = vcmask 7168
    %s19 = scalar_lea.vmem %s1, 2
    %20 = vst.msk [vmem:[%s19] ss:$8 sm:$0x3] %vm18, %v17
    %v21 = vld [vmem:[#allocation0] sm:$0x3]
    %22 = vrot.lane.b32.xlu0 %v21, 125
    %v23 = vpop.permute.xlu0 %22
    %vm24 = vcmask 7168
    %s25 = scalar_lea.vmem %s1, 3
    %26 = vst.msk [vmem:[%s25] ss:$8 sm:$0x3] %vm24, %v23
    %v27 = vld [vmem:[#allocation0] sm:$0x3]
    %28 = vrot.lane.b32.xlu0 %v27, 124
    %v29 = vpop.permute.xlu0 %28
    %vm30 = vcmask 7168
    %s31 = scalar_lea.vmem %s1, 4
    %32 = vst.msk [vmem:[%s31] ss:$8 sm:$0x3] %vm30, %v29
    %v33 = vld [vmem:[#allocation0] sm:$0x3]
    %34 = vrot.lane.b32.xlu0 %v33, 123
    %v35 = vpop.permute.xlu0 %34
    %vm36 = vcmask 7168
    %s37 = scalar_lea.vmem %s1, 5
    %38 = vst.msk [vmem:[%s37] ss:$8 sm:$0x3] %vm36, %v35
    %v39 = vld [vmem:[#allocation0] sm:$0x3]
    %40 = vrot.lane.b32.xlu0 %v39, 122
    %v41 = vpop.permute.xlu0 %40
    %vm42 = vcmask 7168
    %s43 = scalar_lea.vmem %s1, 6
    %44 = vst.msk [vmem:[%s43] ss:$8 sm:$0x3] %vm42, %v41
    %v45 = vld [vmem:[#allocation0] sm:$0x3]
    %46 = vrot.lane.b32.xlu0 %v45, 121
    %v47 = vpop.permute.xlu0 %46
    %vm48 = vcmask 7168
    %s49 = scalar_lea.vmem %s1, 7
    %50 = vst.msk [vmem:[%s49] ss:$8 sm:$0x3] %vm48, %v47

// kernel: tile.2
$region0: #{tile.2}
  %s0 = inlined_call_operand.vmem [shape: f32[2,16], index: 0, kind: input, shape index: {}]
  %s1 = inlined_call_operand.vmem [shape: f32[32,1], index: 1, kind: output, shape index: {}]
  $region1: #{tile.2} parent=0
    #allocation0 [shape = 'u8[4096]{0}', space=vmem, size = 0x1000, scoped, tag = 'scoped mem for input reshape']
    %s3 = sshllo.u32 0, 2
    %v4 = vld [vmem:[%s0] sm:%s3]
    %5 = vst [vmem:[#allocation0] sm:%s3] %v4
    %v6 = vld [vmem:[#allocation0] sm:$0x3]
    %vm7 = vcmask 7168
    %8 = vst.msk [vmem:[%s1] ss:$16 sm:$0x3] %vm7, %v6
    %v9 = vld [vmem:[#allocation0] sm:$0x3]
    %10 = vrot.lane.b32.xlu0 %v9, 127
    %v11 = vpop.permute.xlu0 %10
    %vm12 = vcmask 7168
    %s13 = scalar_lea.vmem %s1, 1
    %14 = vst.msk [vmem:[%s13] ss:$16 sm:$0x3] %vm12, %v11
    %v15 = vld [vmem:[#allocation0] sm:$0x3]
    %16 = vrot.lane.b32.xlu0 %v15, 126
    %v17 = vpop.permute.xlu0 %16
    %vm18 = vcmask 7168
    %s19 = scalar_lea.vmem %s1, 2
    %20 = vst.msk [vmem:[%s19] ss:$16 sm:$0x3] %vm18, %v17
    %v21 = vld [vmem:[#allocation0] sm:$0x3]
    %22 = vrot.lane.b32.xlu0 %v21, 125
    %v23 = vpop.permute.xlu0 %22
    %vm24 = vcmask 7168
    %s25 = scalar_lea.vmem %s1, 3
    %26 = vst.msk [vmem:[%s25] ss:$16 sm:$0x3] %vm24, %v23
    %v27 = vld [vmem:[#allocation0] sm:$0x3]
    %28 = vrot.lane.b32.xlu0 %v27, 124
    %v29 = vpop.permute.xlu0 %28
    %vm30 = vcmask 7168
    %s31 = scalar_lea.vmem %s1, 4
    %32 = vst.msk [vmem:[%s31] ss:$16 sm:$0x3] %vm30, %v29
    %v33 = vld [vmem:[#allocation0] sm:$0x3]
    %34 = vrot.lane.b32.xlu0 %v33, 123
    %v35 = vpop.permute.xlu0 %34
    %vm36 = vcmask 7168
    %s37 = scalar_lea.vmem %s1, 5
    %38 = vst.msk [vmem:[%s37] ss:$16 sm:$0x3] %vm36, %v35
    %v39 = vld [vmem:[#allocation0] sm:$0x3]
    %40 = vrot.lane.b32.xlu0 %v39, 122
    %v41 = vpop.permute.xlu0 %40
    %vm42 = vcmask 7168
    %s43 = scalar_lea.vmem %s1, 6
    %44 = vst.msk [vmem:[%s43] ss:$16 sm:$0x3] %vm42, %v41
    %v45 = vld [vmem:[#allocation0] sm:$0x3]
    %46 = vrot.lane.b32.xlu0 %v45, 121
    %v47 = vpop.permute.xlu0 %46
    %vm48 = vcmask 7168
    %s49 = scalar_lea.vmem %s1, 7
    %50 = vst.msk [vmem:[%s49] ss:$16 sm:$0x3] %vm48, %v47
    %v51 = vld [vmem:[#allocation0] sm:$0x3]
    %52 = vrot.lane.b32.xlu0 %v51, 120
    %v53 = vpop.permute.xlu0 %52
    %vm54 = vcmask 7168
    %s55 = scalar_lea.vmem %s1, 8
    %56 = vst.msk [vmem:[%s55] ss:$16 sm:$0x3] %vm54, %v53
    %v57 = vld [vmem:[#allocation0] sm:$0x3]
    %58 = vrot.lane.b32.xlu0 %v57, 119
    %v59 = vpop.permute.xlu0 %58
    %vm60 = vcmask 7168
    %s61 = scalar_lea.vmem %s1, 9
    %62 = vst.msk [vmem:[%s61] ss:$16 sm:$0x3] %vm60, %v59
    %v63 = vld [vmem:[#allocation0] sm:$0x3]
    %64 = vrot.lane.b32.xlu0 %v63, 118
    %v65 = vpop.permute.xlu0 %64
    %vm66 = vcmask 7168
    %s67 = scalar_lea.vmem %s1, 10
    %68 = vst.msk [vmem:[%s67] ss:$16 sm:$0x3] %vm66, %v65
    %v69 = vld [vmem:[#allocation0] sm:$0x3]
    %70 = vrot.lane.b32.xlu0 %v69, 117
    %v71 = vpop.permute.xlu0 %70
    %vm72 = vcmask 7168
    %s73 = scalar_lea.vmem %s1, 11
    %74 = vst.msk [vmem:[%s73] ss:$16 sm:$0x3] %vm72, %v71
    %v75 = vld [vmem:[#allocation0] sm:$0x3]
    %76 = vrot.lane.b32.xlu0 %v75, 116
    %v77 = vpop.permute.xlu0 %76
    %vm78 = vcmask 7168
    %s79 = scalar_lea.vmem %s1, 12
    %80 = vst.msk [vmem:[%s79] ss:$16 sm:$0x3] %vm78, %v77
    %v81 = vld [vmem:[#allocation0] sm:$0x3]
    %82 = vrot.lane.b32.xlu0 %v81, 115
    %v83 = vpop.permute.xlu0 %82
    %vm84 = vcmask 7168
    %s85 = scalar_lea.vmem %s1, 13
    %86 = vst.msk [vmem:[%s85] ss:$16 sm:$0x3] %vm84, %v83
    %v87 = vld [vmem:[#allocation0] sm:$0x3]
    %88 = vrot.lane.b32.xlu0 %v87, 114
    %v89 = vpop.permute.xlu0 %88
    %vm90 = vcmask 7168
    %s91 = scalar_lea.vmem %s1, 14
    %92 = vst.msk [vmem:[%s91] ss:$16 sm:$0x3] %vm90, %v89
    %v93 = vld [vmem:[#allocation0] sm:$0x3]
    %94 = vrot.lane.b32.xlu0 %v93, 113
    %v95 = vpop.permute.xlu0 %94
    %vm96 = vcmask 7168
    %s97 = scalar_lea.vmem %s1, 15
    %98 = vst.msk [vmem:[%s97] ss:$16 sm:$0x3] %vm96, %v95

// kernel: conv2_forward.3
$region0: #{conv2_forward.3}
  #allocation0 [shape = 'u32[]', space=smem, size = 0x4, offset = 0x4, fixed_abs, tag = 'smem constant byte address 0x4 - core index']
  #allocation1 [shape = 'u32[144,128]{1,0:T(1,128)}', space=vmem, size = 0x12000, scoped, tag = 'internal scratch']
  %s0 = inlined_call_operand.vmem [shape: f32[2,896], index: 0, kind: input, shape index: {}]
  %s1 = inlined_call_operand.vmem [shape: bf16[896,896], index: 1, kind: input, shape index: {}]
  %s2 = inlined_call_operand.vmem [shape: f32[2,1792], index: 2, kind: output, shape index: {}]
  %s3 = sld [smem:[#allocation0]]
  $region18: #{conv2_forward.3} parent=0
    _
  %s5 = ssub.s32 1, %s3
  %s6 = scalar_select 0, %s5, %s3
  // Predicated region
  $region2: #{conv2_forward.3} parent=0 // pred_check
    _
  $region3: #{conv2_forward.3} parent=0 // pred_check_branch
    %8 = sbr.rel (0) target = $region5
  $region4: #{conv2_forward.3} parent=0 // pred_region
    _
  $region5: #{conv2_forward.3} parent=0 // pred_fallthru
    _
  // Predicated region
  $region6: #{conv2_forward.3} parent=0 // pred_check
    _
  $region7: #{conv2_forward.3} parent=0 // pred_check_branch
    %10 = sbr.rel (0) target = $region9
  $region8: #{conv2_forward.3} parent=0 // pred_region
    _
  $region9: #{conv2_forward.3} parent=0 // pred_fallthru
    _
  %v12 = vld [vmem:[%s0] sm:$0xff]
  %v13 = vld [vmem:[%s0 + $0x8] sm:$0x3f]
  %14 = vst [vmem:[%s2] sm:$0xff] %v12
  %15 = vst [vmem:[%s2 + $0x8] sm:$0x3f] %v13
  %v18 = vcombine.high %v12, %v12
  %v20 = vunpack.c.l.s4 1983009808
  %v21 = vunpack.c.0.s8 %v20
  %v22 = vlaneseq
  %v23 = vshrl.u32 %v22, 7
  %v24 = vsub.s32 %v21, %v23
  %v25 = vrot.slane %v12, %v24
  %v27 = vunpack.c.l.s4 1983009808
  %v28 = vunpack.c.0.s8 %v27
  %v29 = vlaneseq
  %v30 = vshrl.u32 %v29, 7
  %v31 = vsub.s32 %v28, %v30
  %v32 = vrot.slane %v18, %v31
  %v33 = vcombine.high %v25, %v25
  %v34 = vcombine.high %v32, %v32
  %v35 = vcombine.high %v13, %v13
  %v37 = vunpack.c.l.s4 1983009808
  %v38 = vunpack.c.0.s8 %v37
  %v39 = vlaneseq
  %v40 = vshrl.u32 %v39, 7
  %v41 = vsub.s32 %v38, %v40
  %v42 = vrot.slane %v13, %v41
  %v44 = vunpack.c.l.s4 1983009808
  %v45 = vunpack.c.0.s8 %v44
  %v46 = vlaneseq
  %v47 = vshrl.u32 %v46, 7
  %v48 = vsub.s32 %v45, %v47
  %v49 = vrot.slane %v35, %v48
  %v50 = vcombine.high %v42, %v42
  %v58 = vpack.c.bf16 %v25, %v25
  %v59 = vpack.c.bf16 %v33, %v33
  %v60 = vpack.c.bf16 %v32, %v32
  %v61 = vpack.c.bf16 %v34, %v34
  %v62 = vpack.c.bf16 %v42, %v42
  %v63 = vpack.c.bf16 %v50, %v50
  %v64 = vpack.c.bf16 %v49, %v49
  %v65 = vld [vmem:[%s1] sm:$0xff]
  %v66 = vld [vmem:[%s1 + $0x8] sm:$0xff]
  %v67 = vld [vmem:[%s1 + $0x10] sm:$0xff]
  %v68 = vld [vmem:[%s1 + $0x18] sm:$0xf]
  %v69 = vld [vmem:[%s1 + $0x1c] sm:$0xff]
  %v70 = vld [vmem:[%s1 + $0x24] sm:$0xff]
  %v71 = vld [vmem:[%s1 + $0x2c] sm:$0xff]
  %v72 = vld [vmem:[%s1 + $0x34] sm:$0xf]
  %v73 = vld [vmem:[%s1 + $0x38] sm:$0xff]
  %v74 = vld [vmem:[%s1 + $0x40] sm:$0xff]
  %v75 = vld [vmem:[%s1 + $0x48] sm:$0xff]
  %v76 = vld [vmem:[%s1 + $0x50] sm:$0xf]
  %v77 = vld [vmem:[%s1 + $0x54] sm:$0xff]
  %v78 = vld [vmem:[%s1 + $0x5c] sm:$0xff]
  %v79 = vld [vmem:[%s1 + $0x64] sm:$0xff]
  %v80 = vld [vmem:[%s1 + $0x6c] sm:$0xf]
  %v81 = vld [vmem:[%s1 + $0x70] sm:$0xff]
  %v82 = vld [vmem:[%s1 + $0x78] sm:$0xff]
  %v83 = vld [vmem:[%s1 + $0x80] sm:$0xff]
  %v84 = vld [vmem:[%s1 + $0x88] sm:$0xf]
  %v85 = vld [vmem:[%s1 + $0x8c] sm:$0xff]
  %v86 = vld [vmem:[%s1 + $0x94] sm:$0xff]
  %v87 = vld [vmem:[%s1 + $0x9c] sm:$0xff]
  %v88 = vld [vmem:[%s1 + $0xa4] sm:$0xf]
  %v89 = vld [vmem:[%s1 + $0xa8] sm:$0xff]
  %v90 = vld [vmem:[%s1 + $0xb0] sm:$0xff]
  %v91 = vld [vmem:[%s1 + $0xb8] sm:$0xff]
  %v92 = vld [vmem:[%s1 + $0xc0] sm:$0xf]
  %v93 = vld [vmem:[%s1 + $0xc4] sm:$0xff]
  %v94 = vld [vmem:[%s1 + $0xcc] sm:$0xff]
  %v95 = vld [vmem:[%s1 + $0xd4] sm:$0xff]
  %v96 = vld [vmem:[%s1 + $0xdc] sm:$0xf]
  %v97 = vld [vmem:[%s1 + $0xe0] sm:$0xff]
  %v98 = vld [vmem:[%s1 + $0xe8] sm:$0xff]
  %v99 = vld [vmem:[%s1 + $0xf0] sm:$0xff]
  %v100 = vld [vmem:[%s1 + $0xf8] sm:$0xf]
  %v101 = vld [vmem:[%s1 + $0xfc] sm:$0xff]
  %v102 = vld [vmem:[%s1 + $0x104] sm:$0xff]
  %v103 = vld [vmem:[%s1 + $0x10c] sm:$0xff]
  %v104 = vld [vmem:[%s1 + $0x114] sm:$0xf]
  %v105 = vld [vmem:[%s1 + $0x118] sm:$0xff]
  %v106 = vld [vmem:[%s1 + $0x120] sm:$0xff]
  %v107 = vld [vmem:[%s1 + $0x128] sm:$0xff]
  %v108 = vld [vmem:[%s1 + $0x130] sm:$0xf]
  %v109 = vld [vmem:[%s1 + $0x134] sm:$0xff]
  %v110 = vld [vmem:[%s1 + $0x13c] sm:$0xff]
  %v111 = vld [vmem:[%s1 + $0x144] sm:$0xff]
  %v112 = vld [vmem:[%s1 + $0x14c] sm:$0xf]
  %v113 = vld [vmem:[%s1 + $0x150] sm:$0xff]
  %v114 = vld [vmem:[%s1 + $0x158] sm:$0xff]
  %v115 = vld [vmem:[%s1 + $0x160] sm:$0xff]
  %v116 = vld [vmem:[%s1 + $0x168] sm:$0xf]
  %v117 = vld [vmem:[%s1 + $0x16c] sm:$0xff]
  %v118 = vld [vmem:[%s1 + $0x174] sm:$0xff]
  %v119 = vld [vmem:[%s1 + $0x17c] sm:$0xff]
  %v120 = vld [vmem:[%s1 + $0x184] sm:$0xf]
  %v121 = vld [vmem:[%s1 + $0x188] sm:$0xff]
  %v122 = vld [vmem:[%s1 + $0x190] sm:$0xff]
  %v123 = vld [vmem:[%s1 + $0x198] sm:$0xff]
  %v124 = vld [vmem:[%s1 + $0x1a0] sm:$0xf]
  %v125 = vld [vmem:[%s1 + $0x1a4] sm:$0xff]
  %v126 = vld [vmem:[%s1 + $0x1ac] sm:$0xff]
  %v127 = vld [vmem:[%s1 + $0x1b4] sm:$0xff]
  %v128 = vld [vmem:[%s1 + $0x1bc] sm:$0xf]
  %v129 = vld [vmem:[%s1 + $0x1c0] sm:$0xff]
  %v130 = vld [vmem:[%s1 + $0x1c8] sm:$0xff]
  %v131 = vld [vmem:[%s1 + $0x1d0] sm:$0xff]
  %v132 = vld [vmem:[%s1 + $0x1d8] sm:$0xf]
  %v133 = vld [vmem:[%s1 + $0x1dc] sm:$0xff]
  %v134 = vld [vmem:[%s1 + $0x1e4] sm:$0xff]
  %v135 = vld [vmem:[%s1 + $0x1ec] sm:$0xff]
  %v136 = vld [vmem:[%s1 + $0x1f4] sm:$0xf]
  %v137 = vld [vmem:[%s1 + $0x1f8] sm:$0xff]
  %v138 = vld [vmem:[%s1 + $0x200] sm:$0xff]
  %v139 = vld [vmem:[%s1 + $0x208] sm:$0xff]
  %v140 = vld [vmem:[%s1 + $0x210] sm:$0xf]
  %v141 = vld [vmem:[%s1 + $0x214] sm:$0xff]
  %v142 = vld [vmem:[%s1 + $0x21c] sm:$0xff]
  %v143 = vld [vmem:[%s1 + $0x224] sm:$0xff]
  %v144 = vld [vmem:[%s1 + $0x22c] sm:$0xf]
  %v145 = vld [vmem:[%s1 + $0x230] sm:$0xff]
  %v146 = vld [vmem:[%s1 + $0x238] sm:$0xff]
  %v147 = vld [vmem:[%s1 + $0x240] sm:$0xff]
  %v148 = vld [vmem:[%s1 + $0x248] sm:$0xf]
  %v149 = vld [vmem:[%s1 + $0x24c] sm:$0xff]
  %v150 = vld [vmem:[%s1 + $0x254] sm:$0xff]
  %v151 = vld [vmem:[%s1 + $0x25c] sm:$0xff]
  %v152 = vld [vmem:[%s1 + $0x264] sm:$0xf]
  %v153 = vld [vmem:[%s1 + $0x268] sm:$0xff]
  %v154 = vld [vmem:[%s1 + $0x270] sm:$0xff]
  %v155 = vld [vmem:[%s1 + $0x278] sm:$0xff]
  %v156 = vld [vmem:[%s1 + $0x280] sm:$0xf]
  %v157 = vld [vmem:[%s1 + $0x284] sm:$0xff]
  %v158 = vld [vmem:[%s1 + $0x28c] sm:$0xff]
  %v159 = vld [vmem:[%s1 + $0x294] sm:$0xff]
  %v160 = vld [vmem:[%s1 + $0x29c] sm:$0xf]
  %v161 = vld [vmem:[%s1 + $0x2a0] sm:$0xff]
  %v162 = vld [vmem:[%s1 + $0x2a8] sm:$0xff]
  %v163 = vld [vmem:[%s1 + $0x2b0] sm:$0xff]
  %v164 = vld [vmem:[%s1 + $0x2b8] sm:$0xf]
  %v165 = vld [vmem:[%s1 + $0x2bc] sm:$0xff]
  %v166 = vld [vmem:[%s1 + $0x2c4] sm:$0xff]
  %v167 = vld [vmem:[%s1 + $0x2cc] sm:$0xff]
  %v168 = vld [vmem:[%s1 + $0x2d4] sm:$0xf]
  %v169 = vld [vmem:[%s1 + $0x2d8] sm:$0xff]
  %v170 = vld [vmem:[%s1 + $0x2e0] sm:$0xff]
  %v171 = vld [vmem:[%s1 + $0x2e8] sm:$0xff]
  %v172 = vld [vmem:[%s1 + $0x2f0] sm:$0xf]
  %v173 = vld [vmem:[%s1 + $0x2f4] sm:$0xff]
  %v174 = vld [vmem:[%s1 + $0x2fc] sm:$0xff]
  %v175 = vld [vmem:[%s1 + $0x304] sm:$0xff]
  %v176 = vld [vmem:[%s1 + $0x30c] sm:$0xf]
  %v177 = vld [vmem:[%s1 + $0x310] sm:$0xff]
  %v178 = vld [vmem:[%s1 + $0x318] sm:$0xff]
  %v179 = vld [vmem:[%s1 + $0x320] sm:$0xff]
  %v180 = vld [vmem:[%s1 + $0x328] sm:$0xf]
  %v181 = vld [vmem:[%s1 + $0x32c] sm:$0xff]
  %v182 = vld [vmem:[%s1 + $0x334] sm:$0xff]
  %v183 = vld [vmem:[%s1 + $0x33c] sm:$0xff]
  %v184 = vld [vmem:[%s1 + $0x344] sm:$0xf]
  %v185 = vld [vmem:[%s1 + $0x348] sm:$0xff]
  %v186 = vld [vmem:[%s1 + $0x350] sm:$0xff]
  %v187 = vld [vmem:[%s1 + $0x358] sm:$0xff]
  %v188 = vld [vmem:[%s1 + $0x360] sm:$0xf]
  %v189 = vld [vmem:[%s1 + $0x364] sm:$0xff]
  %v190 = vld [vmem:[%s1 + $0x36c] sm:$0xff]
  %v191 = vld [vmem:[%s1 + $0x374] sm:$0xff]
  %v192 = vld [vmem:[%s1 + $0x37c] sm:$0xf]
  %v193 = vld [vmem:[%s1 + $0x380] sm:$0xff]
  %v194 = vld [vmem:[%s1 + $0x388] sm:$0xff]
  %v195 = vld [vmem:[%s1 + $0x390] sm:$0xff]
  %v196 = vld [vmem:[%s1 + $0x398] sm:$0xf]
  %v197 = vld [vmem:[%s1 + $0x39c] sm:$0xff]
  %v198 = vld [vmem:[%s1 + $0x3a4] sm:$0xff]
  %v199 = vld [vmem:[%s1 + $0x3ac] sm:$0xff]
  %v200 = vld [vmem:[%s1 + $0x3b4] sm:$0xf]
  %v201 = vld [vmem:[%s1 + $0x3b8] sm:$0xff]
  %v202 = vld [vmem:[%s1 + $0x3c0] sm:$0xff]
  %v203 = vld [vmem:[%s1 + $0x3c8] sm:$0xff]
  %v204 = vld [vmem:[%s1 + $0x3d0] sm:$0xf]
  %v205 = vld [vmem:[%s1 + $0x3d4] sm:$0xff]
  %v206 = vld [vmem:[%s1 + $0x3dc] sm:$0xff]
  %v207 = vld [vmem:[%s1 + $0x3e4] sm:$0xff]
  %v208 = vld [vmem:[%s1 + $0x3ec] sm:$0xf]
  %v209 = vld [vmem:[%s1 + $0x3f0] sm:$0xff]
  %v210 = vld [vmem:[%s1 + $0x3f8] sm:$0xff]
  %v211 = vld [vmem:[%s1 + $0x400] sm:$0xff]
  %v212 = vld [vmem:[%s1 + $0x408] sm:$0xf]
  %v213 = vld [vmem:[%s1 + $0x40c] sm:$0xff]
  %v214 = vld [vmem:[%s1 + $0x414] sm:$0xff]
  %v215 = vld [vmem:[%s1 + $0x41c] sm:$0xff]
  %v216 = vld [vmem:[%s1 + $0x424] sm:$0xf]
  %v217 = vld [vmem:[%s1 + $0x428] sm:$0xff]
  %v218 = vld [vmem:[%s1 + $0x430] sm:$0xff]
  %v219 = vld [vmem:[%s1 + $0x438] sm:$0xff]
  %v220 = vld [vmem:[%s1 + $0x440] sm:$0xf]
  %v221 = vld [vmem:[%s1 + $0x444] sm:$0xff]
  %v222 = vld [vmem:[%s1 + $0x44c] sm:$0xff]
  %v223 = vld [vmem:[%s1 + $0x454] sm:$0xff]
  %v224 = vld [vmem:[%s1 + $0x45c] sm:$0xf]
  %v225 = vld [vmem:[%s1 + $0x460] sm:$0xff]
  %v226 = vld [vmem:[%s1 + $0x468] sm:$0xff]
  %v227 = vld [vmem:[%s1 + $0x470] sm:$0xff]
  %v228 = vld [vmem:[%s1 + $0x478] sm:$0xf]
  %v229 = vld [vmem:[%s1 + $0x47c] sm:$0xff]
  %v230 = vld [vmem:[%s1 + $0x484] sm:$0xff]
  %v231 = vld [vmem:[%s1 + $0x48c] sm:$0xff]
  %v232 = vld [vmem:[%s1 + $0x494] sm:$0xf]
  %v233 = vld [vmem:[%s1 + $0x498] sm:$0xff]
  %v234 = vld [vmem:[%s1 + $0x4a0] sm:$0xff]
  %v235 = vld [vmem:[%s1 + $0x4a8] sm:$0xff]
  %v236 = vld [vmem:[%s1 + $0x4b0] sm:$0xf]
  %v237 = vld [vmem:[%s1 + $0x4b4] sm:$0xff]
  %v238 = vld [vmem:[%s1 + $0x4bc] sm:$0xff]
  %v239 = vld [vmem:[%s1 + $0x4c4] sm:$0xff]
  %v240 = vld [vmem:[%s1 + $0x4cc] sm:$0xf]
  %v241 = vld [vmem:[%s1 + $0x4d0] sm:$0xff]
  %v242 = vld [vmem:[%s1 + $0x4d8] sm:$0xff]
  %v243 = vld [vmem:[%s1 + $0x4e0] sm:$0xff]
  %v244 = vld [vmem:[%s1 + $0x4e8] sm:$0xf]
  %v245 = vld [vmem:[%s1 + $0x4ec] sm:$0xff]
  %v246 = vld [vmem:[%s1 + $0x4f4] sm:$0xff]
  %v247 = vld [vmem:[%s1 + $0x4fc] sm:$0xff]
  %v248 = vld [vmem:[%s1 + $0x504] sm:$0xf]
  %v249 = vld [vmem:[%s1 + $0x508] sm:$0xff]
  %v250 = vld [vmem:[%s1 + $0x510] sm:$0xff]
  %v251 = vld [vmem:[%s1 + $0x518] sm:$0xff]
  %v252 = vld [vmem:[%s1 + $0x520] sm:$0xf]
  %v253 = vld [vmem:[%s1 + $0x524] sm:$0xff]
  %v254 = vld [vmem:[%s1 + $0x52c] sm:$0xff]
  %v255 = vld [vmem:[%s1 + $0x534] sm:$0xff]
  %v256 = vld [vmem:[%s1 + $0x53c] sm:$0xf]
  %v257 = vld [vmem:[%s1 + $0x540] sm:$0xff]
  %v258 = vld [vmem:[%s1 + $0x548] sm:$0xff]
  %v259 = vld [vmem:[%s1 + $0x550] sm:$0xff]
  %v260 = vld [vmem:[%s1 + $0x558] sm:$0xf]
  %v261 = vld [vmem:[%s1 + $0x55c] sm:$0xff]
  %v262 = vld [vmem:[%s1 + $0x564] sm:$0xff]
  %v263 = vld [vmem:[%s1 + $0x56c] sm:$0xff]
  %v264 = vld [vmem:[%s1 + $0x574] sm:$0xf]
  %v265 = vld [vmem:[%s1 + $0x578] sm:$0xff]
  %v266 = vld [vmem:[%s1 + $0x580] sm:$0xff]
  %v267 = vld [vmem:[%s1 + $0x588] sm:$0xff]
  %v268 = vld [vmem:[%s1 + $0x590] sm:$0xf]
  %v269 = vld [vmem:[%s1 + $0x594] sm:$0xff]
  %v270 = vld [vmem:[%s1 + $0x59c] sm:$0xff]
  %v271 = vld [vmem:[%s1 + $0x5a4] sm:$0xff]
  %v272 = vld [vmem:[%s1 + $0x5ac] sm:$0xf]
  %v273 = vld [vmem:[%s1 + $0x5b0] sm:$0xff]
  %v274 = vld [vmem:[%s1 + $0x5b8] sm:$0xff]
  %v275 = vld [vmem:[%s1 + $0x5c0] sm:$0xff]
  %v276 = vld [vmem:[%s1 + $0x5c8] sm:$0xf]
  %v277 = vld [vmem:[%s1 + $0x5cc] sm:$0xff]
  %v278 = vld [vmem:[%s1 + $0x5d4] sm:$0xff]
  %v279 = vld [vmem:[%s1 + $0x5dc] sm:$0xff]
  %v280 = vld [vmem:[%s1 + $0x5e4] sm:$0xf]
  %v281 = vld [vmem:[%s1 + $0x5e8] sm:$0xff]
  %v282 = vld [vmem:[%s1 + $0x5f0] sm:$0xff]
  %v283 = vld [vmem:[%s1 + $0x5f8] sm:$0xff]
  %v284 = vld [vmem:[%s1 + $0x600] sm:$0xf]
  %v285 = vld [vmem:[%s1 + $0x604] sm:$0xff]
  %v286 = vld [vmem:[%s1 + $0x60c] sm:$0xff]
  %v287 = vld [vmem:[%s1 + $0x614] sm:$0xff]
  %v288 = vld [vmem:[%s1 + $0x61c] sm:$0xf]
  %v289 = vld [vmem:[%s1 + $0x620] sm:$0xff]
  %v290 = vld [vmem:[%s1 + $0x628] sm:$0xff]
  %v291 = vld [vmem:[%s1 + $0x630] sm:$0xff]
  %v292 = vld [vmem:[%s1 + $0x638] sm:$0xf]
  %v293 = vld [vmem:[%s1 + $0x63c] sm:$0xff]
  %v294 = vld [vmem:[%s1 + $0x644] sm:$0xff]
  %v295 = vld [vmem:[%s1 + $0x64c] sm:$0xff]
  %v296 = vld [vmem:[%s1 + $0x654] sm:$0xf]
  %v297 = vld [vmem:[%s1 + $0x658] sm:$0xff]
  %v298 = vld [vmem:[%s1 + $0x660] sm:$0xff]
  %v299 = vld [vmem:[%s1 + $0x668] sm:$0xff]
  %v300 = vld [vmem:[%s1 + $0x670] sm:$0xf]
  %v301 = vld [vmem:[%s1 + $0x674] sm:$0xff]
  %v302 = vld [vmem:[%s1 + $0x67c] sm:$0xff]
  %v303 = vld [vmem:[%s1 + $0x684] sm:$0xff]
  %v304 = vld [vmem:[%s1 + $0x68c] sm:$0xf]
  %v305 = vld [vmem:[%s1 + $0x690] sm:$0xff]
  %v306 = vld [vmem:[%s1 + $0x698] sm:$0xff]
  %v307 = vld [vmem:[%s1 + $0x6a0] sm:$0xff]
  %v308 = vld [vmem:[%s1 + $0x6a8] sm:$0xf]
  %v309 = vld [vmem:[%s1 + $0x6ac] sm:$0xff]
  %v310 = vld [vmem:[%s1 + $0x6b4] sm:$0xff]
  %v311 = vld [vmem:[%s1 + $0x6bc] sm:$0xff]
  %v312 = vld [vmem:[%s1 + $0x6c4] sm:$0xf]
  %v313 = vld [vmem:[%s1 + $0x6c8] sm:$0xff]
  %v314 = vld [vmem:[%s1 + $0x6d0] sm:$0xff]
  %v315 = vld [vmem:[%s1 + $0x6d8] sm:$0xff]
  %v316 = vld [vmem:[%s1 + $0x6e0] sm:$0xf]
  %v317 = vld [vmem:[%s1 + $0x6e4] sm:$0xff]
  %v318 = vld [vmem:[%s1 + $0x6ec] sm:$0xff]
  %v319 = vld [vmem:[%s1 + $0x6f4] sm:$0xff]
  %v320 = vld [vmem:[%s1 + $0x6fc] sm:$0xf]
  %v321 = vld [vmem:[%s1 + $0x700] sm:$0xff]
  %v322 = vld [vmem:[%s1 + $0x708] sm:$0xff]
  %v323 = vld [vmem:[%s1 + $0x710] sm:$0xff]
  %v324 = vld [vmem:[%s1 + $0x718] sm:$0xf]
  %v325 = vld [vmem:[%s1 + $0x71c] sm:$0xff]
  %v326 = vld [vmem:[%s1 + $0x724] sm:$0xff]
  %v327 = vld [vmem:[%s1 + $0x72c] sm:$0xff]
  %v328 = vld [vmem:[%s1 + $0x734] sm:$0xf]
  %v329 = vld [vmem:[%s1 + $0x738] sm:$0xff]
  %v330 = vld [vmem:[%s1 + $0x740] sm:$0xff]
  %v331 = vld [vmem:[%s1 + $0x748] sm:$0xff]
  %v332 = vld [vmem:[%s1 + $0x750] sm:$0xf]
  %v333 = vld [vmem:[%s1 + $0x754] sm:$0xff]
  %v334 = vld [vmem:[%s1 + $0x75c] sm:$0xff]
  %v335 = vld [vmem:[%s1 + $0x764] sm:$0xff]
  %v336 = vld [vmem:[%s1 + $0x76c] sm:$0xf]
  %v337 = vld [vmem:[%s1 + $0x770] sm:$0xff]
  %v338 = vld [vmem:[%s1 + $0x778] sm:$0xff]
  %v339 = vld [vmem:[%s1 + $0x780] sm:$0xff]
  %v340 = vld [vmem:[%s1 + $0x788] sm:$0xf]
  %v341 = vld [vmem:[%s1 + $0x78c] sm:$0xff]
  %v342 = vld [vmem:[%s1 + $0x794] sm:$0xff]
  %v343 = vld [vmem:[%s1 + $0x79c] sm:$0xff]
  %v344 = vld [vmem:[%s1 + $0x7a4] sm:$0xf]
  %v345 = vld [vmem:[%s1 + $0x7a8] sm:$0xff]
  %v346 = vld [vmem:[%s1 + $0x7b0] sm:$0xff]
  %v347 = vld [vmem:[%s1 + $0x7b8] sm:$0xff]
  %v348 = vld [vmem:[%s1 + $0x7c0] sm:$0xf]
  %v349 = vld [vmem:[%s1 + $0x7c4] sm:$0xff]
  %v350 = vld [vmem:[%s1 + $0x7cc] sm:$0xff]
  %v351 = vld [vmem:[%s1 + $0x7d4] sm:$0xff]
  %v352 = vld [vmem:[%s1 + $0x7dc] sm:$0xf]
  %v353 = vld [vmem:[%s1 + $0x7e0] sm:$0xff]
  %v354 = vld [vmem:[%s1 + $0x7e8] sm:$0xff]
  %v355 = vld [vmem:[%s1 + $0x7f0] sm:$0xff]
  %v356 = vld [vmem:[%s1 + $0x7f8] sm:$0xf]
  %v357 = vld [vmem:[%s1 + $0x7fc] sm:$0xff]
  %v358 = vld [vmem:[%s1 + $0x804] sm:$0xff]
  %v359 = vld [vmem:[%s1 + $0x80c] sm:$0xff]
  %v360 = vld [vmem:[%s1 + $0x814] sm:$0xf]
  %v361 = vld [vmem:[%s1 + $0x818] sm:$0xff]
  %v362 = vld [vmem:[%s1 + $0x820] sm:$0xff]
  %v363 = vld [vmem:[%s1 + $0x828] sm:$0xff]
  %v364 = vld [vmem:[%s1 + $0x830] sm:$0xf]
  %v365 = vld [vmem:[%s1 + $0x834] sm:$0xff]
  %v366 = vld [vmem:[%s1 + $0x83c] sm:$0xff]
  %v367 = vld [vmem:[%s1 + $0x844] sm:$0xff]
  %v368 = vld [vmem:[%s1 + $0x84c] sm:$0xf]
  %v369 = vld [vmem:[%s1 + $0x850] sm:$0xff]
  %v370 = vld [vmem:[%s1 + $0x858] sm:$0xff]
  %v371 = vld [vmem:[%s1 + $0x860] sm:$0xff]
  %v372 = vld [vmem:[%s1 + $0x868] sm:$0xf]
  %v373 = vld [vmem:[%s1 + $0x86c] sm:$0xff]
  %v374 = vld [vmem:[%s1 + $0x874] sm:$0xff]
  %v375 = vld [vmem:[%s1 + $0x87c] sm:$0xff]
  %v376 = vld [vmem:[%s1 + $0x884] sm:$0xf]
  %v377 = vld [vmem:[%s1 + $0x888] sm:$0xff]
  %v378 = vld [vmem:[%s1 + $0x890] sm:$0xff]
  %v379 = vld [vmem:[%s1 + $0x898] sm:$0xff]
  %v380 = vld [vmem:[%s1 + $0x8a0] sm:$0xf]
  %v381 = vld [vmem:[%s1 + $0x8a4] sm:$0xff]
  %v382 = vld [vmem:[%s1 + $0x8ac] sm:$0xff]
  %v383 = vld [vmem:[%s1 + $0x8b4] sm:$0xff]
  %v384 = vld [vmem:[%s1 + $0x8bc] sm:$0xf]
  %v385 = vld [vmem:[%s1 + $0x8c0] sm:$0xff]
  %v386 = vld [vmem:[%s1 + $0x8c8] sm:$0xff]
  %v387 = vld [vmem:[%s1 + $0x8d0] sm:$0xff]
  %v388 = vld [vmem:[%s1 + $0x8d8] sm:$0xf]
  %v389 = vld [vmem:[%s1 + $0x8dc] sm:$0xff]
  %v390 = vld [vmem:[%s1 + $0x8e4] sm:$0xff]
  %v391 = vld [vmem:[%s1 + $0x8ec] sm:$0xff]
  %v392 = vld [vmem:[%s1 + $0x8f4] sm:$0xf]
  %v393 = vld [vmem:[%s1 + $0x8f8] sm:$0xff]
  %v394 = vld [vmem:[%s1 + $0x900] sm:$0xff]
  %v395 = vld [vmem:[%s1 + $0x908] sm:$0xff]
  %v396 = vld [vmem:[%s1 + $0x910] sm:$0xf]
  %v397 = vld [vmem:[%s1 + $0x914] sm:$0xff]
  %v398 = vld [vmem:[%s1 + $0x91c] sm:$0xff]
  %v399 = vld [vmem:[%s1 + $0x924] sm:$0xff]
  %v400 = vld [vmem:[%s1 + $0x92c] sm:$0xf]
  %v401 = vld [vmem:[%s1 + $0x930] sm:$0xff]
  %v402 = vld [vmem:[%s1 + $0x938] sm:$0xff]
  %v403 = vld [vmem:[%s1 + $0x940] sm:$0xff]
  %v404 = vld [vmem:[%s1 + $0x948] sm:$0xf]
  %v405 = vld [vmem:[%s1 + $0x94c] sm:$0xff]
  %v406 = vld [vmem:[%s1 + $0x954] sm:$0xff]
  %v407 = vld [vmem:[%s1 + $0x95c] sm:$0xff]
  %v408 = vld [vmem:[%s1 + $0x964] sm:$0xf]
  %v409 = vld [vmem:[%s1 + $0x968] sm:$0xff]
  %v410 = vld [vmem:[%s1 + $0x970] sm:$0xff]
  %v411 = vld [vmem:[%s1 + $0x978] sm:$0xff]
  %v412 = vld [vmem:[%s1 + $0x980] sm:$0xf]
  %v413 = vld [vmem:[%s1 + $0x984] sm:$0xff]
  %v414 = vld [vmem:[%s1 + $0x98c] sm:$0xff]
  %v415 = vld [vmem:[%s1 + $0x994] sm:$0xff]
  %v416 = vld [vmem:[%s1 + $0x99c] sm:$0xf]
  %v417 = vld [vmem:[%s1 + $0x9a0] sm:$0xff]
  %v418 = vld [vmem:[%s1 + $0x9a8] sm:$0xff]
  %v419 = vld [vmem:[%s1 + $0x9b0] sm:$0xff]
  %v420 = vld [vmem:[%s1 + $0x9b8] sm:$0xf]
  %v421 = vld [vmem:[%s1 + $0x9bc] sm:$0xff]
  %v422 = vld [vmem:[%s1 + $0x9c4] sm:$0xff]
  %v423 = vld [vmem:[%s1 + $0x9cc] sm:$0xff]
  %v424 = vld [vmem:[%s1 + $0x9d4] sm:$0xf]
  %v425 = vld [vmem:[%s1 + $0x9d8] sm:$0xff]
  %v426 = vld [vmem:[%s1 + $0x9e0] sm:$0xff]
  %v427 = vld [vmem:[%s1 + $0x9e8] sm:$0xff]
  %v428 = vld [vmem:[%s1 + $0x9f0] sm:$0xf]
  %v429 = vld [vmem:[%s1 + $0x9f4] sm:$0xff]
  %v430 = vld [vmem:[%s1 + $0x9fc] sm:$0xff]
  %v431 = vld [vmem:[%s1 + $0xa04] sm:$0xff]
  %v432 = vld [vmem:[%s1 + $0xa0c] sm:$0xf]
  %v433 = vld [vmem:[%s1 + $0xa10] sm:$0xff]
  %v434 = vld [vmem:[%s1 + $0xa18] sm:$0xff]
  %v435 = vld [vmem:[%s1 + $0xa20] sm:$0xff]
  %v436 = vld [vmem:[%s1 + $0xa28] sm:$0xf]
  %v437 = vld [vmem:[%s1 + $0xa2c] sm:$0xff]
  %v438 = vld [vmem:[%s1 + $0xa34] sm:$0xff]
  %v439 = vld [vmem:[%s1 + $0xa3c] sm:$0xff]
  %v440 = vld [vmem:[%s1 + $0xa44] sm:$0xf]
  %v441 = vld [vmem:[%s1 + $0xa48] sm:$0xff]
  %v442 = vld [vmem:[%s1 + $0xa50] sm:$0xff]
  %v443 = vld [vmem:[%s1 + $0xa58] sm:$0xff]
  %v444 = vld [vmem:[%s1 + $0xa60] sm:$0xf]
  %v445 = vld [vmem:[%s1 + $0xa64] sm:$0xff]
  %v446 = vld [vmem:[%s1 + $0xa6c] sm:$0xff]
  %v447 = vld [vmem:[%s1 + $0xa74] sm:$0xff]
  %v448 = vld [vmem:[%s1 + $0xa7c] sm:$0xf]
  %v449 = vld [vmem:[%s1 + $0xa80] sm:$0xff]
  %v450 = vld [vmem:[%s1 + $0xa88] sm:$0xff]
  %v451 = vld [vmem:[%s1 + $0xa90] sm:$0xff]
  %v452 = vld [vmem:[%s1 + $0xa98] sm:$0xf]
  %v453 = vld [vmem:[%s1 + $0xa9c] sm:$0xff]
  %v454 = vld [vmem:[%s1 + $0xaa4] sm:$0xff]
  %v455 = vld [vmem:[%s1 + $0xaac] sm:$0xff]
  %v456 = vld [vmem:[%s1 + $0xab4] sm:$0xf]
  %v457 = vld [vmem:[%s1 + $0xab8] sm:$0xff]
  %v458 = vld [vmem:[%s1 + $0xac0] sm:$0xff]
  %v459 = vld [vmem:[%s1 + $0xac8] sm:$0xff]
  %v460 = vld [vmem:[%s1 + $0xad0] sm:$0xf]
  %v461 = vld [vmem:[%s1 + $0xad4] sm:$0xff]
  %v462 = vld [vmem:[%s1 + $0xadc] sm:$0xff]
  %v463 = vld [vmem:[%s1 + $0xae4] sm:$0xff]
  %v464 = vld [vmem:[%s1 + $0xaec] sm:$0xf]
  %v465 = vld [vmem:[%s1 + $0xaf0] sm:$0xff]
  %v466 = vld [vmem:[%s1 + $0xaf8] sm:$0xff]
  %v467 = vld [vmem:[%s1 + $0xb00] sm:$0xff]
  %v468 = vld [vmem:[%s1 + $0xb08] sm:$0xf]
  %v469 = vld [vmem:[%s1 + $0xb0c] sm:$0xff]
  %v470 = vld [vmem:[%s1 + $0xb14] sm:$0xff]
  %v471 = vld [vmem:[%s1 + $0xb1c] sm:$0xff]
  %v472 = vld [vmem:[%s1 + $0xb24] sm:$0xf]
  %v473 = vld [vmem:[%s1 + $0xb28] sm:$0xff]
  %v474 = vld [vmem:[%s1 + $0xb30] sm:$0xff]
  %v475 = vld [vmem:[%s1 + $0xb38] sm:$0xff]
  %v476 = vld [vmem:[%s1 + $0xb40] sm:$0xf]
  %v477 = vld [vmem:[%s1 + $0xb44] sm:$0xff]
  %v478 = vld [vmem:[%s1 + $0xb4c] sm:$0xff]
  %v479 = vld [vmem:[%s1 + $0xb54] sm:$0xff]
  %v480 = vld [vmem:[%s1 + $0xb5c] sm:$0xf]
  %v481 = vld [vmem:[%s1 + $0xb60] sm:$0xff]
  %v482 = vld [vmem:[%s1 + $0xb68] sm:$0xff]
  %v483 = vld [vmem:[%s1 + $0xb70] sm:$0xff]
  %v484 = vld [vmem:[%s1 + $0xb78] sm:$0xf]
  %v485 = vld [vmem:[%s1 + $0xb7c] sm:$0xff]
  %v486 = vld [vmem:[%s1 + $0xb84] sm:$0xff]
  %v487 = vld [vmem:[%s1 + $0xb8c] sm:$0xff]
  %v488 = vld [vmem:[%s1 + $0xb94] sm:$0xf]
  %v489 = vld [vmem:[%s1 + $0xb98] sm:$0xff]
  %v490 = vld [vmem:[%s1 + $0xba0] sm:$0xff]
  %v491 = vld [vmem:[%s1 + $0xba8] sm:$0xff]
  %v492 = vld [vmem:[%s1 + $0xbb0] sm:$0xf]
  %v493 = vld [vmem:[%s1 + $0xbb4] sm:$0xff]
  %v494 = vld [vmem:[%s1 + $0xbbc] sm:$0xff]
  %v495 = vld [vmem:[%s1 + $0xbc4] sm:$0xff]
  %v496 = vld [vmem:[%s1 + $0xbcc] sm:$0xf]
  %v497 = vld [vmem:[%s1 + $0xbd0] sm:$0xff]
  %v498 = vld [vmem:[%s1 + $0xbd8] sm:$0xff]
  %v499 = vld [vmem:[%s1 + $0xbe0] sm:$0xff]
  %v500 = vld [vmem:[%s1 + $0xbe8] sm:$0xf]
  %v501 = vld [vmem:[%s1 + $0xbec] sm:$0xff]
  %v502 = vld [vmem:[%s1 + $0xbf4] sm:$0xff]
  %v503 = vld [vmem:[%s1 + $0xbfc] sm:$0xff]
  %v504 = vld [vmem:[%s1 + $0xc04] sm:$0xf]
  %v505 = vld [vmem:[%s1 + $0xc08] sm:$0xff]
  %v506 = vld [vmem:[%s1 + $0xc10] sm:$0xff]
  %v507 = vld [vmem:[%s1 + $0xc18] sm:$0xff]
  %v508 = vld [vmem:[%s1 + $0xc20] sm:$0xf]
  %v509 = vld [vmem:[%s1 + $0xc24] sm:$0xff]
  %v510 = vld [vmem:[%s1 + $0xc2c] sm:$0xff]
  %v511 = vld [vmem:[%s1 + $0xc34] sm:$0xff]
  %v512 = vld [vmem:[%s1 + $0xc3c] sm:$0xf]
  %v961 = vunpack.c.l.b16 %v65
  %v962 = vunpack.c.h.b16 %v65
  %v963 = vunpack.c.l.b16 %v66
  %v964 = vunpack.c.h.b16 %v66
  %v965 = vunpack.c.l.b16 %v67
  %v966 = vunpack.c.h.b16 %v67
  %v967 = vunpack.c.l.b16 %v68
  %v968 = vunpack.c.l.b16 %v69
  %v969 = vunpack.c.h.b16 %v69
  %v970 = vunpack.c.l.b16 %v70
  %v971 = vunpack.c.h.b16 %v70
  %v972 = vunpack.c.l.b16 %v71
  %v973 = vunpack.c.h.b16 %v71
  %v974 = vunpack.c.l.b16 %v72
  %v975 = vunpack.c.l.b16 %v73
  %v976 = vunpack.c.h.b16 %v73
  %v977 = vunpack.c.l.b16 %v74
  %v978 = vunpack.c.h.b16 %v74
  %v979 = vunpack.c.l.b16 %v75
  %v980 = vunpack.c.h.b16 %v75
  %v981 = vunpack.c.l.b16 %v76
  %v982 = vunpack.c.l.b16 %v77
  %v983 = vunpack.c.h.b16 %v77
  %v984 = vunpack.c.l.b16 %v78
  %v985 = vunpack.c.h.b16 %v78
  %v986 = vunpack.c.l.b16 %v79
  %v987 = vunpack.c.h.b16 %v79
  %v988 = vunpack.c.l.b16 %v80
  %v989 = vunpack.c.l.b16 %v81
  %v990 = vunpack.c.h.b16 %v81
  %v991 = vunpack.c.l.b16 %v82
  %v992 = vunpack.c.h.b16 %v82
  %v993 = vunpack.c.l.b16 %v83
  %v994 = vunpack.c.h.b16 %v83
  %v995 = vunpack.c.l.b16 %v84
  %v996 = vunpack.c.l.b16 %v85
  %v997 = vunpack.c.h.b16 %v85
  %v998 = vunpack.c.l.b16 %v86
  %v999 = vunpack.c.h.b16 %v86
  %v1000 = vunpack.c.l.b16 %v87
  %v1001 = vunpack.c.h.b16 %v87
  %v1002 = vunpack.c.l.b16 %v88
  %v1003 = vunpack.c.l.b16 %v89
  %v1004 = vunpack.c.h.b16 %v89
  %v1005 = vunpack.c.l.b16 %v90
  %v1006 = vunpack.c.h.b16 %v90
  %v1007 = vunpack.c.l.b16 %v91
  %v1008 = vunpack.c.h.b16 %v91
  %v1009 = vunpack.c.l.b16 %v92
  %v1010 = vunpack.c.l.b16 %v93
  %v1011 = vunpack.c.h.b16 %v93
  %v1012 = vunpack.c.l.b16 %v94
  %v1013 = vunpack.c.h.b16 %v94
  %v1014 = vunpack.c.l.b16 %v95
  %v1015 = vunpack.c.h.b16 %v95
  %v1016 = vunpack.c.l.b16 %v96
  %v1017 = vunpack.c.l.b16 %v97
  %v1018 = vunpack.c.h.b16 %v97
  %v1019 = vunpack.c.l.b16 %v98
  %v1020 = vunpack.c.h.b16 %v98
  %v1021 = vunpack.c.l.b16 %v99
  %v1022 = vunpack.c.h.b16 %v99
  %v1023 = vunpack.c.l.b16 %v100
  %v1024 = vunpack.c.l.b16 %v101
  %v1025 = vunpack.c.h.b16 %v101
  %v1026 = vunpack.c.l.b16 %v102
  %v1027 = vunpack.c.h.b16 %v102
  %v1028 = vunpack.c.l.b16 %v103
  %v1029 = vunpack.c.h.b16 %v103
  %v1030 = vunpack.c.l.b16 %v104
  %v1031 = vunpack.c.l.b16 %v105
  %v1032 = vunpack.c.h.b16 %v105
  %v1033 = vunpack.c.l.b16 %v106
  %v1034 = vunpack.c.h.b16 %v106
  %v1035 = vunpack.c.l.b16 %v107
  %v1036 = vunpack.c.h.b16 %v107
  %v1037 = vunpack.c.l.b16 %v108
  %v1038 = vunpack.c.l.b16 %v109
  %v1039 = vunpack.c.h.b16 %v109
  %v1040 = vunpack.c.l.b16 %v110
  %v1041 = vunpack.c.h.b16 %v110
  %v1042 = vunpack.c.l.b16 %v111
  %v1043 = vunpack.c.h.b16 %v111
  %v1044 = vunpack.c.l.b16 %v112
  %v1045 = vunpack.c.l.b16 %v113
  %v1046 = vunpack.c.h.b16 %v113
  %v1047 = vunpack.c.l.b16 %v114
  %v1048 = vunpack.c.h.b16 %v114
  %v1049 = vunpack.c.l.b16 %v115
  %v1050 = vunpack.c.h.b16 %v115
  %v1051 = vunpack.c.l.b16 %v116
  %v1052 = vunpack.c.l.b16 %v117
  %v1053 = vunpack.c.h.b16 %v117
  %v1054 = vunpack.c.l.b16 %v118
  %v1055 = vunpack.c.h.b16 %v118
  %v1056 = vunpack.c.l.b16 %v119
  %v1057 = vunpack.c.h.b16 %v119
  %v1058 = vunpack.c.l.b16 %v120
  %v1059 = vunpack.c.l.b16 %v121
  %v1060 = vunpack.c.h.b16 %v121
  %v1061 = vunpack.c.l.b16 %v122
  %v1062 = vunpack.c.h.b16 %v122
  %v1063 = vunpack.c.l.b16 %v123
  %v1064 = vunpack.c.h.b16 %v123
  %v1065 = vunpack.c.l.b16 %v124
  %v1066 = vunpack.c.l.b16 %v125
  %v1067 = vunpack.c.h.b16 %v125
  %v1068 = vunpack.c.l.b16 %v126
  %v1069 = vunpack.c.h.b16 %v126
  %v1070 = vunpack.c.l.b16 %v127
  %v1071 = vunpack.c.h.b16 %v127
  %v1072 = vunpack.c.l.b16 %v128
  %v1073 = vunpack.c.l.b16 %v129
  %v1074 = vunpack.c.h.b16 %v129
  %v1075 = vunpack.c.l.b16 %v130
  %v1076 = vunpack.c.h.b16 %v130
  %v1077 = vunpack.c.l.b16 %v131
  %v1078 = vunpack.c.h.b16 %v131
  %v1079 = vunpack.c.l.b16 %v132
  %v1080 = vunpack.c.l.b16 %v133
  %v1081 = vunpack.c.h.b16 %v133
  %v1082 = vunpack.c.l.b16 %v134
  %v1083 = vunpack.c.h.b16 %v134
  %v1084 = vunpack.c.l.b16 %v135
  %v1085 = vunpack.c.h.b16 %v135
  %v1086 = vunpack.c.l.b16 %v136
  %v1087 = vunpack.c.l.b16 %v137
  %v1088 = vunpack.c.h.b16 %v137
  %v1089 = vunpack.c.l.b16 %v138
  %v1090 = vunpack.c.h.b16 %v138
  %v1091 = vunpack.c.l.b16 %v139
  %v1092 = vunpack.c.h.b16 %v139
  %v1093 = vunpack.c.l.b16 %v140
  %v1094 = vunpack.c.l.b16 %v141
  %v1095 = vunpack.c.h.b16 %v141
  %v1096 = vunpack.c.l.b16 %v142
  %v1097 = vunpack.c.h.b16 %v142
  %v1098 = vunpack.c.l.b16 %v143
  %v1099 = vunpack.c.h.b16 %v143
  %v1100 = vunpack.c.l.b16 %v144
  %v1101 = vunpack.c.l.b16 %v145
  %v1102 = vunpack.c.h.b16 %v145
  %v1103 = vunpack.c.l.b16 %v146
  %v1104 = vunpack.c.h.b16 %v146
  %v1105 = vunpack.c.l.b16 %v147
  %v1106 = vunpack.c.h.b16 %v147
  %v1107 = vunpack.c.l.b16 %v148
  %v1108 = vunpack.c.l.b16 %v149
  %v1109 = vunpack.c.h.b16 %v149
  %v1110 = vunpack.c.l.b16 %v150
  %v1111 = vunpack.c.h.b16 %v150
  %v1112 = vunpack.c.l.b16 %v151
  %v1113 = vunpack.c.h.b16 %v151
  %v1114 = vunpack.c.l.b16 %v152
  %v1115 = vunpack.c.l.b16 %v153
  %v1116 = vunpack.c.h.b16 %v153
  %v1117 = vunpack.c.l.b16 %v154
  %v1118 = vunpack.c.h.b16 %v154
  %v1119 = vunpack.c.l.b16 %v155
  %v1120 = vunpack.c.h.b16 %v155
  %v1121 = vunpack.c.l.b16 %v156
  %v1122 = vunpack.c.l.b16 %v157
  %v1123 = vunpack.c.h.b16 %v157
  %v1124 = vunpack.c.l.b16 %v158
  %v1125 = vunpack.c.h.b16 %v158
  %v1126 = vunpack.c.l.b16 %v159
  %v1127 = vunpack.c.h.b16 %v159
  %v1128 = vunpack.c.l.b16 %v160
  %v1129 = vunpack.c.l.b16 %v161
  %v1130 = vunpack.c.h.b16 %v161
  %v1131 = vunpack.c.l.b16 %v162
  %v1132 = vunpack.c.h.b16 %v162
  %v1133 = vunpack.c.l.b16 %v163
  %v1134 = vunpack.c.h.b16 %v163
  %v1135 = vunpack.c.l.b16 %v164
  %v1136 = vunpack.c.l.b16 %v165
  %v1137 = vunpack.c.h.b16 %v165
  %v1138 = vunpack.c.l.b16 %v166
  %v1139 = vunpack.c.h.b16 %v166
  %v1140 = vunpack.c.l.b16 %v167
  %v1141 = vunpack.c.h.b16 %v167
  %v1142 = vunpack.c.l.b16 %v168
  %v1143 = vunpack.c.l.b16 %v169
  %v1144 = vunpack.c.h.b16 %v169
  %v1145 = vunpack.c.l.b16 %v170
  %v1146 = vunpack.c.h.b16 %v170
  %v1147 = vunpack.c.l.b16 %v171
  %v1148 = vunpack.c.h.b16 %v171
  %v1149 = vunpack.c.l.b16 %v172
  %v1150 = vunpack.c.l.b16 %v173
  %v1151 = vunpack.c.h.b16 %v173
  %v1152 = vunpack.c.l.b16 %v174
  %v1153 = vunpack.c.h.b16 %v174
  %v1154 = vunpack.c.l.b16 %v175
  %v1155 = vunpack.c.h.b16 %v175
  %v1156 = vunpack.c.l.b16 %v176
  %v1157 = vunpack.c.l.b16 %v177
  %v1158 = vunpack.c.h.b16 %v177
  %v1159 = vunpack.c.l.b16 %v178
  %v1160 = vunpack.c.h.b16 %v178
  %v1161 = vunpack.c.l.b16 %v179
  %v1162 = vunpack.c.h.b16 %v179
  %v1163 = vunpack.c.l.b16 %v180
  %v1164 = vunpack.c.l.b16 %v181
  %v1165 = vunpack.c.h.b16 %v181
  %v1166 = vunpack.c.l.b16 %v182
  %v1167 = vunpack.c.h.b16 %v182
  %v1168 = vunpack.c.l.b16 %v183
  %v1169 = vunpack.c.h.b16 %v183
  %v1170 = vunpack.c.l.b16 %v184
  %v1171 = vunpack.c.l.b16 %v185
  %v1172 = vunpack.c.h.b16 %v185
  %v1173 = vunpack.c.l.b16 %v186
  %v1174 = vunpack.c.h.b16 %v186
  %v1175 = vunpack.c.l.b16 %v187
  %v1176 = vunpack.c.h.b16 %v187
  %v1177 = vunpack.c.l.b16 %v188
  %v1178 = vunpack.c.l.b16 %v189
  %v1179 = vunpack.c.h.b16 %v189
  %v1180 = vunpack.c.l.b16 %v190
  %v1181 = vunpack.c.h.b16 %v190
  %v1182 = vunpack.c.l.b16 %v191
  %v1183 = vunpack.c.h.b16 %v191
  %v1184 = vunpack.c.l.b16 %v192
  %v1185 = vunpack.c.l.b16 %v193
  %v1186 = vunpack.c.h.b16 %v193
  %v1187 = vunpack.c.l.b16 %v194
  %v1188 = vunpack.c.h.b16 %v194
  %v1189 = vunpack.c.l.b16 %v195
  %v1190 = vunpack.c.h.b16 %v195
  %v1191 = vunpack.c.l.b16 %v196
  %v1192 = vunpack.c.l.b16 %v197
  %v1193 = vunpack.c.h.b16 %v197
  %v1194 = vunpack.c.l.b16 %v198
  %v1195 = vunpack.c.h.b16 %v198
  %v1196 = vunpack.c.l.b16 %v199
  %v1197 = vunpack.c.h.b16 %v199
  %v1198 = vunpack.c.l.b16 %v200
  %v1199 = vunpack.c.l.b16 %v201
  %v1200 = vunpack.c.h.b16 %v201
  %v1201 = vunpack.c.l.b16 %v202
  %v1202 = vunpack.c.h.b16 %v202
  %v1203 = vunpack.c.l.b16 %v203
  %v1204 = vunpack.c.h.b16 %v203
  %v1205 = vunpack.c.l.b16 %v204
  %v1206 = vunpack.c.l.b16 %v205
  %v1207 = vunpack.c.h.b16 %v205
  %v1208 = vunpack.c.l.b16 %v206
  %v1209 = vunpack.c.h.b16 %v206
  %v1210 = vunpack.c.l.b16 %v207
  %v1211 = vunpack.c.h.b16 %v207
  %v1212 = vunpack.c.l.b16 %v208
  %v1213 = vunpack.c.l.b16 %v209
  %v1214 = vunpack.c.h.b16 %v209
  %v1215 = vunpack.c.l.b16 %v210
  %v1216 = vunpack.c.h.b16 %v210
  %v1217 = vunpack.c.l.b16 %v211
  %v1218 = vunpack.c.h.b16 %v211
  %v1219 = vunpack.c.l.b16 %v212
  %v1220 = vunpack.c.l.b16 %v213
  %v1221 = vunpack.c.h.b16 %v213
  %v1222 = vunpack.c.l.b16 %v214
  %v1223 = vunpack.c.h.b16 %v214
  %v1224 = vunpack.c.l.b16 %v215
  %v1225 = vunpack.c.h.b16 %v215
  %v1226 = vunpack.c.l.b16 %v216
  %v1227 = vunpack.c.l.b16 %v217
  %v1228 = vunpack.c.h.b16 %v217
  %v1229 = vunpack.c.l.b16 %v218
  %v1230 = vunpack.c.h.b16 %v218
  %v1231 = vunpack.c.l.b16 %v219
  %v1232 = vunpack.c.h.b16 %v219
  %v1233 = vunpack.c.l.b16 %v220
  %v1234 = vunpack.c.l.b16 %v221
  %v1235 = vunpack.c.h.b16 %v221
  %v1236 = vunpack.c.l.b16 %v222
  %v1237 = vunpack.c.h.b16 %v222
  %v1238 = vunpack.c.l.b16 %v223
  %v1239 = vunpack.c.h.b16 %v223
  %v1240 = vunpack.c.l.b16 %v224
  %v1241 = vunpack.c.l.b16 %v225
  %v1242 = vunpack.c.h.b16 %v225
  %v1243 = vunpack.c.l.b16 %v226
  %v1244 = vunpack.c.h.b16 %v226
  %v1245 = vunpack.c.l.b16 %v227
  %v1246 = vunpack.c.h.b16 %v227
  %v1247 = vunpack.c.l.b16 %v228
  %v1248 = vunpack.c.l.b16 %v229
  %v1249 = vunpack.c.h.b16 %v229
  %v1250 = vunpack.c.l.b16 %v230
  %v1251 = vunpack.c.h.b16 %v230
  %v1252 = vunpack.c.l.b16 %v231
  %v1253 = vunpack.c.h.b16 %v231
  %v1254 = vunpack.c.l.b16 %v232
  %v1255 = vunpack.c.l.b16 %v233
  %v1256 = vunpack.c.h.b16 %v233
  %v1257 = vunpack.c.l.b16 %v234
  %v1258 = vunpack.c.h.b16 %v234
  %v1259 = vunpack.c.l.b16 %v235
  %v1260 = vunpack.c.h.b16 %v235
  %v1261 = vunpack.c.l.b16 %v236
  %v1262 = vunpack.c.l.b16 %v237
  %v1263 = vunpack.c.h.b16 %v237
  %v1264 = vunpack.c.l.b16 %v238
  %v1265 = vunpack.c.h.b16 %v238
  %v1266 = vunpack.c.l.b16 %v239
  %v1267 = vunpack.c.h.b16 %v239
  %v1268 = vunpack.c.l.b16 %v240
  %v1269 = vunpack.c.l.b16 %v241
  %v1270 = vunpack.c.h.b16 %v241
  %v1271 = vunpack.c.l.b16 %v242
  %v1272 = vunpack.c.h.b16 %v242
  %v1273 = vunpack.c.l.b16 %v243
  %v1274 = vunpack.c.h.b16 %v243
  %v1275 = vunpack.c.l.b16 %v244
  %v1276 = vunpack.c.l.b16 %v245
  %v1277 = vunpack.c.h.b16 %v245
  %v1278 = vunpack.c.l.b16 %v246
  %v1279 = vunpack.c.h.b16 %v246
  %v1280 = vunpack.c.l.b16 %v247
  %v1281 = vunpack.c.h.b16 %v247
  %v1282 = vunpack.c.l.b16 %v248
  %v1283 = vunpack.c.l.b16 %v249
  %v1284 = vunpack.c.h.b16 %v249
  %v1285 = vunpack.c.l.b16 %v250
  %v1286 = vunpack.c.h.b16 %v250
  %v1287 = vunpack.c.l.b16 %v251
  %v1288 = vunpack.c.h.b16 %v251
  %v1289 = vunpack.c.l.b16 %v252
  %v1290 = vunpack.c.l.b16 %v253
  %v1291 = vunpack.c.h.b16 %v253
  %v1292 = vunpack.c.l.b16 %v254
  %v1293 = vunpack.c.h.b16 %v254
  %v1294 = vunpack.c.l.b16 %v255
  %v1295 = vunpack.c.h.b16 %v255
  %v1296 = vunpack.c.l.b16 %v256
  %v1297 = vunpack.c.l.b16 %v257
  %v1298 = vunpack.c.h.b16 %v257
  %v1299 = vunpack.c.l.b16 %v258
  %v1300 = vunpack.c.h.b16 %v258
  %v1301 = vunpack.c.l.b16 %v259
  %v1302 = vunpack.c.h.b16 %v259
  %v1303 = vunpack.c.l.b16 %v260
  %v1304 = vunpack.c.l.b16 %v261
  %v1305 = vunpack.c.h.b16 %v261
  %v1306 = vunpack.c.l.b16 %v262
  %v1307 = vunpack.c.h.b16 %v262
  %v1308 = vunpack.c.l.b16 %v263
  %v1309 = vunpack.c.h.b16 %v263
  %v1310 = vunpack.c.l.b16 %v264
  %v1311 = vunpack.c.l.b16 %v265
  %v1312 = vunpack.c.h.b16 %v265
  %v1313 = vunpack.c.l.b16 %v266
  %v1314 = vunpack.c.h.b16 %v266
  %v1315 = vunpack.c.l.b16 %v267
  %v1316 = vunpack.c.h.b16 %v267
  %v1317 = vunpack.c.l.b16 %v268
  %v1318 = vunpack.c.l.b16 %v269
  %v1319 = vunpack.c.h.b16 %v269
  %v1320 = vunpack.c.l.b16 %v270
  %v1321 = vunpack.c.h.b16 %v270
  %v1322 = vunpack.c.l.b16 %v271
  %v1323 = vunpack.c.h.b16 %v271
  %v1324 = vunpack.c.l.b16 %v272
  %v1325 = vunpack.c.l.b16 %v273
  %v1326 = vunpack.c.h.b16 %v273
  %v1327 = vunpack.c.l.b16 %v274
  %v1328 = vunpack.c.h.b16 %v274
  %v1329 = vunpack.c.l.b16 %v275
  %v1330 = vunpack.c.h.b16 %v275
  %v1331 = vunpack.c.l.b16 %v276
  %v1332 = vunpack.c.l.b16 %v277
  %v1333 = vunpack.c.h.b16 %v277
  %v1334 = vunpack.c.l.b16 %v278
  %v1335 = vunpack.c.h.b16 %v278
  %v1336 = vunpack.c.l.b16 %v279
  %v1337 = vunpack.c.h.b16 %v279
  %v1338 = vunpack.c.l.b16 %v280
  %v1339 = vunpack.c.l.b16 %v281
  %v1340 = vunpack.c.h.b16 %v281
  %v1341 = vunpack.c.l.b16 %v282
  %v1342 = vunpack.c.h.b16 %v282
  %v1343 = vunpack.c.l.b16 %v283
  %v1344 = vunpack.c.h.b16 %v283
  %v1345 = vunpack.c.l.b16 %v284
  %v1346 = vunpack.c.l.b16 %v285
  %v1347 = vunpack.c.h.b16 %v285
  %v1348 = vunpack.c.l.b16 %v286
  %v1349 = vunpack.c.h.b16 %v286
  %v1350 = vunpack.c.l.b16 %v287
  %v1351 = vunpack.c.h.b16 %v287
  %v1352 = vunpack.c.l.b16 %v288
  %v1353 = vunpack.c.l.b16 %v289
  %v1354 = vunpack.c.h.b16 %v289
  %v1355 = vunpack.c.l.b16 %v290
  %v1356 = vunpack.c.h.b16 %v290
  %v1357 = vunpack.c.l.b16 %v291
  %v1358 = vunpack.c.h.b16 %v291
  %v1359 = vunpack.c.l.b16 %v292
  %v1360 = vunpack.c.l.b16 %v293
  %v1361 = vunpack.c.h.b16 %v293
  %v1362 = vunpack.c.l.b16 %v294
  %v1363 = vunpack.c.h.b16 %v294
  %v1364 = vunpack.c.l.b16 %v295
  %v1365 = vunpack.c.h.b16 %v295
  %v1366 = vunpack.c.l.b16 %v296
  %v1367 = vunpack.c.l.b16 %v297
  %v1368 = vunpack.c.h.b16 %v297
  %v1369 = vunpack.c.l.b16 %v298
  %v1370 = vunpack.c.h.b16 %v298
  %v1371 = vunpack.c.l.b16 %v299
  %v1372 = vunpack.c.h.b16 %v299
  %v1373 = vunpack.c.l.b16 %v300
  %v1374 = vunpack.c.l.b16 %v301
  %v1375 = vunpack.c.h.b16 %v301
  %v1376 = vunpack.c.l.b16 %v302
  %v1377 = vunpack.c.h.b16 %v302
  %v1378 = vunpack.c.l.b16 %v303
  %v1379 = vunpack.c.h.b16 %v303
  %v1380 = vunpack.c.l.b16 %v304
  %v1381 = vunpack.c.l.b16 %v305
  %v1382 = vunpack.c.h.b16 %v305
  %v1383 = vunpack.c.l.b16 %v306
  %v1384 = vunpack.c.h.b16 %v306
  %v1385 = vunpack.c.l.b16 %v307
  %v1386 = vunpack.c.h.b16 %v307
  %v1387 = vunpack.c.l.b16 %v308
  %v1388 = vunpack.c.l.b16 %v309
  %v1389 = vunpack.c.h.b16 %v309
  %v1390 = vunpack.c.l.b16 %v310
  %v1391 = vunpack.c.h.b16 %v310
  %v1392 = vunpack.c.l.b16 %v311
  %v1393 = vunpack.c.h.b16 %v311
  %v1394 = vunpack.c.l.b16 %v312
  %v1395 = vunpack.c.l.b16 %v313
  %v1396 = vunpack.c.h.b16 %v313
  %v1397 = vunpack.c.l.b16 %v314
  %v1398 = vunpack.c.h.b16 %v314
  %v1399 = vunpack.c.l.b16 %v315
  %v1400 = vunpack.c.h.b16 %v315
  %v1401 = vunpack.c.l.b16 %v316
  %v1402 = vunpack.c.l.b16 %v317
  %v1403 = vunpack.c.h.b16 %v317
  %v1404 = vunpack.c.l.b16 %v318
  %v1405 = vunpack.c.h.b16 %v318
  %v1406 = vunpack.c.l.b16 %v319
  %v1407 = vunpack.c.h.b16 %v319
  %v1408 = vunpack.c.l.b16 %v320
  %v1409 = vunpack.c.l.b16 %v321
  %v1410 = vunpack.c.h.b16 %v321
  %v1411 = vunpack.c.l.b16 %v322
  %v1412 = vunpack.c.h.b16 %v322
  %v1413 = vunpack.c.l.b16 %v323
  %v1414 = vunpack.c.h.b16 %v323
  %v1415 = vunpack.c.l.b16 %v324
  %v1416 = vunpack.c.l.b16 %v325
  %v1417 = vunpack.c.h.b16 %v325
  %v1418 = vunpack.c.l.b16 %v326
  %v1419 = vunpack.c.h.b16 %v326
  %v1420 = vunpack.c.l.b16 %v327
  %v1421 = vunpack.c.h.b16 %v327
  %v1422 = vunpack.c.l.b16 %v328
  %v1423 = vunpack.c.l.b16 %v329
  %v1424 = vunpack.c.h.b16 %v329
  %v1425 = vunpack.c.l.b16 %v330
  %v1426 = vunpack.c.h.b16 %v330
  %v1427 = vunpack.c.l.b16 %v331
  %v1428 = vunpack.c.h.b16 %v331
  %v1429 = vunpack.c.l.b16 %v332
  %v1430 = vunpack.c.l.b16 %v333
  %v1431 = vunpack.c.h.b16 %v333
  %v1432 = vunpack.c.l.b16 %v334
  %v1433 = vunpack.c.h.b16 %v334
  %v1434 = vunpack.c.l.b16 %v335
  %v1435 = vunpack.c.h.b16 %v335
  %v1436 = vunpack.c.l.b16 %v336
  %v1437 = vunpack.c.l.b16 %v337
  %v1438 = vunpack.c.h.b16 %v337
  %v1439 = vunpack.c.l.b16 %v338
  %v1440 = vunpack.c.h.b16 %v338
  %v1441 = vunpack.c.l.b16 %v339
  %v1442 = vunpack.c.h.b16 %v339
  %v1443 = vunpack.c.l.b16 %v340
  %v1444 = vunpack.c.l.b16 %v341
  %v1445 = vunpack.c.h.b16 %v341
  %v1446 = vunpack.c.l.b16 %v342
  %v1447 = vunpack.c.h.b16 %v342
  %v1448 = vunpack.c.l.b16 %v343
  %v1449 = vunpack.c.h.b16 %v343
  %v1450 = vunpack.c.l.b16 %v344
  %v1451 = vunpack.c.l.b16 %v345
  %v1452 = vunpack.c.h.b16 %v345
  %v1453 = vunpack.c.l.b16 %v346
  %v1454 = vunpack.c.h.b16 %v346
  %v1455 = vunpack.c.l.b16 %v347
  %v1456 = vunpack.c.h.b16 %v347
  %v1457 = vunpack.c.l.b16 %v348
  %v1458 = vunpack.c.l.b16 %v349
  %v1459 = vunpack.c.h.b16 %v349
  %v1460 = vunpack.c.l.b16 %v350
  %v1461 = vunpack.c.h.b16 %v350
  %v1462 = vunpack.c.l.b16 %v351
  %v1463 = vunpack.c.h.b16 %v351
  %v1464 = vunpack.c.l.b16 %v352
  %v1465 = vunpack.c.l.b16 %v353
  %v1466 = vunpack.c.h.b16 %v353
  %v1467 = vunpack.c.l.b16 %v354
  %v1468 = vunpack.c.h.b16 %v354
  %v1469 = vunpack.c.l.b16 %v355
  %v1470 = vunpack.c.h.b16 %v355
  %v1471 = vunpack.c.l.b16 %v356
  %v1472 = vunpack.c.l.b16 %v357
  %v1473 = vunpack.c.h.b16 %v357
  %v1474 = vunpack.c.l.b16 %v358
  %v1475 = vunpack.c.h.b16 %v358
  %v1476 = vunpack.c.l.b16 %v359
  %v1477 = vunpack.c.h.b16 %v359
  %v1478 = vunpack.c.l.b16 %v360
  %v1479 = vunpack.c.l.b16 %v361
  %v1480 = vunpack.c.h.b16 %v361
  %v1481 = vunpack.c.l.b16 %v362
  %v1482 = vunpack.c.h.b16 %v362
  %v1483 = vunpack.c.l.b16 %v363
  %v1484 = vunpack.c.h.b16 %v363
  %v1485 = vunpack.c.l.b16 %v364
  %v1486 = vunpack.c.l.b16 %v365
  %v1487 = vunpack.c.h.b16 %v365
  %v1488 = vunpack.c.l.b16 %v366
  %v1489 = vunpack.c.h.b16 %v366
  %v1490 = vunpack.c.l.b16 %v367
  %v1491 = vunpack.c.h.b16 %v367
  %v1492 = vunpack.c.l.b16 %v368
  %v1493 = vunpack.c.l.b16 %v369
  %v1494 = vunpack.c.h.b16 %v369
  %v1495 = vunpack.c.l.b16 %v370
  %v1496 = vunpack.c.h.b16 %v370
  %v1497 = vunpack.c.l.b16 %v371
  %v1498 = vunpack.c.h.b16 %v371
  %v1499 = vunpack.c.l.b16 %v372
  %v1500 = vunpack.c.l.b16 %v373
  %v1501 = vunpack.c.h.b16 %v373
  %v1502 = vunpack.c.l.b16 %v374
  %v1503 = vunpack.c.h.b16 %v374
  %v1504 = vunpack.c.l.b16 %v375
  %v1505 = vunpack.c.h.b16 %v375
  %v1506 = vunpack.c.l.b16 %v376
  %v1507 = vunpack.c.l.b16 %v377
  %v1508 = vunpack.c.h.b16 %v377
  %v1509 = vunpack.c.l.b16 %v378
  %v1510 = vunpack.c.h.b16 %v378
  %v1511 = vunpack.c.l.b16 %v379
  %v1512 = vunpack.c.h.b16 %v379
  %v1513 = vunpack.c.l.b16 %v380
  %v1514 = vunpack.c.l.b16 %v381
  %v1515 = vunpack.c.h.b16 %v381
  %v1516 = vunpack.c.l.b16 %v382
  %v1517 = vunpack.c.h.b16 %v382
  %v1518 = vunpack.c.l.b16 %v383
  %v1519 = vunpack.c.h.b16 %v383
  %v1520 = vunpack.c.l.b16 %v384
  %v1521 = vunpack.c.l.b16 %v385
  %v1522 = vunpack.c.h.b16 %v385
  %v1523 = vunpack.c.l.b16 %v386
  %v1524 = vunpack.c.h.b16 %v386
  %v1525 = vunpack.c.l.b16 %v387
  %v1526 = vunpack.c.h.b16 %v387
  %v1527 = vunpack.c.l.b16 %v388
  %v1528 = vunpack.c.l.b16 %v389
  %v1529 = vunpack.c.h.b16 %v389
  %v1530 = vunpack.c.l.b16 %v390
  %v1531 = vunpack.c.h.b16 %v390
  %v1532 = vunpack.c.l.b16 %v391
  %v1533 = vunpack.c.h.b16 %v391
  %v1534 = vunpack.c.l.b16 %v392
  %v1535 = vunpack.c.l.b16 %v393
  %v1536 = vunpack.c.h.b16 %v393
  %v1537 = vunpack.c.l.b16 %v394
  %v1538 = vunpack.c.h.b16 %v394
  %v1539 = vunpack.c.l.b16 %v395
  %v1540 = vunpack.c.h.b16 %v395
  %v1541 = vunpack.c.l.b16 %v396
  %v1542 = vunpack.c.l.b16 %v397
  %v1543 = vunpack.c.h.b16 %v397
  %v1544 = vunpack.c.l.b16 %v398
  %v1545 = vunpack.c.h.b16 %v398
  %v1546 = vunpack.c.l.b16 %v399
  %v1547 = vunpack.c.h.b16 %v399
  %v1548 = vunpack.c.l.b16 %v400
  %v1549 = vunpack.c.l.b16 %v401
  %v1550 = vunpack.c.h.b16 %v401
  %v1551 = vunpack.c.l.b16 %v402
  %v1552 = vunpack.c.h.b16 %v402
  %v1553 = vunpack.c.l.b16 %v403
  %v1554 = vunpack.c.h.b16 %v403
  %v1555 = vunpack.c.l.b16 %v404
  %v1556 = vunpack.c.l.b16 %v405
  %v1557 = vunpack.c.h.b16 %v405
  %v1558 = vunpack.c.l.b16 %v406
  %v1559 = vunpack.c.h.b16 %v406
  %v1560 = vunpack.c.l.b16 %v407
  %v1561 = vunpack.c.h.b16 %v407
  %v1562 = vunpack.c.l.b16 %v408
  %v1563 = vunpack.c.l.b16 %v409
  %v1564 = vunpack.c.h.b16 %v409
  %v1565 = vunpack.c.l.b16 %v410
  %v1566 = vunpack.c.h.b16 %v410
  %v1567 = vunpack.c.l.b16 %v411
  %v1568 = vunpack.c.h.b16 %v411
  %v1569 = vunpack.c.l.b16 %v412
  %v1570 = vunpack.c.l.b16 %v413
  %v1571 = vunpack.c.h.b16 %v413
  %v1572 = vunpack.c.l.b16 %v414
  %v1573 = vunpack.c.h.b16 %v414
  %v1574 = vunpack.c.l.b16 %v415
  %v1575 = vunpack.c.h.b16 %v415
  %v1576 = vunpack.c.l.b16 %v416
  %v1577 = vunpack.c.l.b16 %v417
  %v1578 = vunpack.c.h.b16 %v417
  %v1579 = vunpack.c.l.b16 %v418
  %v1580 = vunpack.c.h.b16 %v418
  %v1581 = vunpack.c.l.b16 %v419
  %v1582 = vunpack.c.h.b16 %v419
  %v1583 = vunpack.c.l.b16 %v420
  %v1584 = vunpack.c.l.b16 %v421
  %v1585 = vunpack.c.h.b16 %v421
  %v1586 = vunpack.c.l.b16 %v422
  %v1587 = vunpack.c.h.b16 %v422
  %v1588 = vunpack.c.l.b16 %v423
  %v1589 = vunpack.c.h.b16 %v423
  %v1590 = vunpack.c.l.b16 %v424
  %v1591 = vunpack.c.l.b16 %v425
  %v1592 = vunpack.c.h.b16 %v425
  %v1593 = vunpack.c.l.b16 %v426
  %v1594 = vunpack.c.h.b16 %v426
  %v1595 = vunpack.c.l.b16 %v427
  %v1596 = vunpack.c.h.b16 %v427
  %v1597 = vunpack.c.l.b16 %v428
  %v1598 = vunpack.c.l.b16 %v429
  %v1599 = vunpack.c.h.b16 %v429
  %v1600 = vunpack.c.l.b16 %v430
  %v1601 = vunpack.c.h.b16 %v430
  %v1602 = vunpack.c.l.b16 %v431
  %v1603 = vunpack.c.h.b16 %v431
  %v1604 = vunpack.c.l.b16 %v432
  %v1605 = vunpack.c.l.b16 %v433
  %v1606 = vunpack.c.h.b16 %v433
  %v1607 = vunpack.c.l.b16 %v434
  %v1608 = vunpack.c.h.b16 %v434
  %v1609 = vunpack.c.l.b16 %v435
  %v1610 = vunpack.c.h.b16 %v435
  %v1611 = vunpack.c.l.b16 %v436
  %v1612 = vunpack.c.l.b16 %v437
  %v1613 = vunpack.c.h.b16 %v437
  %v1614 = vunpack.c.l.b16 %v438
  %v1615 = vunpack.c.h.b16 %v438
  %v1616 = vunpack.c.l.b16 %v439
  %v1617 = vunpack.c.h.b16 %v439
  %v1618 = vunpack.c.l.b16 %v440
  %v1619 = vunpack.c.l.b16 %v441
  %v1620 = vunpack.c.h.b16 %v441
  %v1621 = vunpack.c.l.b16 %v442
  %v1622 = vunpack.c.h.b16 %v442
  %v1623 = vunpack.c.l.b16 %v443
  %v1624 = vunpack.c.h.b16 %v443
  %v1625 = vunpack.c.l.b16 %v444
  %v1626 = vunpack.c.l.b16 %v445
  %v1627 = vunpack.c.h.b16 %v445
  %v1628 = vunpack.c.l.b16 %v446
  %v1629 = vunpack.c.h.b16 %v446
  %v1630 = vunpack.c.l.b16 %v447
  %v1631 = vunpack.c.h.b16 %v447
  %v1632 = vunpack.c.l.b16 %v448
  %v1633 = vunpack.c.l.b16 %v449
  %v1634 = vunpack.c.h.b16 %v449
  %v1635 = vunpack.c.l.b16 %v450
  %v1636 = vunpack.c.h.b16 %v450
  %v1637 = vunpack.c.l.b16 %v451
  %v1638 = vunpack.c.h.b16 %v451
  %v1639 = vunpack.c.l.b16 %v452
  %v1640 = vunpack.c.l.b16 %v453
  %v1641 = vunpack.c.h.b16 %v453
  %v1642 = vunpack.c.l.b16 %v454
  %v1643 = vunpack.c.h.b16 %v454
  %v1644 = vunpack.c.l.b16 %v455
  %v1645 = vunpack.c.h.b16 %v455
  %v1646 = vunpack.c.l.b16 %v456
  %v1647 = vunpack.c.l.b16 %v457
  %v1648 = vunpack.c.h.b16 %v457
  %v1649 = vunpack.c.l.b16 %v458
  %v1650 = vunpack.c.h.b16 %v458
  %v1651 = vunpack.c.l.b16 %v459
  %v1652 = vunpack.c.h.b16 %v459
  %v1653 = vunpack.c.l.b16 %v460
  %v1654 = vunpack.c.l.b16 %v461
  %v1655 = vunpack.c.h.b16 %v461
  %v1656 = vunpack.c.l.b16 %v462
  %v1657 = vunpack.c.h.b16 %v462
  %v1658 = vunpack.c.l.b16 %v463
  %v1659 = vunpack.c.h.b16 %v463
  %v1660 = vunpack.c.l.b16 %v464
  %v1661 = vunpack.c.l.b16 %v465
  %v1662 = vunpack.c.h.b16 %v465
  %v1663 = vunpack.c.l.b16 %v466
  %v1664 = vunpack.c.h.b16 %v466
  %v1665 = vunpack.c.l.b16 %v467
  %v1666 = vunpack.c.h.b16 %v467
  %v1667 = vunpack.c.l.b16 %v468
  %v1668 = vunpack.c.l.b16 %v469
  %v1669 = vunpack.c.h.b16 %v469
  %v1670 = vunpack.c.l.b16 %v470
  %v1671 = vunpack.c.h.b16 %v470
  %v1672 = vunpack.c.l.b16 %v471
  %v1673 = vunpack.c.h.b16 %v471
  %v1674 = vunpack.c.l.b16 %v472
  %v1675 = vunpack.c.l.b16 %v473
  %v1676 = vunpack.c.h.b16 %v473
  %v1677 = vunpack.c.l.b16 %v474
  %v1678 = vunpack.c.h.b16 %v474
  %v1679 = vunpack.c.l.b16 %v475
  %v1680 = vunpack.c.h.b16 %v475
  %v1681 = vunpack.c.l.b16 %v476
  %v1682 = vunpack.c.l.b16 %v477
  %v1683 = vunpack.c.h.b16 %v477
  %v1684 = vunpack.c.l.b16 %v478
  %v1685 = vunpack.c.h.b16 %v478
  %v1686 = vunpack.c.l.b16 %v479
  %v1687 = vunpack.c.h.b16 %v479
  %v1688 = vunpack.c.l.b16 %v480
  %v1689 = vunpack.c.l.b16 %v481
  %v1690 = vunpack.c.h.b16 %v481
  %v1691 = vunpack.c.l.b16 %v482
  %v1692 = vunpack.c.h.b16 %v482
  %v1693 = vunpack.c.l.b16 %v483
  %v1694 = vunpack.c.h.b16 %v483
  %v1695 = vunpack.c.l.b16 %v484
  %v1696 = vunpack.c.l.b16 %v485
  %v1697 = vunpack.c.h.b16 %v485
  %v1698 = vunpack.c.l.b16 %v486
  %v1699 = vunpack.c.h.b16 %v486
  %v1700 = vunpack.c.l.b16 %v487
  %v1701 = vunpack.c.h.b16 %v487
  %v1702 = vunpack.c.l.b16 %v488
  %v1703 = vunpack.c.l.b16 %v489
  %v1704 = vunpack.c.h.b16 %v489
  %v1705 = vunpack.c.l.b16 %v490
  %v1706 = vunpack.c.h.b16 %v490
  %v1707 = vunpack.c.l.b16 %v491
  %v1708 = vunpack.c.h.b16 %v491
  %v1709 = vunpack.c.l.b16 %v492
  %v1710 = vunpack.c.l.b16 %v493
  %v1711 = vunpack.c.h.b16 %v493
  %v1712 = vunpack.c.l.b16 %v494
  %v1713 = vunpack.c.h.b16 %v494
  %v1714 = vunpack.c.l.b16 %v495
  %v1715 = vunpack.c.h.b16 %v495
  %v1716 = vunpack.c.l.b16 %v496
  %v1717 = vunpack.c.l.b16 %v497
  %v1718 = vunpack.c.h.b16 %v497
  %v1719 = vunpack.c.l.b16 %v498
  %v1720 = vunpack.c.h.b16 %v498
  %v1721 = vunpack.c.l.b16 %v499
  %v1722 = vunpack.c.h.b16 %v499
  %v1723 = vunpack.c.l.b16 %v500
  %v1724 = vunpack.c.l.b16 %v501
  %v1725 = vunpack.c.h.b16 %v501
  %v1726 = vunpack.c.l.b16 %v502
  %v1727 = vunpack.c.h.b16 %v502
  %v1728 = vunpack.c.l.b16 %v503
  %v1729 = vunpack.c.h.b16 %v503
  %v1730 = vunpack.c.l.b16 %v504
  %v1731 = vunpack.c.l.b16 %v505
  %v1732 = vunpack.c.h.b16 %v505
  %v1733 = vunpack.c.l.b16 %v506
  %v1734 = vunpack.c.h.b16 %v506
  %v1735 = vunpack.c.l.b16 %v507
  %v1736 = vunpack.c.h.b16 %v507
  %v1737 = vunpack.c.l.b16 %v508
  %v1738 = vunpack.c.l.b16 %v509
  %v1739 = vunpack.c.h.b16 %v509
  %v1740 = vunpack.c.l.b16 %v510
  %v1741 = vunpack.c.h.b16 %v510
  %v1742 = vunpack.c.l.b16 %v511
  %v1743 = vunpack.c.h.b16 %v511
  %v1744 = vunpack.c.l.b16 %v512
  %v1745 = vpack.c.b16 %v968, %v961
  %v1746 = vpack.c.b16 %v969, %v962
  %v1747 = vpack.c.b16 %v970, %v963
  %v1748 = vpack.c.b16 %v971, %v964
  %v1749 = vpack.c.b16 %v972, %v965
  %v1750 = vpack.c.b16 %v973, %v966
  %v1751 = vpack.c.b16 %v974, %v967
  %v1752 = vpack.c.b16 %v982, %v975
  %v1753 = vpack.c.b16 %v983, %v976
  %v1754 = vpack.c.b16 %v984, %v977
  %v1755 = vpack.c.b16 %v985, %v978
  %v1756 = vpack.c.b16 %v986, %v979
  %v1757 = vpack.c.b16 %v987, %v980
  %v1758 = vpack.c.b16 %v988, %v981
  %v1759 = vpack.c.b16 %v996, %v989
  %v1760 = vpack.c.b16 %v997, %v990
  %v1761 = vpack.c.b16 %v998, %v991
  %v1762 = vpack.c.b16 %v999, %v992
  %v1763 = vpack.c.b16 %v1000, %v993
  %v1764 = vpack.c.b16 %v1001, %v994
  %v1765 = vpack.c.b16 %v1002, %v995
  %v1766 = vpack.c.b16 %v1010, %v1003
  %v1767 = vpack.c.b16 %v1011, %v1004
  %v1768 = vpack.c.b16 %v1012, %v1005
  %v1769 = vpack.c.b16 %v1013, %v1006
  %v1770 = vpack.c.b16 %v1014, %v1007
  %v1771 = vpack.c.b16 %v1015, %v1008
  %v1772 = vpack.c.b16 %v1016, %v1009
  %v1773 = vpack.c.b16 %v1024, %v1017
  %v1774 = vpack.c.b16 %v1025, %v1018
  %v1775 = vpack.c.b16 %v1026, %v1019
  %v1776 = vpack.c.b16 %v1027, %v1020
  %v1777 = vpack.c.b16 %v1028, %v1021
  %v1778 = vpack.c.b16 %v1029, %v1022
  %v1779 = vpack.c.b16 %v1030, %v1023
  %v1780 = vpack.c.b16 %v1038, %v1031
  %v1781 = vpack.c.b16 %v1039, %v1032
  %v1782 = vpack.c.b16 %v1040, %v1033
  %v1783 = vpack.c.b16 %v1041, %v1034
  %v1784 = vpack.c.b16 %v1042, %v1035
  %v1785 = vpack.c.b16 %v1043, %v1036
  %v1786 = vpack.c.b16 %v1044, %v1037
  %v1787 = vpack.c.b16 %v1052, %v1045
  %v1788 = vpack.c.b16 %v1053, %v1046
  %v1789 = vpack.c.b16 %v1054, %v1047
  %v1790 = vpack.c.b16 %v1055, %v1048
  %v1791 = vpack.c.b16 %v1056, %v1049
  %v1792 = vpack.c.b16 %v1057, %v1050
  %v1793 = vpack.c.b16 %v1058, %v1051
  %v1794 = vpack.c.b16 %v1066, %v1059
  %v1795 = vpack.c.b16 %v1067, %v1060
  %v1796 = vpack.c.b16 %v1068, %v1061
  %v1797 = vpack.c.b16 %v1069, %v1062
  %v1798 = vpack.c.b16 %v1070, %v1063
  %v1799 = vpack.c.b16 %v1071, %v1064
  %v1800 = vpack.c.b16 %v1072, %v1065
  %v1801 = vpack.c.b16 %v1080, %v1073
  %v1802 = vpack.c.b16 %v1081, %v1074
  %v1803 = vpack.c.b16 %v1082, %v1075
  %v1804 = vpack.c.b16 %v1083, %v1076
  %v1805 = vpack.c.b16 %v1084, %v1077
  %v1806 = vpack.c.b16 %v1085, %v1078
  %v1807 = vpack.c.b16 %v1086, %v1079
  %v1808 = vpack.c.b16 %v1094, %v1087
  %v1809 = vpack.c.b16 %v1095, %v1088
  %v1810 = vpack.c.b16 %v1096, %v1089
  %v1811 = vpack.c.b16 %v1097, %v1090
  %v1812 = vpack.c.b16 %v1098, %v1091
  %v1813 = vpack.c.b16 %v1099, %v1092
  %v1814 = vpack.c.b16 %v1100, %v1093
  %v1815 = vpack.c.b16 %v1108, %v1101
  %v1816 = vpack.c.b16 %v1109, %v1102
  %v1817 = vpack.c.b16 %v1110, %v1103
  %v1818 = vpack.c.b16 %v1111, %v1104
  %v1819 = vpack.c.b16 %v1112, %v1105
  %v1820 = vpack.c.b16 %v1113, %v1106
  %v1821 = vpack.c.b16 %v1114, %v1107
  %v1822 = vpack.c.b16 %v1122, %v1115
  %v1823 = vpack.c.b16 %v1123, %v1116
  %v1824 = vpack.c.b16 %v1124, %v1117
  %v1825 = vpack.c.b16 %v1125, %v1118
  %v1826 = vpack.c.b16 %v1126, %v1119
  %v1827 = vpack.c.b16 %v1127, %v1120
  %v1828 = vpack.c.b16 %v1128, %v1121
  %v1829 = vpack.c.b16 %v1136, %v1129
  %v1830 = vpack.c.b16 %v1137, %v1130
  %v1831 = vpack.c.b16 %v1138, %v1131
  %v1832 = vpack.c.b16 %v1139, %v1132
  %v1833 = vpack.c.b16 %v1140, %v1133
  %v1834 = vpack.c.b16 %v1141, %v1134
  %v1835 = vpack.c.b16 %v1142, %v1135
  %v1836 = vpack.c.b16 %v1150, %v1143
  %v1837 = vpack.c.b16 %v1151, %v1144
  %v1838 = vpack.c.b16 %v1152, %v1145
  %v1839 = vpack.c.b16 %v1153, %v1146
  %v1840 = vpack.c.b16 %v1154, %v1147
  %v1841 = vpack.c.b16 %v1155, %v1148
  %v1842 = vpack.c.b16 %v1156, %v1149
  %v1843 = vpack.c.b16 %v1164, %v1157
  %v1844 = vpack.c.b16 %v1165, %v1158
  %v1845 = vpack.c.b16 %v1166, %v1159
  %v1846 = vpack.c.b16 %v1167, %v1160
  %v1847 = vpack.c.b16 %v1168, %v1161
  %v1848 = vpack.c.b16 %v1169, %v1162
  %v1849 = vpack.c.b16 %v1170, %v1163
  %v1850 = vpack.c.b16 %v1178, %v1171
  %v1851 = vpack.c.b16 %v1179, %v1172
  %v1852 = vpack.c.b16 %v1180, %v1173
  %v1853 = vpack.c.b16 %v1181, %v1174
  %v1854 = vpack.c.b16 %v1182, %v1175
  %v1855 = vpack.c.b16 %v1183, %v1176
  %v1856 = vpack.c.b16 %v1184, %v1177
  %v1857 = vpack.c.b16 %v1192, %v1185
  %v1858 = vpack.c.b16 %v1193, %v1186
  %v1859 = vpack.c.b16 %v1194, %v1187
  %v1860 = vpack.c.b16 %v1195, %v1188
  %v1861 = vpack.c.b16 %v1196, %v1189
  %v1862 = vpack.c.b16 %v1197, %v1190
  %v1863 = vpack.c.b16 %v1198, %v1191
  %v1864 = vpack.c.b16 %v1206, %v1199
  %v1865 = vpack.c.b16 %v1207, %v1200
  %v1866 = vpack.c.b16 %v1208, %v1201
  %v1867 = vpack.c.b16 %v1209, %v1202
  %v1868 = vpack.c.b16 %v1210, %v1203
  %v1869 = vpack.c.b16 %v1211, %v1204
  %v1870 = vpack.c.b16 %v1212, %v1205
  %v1871 = vpack.c.b16 %v1220, %v1213
  %v1872 = vpack.c.b16 %v1221, %v1214
  %v1873 = vpack.c.b16 %v1222, %v1215
  %v1874 = vpack.c.b16 %v1223, %v1216
  %v1875 = vpack.c.b16 %v1224, %v1217
  %v1876 = vpack.c.b16 %v1225, %v1218
  %v1877 = vpack.c.b16 %v1226, %v1219
  %v1878 = vpack.c.b16 %v1234, %v1227
  %v1879 = vpack.c.b16 %v1235, %v1228
  %v1880 = vpack.c.b16 %v1236, %v1229
  %v1881 = vpack.c.b16 %v1237, %v1230
  %v1882 = vpack.c.b16 %v1238, %v1231
  %v1883 = vpack.c.b16 %v1239, %v1232
  %v1884 = vpack.c.b16 %v1240, %v1233
  %v1885 = vpack.c.b16 %v1248, %v1241
  %v1886 = vpack.c.b16 %v1249, %v1242
  %v1887 = vpack.c.b16 %v1250, %v1243
  %v1888 = vpack.c.b16 %v1251, %v1244
  %v1889 = vpack.c.b16 %v1252, %v1245
  %v1890 = vpack.c.b16 %v1253, %v1246
  %v1891 = vpack.c.b16 %v1254, %v1247
  %v1892 = vpack.c.b16 %v1262, %v1255
  %v1893 = vpack.c.b16 %v1263, %v1256
  %v1894 = vpack.c.b16 %v1264, %v1257
  %v1895 = vpack.c.b16 %v1265, %v1258
  %v1896 = vpack.c.b16 %v1266, %v1259
  %v1897 = vpack.c.b16 %v1267, %v1260
  %v1898 = vpack.c.b16 %v1268, %v1261
  %v1899 = vpack.c.b16 %v1276, %v1269
  %v1900 = vpack.c.b16 %v1277, %v1270
  %v1901 = vpack.c.b16 %v1278, %v1271
  %v1902 = vpack.c.b16 %v1279, %v1272
  %v1903 = vpack.c.b16 %v1280, %v1273
  %v1904 = vpack.c.b16 %v1281, %v1274
  %v1905 = vpack.c.b16 %v1282, %v1275
  %v1906 = vpack.c.b16 %v1290, %v1283
  %v1907 = vpack.c.b16 %v1291, %v1284
  %v1908 = vpack.c.b16 %v1292, %v1285
  %v1909 = vpack.c.b16 %v1293, %v1286
  %v1910 = vpack.c.b16 %v1294, %v1287
  %v1911 = vpack.c.b16 %v1295, %v1288
  %v1912 = vpack.c.b16 %v1296, %v1289
  %v1913 = vpack.c.b16 %v1304, %v1297
  %v1914 = vpack.c.b16 %v1305, %v1298
  %v1915 = vpack.c.b16 %v1306, %v1299
  %v1916 = vpack.c.b16 %v1307, %v1300
  %v1917 = vpack.c.b16 %v1308, %v1301
  %v1918 = vpack.c.b16 %v1309, %v1302
  %v1919 = vpack.c.b16 %v1310, %v1303
  %v1920 = vpack.c.b16 %v1318, %v1311
  %v1921 = vpack.c.b16 %v1319, %v1312
  %v1922 = vpack.c.b16 %v1320, %v1313
  %v1923 = vpack.c.b16 %v1321, %v1314
  %v1924 = vpack.c.b16 %v1322, %v1315
  %v1925 = vpack.c.b16 %v1323, %v1316
  %v1926 = vpack.c.b16 %v1324, %v1317
  %v1927 = vpack.c.b16 %v1332, %v1325
  %v1928 = vpack.c.b16 %v1333, %v1326
  %v1929 = vpack.c.b16 %v1334, %v1327
  %v1930 = vpack.c.b16 %v1335, %v1328
  %v1931 = vpack.c.b16 %v1336, %v1329
  %v1932 = vpack.c.b16 %v1337, %v1330
  %v1933 = vpack.c.b16 %v1338, %v1331
  %v1934 = vpack.c.b16 %v1346, %v1339
  %v1935 = vpack.c.b16 %v1347, %v1340
  %v1936 = vpack.c.b16 %v1348, %v1341
  %v1937 = vpack.c.b16 %v1349, %v1342
  %v1938 = vpack.c.b16 %v1350, %v1343
  %v1939 = vpack.c.b16 %v1351, %v1344
  %v1940 = vpack.c.b16 %v1352, %v1345
  %v1941 = vpack.c.b16 %v1360, %v1353
  %v1942 = vpack.c.b16 %v1361, %v1354
  %v1943 = vpack.c.b16 %v1362, %v1355
  %v1944 = vpack.c.b16 %v1363, %v1356
  %v1945 = vpack.c.b16 %v1364, %v1357
  %v1946 = vpack.c.b16 %v1365, %v1358
  %v1947 = vpack.c.b16 %v1366, %v1359
  %v1948 = vpack.c.b16 %v1374, %v1367
  %v1949 = vpack.c.b16 %v1375, %v1368
  %v1950 = vpack.c.b16 %v1376, %v1369
  %v1951 = vpack.c.b16 %v1377, %v1370
  %v1952 = vpack.c.b16 %v1378, %v1371
  %v1953 = vpack.c.b16 %v1379, %v1372
  %v1954 = vpack.c.b16 %v1380, %v1373
  %v1955 = vpack.c.b16 %v1388, %v1381
  %v1956 = vpack.c.b16 %v1389, %v1382
  %v1957 = vpack.c.b16 %v1390, %v1383
  %v1958 = vpack.c.b16 %v1391, %v1384
  %v1959 = vpack.c.b16 %v1392, %v1385
  %v1960 = vpack.c.b16 %v1393, %v1386
  %v1961 = vpack.c.b16 %v1394, %v1387
  %v1962 = vpack.c.b16 %v1402, %v1395
  %v1963 = vpack.c.b16 %v1403, %v1396
  %v1964 = vpack.c.b16 %v1404, %v1397
  %v1965 = vpack.c.b16 %v1405, %v1398
  %v1966 = vpack.c.b16 %v1406, %v1399
  %v1967 = vpack.c.b16 %v1407, %v1400
  %v1968 = vpack.c.b16 %v1408, %v1401
  %v1969 = vpack.c.b16 %v1416, %v1409
  %v1970 = vpack.c.b16 %v1417, %v1410
  %v1971 = vpack.c.b16 %v1418, %v1411
  %v1972 = vpack.c.b16 %v1419, %v1412
  %v1973 = vpack.c.b16 %v1420, %v1413
  %v1974 = vpack.c.b16 %v1421, %v1414
  %v1975 = vpack.c.b16 %v1422, %v1415
  %v1976 = vpack.c.b16 %v1430, %v1423
  %v1977 = vpack.c.b16 %v1431, %v1424
  %v1978 = vpack.c.b16 %v1432, %v1425
  %v1979 = vpack.c.b16 %v1433, %v1426
  %v1980 = vpack.c.b16 %v1434, %v1427
  %v1981 = vpack.c.b16 %v1435, %v1428
  %v1982 = vpack.c.b16 %v1436, %v1429
  %v1983 = vpack.c.b16 %v1444, %v1437
  %v1984 = vpack.c.b16 %v1445, %v1438
  %v1985 = vpack.c.b16 %v1446, %v1439
  %v1986 = vpack.c.b16 %v1447, %v1440
  %v1987 = vpack.c.b16 %v1448, %v1441
  %v1988 = vpack.c.b16 %v1449, %v1442
  %v1989 = vpack.c.b16 %v1450, %v1443
  %v1990 = vpack.c.b16 %v1458, %v1451
  %v1991 = vpack.c.b16 %v1459, %v1452
  %v1992 = vpack.c.b16 %v1460, %v1453
  %v1993 = vpack.c.b16 %v1461, %v1454
  %v1994 = vpack.c.b16 %v1462, %v1455
  %v1995 = vpack.c.b16 %v1463, %v1456
  %v1996 = vpack.c.b16 %v1464, %v1457
  %v1997 = vpack.c.b16 %v1472, %v1465
  %v1998 = vpack.c.b16 %v1473, %v1466
  %v1999 = vpack.c.b16 %v1474, %v1467
  %v2000 = vpack.c.b16 %v1475, %v1468
  %v2001 = vpack.c.b16 %v1476, %v1469
  %v2002 = vpack.c.b16 %v1477, %v1470
  %v2003 = vpack.c.b16 %v1478, %v1471
  %v2004 = vpack.c.b16 %v1486, %v1479
  %v2005 = vpack.c.b16 %v1487, %v1480
  %v2006 = vpack.c.b16 %v1488, %v1481
  %v2007 = vpack.c.b16 %v1489, %v1482
  %v2008 = vpack.c.b16 %v1490, %v1483
  %v2009 = vpack.c.b16 %v1491, %v1484
  %v2010 = vpack.c.b16 %v1492, %v1485
  %v2011 = vpack.c.b16 %v1500, %v1493
  %v2012 = vpack.c.b16 %v1501, %v1494
  %v2013 = vpack.c.b16 %v1502, %v1495
  %v2014 = vpack.c.b16 %v1503, %v1496
  %v2015 = vpack.c.b16 %v1504, %v1497
  %v2016 = vpack.c.b16 %v1505, %v1498
  %v2017 = vpack.c.b16 %v1506, %v1499
  %v2018 = vpack.c.b16 %v1514, %v1507
  %v2019 = vpack.c.b16 %v1515, %v1508
  %v2020 = vpack.c.b16 %v1516, %v1509
  %v2021 = vpack.c.b16 %v1517, %v1510
  %v2022 = vpack.c.b16 %v1518, %v1511
  %v2023 = vpack.c.b16 %v1519, %v1512
  %v2024 = vpack.c.b16 %v1520, %v1513
  %v2025 = vpack.c.b16 %v1528, %v1521
  %v2026 = vpack.c.b16 %v1529, %v1522
  %v2027 = vpack.c.b16 %v1530, %v1523
  %v2028 = vpack.c.b16 %v1531, %v1524
  %v2029 = vpack.c.b16 %v1532, %v1525
  %v2030 = vpack.c.b16 %v1533, %v1526
  %v2031 = vpack.c.b16 %v1534, %v1527
  %v2032 = vpack.c.b16 %v1542, %v1535
  %v2033 = vpack.c.b16 %v1543, %v1536
  %v2034 = vpack.c.b16 %v1544, %v1537
  %v2035 = vpack.c.b16 %v1545, %v1538
  %v2036 = vpack.c.b16 %v1546, %v1539
  %v2037 = vpack.c.b16 %v1547, %v1540
  %v2038 = vpack.c.b16 %v1548, %v1541
  %v2039 = vpack.c.b16 %v1556, %v1549
  %v2040 = vpack.c.b16 %v1557, %v1550
  %v2041 = vpack.c.b16 %v1558, %v1551
  %v2042 = vpack.c.b16 %v1559, %v1552
  %v2043 = vpack.c.b16 %v1560, %v1553
  %v2044 = vpack.c.b16 %v1561, %v1554
  %v2045 = vpack.c.b16 %v1562, %v1555
  %v2046 = vpack.c.b16 %v1570, %v1563
  %v2047 = vpack.c.b16 %v1571, %v1564
  %v2048 = vpack.c.b16 %v1572, %v1565
  %v2049 = vpack.c.b16 %v1573, %v1566
  %v2050 = vpack.c.b16 %v1574, %v1567
  %v2051 = vpack.c.b16 %v1575, %v1568
  %v2052 = vpack.c.b16 %v1576, %v1569
  %v2053 = vpack.c.b16 %v1584, %v1577
  %v2054 = vpack.c.b16 %v1585, %v1578
  %v2055 = vpack.c.b16 %v1586, %v1579
  %v2056 = vpack.c.b16 %v1587, %v1580
  %v2057 = vpack.c.b16 %v1588, %v1581
  %v2058 = vpack.c.b16 %v1589, %v1582
  %v2059 = vpack.c.b16 %v1590, %v1583
  %v2060 = vpack.c.b16 %v1598, %v1591
  %v2061 = vpack.c.b16 %v1599, %v1592
  %v2062 = vpack.c.b16 %v1600, %v1593
  %v2063 = vpack.c.b16 %v1601, %v1594
  %v2064 = vpack.c.b16 %v1602, %v1595
  %v2065 = vpack.c.b16 %v1603, %v1596
  %v2066 = vpack.c.b16 %v1604, %v1597
  %v2067 = vpack.c.b16 %v1612, %v1605
  %v2068 = vpack.c.b16 %v1613, %v1606
  %v2069 = vpack.c.b16 %v1614, %v1607
  %v2070 = vpack.c.b16 %v1615, %v1608
  %v2071 = vpack.c.b16 %v1616, %v1609
  %v2072 = vpack.c.b16 %v1617, %v1610
  %v2073 = vpack.c.b16 %v1618, %v1611
  %v2074 = vpack.c.b16 %v1626, %v1619
  %v2075 = vpack.c.b16 %v1627, %v1620
  %v2076 = vpack.c.b16 %v1628, %v1621
  %v2077 = vpack.c.b16 %v1629, %v1622
  %v2078 = vpack.c.b16 %v1630, %v1623
  %v2079 = vpack.c.b16 %v1631, %v1624
  %v2080 = vpack.c.b16 %v1632, %v1625
  %v2081 = vpack.c.b16 %v1640, %v1633
  %v2082 = vpack.c.b16 %v1641, %v1634
  %v2083 = vpack.c.b16 %v1642, %v1635
  %v2084 = vpack.c.b16 %v1643, %v1636
  %v2085 = vpack.c.b16 %v1644, %v1637
  %v2086 = vpack.c.b16 %v1645, %v1638
  %v2087 = vpack.c.b16 %v1646, %v1639
  %v2088 = vpack.c.b16 %v1654, %v1647
  %v2089 = vpack.c.b16 %v1655, %v1648
  %v2090 = vpack.c.b16 %v1656, %v1649
  %v2091 = vpack.c.b16 %v1657, %v1650
  %v2092 = vpack.c.b16 %v1658, %v1651
  %v2093 = vpack.c.b16 %v1659, %v1652
  %v2094 = vpack.c.b16 %v1660, %v1653
  %v2095 = vpack.c.b16 %v1668, %v1661
  %v2096 = vpack.c.b16 %v1669, %v1662
  %v2097 = vpack.c.b16 %v1670, %v1663
  %v2098 = vpack.c.b16 %v1671, %v1664
  %v2099 = vpack.c.b16 %v1672, %v1665
  %v2100 = vpack.c.b16 %v1673, %v1666
  %v2101 = vpack.c.b16 %v1674, %v1667
  %v2102 = vpack.c.b16 %v1682, %v1675
  %v2103 = vpack.c.b16 %v1683, %v1676
  %v2104 = vpack.c.b16 %v1684, %v1677
  %v2105 = vpack.c.b16 %v1685, %v1678
  %v2106 = vpack.c.b16 %v1686, %v1679
  %v2107 = vpack.c.b16 %v1687, %v1680
  %v2108 = vpack.c.b16 %v1688, %v1681
  %v2109 = vpack.c.b16 %v1696, %v1689
  %v2110 = vpack.c.b16 %v1697, %v1690
  %v2111 = vpack.c.b16 %v1698, %v1691
  %v2112 = vpack.c.b16 %v1699, %v1692
  %v2113 = vpack.c.b16 %v1700, %v1693
  %v2114 = vpack.c.b16 %v1701, %v1694
  %v2115 = vpack.c.b16 %v1702, %v1695
  %v2116 = vpack.c.b16 %v1710, %v1703
  %v2117 = vpack.c.b16 %v1711, %v1704
  %v2118 = vpack.c.b16 %v1712, %v1705
  %v2119 = vpack.c.b16 %v1713, %v1706
  %v2120 = vpack.c.b16 %v1714, %v1707
  %v2121 = vpack.c.b16 %v1715, %v1708
  %v2122 = vpack.c.b16 %v1716, %v1709
  %v2123 = vpack.c.b16 %v1724, %v1717
  %v2124 = vpack.c.b16 %v1725, %v1718
  %v2125 = vpack.c.b16 %v1726, %v1719
  %v2126 = vpack.c.b16 %v1727, %v1720
  %v2127 = vpack.c.b16 %v1728, %v1721
  %v2128 = vpack.c.b16 %v1729, %v1722
  %v2129 = vpack.c.b16 %v1730, %v1723
  %v2130 = vpack.c.b16 %v1738, %v1731
  %v2131 = vpack.c.b16 %v1739, %v1732
  %v2132 = vpack.c.b16 %v1740, %v1733
  %v2133 = vpack.c.b16 %v1741, %v1734
  %v2134 = vpack.c.b16 %v1742, %v1735
  %v2135 = vpack.c.b16 %v1743, %v1736
  %v2136 = vpack.c.b16 %v1744, %v1737
  %2529 = vmatprep.subr.bf16.mxu0 %v1746
  %2530 = vmatpush1.bf16.msra.mxu0 %v1745
  %2531 = vmatprep.subr.bf16.mxu0 %v1753
  %2532 = vmatpush1.bf16.msra.mxu0 %v1752
  %2533 = vmatprep.subr.bf16.mxu0 %v1760
  %2534 = vmatpush1.bf16.msra.mxu0 %v1759
  %2535 = vmatprep.subr.bf16.mxu0 %v1767
  %2536 = vmatpush1.bf16.msra.mxu0 %v1766
  %2537 = vmatprep.subr.bf16.mxu0 %v1774
  %2538 = vmatpush1.bf16.msra.mxu0 %v1773
  %2539 = vmatprep.subr.bf16.mxu0 %v1781
  %2540 = vmatpush1.bf16.msra.mxu0 %v1780
  %2541 = vmatprep.subr.bf16.mxu0 %v1788
  %2542 = vmatpush1.bf16.msra.mxu0 %v1787
  %2543 = vmatprep.subr.bf16.mxu0 %v1795
  %2544 = vmatpush1.bf16.msra.mxu0 %v1794
  %2545 = vmatprep.subr.bf16.mxu0 %v1802
  %2546 = vmatpush1.bf16.msra.mxu0 %v1801
  %2547 = vmatprep.subr.bf16.mxu0 %v1809
  %2548 = vmatpush1.bf16.msra.mxu0 %v1808
  %2549 = vmatprep.subr.bf16.mxu0 %v1816
  %2550 = vmatpush1.bf16.msra.mxu0 %v1815
  %2551 = vmatprep.subr.bf16.mxu0 %v1823
  %2552 = vmatpush1.bf16.msra.mxu0 %v1822
  %2553 = vmatprep.subr.bf16.mxu0 %v1830
  %2554 = vmatpush1.bf16.msra.mxu0 %v1829
  %2555 = vmatprep.subr.bf16.mxu0 %v1837
  %2556 = vmatpush1.bf16.msra.mxu0 %v1836
  %2557 = vmatprep.subr.bf16.mxu0 %v1844
  %2558 = vmatpush1.bf16.msra.mxu0 %v1843
  %2559 = vmatprep.subr.bf16.mxu0 %v1851
  %2560 = vmatpush1.bf16.msra.mxu0 %v1850
  %2561 = vmatprep.mubr.bf16.mxu0 %v59
  %2562 = vmatmul.mubr.bf16.gmra.mrb[0].mxu0 %v58
  %v2563 = vpop.f32.mrb[0].mxu0
  %v2564 = vadd.f32 0.0, %v2563
  %v2565 = vpop.f32.mrb[0].mxu0
  %v2566 = vadd.f32 0.0, %v2565
  %v2567 = vpop.f32.mrb[0].mxu0
  %v2568 = vpop.f32.mrb[0].mxu0
  %2569 = vdwg.mxu0
  %2570 = vmatprep.subr.bf16.mxu0 %v1858
  %2571 = vmatpush1.bf16.msra.mxu0 %v1857
  %2572 = vmatprep.subr.bf16.mxu0 %v1865
  %2573 = vmatpush1.bf16.msra.mxu0 %v1864
  %2574 = vmatprep.subr.bf16.mxu0 %v1872
  %2575 = vmatpush1.bf16.msra.mxu0 %v1871
  %2576 = vmatprep.subr.bf16.mxu0 %v1879
  %2577 = vmatpush1.bf16.msra.mxu0 %v1878
  %2578 = vmatprep.subr.bf16.mxu0 %v1886
  %2579 = vmatpush1.bf16.msra.mxu0 %v1885
  %2580 = vmatprep.subr.bf16.mxu0 %v1893
  %2581 = vmatpush1.bf16.msra.mxu0 %v1892
  %2582 = vmatprep.subr.bf16.mxu0 %v1900
  %2583 = vmatpush1.bf16.msra.mxu0 %v1899
  %2584 = vmatprep.subr.bf16.mxu0 %v1907
  %2585 = vmatpush1.bf16.msra.mxu0 %v1906
  %2586 = vmatprep.subr.bf16.mxu0 %v1914
  %2587 = vmatpush1.bf16.msra.mxu0 %v1913
  %2588 = vmatprep.subr.bf16.mxu0 %v1921
  %2589 = vmatpush1.bf16.msra.mxu0 %v1920
  %2590 = vmatprep.subr.bf16.mxu0 %v1928
  %2591 = vmatpush1.bf16.msra.mxu0 %v1927
  %2592 = vmatprep.subr.bf16.mxu0 %v1935
  %2593 = vmatpush1.bf16.msra.mxu0 %v1934
  %2594 = vmatprep.subr.bf16.mxu0 %v1942
  %2595 = vmatpush1.bf16.msra.mxu0 %v1941
  %2596 = vmatprep.subr.bf16.mxu0 %v1949
  %2597 = vmatpush1.bf16.msra.mxu0 %v1948
  %2598 = vmatprep.subr.bf16.mxu0 %v1956
  %2599 = vmatpush1.bf16.msra.mxu0 %v1955
  %2600 = vmatprep.subr.bf16.mxu0 %v1963
  %2601 = vmatpush1.bf16.msra.mxu0 %v1962
  %2602 = vmatprep.mubr.bf16.mxu0 %v61
  %2603 = vmatmul.mubr.bf16.gmra.mrb[0].mxu0 %v60
  %v2604 = vpop.f32.mrb[0].mxu0
  %v2605 = vadd.f32 %v2564, %v2604
  %v2606 = vpop.f32.mrb[0].mxu0
  %v2607 = vadd.f32 %v2566, %v2606
  %v2608 = vpop.f32.mrb[0].mxu0
  %v2609 = vpop.f32.mrb[0].mxu0
  %2610 = vdwg.mxu0
  %2611 = vmatprep.subr.bf16.mxu0 %v1970
  %2612 = vmatpush1.bf16.msra.mxu0 %v1969
  %2613 = vmatprep.subr.bf16.mxu0 %v1977
  %2614 = vmatpush1.bf16.msra.mxu0 %v1976
  %2615 = vmatprep.subr.bf16.mxu0 %v1984
  %2616 = vmatpush1.bf16.msra.mxu0 %v1983
  %2617 = vmatprep.subr.bf16.mxu0 %v1991
  %2618 = vmatpush1.bf16.msra.mxu0 %v1990
  %2619 = vmatprep.subr.bf16.mxu0 %v1998
  %2620 = vmatpush1.bf16.msra.mxu0 %v1997
  %2621 = vmatprep.subr.bf16.mxu0 %v2005
  %2622 = vmatpush1.bf16.msra.mxu0 %v2004
  %2623 = vmatprep.subr.bf16.mxu0 %v2012
  %2624 = vmatpush1.bf16.msra.mxu0 %v2011
  %2625 = vmatprep.subr.bf16.mxu0 %v2019
  %2626 = vmatpush1.bf16.msra.mxu0 %v2018
  %2627 = vmatprep.subr.bf16.mxu0 %v2026
  %2628 = vmatpush1.bf16.msra.mxu0 %v2025
  %2629 = vmatprep.subr.bf16.mxu0 %v2033
  %2630 = vmatpush1.bf16.msra.mxu0 %v2032
  %2631 = vmatprep.subr.bf16.mxu0 %v2040
  %2632 = vmatpush1.bf16.msra.mxu0 %v2039
  %2633 = vmatprep.subr.bf16.mxu0 %v2047
  %2634 = vmatpush1.bf16.msra.mxu0 %v2046
  %2635 = vmatprep.subr.bf16.mxu0 %v2054
  %2636 = vmatpush1.bf16.msra.mxu0 %v2053
  %2637 = vmatprep.subr.bf16.mxu0 %v2061
  %2638 = vmatpush1.bf16.msra.mxu0 %v2060
  %2639 = vmatprep.subr.bf16.mxu0 %v2068
  %2640 = vmatpush1.bf16.msra.mxu0 %v2067
  %2641 = vmatprep.subr.bf16.mxu0 %v2075
  %2642 = vmatpush1.bf16.msra.mxu0 %v2074
  %2643 = vmatprep.mubr.bf16.mxu0 %v63
  %2644 = vmatmul.mubr.bf16.gmra.mrb[0].mxu0 %v62
  %v2645 = vpop.f32.mrb[0].mxu0
  %v2646 = vadd.f32 %v2605, %v2645
  %v2647 = vpop.f32.mrb[0].mxu0
  %v2648 = vadd.f32 %v2607, %v2647
  %v2649 = vpop.f32.mrb[0].mxu0
  %v2650 = vpop.f32.mrb[0].mxu0
  %2651 = vdwg.mxu0
  %2652 = vmatprep.subr.bf16.mxu0 %v2082
  %2653 = vmatpush1.bf16.msra.mxu0 %v2081
  %2654 = vmatprep.subr.bf16.mxu0 %v2089
  %2655 = vmatpush1.bf16.msra.mxu0 %v2088
  %2656 = vmatprep.subr.bf16.mxu0 %v2096
  %2657 = vmatpush1.bf16.msra.mxu0 %v2095
  %2658 = vmatprep.subr.bf16.mxu0 %v2103
  %2659 = vmatpush1.bf16.msra.mxu0 %v2102
  %2660 = vmatprep.subr.bf16.mxu0 %v2110
  %2661 = vmatpush1.bf16.msra.mxu0 %v2109
  %2662 = vmatprep.subr.bf16.mxu0 %v2117
  %2663 = vmatpush1.bf16.msra.mxu0 %v2116
  %2664 = vmatprep.subr.bf16.mxu0 %v2124
  %2665 = vmatpush1.bf16.msra.mxu0 %v2123
  %2666 = vmatprep.subr.bf16.mxu0 %v2131
  %2667 = vmatpush1.bf16.msra.mxu0 %v2130
  %2668 = vmatprep.subr.bf16.mxu0 0
  %2669 = vmatpush1.bf16.msra.mxu0 0
  %2670 = vmatprep.subr.bf16.mxu0 0
  %2671 = vmatpush1.bf16.msra.mxu0 0
  %2672 = vmatprep.subr.bf16.mxu0 0
  %2673 = vmatpush1.bf16.msra.mxu0 0
  %2674 = vmatprep.subr.bf16.mxu0 0
  %2675 = vmatpush1.bf16.msra.mxu0 0
  %2676 = vmatprep.subr.bf16.mxu0 0
  %2677 = vmatpush1.bf16.msra.mxu0 0
  %2678 = vmatprep.subr.bf16.mxu0 0
  %2679 = vmatpush1.bf16.msra.mxu0 0
  %2680 = vmatprep.subr.bf16.mxu0 0
  %2681 = vmatpush1.bf16.msra.mxu0 0
  %2682 = vmatprep.subr.bf16.mxu0 0
  %2683 = vmatpush1.bf16.msra.mxu0 0
  %2684 = vmatprep.mubr.bf16.mxu0 0
  %2685 = vmatmul.mubr.bf16.gmra.mrb[0].mxu0 %v64
  %v2686 = vpop.f32.mrb[0].mxu0
  %v2687 = vadd.f32 %v2646, %v2686
  %v2688 = vpop.f32.mrb[0].mxu0
  %v2689 = vadd.f32 %v2648, %v2688
  %v2690 = vpop.f32.mrb[0].mxu0
  %v2691 = vpop.f32.mrb[0].mxu0
  %2692 = vdwg.mxu0
  %2693 = vmatprep.subr.bf16.mxu0 %v1748
  %2694 = vmatpush1.bf16.msra.mxu0 %v1747
  %2695 = vmatprep.subr.bf16.mxu0 %v1755
  %2696 = vmatpush1.bf16.msra.mxu0 %v1754
  %2697 = vmatprep.subr.bf16.mxu0 %v1762
  %2698 = vmatpush1.bf16.msra.mxu0 %v1761
  %2699 = vmatprep.subr.bf16.mxu0 %v1769
  %2700 = vmatpush1.bf16.msra.mxu0 %v1768
  %2701 = vmatprep.subr.bf16.mxu0 %v1776
  %2702 = vmatpush1.bf16.msra.mxu0 %v1775
  %2703 = vmatprep.subr.bf16.mxu0 %v1783
  %2704 = vmatpush1.bf16.msra.mxu0 %v1782
  %2705 = vmatprep.subr.bf16.mxu0 %v1790
  %2706 = vmatpush1.bf16.msra.mxu0 %v1789
  %2707 = vmatprep.subr.bf16.mxu0 %v1797
  %2708 = vmatpush1.bf16.msra.mxu0 %v1796
  %2709 = vmatprep.subr.bf16.mxu0 %v1804
  %2710 = vmatpush1.bf16.msra.mxu0 %v1803
  %2711 = vmatprep.subr.bf16.mxu0 %v1811
  %2712 = vmatpush1.bf16.msra.mxu0 %v1810
  %2713 = vmatprep.subr.bf16.mxu0 %v1818
  %2714 = vmatpush1.bf16.msra.mxu0 %v1817
  %2715 = vmatprep.subr.bf16.mxu0 %v1825
  %2716 = vmatpush1.bf16.msra.mxu0 %v1824
  %2717 = vmatprep.subr.bf16.mxu0 %v1832
  %2718 = vmatpush1.bf16.msra.mxu0 %v1831
  %2719 = vmatprep.subr.bf16.mxu0 %v1839
  %2720 = vmatpush1.bf16.msra.mxu0 %v1838
  %2721 = vmatprep.subr.bf16.mxu0 %v1846
  %2722 = vmatpush1.bf16.msra.mxu0 %v1845
  %2723 = vmatprep.subr.bf16.mxu0 %v1853
  %2724 = vmatpush1.bf16.msra.mxu0 %v1852
  %2725 = vmatprep.mubr.bf16.mxu0 %v59
  %2726 = vmatmul.mubr.bf16.gmra.mrb[0].mxu0 %v58
  %v2727 = vpop.f32.mrb[0].mxu0
  %v2728 = vadd.f32 0.0, %v2727
  %v2729 = vpop.f32.mrb[0].mxu0
  %v2730 = vadd.f32 0.0, %v2729
  %v2731 = vpop.f32.mrb[0].mxu0
  %v2732 = vpop.f32.mrb[0].mxu0
  %2733 = vdwg.mxu0
  %2734 = vmatprep.subr.bf16.mxu0 %v1860
  %2735 = vmatpush1.bf16.msra.mxu0 %v1859
  %2736 = vmatprep.subr.bf16.mxu0 %v1867
  %2737 = vmatpush1.bf16.msra.mxu0 %v1866
  %2738 = vmatprep.subr.bf16.mxu0 %v1874
  %2739 = vmatpush1.bf16.msra.mxu0 %v1873
  %2740 = vmatprep.subr.bf16.mxu0 %v1881
  %2741 = vmatpush1.bf16.msra.mxu0 %v1880
  %2742 = vmatprep.subr.bf16.mxu0 %v1888
  %2743 = vmatpush1.bf16.msra.mxu0 %v1887
  %2744 = vmatprep.subr.bf16.mxu0 %v1895
  %2745 = vmatpush1.bf16.msra.mxu0 %v1894
  %2746 = vmatprep.subr.bf16.mxu0 %v1902
  %2747 = vmatpush1.bf16.msra.mxu0 %v1901
  %2748 = vmatprep.subr.bf16.mxu0 %v1909
  %2749 = vmatpush1.bf16.msra.mxu0 %v1908
  %2750 = vmatprep.subr.bf16.mxu0 %v1916
  %2751 = vmatpush1.bf16.msra.mxu0 %v1915
  %2752 = vmatprep.subr.bf16.mxu0 %v1923
  %2753 = vmatpush1.bf16.msra.mxu0 %v1922
  %2754 = vmatprep.subr.bf16.mxu0 %v1930
  %2755 = vmatpush1.bf16.msra.mxu0 %v1929
  %2756 = vmatprep.subr.bf16.mxu0 %v1937
  %2757 = vmatpush1.bf16.msra.mxu0 %v1936
  %2758 = vmatprep.subr.bf16.mxu0 %v1944
  %2759 = vmatpush1.bf16.msra.mxu0 %v1943
  %2760 = vmatprep.subr.bf16.mxu0 %v1951
  %2761 = vmatpush1.bf16.msra.mxu0 %v1950
  %2762 = vmatprep.subr.bf16.mxu0 %v1958
  %2763 = vmatpush1.bf16.msra.mxu0 %v1957
  %2764 = vmatprep.subr.bf16.mxu0 %v1965
  %2765 = vmatpush1.bf16.msra.mxu0 %v1964
  %2766 = vmatprep.mubr.bf16.mxu0 %v61
  %2767 = vmatmul.mubr.bf16.gmra.mrb[0].mxu0 %v60
  %v2768 = vpop.f32.mrb[0].mxu0
  %v2769 = vadd.f32 %v2728, %v2768
  %v2770 = vpop.f32.mrb[0].mxu0
  %v2771 = vadd.f32 %v2730, %v2770
  %v2772 = vpop.f32.mrb[0].mxu0
  %v2773 = vpop.f32.mrb[0].mxu0
  %2774 = vdwg.mxu0
  %2775 = vmatprep.subr.bf16.mxu0 %v1972
  %2776 = vmatpush1.bf16.msra.mxu0 %v1971
  %2777 = vmatprep.subr.bf16.mxu0 %v1979
  %2778 = vmatpush1.bf16.msra.mxu0 %v1978
  %2779 = vmatprep.subr.bf16.mxu0 %v1986
  %2780 = vmatpush1.bf16.msra.mxu0 %v1985
  %2781 = vmatprep.subr.bf16.mxu0 %v1993
  %2782 = vmatpush1.bf16.msra.mxu0 %v1992
  %2783 = vmatprep.subr.bf16.mxu0 %v2000
  %2784 = vmatpush1.bf16.msra.mxu0 %v1999
  %2785 = vmatprep.subr.bf16.mxu0 %v2007
  %2786 = vmatpush1.bf16.msra.mxu0 %v2006
  %2787 = vmatprep.subr.bf16.mxu0 %v2014
  %2788 = vmatpush1.bf16.msra.mxu0 %v2013
  %2789 = vmatprep.subr.bf16.mxu0 %v2021
  %2790 = vmatpush1.bf16.msra.mxu0 %v2020
  %2791 = vmatprep.subr.bf16.mxu0 %v2028
  %2792 = vmatpush1.bf16.msra.mxu0 %v2027
  %2793 = vmatprep.subr.bf16.mxu0 %v2035
  %2794 = vmatpush1.bf16.msra.mxu0 %v2034
  %2795 = vmatprep.subr.bf16.mxu0 %v2042
  %2796 = vmatpush1.bf16.msra.mxu0 %v2041
  %2797 = vmatprep.subr.bf16.mxu0 %v2049
  %2798 = vmatpush1.bf16.msra.mxu0 %v2048
  %2799 = vmatprep.subr.bf16.mxu0 %v2056
  %2800 = vmatpush1.bf16.msra.mxu0 %v2055
  %2801 = vmatprep.subr.bf16.mxu0 %v2063
  %2802 = vmatpush1.bf16.msra.mxu0 %v2062
  %2803 = vmatprep.subr.bf16.mxu0 %v2070
  %2804 = vmatpush1.bf16.msra.mxu0 %v2069
  %2805 = vmatprep.subr.bf16.mxu0 %v2077
  %2806 = vmatpush1.bf16.msra.mxu0 %v2076
  %2807 = vmatprep.mubr.bf16.mxu0 %v63
  %2808 = vmatmul.mubr.bf16.gmra.mrb[0].mxu0 %v62
  %v2809 = vpop.f32.mrb[0].mxu0
  %v2810 = vadd.f32 %v2769, %v2809
  %v2811 = vpop.f32.mrb[0].mxu0
  %v2812 = vadd.f32 %v2771, %v2811
  %v2813 = vpop.f32.mrb[0].mxu0
  %v2814 = vpop.f32.mrb[0].mxu0
  %2815 = vdwg.mxu0
  %2816 = vmatprep.subr.bf16.mxu0 %v2084
  %2817 = vmatpush1.bf16.msra.mxu0 %v2083
  %2818 = vmatprep.subr.bf16.mxu0 %v2091
  %2819 = vmatpush1.bf16.msra.mxu0 %v2090
  %2820 = vmatprep.subr.bf16.mxu0 %v2098
  %2821 = vmatpush1.bf16.msra.mxu0 %v2097
  %2822 = vmatprep.subr.bf16.mxu0 %v2105
  %2823 = vmatpush1.bf16.msra.mxu0 %v2104
  %2824 = vmatprep.subr.bf16.mxu0 %v2112
  %2825 = vmatpush1.bf16.msra.mxu0 %v2111
  %2826 = vmatprep.subr.bf16.mxu0 %v2119
  %2827 = vmatpush1.bf16.msra.mxu0 %v2118
  %2828 = vmatprep.subr.bf16.mxu0 %v2126
  %2829 = vmatpush1.bf16.msra.mxu0 %v2125
  %2830 = vmatprep.subr.bf16.mxu0 %v2133
  %2831 = vmatpush1.bf16.msra.mxu0 %v2132
  %2832 = vmatprep.subr.bf16.mxu0 0
  %2833 = vmatpush1.bf16.msra.mxu0 0
  %2834 = vmatprep.subr.bf16.mxu0 0
  %2835 = vmatpush1.bf16.msra.mxu0 0
  %2836 = vmatprep.subr.bf16.mxu0 0
  %2837 = vmatpush1.bf16.msra.mxu0 0
  %2838 = vmatprep.subr.bf16.mxu0 0
  %2839 = vmatpush1.bf16.msra.mxu0 0
  %2840 = vmatprep.subr.bf16.mxu0 0
  %2841 = vmatpush1.bf16.msra.mxu0 0
  %2842 = vmatprep.subr.bf16.mxu0 0
  %2843 = vmatpush1.bf16.msra.mxu0 0
  %2844 = vmatprep.subr.bf16.mxu0 0
  %2845 = vmatpush1.bf16.msra.mxu0 0
  %2846 = vmatprep.subr.bf16.mxu0 0
  %2847 = vmatpush1.bf16.msra.mxu0 0
  %2848 = vmatprep.mubr.bf16.mxu0 0
  %2849 = vmatmul.mubr.bf16.gmra.mrb[0].mxu0 %v64
  %v2850 = vpop.f32.mrb[0].mxu0
  %v2851 = vadd.f32 %v2810, %v2850
  %v2852 = vpop.f32.mrb[0].mxu0
  %v2853 = vadd.f32 %v2812, %v2852
  %v2854 = vpop.f32.mrb[0].mxu0
  %v2855 = vpop.f32.mrb[0].mxu0
  %2856 = vdwg.mxu0
  %2857 = vmatprep.subr.bf16.mxu0 %v1750
  %2858 = vmatpush1.bf16.msra.mxu0 %v1749
  %2859 = vmatprep.subr.bf16.mxu0 %v1757
  %2860 = vmatpush1.bf16.msra.mxu0 %v1756
  %2861 = vmatprep.subr.bf16.mxu0 %v1764
  %2862 = vmatpush1.bf16.msra.mxu0 %v1763
  %2863 = vmatprep.subr.bf16.mxu0 %v1771
  %2864 = vmatpush1.bf16.msra.mxu0 %v1770
  %2865 = vmatprep.subr.bf16.mxu0 %v1778
  %2866 = vmatpush1.bf16.msra.mxu0 %v1777
  %2867 = vmatprep.subr.bf16.mxu0 %v1785
  %2868 = vmatpush1.bf16.msra.mxu0 %v1784
  %2869 = vmatprep.subr.bf16.mxu0 %v1792
  %2870 = vmatpush1.bf16.msra.mxu0 %v1791
  %2871 = vmatprep.subr.bf16.mxu0 %v1799
  %2872 = vmatpush1.bf16.msra.mxu0 %v1798
  %2873 = vmatprep.subr.bf16.mxu0 %v1806
  %2874 = vmatpush1.bf16.msra.mxu0 %v1805
  %2875 = vmatprep.subr.bf16.mxu0 %v1813
  %2876 = vmatpush1.bf16.msra.mxu0 %v1812
  %2877 = vmatprep.subr.bf16.mxu0 %v1820
  %2878 = vmatpush1.bf16.msra.mxu0 %v1819
  %2879 = vmatprep.subr.bf16.mxu0 %v1827
  %2880 = vmatpush1.bf16.msra.mxu0 %v1826
  %2881 = vmatprep.subr.bf16.mxu0 %v1834
  %2882 = vmatpush1.bf16.msra.mxu0 %v1833
  %2883 = vmatprep.subr.bf16.mxu0 %v1841
  %2884 = vmatpush1.bf16.msra.mxu0 %v1840
  %2885 = vmatprep.subr.bf16.mxu0 %v1848
  %2886 = vmatpush1.bf16.msra.mxu0 %v1847
  %2887 = vmatprep.subr.bf16.mxu0 %v1855
  %2888 = vmatpush1.bf16.msra.mxu0 %v1854
  %2889 = vmatprep.mubr.bf16.mxu0 %v59
  %2890 = vmatmul.mubr.bf16.gmra.mrb[0].mxu0 %v58
  %v2891 = vpop.f32.mrb[0].mxu0
  %v2892 = vadd.f32 0.0, %v2891
  %v2893 = vpop.f32.mrb[0].mxu0
  %v2894 = vadd.f32 0.0, %v2893
  %v2895 = vpop.f32.mrb[0].mxu0
  %v2896 = vpop.f32.mrb[0].mxu0
  %2897 = vdwg.mxu0
  %2898 = vmatprep.subr.bf16.mxu0 %v1862
  %2899 = vmatpush1.bf16.msra.mxu0 %v1861
  %2900 = vmatprep.subr.bf16.mxu0 %v1869
  %2901 = vmatpush1.bf16.msra.mxu0 %v1868
  %2902 = vmatprep.subr.bf16.mxu0 %v1876
  %2903 = vmatpush1.bf16.msra.mxu0 %v1875
  %2904 = vmatprep.subr.bf16.mxu0 %v1883
  %2905 = vmatpush1.bf16.msra.mxu0 %v1882
  %2906 = vmatprep.subr.bf16.mxu0 %v1890
  %2907 = vmatpush1.bf16.msra.mxu0 %v1889
  %2908 = vmatprep.subr.bf16.mxu0 %v1897
  %2909 = vmatpush1.bf16.msra.mxu0 %v1896
  %2910 = vmatprep.subr.bf16.mxu0 %v1904
  %2911 = vmatpush1.bf16.msra.mxu0 %v1903
  %2912 = vmatprep.subr.bf16.mxu0 %v1911
  %2913 = vmatpush1.bf16.msra.mxu0 %v1910
  %2914 = vmatprep.subr.bf16.mxu0 %v1918
  %2915 = vmatpush1.bf16.msra.mxu0 %v1917
  %2916 = vmatprep.subr.bf16.mxu0 %v1925
  %2917 = vmatpush1.bf16.msra.mxu0 %v1924
  %2918 = vmatprep.subr.bf16.mxu0 %v1932
  %2919 = vmatpush1.bf16.msra.mxu0 %v1931
  %2920 = vmatprep.subr.bf16.mxu0 %v1939
  %2921 = vmatpush1.bf16.msra.mxu0 %v1938
  %2922 = vmatprep.subr.bf16.mxu0 %v1946
  %2923 = vmatpush1.bf16.msra.mxu0 %v1945
  %2924 = vmatprep.subr.bf16.mxu0 %v1953
  %2925 = vmatpush1.bf16.msra.mxu0 %v1952
  %2926 = vmatprep.subr.bf16.mxu0 %v1960
  %2927 = vmatpush1.bf16.msra.mxu0 %v1959
  %2928 = vmatprep.subr.bf16.mxu0 %v1967
  %2929 = vmatpush1.bf16.msra.mxu0 %v1966
  %2930 = vmatprep.mubr.bf16.mxu0 %v61
  %2931 = vmatmul.mubr.bf16.gmra.mrb[0].mxu0 %v60
  %v2932 = vpop.f32.mrb[0].mxu0
  %v2933 = vadd.f32 %v2892, %v2932
  %v2934 = vpop.f32.mrb[0].mxu0
  %v2935 = vadd.f32 %v2894, %v2934
  %v2936 = vpop.f32.mrb[0].mxu0
  %v2937 = vpop.f32.mrb[0].mxu0
  %2938 = vdwg.mxu0
  %2939 = vmatprep.subr.bf16.mxu0 %v1974
  %2940 = vmatpush1.bf16.msra.mxu0 %v1973
  %2941 = vmatprep.subr.bf16.mxu0 %v1981
  %2942 = vmatpush1.bf16.msra.mxu0 %v1980
  %2943 = vmatprep.subr.bf16.mxu0 %v1988
  %2944 = vmatpush1.bf16.msra.mxu0 %v1987
  %2945 = vmatprep.subr.bf16.mxu0 %v1995
  %2946 = vmatpush1.bf16.msra.mxu0 %v1994
  %2947 = vmatprep.subr.bf16.mxu0 %v2002
  %2948 = vmatpush1.bf16.msra.mxu0 %v2001
  %2949 = vmatprep.subr.bf16.mxu0 %v2009
  %2950 = vmatpush1.bf16.msra.mxu0 %v2008
  %2951 = vmatprep.subr.bf16.mxu0 %v2016
  %2952 = vmatpush1.bf16.msra.mxu0 %v2015
  %2953 = vmatprep.subr.bf16.mxu0 %v2023
  %2954 = vmatpush1.bf16.msra.mxu0 %v2022
  %2955 = vmatprep.subr.bf16.mxu0 %v2030
  %2956 = vmatpush1.bf16.msra.mxu0 %v2029
  %2957 = vmatprep.subr.bf16.mxu0 %v2037
  %2958 = vmatpush1.bf16.msra.mxu0 %v2036
  %2959 = vmatprep.subr.bf16.mxu0 %v2044
  %2960 = vmatpush1.bf16.msra.mxu0 %v2043
  %2961 = vmatprep.subr.bf16.mxu0 %v2051
  %2962 = vmatpush1.bf16.msra.mxu0 %v2050
  %2963 = vmatprep.subr.bf16.mxu0 %v2058
  %2964 = vmatpush1.bf16.msra.mxu0 %v2057
  %2965 = vmatprep.subr.bf16.mxu0 %v2065
  %2966 = vmatpush1.bf16.msra.mxu0 %v2064
  %2967 = vmatprep.subr.bf16.mxu0 %v2072
  %2968 = vmatpush1.bf16.msra.mxu0 %v2071
  %2969 = vmatprep.subr.bf16.mxu0 %v2079
  %2970 = vmatpush1.bf16.msra.mxu0 %v2078
  %2971 = vmatprep.mubr.bf16.mxu0 %v63
  %2972 = vmatmul.mubr.bf16.gmra.mrb[0].mxu0 %v62
  %v2973 = vpop.f32.mrb[0].mxu0
  %v2974 = vadd.f32 %v2933, %v2973
  %v2975 = vpop.f32.mrb[0].mxu0
  %v2976 = vadd.f32 %v2935, %v2975
  %v2977 = vpop.f32.mrb[0].mxu0
  %v2978 = vpop.f32.mrb[0].mxu0
  %2979 = vdwg.mxu0
  %2980 = vmatprep.subr.bf16.mxu0 %v2086
  %2981 = vmatpush1.bf16.msra.mxu0 %v2085
  %2982 = vmatprep.subr.bf16.mxu0 %v2093
  %2983 = vmatpush1.bf16.msra.mxu0 %v2092
  %2984 = vmatprep.subr.bf16.mxu0 %v2100
  %2985 = vmatpush1.bf16.msra.mxu0 %v2099
  %2986 = vmatprep.subr.bf16.mxu0 %v2107
  %2987 = vmatpush1.bf16.msra.mxu0 %v2106
  %2988 = vmatprep.subr.bf16.mxu0 %v2114
  %2989 = vmatpush1.bf16.msra.mxu0 %v2113
  %2990 = vmatprep.subr.bf16.mxu0 %v2121
  %2991 = vmatpush1.bf16.msra.mxu0 %v2120
  %2992 = vmatprep.subr.bf16.mxu0 %v2128
  %2993 = vmatpush1.bf16.msra.mxu0 %v2127
  %2994 = vmatprep.subr.bf16.mxu0 %v2135
  %2995 = vmatpush1.bf16.msra.mxu0 %v2134
  %2996 = vmatprep.subr.bf16.mxu0 0
  %2997 = vmatpush1.bf16.msra.mxu0 0
  %2998 = vmatprep.subr.bf16.mxu0 0
  %2999 = vmatpush1.bf16.msra.mxu0 0
  %3000 = vmatprep.subr.bf16.mxu0 0
  %3001 = vmatpush1.bf16.msra.mxu0 0
  %3002 = vmatprep.subr.bf16.mxu0 0
  %3003 = vmatpush1.bf16.msra.mxu0 0
  %3004 = vmatprep.subr.bf16.mxu0 0
  %3005 = vmatpush1.bf16.msra.mxu0 0
  %3006 = vmatprep.subr.bf16.mxu0 0
  %3007 = vmatpush1.bf16.msra.mxu0 0
  %3008 = vmatprep.subr.bf16.mxu0 0
  %3009 = vmatpush1.bf16.msra.mxu0 0
  %3010 = vmatprep.subr.bf16.mxu0 0
  %3011 = vmatpush1.bf16.msra.mxu0 0
  %3012 = vmatprep.mubr.bf16.mxu0 0
  %3013 = vmatmul.mubr.bf16.gmra.mrb[0].mxu0 %v64
  %v3014 = vpop.f32.mrb[0].mxu0
  %v3015 = vadd.f32 %v2974, %v3014
  %v3016 = vpop.f32.mrb[0].mxu0
  %v3017 = vadd.f32 %v2976, %v3016
  %v3018 = vpop.f32.mrb[0].mxu0
  %v3019 = vpop.f32.mrb[0].mxu0
  %3020 = vdwg.mxu0
  %3021 = vmatprep.subr.bf16.mxu0 0
  %3022 = vmatpush1.bf16.msra.mxu0 %v1751
  %3023 = vmatprep.subr.bf16.mxu0 0
  %3024 = vmatpush1.bf16.msra.mxu0 %v1758
  %3025 = vmatprep.subr.bf16.mxu0 0
  %3026 = vmatpush1.bf16.msra.mxu0 %v1765
  %3027 = vmatprep.subr.bf16.mxu0 0
  %3028 = vmatpush1.bf16.msra.mxu0 %v1772
  %3029 = vmatprep.subr.bf16.mxu0 0
  %3030 = vmatpush1.bf16.msra.mxu0 %v1779
  %3031 = vmatprep.subr.bf16.mxu0 0
  %3032 = vmatpush1.bf16.msra.mxu0 %v1786
  %3033 = vmatprep.subr.bf16.mxu0 0
  %3034 = vmatpush1.bf16.msra.mxu0 %v1793
  %3035 = vmatprep.subr.bf16.mxu0 0
  %3036 = vmatpush1.bf16.msra.mxu0 %v1800
  %3037 = vmatprep.subr.bf16.mxu0 0
  %3038 = vmatpush1.bf16.msra.mxu0 %v1807
  %3039 = vmatprep.subr.bf16.mxu0 0
  %3040 = vmatpush1.bf16.msra.mxu0 %v1814
  %3041 = vmatprep.subr.bf16.mxu0 0
  %3042 = vmatpush1.bf16.msra.mxu0 %v1821
  %3043 = vmatprep.subr.bf16.mxu0 0
  %3044 = vmatpush1.bf16.msra.mxu0 %v1828
  %3045 = vmatprep.subr.bf16.mxu0 0
  %3046 = vmatpush1.bf16.msra.mxu0 %v1835
  %3047 = vmatprep.subr.bf16.mxu0 0
  %3048 = vmatpush1.bf16.msra.mxu0 %v1842
  %3049 = vmatprep.subr.bf16.mxu0 0
  %3050 = vmatpush1.bf16.msra.mxu0 %v1849
  %3051 = vmatprep.subr.bf16.mxu0 0
  %3052 = vmatpush1.bf16.msra.mxu0 %v1856
  %3053 = vmatprep.mubr.bf16.mxu0 %v59
  %3054 = vmatmul.mubr.bf16.gmra.mrb[0].mxu0 %v58
  %v3055 = vpop.f32.mrb[0].mxu0
  %v3056 = vadd.f32 0.0, %v3055
  %v3057 = vpop.f32.mrb[0].mxu0
  %v3058 = vpop.f32.mrb[0].mxu0
  %v3059 = vpop.f32.mrb[0].mxu0
  %3060 = vdwg.mxu0
  %3061 = vmatprep.subr.bf16.mxu0 0
  %3062 = vmatpush1.bf16.msra.mxu0 %v1863
  %3063 = vmatprep.subr.bf16.mxu0 0
  %3064 = vmatpush1.bf16.msra.mxu0 %v1870
  %3065 = vmatprep.subr.bf16.mxu0 0
  %3066 = vmatpush1.bf16.msra.mxu0 %v1877
  %3067 = vmatprep.subr.bf16.mxu0 0
  %3068 = vmatpush1.bf16.msra.mxu0 %v1884
  %3069 = vmatprep.subr.bf16.mxu0 0
  %3070 = vmatpush1.bf16.msra.mxu0 %v1891
  %3071 = vmatprep.subr.bf16.mxu0 0
  %3072 = vmatpush1.bf16.msra.mxu0 %v1898
  %3073 = vmatprep.subr.bf16.mxu0 0
  %3074 = vmatpush1.bf16.msra.mxu0 %v1905
  %3075 = vmatprep.subr.bf16.mxu0 0
  %3076 = vmatpush1.bf16.msra.mxu0 %v1912
  %3077 = vmatprep.subr.bf16.mxu0 0
  %3078 = vmatpush1.bf16.msra.mxu0 %v1919
  %3079 = vmatprep.subr.bf16.mxu0 0
  %3080 = vmatpush1.bf16.msra.mxu0 %v1926
  %3081 = vmatprep.subr.bf16.mxu0 0
  %3082 = vmatpush1.bf16.msra.mxu0 %v1933
  %3083 = vmatprep.subr.bf16.mxu0 0
  %3084 = vmatpush1.bf16.msra.mxu0 %v1940
  %3085 = vmatprep.subr.bf16.mxu0 0
  %3086 = vmatpush1.bf16.msra.mxu0 %v1947
  %3087 = vmatprep.subr.bf16.mxu0 0
  %3088 = vmatpush1.bf16.msra.mxu0 %v1954
  %3089 = vmatprep.subr.bf16.mxu0 0
  %3090 = vmatpush1.bf16.msra.mxu0 %v1961
  %3091 = vmatprep.subr.bf16.mxu0 0
  %3092 = vmatpush1.bf16.msra.mxu0 %v1968
  %3093 = vmatprep.mubr.bf16.mxu0 %v61
  %3094 = vmatmul.mubr.bf16.gmra.mrb[0].mxu0 %v60
  %v3095 = vpop.f32.mrb[0].mxu0
  %v3096 = vadd.f32 %v3056, %v3095
  %v3097 = vpop.f32.mrb[0].mxu0
  %v3098 = vpop.f32.mrb[0].mxu0
  %v3099 = vpop.f32.mrb[0].mxu0
  %3100 = vdwg.mxu0
  %3101 = vmatprep.subr.bf16.mxu0 0
  %3102 = vmatpush1.bf16.msra.mxu0 %v1975
  %3103 = vmatprep.subr.bf16.mxu0 0
  %3104 = vmatpush1.bf16.msra.mxu0 %v1982
  %3105 = vmatprep.subr.bf16.mxu0 0
  %3106 = vmatpush1.bf16.msra.mxu0 %v1989
  %3107 = vmatprep.subr.bf16.mxu0 0
  %3108 = vmatpush1.bf16.msra.mxu0 %v1996
  %3109 = vmatprep.subr.bf16.mxu0 0
  %3110 = vmatpush1.bf16.msra.mxu0 %v2003
  %3111 = vmatprep.subr.bf16.mxu0 0
  %3112 = vmatpush1.bf16.msra.mxu0 %v2010
  %3113 = vmatprep.subr.bf16.mxu0 0
  %3114 = vmatpush1.bf16.msra.mxu0 %v2017
  %3115 = vmatprep.subr.bf16.mxu0 0
  %3116 = vmatpush1.bf16.msra.mxu0 %v2024
  %3117 = vmatprep.subr.bf16.mxu0 0
  %3118 = vmatpush1.bf16.msra.mxu0 %v2031
  %3119 = vmatprep.subr.bf16.mxu0 0
  %3120 = vmatpush1.bf16.msra.mxu0 %v2038
  %3121 = vmatprep.subr.bf16.mxu0 0
  %3122 = vmatpush1.bf16.msra.mxu0 %v2045
  %3123 = vmatprep.subr.bf16.mxu0 0
  %3124 = vmatpush1.bf16.msra.mxu0 %v2052
  %3125 = vmatprep.subr.bf16.mxu0 0
  %3126 = vmatpush1.bf16.msra.mxu0 %v2059
  %3127 = vmatprep.subr.bf16.mxu0 0
  %3128 = vmatpush1.bf16.msra.mxu0 %v2066
  %3129 = vmatprep.subr.bf16.mxu0 0
  %3130 = vmatpush1.bf16.msra.mxu0 %v2073
  %3131 = vmatprep.subr.bf16.mxu0 0
  %3132 = vmatpush1.bf16.msra.mxu0 %v2080
  %3133 = vmatprep.mubr.bf16.mxu0 %v63
  %3134 = vmatmul.mubr.bf16.gmra.mrb[0].mxu0 %v62
  %v3135 = vpop.f32.mrb[0].mxu0
  %v3136 = vadd.f32 %v3096, %v3135
  %v3137 = vpop.f32.mrb[0].mxu0
  %v3138 = vpop.f32.mrb[0].mxu0
  %v3139 = vpop.f32.mrb[0].mxu0
  %3140 = vdwg.mxu0
  %3141 = vmatprep.subr.bf16.mxu0 0
  %3142 = vmatpush1.bf16.msra.mxu0 %v2087
  %3143 = vmatprep.subr.bf16.mxu0 0
  %3144 = vmatpush1.bf16.msra.mxu0 %v2094
  %3145 = vmatprep.subr.bf16.mxu0 0
  %3146 = vmatpush1.bf16.msra.mxu0 %v2101
  %3147 = vmatprep.subr.bf16.mxu0 0
  %3148 = vmatpush1.bf16.msra.mxu0 %v2108
  %3149 = vmatprep.subr.bf16.mxu0 0
  %3150 = vmatpush1.bf16.msra.mxu0 %v2115
  %3151 = vmatprep.subr.bf16.mxu0 0
  %3152 = vmatpush1.bf16.msra.mxu0 %v2122
  %3153 = vmatprep.subr.bf16.mxu0 0
  %3154 = vmatpush1.bf16.msra.mxu0 %v2129
  %3155 = vmatprep.subr.bf16.mxu0 0
  %3156 = vmatpush1.bf16.msra.mxu0 %v2136
  %3157 = vmatprep.subr.bf16.mxu0 0
  %3158 = vmatpush1.bf16.msra.mxu0 0
  %3159 = vmatprep.subr.bf16.mxu0 0
  %3160 = vmatpush1.bf16.msra.mxu0 0
  %3161 = vmatprep.subr.bf16.mxu0 0
  %3162 = vmatpush1.bf16.msra.mxu0 0
  %3163 = vmatprep.subr.bf16.mxu0 0
  %3164 = vmatpush1.bf16.msra.mxu0 0
  %3165 = vmatprep.subr.bf16.mxu0 0
  %3166 = vmatpush1.bf16.msra.mxu0 0
  %3167 = vmatprep.subr.bf16.mxu0 0
  %3168 = vmatpush1.bf16.msra.mxu0 0
  %3169 = vmatprep.subr.bf16.mxu0 0
  %3170 = vmatpush1.bf16.msra.mxu0 0
  %3171 = vmatprep.subr.bf16.mxu0 0
  %3172 = vmatpush1.bf16.msra.mxu0 0
  %3173 = vmatprep.mubr.bf16.mxu0 0
  %3174 = vmatmul.mubr.bf16.gmra.mrb[0].mxu0 %v64
  %v3175 = vpop.f32.mrb[0].mxu0
  %v3176 = vadd.f32 %v3136, %v3175
  %v3177 = vpop.f32.mrb[0].mxu0
  %v3178 = vpop.f32.mrb[0].mxu0
  %v3179 = vpop.f32.mrb[0].mxu0
  %3180 = vdwg.mxu0
  %v3188 = vcombine.low %v2687, %v2689
  %v3189 = vcombine.low %v2851, %v2853
  %v3191 = vunpack.c.l.s4 1983009808
  %v3192 = vunpack.c.0.s8 %v3191
  %v3193 = vlaneseq
  %v3194 = vshrl.u32 %v3193, 7
  %v3195 = vsub.s32 %v3192, %v3194
  %v3196 = vrot.slane %v3188, %v3195
  %v3198 = vunpack.c.l.s4 1983009808
  %v3199 = vunpack.c.0.s8 %v3198
  %v3200 = vlaneseq
  %v3201 = vshrl.u32 %v3200, 7
  %v3202 = vsub.s32 %v3199, %v3201
  %v3203 = vrot.slane %v3189, %v3202
  %v3204 = vcombine.low %v3196, %v3203
  %v3205 = vcombine.low %v3015, %v3017
  %v3207 = vunpack.c.l.s4 1983009808
  %v3208 = vunpack.c.0.s8 %v3207
  %v3209 = vlaneseq
  %v3210 = vshrl.u32 %v3209, 7
  %v3211 = vsub.s32 %v3208, %v3210
  %v3212 = vrot.slane %v3205, %v3211
  %v3214 = vunpack.c.l.s4 1983009808
  %v3215 = vunpack.c.0.s8 %v3214
  %v3216 = vlaneseq
  %v3217 = vshrl.u32 %v3216, 7
  %v3218 = vsub.s32 %v3215, %v3217
  %v3219 = vrot.slane %v3176, %v3218
  %v3220 = vcombine.low %v3212, %v3219
  %3223 = vst [vmem:[%s2 + $0xe] sm:$0xff] %v3204
  %3224 = vst [vmem:[%s2 + $0x16] sm:$0x3f] %v3220
  // Predicated region
  $region10: #{conv2_forward.3} parent=0 // pred_check
    _
  $region11: #{conv2_forward.3} parent=0 // pred_check_branch
    %3226 = sbr.rel (0) target = $region13
  $region12: #{conv2_forward.3} parent=0 // pred_region
    _
  $region13: #{conv2_forward.3} parent=0 // pred_fallthru
    _
  // Predicated region
  $region14: #{conv2_forward.3} parent=0 // pred_check
    _
  $region15: #{conv2_forward.3} parent=0 // pred_check_branch
    %3228 = sbr.rel (0) target = $region17
  $region16: #{conv2_forward.3} parent=0 // pred_region
    _
  $region17: #{conv2_forward.3} parent=0 // pred_fallthru
    _

// kernel: conv2_forward.2
$region0: #{conv2_forward.2}
  #allocation0 [shape = 'u32[]', space=smem, size = 0x4, offset = 0x4, fixed_abs, tag = 'smem constant byte address 0x4 - core index']
  #allocation1 [shape = 'u32[144,128]{1,0:T(1,128)}', space=vmem, size = 0x12000, scoped, tag = 'internal scratch']
  #allocation2 [shape = 'f32[16,964]{1,0:T(8,128)}', space=vmem, size = 0x10000, scoped, tag = 'scratch operand']
  #allocation3 [shape = 'f32[32,964]{1,0:T(8,128)}', space=vmem, size = 0x20000, scoped, tag = 'scratch operand']
  %s0 = inlined_call_operand.vmem [shape: f32[2,964], index: 0, kind: input, shape index: {}]
  %s1 = inlined_call_operand.vmem [shape: f32[9,16,2], index: 1, kind: input, shape index: {}]
  %s2 = inlined_call_operand.vmem [shape: f32[16,1], index: 2, kind: input, shape index: {}]
  %s3 = inlined_call_operand.vmem [shape: f32[9,32,16], index: 3, kind: input, shape index: {}]
  %s4 = inlined_call_operand.vmem [shape: f32[32,1], index: 4, kind: input, shape index: {}]
  %s5 = inlined_call_operand.vmem [shape: f32[32,1], index: 5, kind: input, shape index: {}]
  %s6 = inlined_call_operand.vmem [shape: f32[32,1], index: 6, kind: input, shape index: {}]
  %s7 = inlined_call_operand.hbm [shape: f32[1,900], index: 7, kind: input, shape index: {}]
  %s8 = inlined_call_operand.vmem [shape: f32[900,128], index: 8, kind: input, shape index: {}]
  %s9 = inlined_call_operand.vmem [shape: f32[32,128], index: 9, kind: output, shape index: {}]
  %s10 = sld [smem:[#allocation0]]
  $region50: #{conv2_forward.2} parent=0
    _
  %s12 = ssub.s32 1, %s10
  %s13 = scalar_select 0, %s12, %s10
  $region1: #{conv2_forward.2} parent=0
    #allocation4 [shape = 'u8[4096]{0}', space=vmem, size = 0x1000, scoped, tag = 'input window, operand 7, single buffered']
    #allocation5 [shape = 's32[1]{0}', space=sflag, size = 0x4, scoped, tag = 'scoped memory for conv2_forward.2']
    %14 = vsyncpa [#allocation5], 0
    // Predicated region
    $region2: #{conv2_forward.2} parent=1 // pred_check
      _
    $region3: #{conv2_forward.2} parent=1 // pred_check_branch
      %16 = sbr.rel (0) target = $region5
    $region4: #{conv2_forward.2} parent=1 // pred_region
      _
    $region5: #{conv2_forward.2} parent=1 // pred_fallthru
      _
    // Predicated region
    $region6: #{conv2_forward.2} parent=1 // pred_check
      _
    $region7: #{conv2_forward.2} parent=1 // pred_check_branch
      %18 = sbr.rel (0) target = $region9
    $region8: #{conv2_forward.2} parent=1 // pred_region
      _
    $region9: #{conv2_forward.2} parent=1 // pred_fallthru
      _
    // Predicated region
    $region10: #{conv2_forward.2} parent=1 // pred_check
      _
    $region11: #{conv2_forward.2} parent=1 // pred_check_branch
      %20 = sbr.rel (0) target = $region13
    $region12: #{conv2_forward.2} parent=1 // pred_region
      _
    $region13: #{conv2_forward.2} parent=1 // pred_fallthru
      _
    // Predicated region
    $region14: #{conv2_forward.2} parent=1 // pred_check
      _
    $region15: #{conv2_forward.2} parent=1 // pred_check_branch
      %22 = sbr.rel (0) target = $region17
    $region16: #{conv2_forward.2} parent=1 // pred_region
      _
    $region17: #{conv2_forward.2} parent=1 // pred_fallthru
      _
    // Predicated region
    $region18: #{conv2_forward.2} parent=1 // pred_check
      _
    $region19: #{conv2_forward.2} parent=1 // pred_check_branch
      %24 = sbr.rel (0) target = $region21
    $region20: #{conv2_forward.2} parent=1 // pred_region
      _
    $region21: #{conv2_forward.2} parent=1 // pred_fallthru
      _
    // Predicated region
    $region22: #{conv2_forward.2} parent=1 // pred_check
      _
    $region23: #{conv2_forward.2} parent=1 // pred_check_branch
      %26 = sbr.rel (0) target = $region25
    $region24: #{conv2_forward.2} parent=1 // pred_region
      _
    $region25: #{conv2_forward.2} parent=1 // pred_fallthru
      _
    // Predicated region
    $region26: #{conv2_forward.2} parent=1 // pred_check
      _
    $region27: #{conv2_forward.2} parent=1 // pred_check_branch
      %28 = sbr.rel (0) target = $region29
    $region28: #{conv2_forward.2} parent=1 // pred_region
      _
    $region29: #{conv2_forward.2} parent=1 // pred_fallthru
      _
    // Predicated region
    $region30: #{conv2_forward.2} parent=1 // pred_check
      _
    $region31: #{conv2_forward.2} parent=1 // pred_check_branch
      %30 = sbr.rel (0) target = $region33
    $region32: #{conv2_forward.2} parent=1 // pred_region
      %s32 = ssub.s32 128, 128
      %33 = vsyncadd [#allocation5], %s32
      %s35 = sshll.u32 [#allocation4], 4
      %s36 = int_to_ptr.vmem [resolvable:$true] %s35
      %38 = dma.hbm_to_vmem [thread:$0]  %s7, 128, %s36, [#allocation5]
    $region33: #{conv2_forward.2} parent=1 // pred_fallthru
      _
    // Predicated region
    $region34: #{conv2_forward.2} parent=1 // pred_check
      _
    $region35: #{conv2_forward.2} parent=1 // pred_check_branch
      %40 = sbr.rel (0) target = $region37
    $region36: #{conv2_forward.2} parent=1 // pred_region
      _
    $region37: #{conv2_forward.2} parent=1 // pred_fallthru
      _
    // Predicated region
    $region38: #{conv2_forward.2} parent=1 // pred_check
      _
    $region39: #{conv2_forward.2} parent=1 // pred_check_branch
      %42 = sbr.rel (0) target = $region41
    $region40: #{conv2_forward.2} parent=1 // pred_region
      %43 = dma.done [#allocation5], 128
    $region41: #{conv2_forward.2} parent=1 // pred_fallthru
      _
    %vm44 = vcmask 261120
    %45 = vst.msk [vmem:[#allocation2] sm:$0xff] %vm44, 0.0
    %46 = vst.msk [vmem:[#allocation2 + $0x40] sm:$0xff] %vm44, 0.0
    %vm47 = vcmask 556320
    %48 = vst.msk [vmem:[#allocation2 + $0x38] sm:$0xff] %vm47, 0.0
    %49 = vst.msk [vmem:[#allocation2 + $0x78] sm:$0xff] %vm47, 0.0
    %50 = vst.msk [vmem:[#allocation3] sm:$0xff] %vm44, 0.0
    %51 = vst.msk [vmem:[#allocation3 + $0x40] sm:$0xff] %vm44, 0.0
    %52 = vst.msk [vmem:[#allocation3 + $0x80] sm:$0xff] %vm44, 0.0
    %53 = vst.msk [vmem:[#allocation3 + $0xc0] sm:$0xff] %vm44, 0.0
    %54 = vst.msk [vmem:[#allocation3 + $0x38] sm:$0xff] %vm47, 0.0
    %55 = vst.msk [vmem:[#allocation3 + $0x78] sm:$0xff] %vm47, 0.0
    %56 = vst.msk [vmem:[#allocation3 + $0xb8] sm:$0xff] %vm47, 0.0
    %57 = vst.msk [vmem:[#allocation3 + $0xf8] sm:$0xff] %vm47, 0.0
    %v58 = vld [vmem:[%s1] sm:$0xff]
    %v59 = vld [vmem:[%s1 + $0x8] sm:$0xff]
    %v60 = vld [vmem:[%s0] sm:$0xff]
    %v61 = vld [vmem:[%s0 + $0x8] sm:$0xff]
    %s62 = scalar_lea.vmem %s1, 16
    %v63 = vld [vmem:[%s62] sm:$0xff]
    %v64 = vld [vmem:[%s62 + $0x8] sm:$0xff]
    %v67 = vcombine.high %v60, %v60
    %v69 = vunpack.c.l.s4 1983009808
    %v70 = vunpack.c.0.s8 %v69
    %v71 = vlaneseq
    %v72 = vshrl.u32 %v71, 7
    %v73 = vsub.s32 %v70, %v72
    %v74 = vrot.slane %v60, %v73
    %v76 = vunpack.c.l.s4 1983009808
    %v77 = vunpack.c.0.s8 %v76
    %v78 = vlaneseq
    %v79 = vshrl.u32 %v78, 7
    %v80 = vsub.s32 %v77, %v79
    %v81 = vrot.slane %v67, %v80
    %v82 = vcombine.high %v74, %v74
    %v83 = vcombine.high %v81, %v81
    %v84 = vcombine.high %v61, %v61
    %v86 = vunpack.c.l.s4 1983009808
    %v87 = vunpack.c.0.s8 %v86
    %v88 = vlaneseq
    %v89 = vshrl.u32 %v88, 7
    %v90 = vsub.s32 %v87, %v89
    %v91 = vrot.slane %v61, %v90
    %v93 = vunpack.c.l.s4 1983009808
    %v94 = vunpack.c.0.s8 %v93
    %v95 = vlaneseq
    %v96 = vshrl.u32 %v95, 7
    %v97 = vsub.s32 %v94, %v96
    %v98 = vrot.slane %v84, %v97
    %v99 = vcombine.high %v91, %v91
    %v100 = vcombine.high %v98, %v98
    %101 = vrot.lane.b32.xlu0 %v74, 126
    %v102 = vpop.permute.xlu0 %101
    %103 = vrot.lane.b32.xlu0 %v82, 126
    %v104 = vpop.permute.xlu0 %103
    %105 = vrot.lane.b32.xlu0 %v81, 126
    %v106 = vpop.permute.xlu0 %105
    %107 = vrot.lane.b32.xlu0 %v83, 126
    %v108 = vpop.permute.xlu0 %107
    %109 = vrot.lane.b32.xlu0 %v91, 126
    %v110 = vpop.permute.xlu0 %109
    %111 = vrot.lane.b32.xlu0 %v99, 126
    %v112 = vpop.permute.xlu0 %111
    %113 = vrot.lane.b32.xlu0 %v98, 126
    %v114 = vpop.permute.xlu0 %113
    %115 = vrot.lane.b32.xlu0 %v100, 126
    %v116 = vpop.permute.xlu0 %115
    %vm117 = vcmask 1031168
    %v118 = vsel %vm117, %v102, %v104
    %v119 = vsel %vm117, %v104, %v106
    %v120 = vsel %vm117, %v106, %v108
    %v121 = vsel %vm117, %v108, %v110
    %v122 = vsel %vm117, %v110, %v112
    %v123 = vsel %vm117, %v112, %v114
    %v124 = vsel %vm117, %v114, %v116
    %vm125 = vcmask 15360
    %v127 = vsel %vm125, %v63, 0
    %v130 = vsel %vm125, %v64, 0
    %vm132 = vcmask 1041408
    %v133 = vsel %vm132, %v118, 0
    %v135 = vsel %vm132, %v119, 0
    %v137 = vsel %vm132, %v120, 0
    %v139 = vsel %vm132, %v121, 0
    %v141 = vsel %vm132, %v122, 0
    %v143 = vsel %vm132, %v123, 0
    %v145 = vsel %vm132, %v124, 0
    %v147 = vsel %vm132, %v116, 0
    %149 = vmatprep.subr.mxu0 %v135
    %150 = vmatpush1.msra.mxu0 %v133
    %151 = vmatprep.subr.mxu0 0.0
    %152 = vmatpush1.msra.mxu0 0.0
    %153 = vmatprep.subr.mxu0 0.0
    %154 = vmatpush1.msra.mxu0 0.0
    %155 = vmatprep.subr.mxu0 0.0
    %156 = vmatpush1.msra.mxu0 0.0
    %157 = vmatprep.subr.mxu0 0.0
    %158 = vmatpush1.msra.mxu0 0.0
    %159 = vmatprep.subr.mxu0 0.0
    %160 = vmatpush1.msra.mxu0 0.0
    %161 = vmatprep.subr.mxu0 0.0
    %162 = vmatpush1.msra.mxu0 0.0
    %163 = vmatprep.subr.mxu0 0.0
    %164 = vmatpush1.msra.mxu0 0.0
    %165 = vmatprep.subr.mxu0 0.0
    %166 = vmatpush1.msra.mxu0 0.0
    %167 = vmatprep.subr.mxu0 0.0
    %168 = vmatpush1.msra.mxu0 0.0
    %169 = vmatprep.subr.mxu0 0.0
    %170 = vmatpush1.msra.mxu0 0.0
    %171 = vmatprep.subr.mxu0 0.0
    %172 = vmatpush1.msra.mxu0 0.0
    %173 = vmatprep.subr.mxu0 0.0
    %174 = vmatpush1.msra.mxu0 0.0
    %175 = vmatprep.subr.mxu0 0.0
    %176 = vmatpush1.msra.mxu0 0.0
    %177 = vmatprep.subr.mxu0 0.0
    %178 = vmatpush1.msra.mxu0 0.0
    %179 = vmatprep.subr.mxu0 0.0
    %180 = vmatpush1.msra.mxu0 0.0
    %181 = vmatprep.subr.mxu0 0.0
    %182 = vmatpush1.msra.mxu0 0.0
    %183 = vmatprep.subr.mxu0 0.0
    %184 = vmatpush1.msra.mxu0 0.0
    %185 = vmatprep.subr.mxu0 0.0
    %186 = vmatpush1.msra.mxu0 0.0
    %187 = vmatprep.subr.mxu0 0.0
    %188 = vmatpush1.msra.mxu0 0.0
    %189 = vmatprep.subr.mxu0 0.0
    %190 = vmatpush1.msra.mxu0 0.0
    %191 = vmatprep.subr.mxu0 0.0
    %192 = vmatpush1.msra.mxu0 0.0
    %193 = vmatprep.subr.mxu0 0.0
    %194 = vmatpush1.msra.mxu0 0.0
    %195 = vmatprep.subr.mxu0 0.0
    %196 = vmatpush1.msra.mxu0 0.0
    %197 = vmatprep.subr.mxu0 0.0
    %198 = vmatpush1.msra.mxu0 0.0
    %199 = vmatprep.subr.mxu0 0.0
    %200 = vmatpush1.msra.mxu0 0.0
    %201 = vmatprep.subr.mxu0 0.0
    %202 = vmatpush1.msra.mxu0 0.0
    %203 = vmatprep.subr.mxu0 0.0
    %204 = vmatpush1.msra.mxu0 0.0
    %205 = vmatprep.subr.mxu0 0.0
    %206 = vmatpush1.msra.mxu0 0.0
    %207 = vmatprep.subr.mxu0 0.0
    %208 = vmatpush1.msra.mxu0 0.0
    %209 = vmatprep.subr.mxu0 0.0
    %210 = vmatpush1.msra.mxu0 0.0
    %211 = vmatprep.subr.mxu0 0.0
    %212 = vmatpush1.msra.mxu0 0.0
    %213 = vmatprep.mubr.f32.mxu0 0.0
    %214 = vmatmul.mubr.f32.gmra.mrb[0].mxu0 %v127
    %v215 = vpop.f32.mrb[0].mxu0
    %v216 = vadd.f32 0.0, %v215
    %v217 = vpop.f32.mrb[0].mxu0
    %v218 = vadd.f32 0.0, %v217
    %219 = vmatprep.mubr.f32.mxu0 0.0
    %220 = vmatmul.mubr.f32.gmra.mrb[0].mxu0 %v130
    %v221 = vpop.f32.mrb[0].mxu0
    %v222 = vadd.f32 0.0, %v221
    %v223 = vpop.f32.mrb[0].mxu0
    %v224 = vadd.f32 0.0, %v223
    %225 = vdwg.mxu0
    %226 = vmatprep.subr.mxu0 %v139
    %227 = vmatpush1.msra.mxu0 %v137
    %228 = vmatprep.subr.mxu0 0.0
    %229 = vmatpush1.msra.mxu0 0.0
    %230 = vmatprep.subr.mxu0 0.0
    %231 = vmatpush1.msra.mxu0 0.0
    %232 = vmatprep.subr.mxu0 0.0
    %233 = vmatpush1.msra.mxu0 0.0
    %234 = vmatprep.subr.mxu0 0.0
    %235 = vmatpush1.msra.mxu0 0.0
    %236 = vmatprep.subr.mxu0 0.0
    %237 = vmatpush1.msra.mxu0 0.0
    %238 = vmatprep.subr.mxu0 0.0
    %239 = vmatpush1.msra.mxu0 0.0
    %240 = vmatprep.subr.mxu0 0.0
    %241 = vmatpush1.msra.mxu0 0.0
    %242 = vmatprep.subr.mxu0 0.0
    %243 = vmatpush1.msra.mxu0 0.0
    %244 = vmatprep.subr.mxu0 0.0
    %245 = vmatpush1.msra.mxu0 0.0
    %246 = vmatprep.subr.mxu0 0.0
    %247 = vmatpush1.msra.mxu0 0.0
    %248 = vmatprep.subr.mxu0 0.0
    %249 = vmatpush1.msra.mxu0 0.0
    %250 = vmatprep.subr.mxu0 0.0
    %251 = vmatpush1.msra.mxu0 0.0
    %252 = vmatprep.subr.mxu0 0.0
    %253 = vmatpush1.msra.mxu0 0.0
    %254 = vmatprep.subr.mxu0 0.0
    %255 = vmatpush1.msra.mxu0 0.0
    %256 = vmatprep.subr.mxu0 0.0
    %257 = vmatpush1.msra.mxu0 0.0
    %258 = vmatprep.subr.mxu0 0.0
    %259 = vmatpush1.msra.mxu0 0.0
    %260 = vmatprep.subr.mxu0 0.0
    %261 = vmatpush1.msra.mxu0 0.0
    %262 = vmatprep.subr.mxu0 0.0
    %263 = vmatpush1.msra.mxu0 0.0
    %264 = vmatprep.subr.mxu0 0.0
    %265 = vmatpush1.msra.mxu0 0.0
    %266 = vmatprep.subr.mxu0 0.0
    %267 = vmatpush1.msra.mxu0 0.0
    %268 = vmatprep.subr.mxu0 0.0
    %269 = vmatpush1.msra.mxu0 0.0
    %270 = vmatprep.subr.mxu0 0.0
    %271 = vmatpush1.msra.mxu0 0.0
    %272 = vmatprep.subr.mxu0 0.0
    %273 = vmatpush1.msra.mxu0 0.0
    %274 = vmatprep.subr.mxu0 0.0
    %275 = vmatpush1.msra.mxu0 0.0
    %276 = vmatprep.subr.mxu0 0.0
    %277 = vmatpush1.msra.mxu0 0.0
    %278 = vmatprep.subr.mxu0 0.0
    %279 = vmatpush1.msra.mxu0 0.0
    %280 = vmatprep.subr.mxu0 0.0
    %281 = vmatpush1.msra.mxu0 0.0
    %282 = vmatprep.subr.mxu0 0.0
    %283 = vmatpush1.msra.mxu0 0.0
    %284 = vmatprep.subr.mxu0 0.0
    %285 = vmatpush1.msra.mxu0 0.0
    %286 = vmatprep.subr.mxu0 0.0
    %287 = vmatpush1.msra.mxu0 0.0
    %288 = vmatprep.subr.mxu0 0.0
    %289 = vmatpush1.msra.mxu0 0.0
    %290 = vmatprep.mubr.f32.mxu0 0.0
    %291 = vmatmul.mubr.f32.gmra.mrb[0].mxu0 %v127
    %v292 = vpop.f32.mrb[0].mxu0
    %v293 = vadd.f32 0.0, %v292
    %v294 = vpop.f32.mrb[0].mxu0
    %v295 = vadd.f32 0.0, %v294
    %296 = vmatprep.mubr.f32.mxu0 0.0
    %297 = vmatmul.mubr.f32.gmra.mrb[0].mxu0 %v130
    %v298 = vpop.f32.mrb[0].mxu0
    %v299 = vadd.f32 0.0, %v298
    %v300 = vpop.f32.mrb[0].mxu0
    %v301 = vadd.f32 0.0, %v300
    %302 = vdwg.mxu0
    %303 = vmatprep.subr.mxu0 %v143
    %304 = vmatpush1.msra.mxu0 %v141
    %305 = vmatprep.subr.mxu0 0.0
    %306 = vmatpush1.msra.mxu0 0.0
    %307 = vmatprep.subr.mxu0 0.0
    %308 = vmatpush1.msra.mxu0 0.0
    %309 = vmatprep.subr.mxu0 0.0
    %310 = vmatpush1.msra.mxu0 0.0
    %311 = vmatprep.subr.mxu0 0.0
    %312 = vmatpush1.msra.mxu0 0.0
    %313 = vmatprep.subr.mxu0 0.0
    %314 = vmatpush1.msra.mxu0 0.0
    %315 = vmatprep.subr.mxu0 0.0
    %316 = vmatpush1.msra.mxu0 0.0
    %317 = vmatprep.subr.mxu0 0.0
    %318 = vmatpush1.msra.mxu0 0.0
    %319 = vmatprep.subr.mxu0 0.0
    %320 = vmatpush1.msra.mxu0 0.0
    %321 = vmatprep.subr.mxu0 0.0
    %322 = vmatpush1.msra.mxu0 0.0
    %323 = vmatprep.subr.mxu0 0.0
    %324 = vmatpush1.msra.mxu0 0.0
    %325 = vmatprep.subr.mxu0 0.0
    %326 = vmatpush1.msra.mxu0 0.0
    %327 = vmatprep.subr.mxu0 0.0
    %328 = vmatpush1.msra.mxu0 0.0
    %329 = vmatprep.subr.mxu0 0.0
    %330 = vmatpush1.msra.mxu0 0.0
    %331 = vmatprep.subr.mxu0 0.0
    %332 = vmatpush1.msra.mxu0 0.0
    %333 = vmatprep.subr.mxu0 0.0
    %334 = vmatpush1.msra.mxu0 0.0
    %335 = vmatprep.subr.mxu0 0.0
    %336 = vmatpush1.msra.mxu0 0.0
    %337 = vmatprep.subr.mxu0 0.0
    %338 = vmatpush1.msra.mxu0 0.0
    %339 = vmatprep.subr.mxu0 0.0
    %340 = vmatpush1.msra.mxu0 0.0
    %341 = vmatprep.subr.mxu0 0.0
    %342 = vmatpush1.msra.mxu0 0.0
    %343 = vmatprep.subr.mxu0 0.0
    %344 = vmatpush1.msra.mxu0 0.0
    %345 = vmatprep.subr.mxu0 0.0
    %346 = vmatpush1.msra.mxu0 0.0
    %347 = vmatprep.subr.mxu0 0.0
    %348 = vmatpush1.msra.mxu0 0.0
    %349 = vmatprep.subr.mxu0 0.0
    %350 = vmatpush1.msra.mxu0 0.0
    %351 = vmatprep.subr.mxu0 0.0
    %352 = vmatpush1.msra.mxu0 0.0
    %353 = vmatprep.subr.mxu0 0.0
    %354 = vmatpush1.msra.mxu0 0.0
    %355 = vmatprep.subr.mxu0 0.0
    %356 = vmatpush1.msra.mxu0 0.0
    %357 = vmatprep.subr.mxu0 0.0
    %358 = vmatpush1.msra.mxu0 0.0
    %359 = vmatprep.subr.mxu0 0.0
    %360 = vmatpush1.msra.mxu0 0.0
    %361 = vmatprep.subr.mxu0 0.0
    %362 = vmatpush1.msra.mxu0 0.0
    %363 = vmatprep.subr.mxu0 0.0
    %364 = vmatpush1.msra.mxu0 0.0
    %365 = vmatprep.subr.mxu0 0.0
    %366 = vmatpush1.msra.mxu0 0.0
    %367 = vmatprep.mubr.f32.mxu0 0.0
    %368 = vmatmul.mubr.f32.gmra.mrb[0].mxu0 %v127
    %v369 = vpop.f32.mrb[0].mxu0
    %v370 = vadd.f32 0.0, %v369
    %v371 = vpop.f32.mrb[0].mxu0
    %v372 = vadd.f32 0.0, %v371
    %373 = vmatprep.mubr.f32.mxu0 0.0
    %374 = vmatmul.mubr.f32.gmra.mrb[0].mxu0 %v130
    %v375 = vpop.f32.mrb[0].mxu0
    %v376 = vadd.f32 0.0, %v375
    %v377 = vpop.f32.mrb[0].mxu0
    %v378 = vadd.f32 0.0, %v377
    %379 = vdwg.mxu0
    %380 = vmatprep.subr.mxu0 %v147
    %381 = vmatpush1.msra.mxu0 %v145
    %382 = vmatprep.subr.mxu0 0.0
    %383 = vmatpush1.msra.mxu0 0.0
    %384 = vmatprep.subr.mxu0 0.0
    %385 = vmatpush1.msra.mxu0 0.0
    %386 = vmatprep.subr.mxu0 0.0
    %387 = vmatpush1.msra.mxu0 0.0
    %388 = vmatprep.subr.mxu0 0.0
    %389 = vmatpush1.msra.mxu0 0.0
    %390 = vmatprep.subr.mxu0 0.0
    %391 = vmatpush1.msra.mxu0 0.0
    %392 = vmatprep.subr.mxu0 0.0
    %393 = vmatpush1.msra.mxu0 0.0
    %394 = vmatprep.subr.mxu0 0.0
    %395 = vmatpush1.msra.mxu0 0.0
    %396 = vmatprep.subr.mxu0 0.0
    %397 = vmatpush1.msra.mxu0 0.0
    %398 = vmatprep.subr.mxu0 0.0
    %399 = vmatpush1.msra.mxu0 0.0
    %400 = vmatprep.subr.mxu0 0.0
    %401 = vmatpush1.msra.mxu0 0.0
    %402 = vmatprep.subr.mxu0 0.0
    %403 = vmatpush1.msra.mxu0 0.0
    %404 = vmatprep.subr.mxu0 0.0
    %405 = vmatpush1.msra.mxu0 0.0
    %406 = vmatprep.subr.mxu0 0.0
    %407 = vmatpush1.msra.mxu0 0.0
    %408 = vmatprep.subr.mxu0 0.0
    %409 = vmatpush1.msra.mxu0 0.0
    %410 = vmatprep.subr.mxu0 0.0
    %411 = vmatpush1.msra.mxu0 0.0
    %412 = vmatprep.subr.mxu0 0.0
    %413 = vmatpush1.msra.mxu0 0.0
    %414 = vmatprep.subr.mxu0 0.0
    %415 = vmatpush1.msra.mxu0 0.0
    %416 = vmatprep.subr.mxu0 0.0
    %417 = vmatpush1.msra.mxu0 0.0
    %418 = vmatprep.subr.mxu0 0.0
    %419 = vmatpush1.msra.mxu0 0.0
    %420 = vmatprep.subr.mxu0 0.0
    %421 = vmatpush1.msra.mxu0 0.0
    %422 = vmatprep.subr.mxu0 0.0
    %423 = vmatpush1.msra.mxu0 0.0
    %424 = vmatprep.subr.mxu0 0.0
    %425 = vmatpush1.msra.mxu0 0.0
    %426 = vmatprep.subr.mxu0 0.0
    %427 = vmatpush1.msra.mxu0 0.0
    %428 = vmatprep.subr.mxu0 0.0
    %429 = vmatpush1.msra.mxu0 0.0
    %430 = vmatprep.subr.mxu0 0.0
    %431 = vmatpush1.msra.mxu0 0.0
    %432 = vmatprep.subr.mxu0 0.0
    %433 = vmatpush1.msra.mxu0 0.0
    %434 = vmatprep.subr.mxu0 0.0
    %435 = vmatpush1.msra.mxu0 0.0
    %436 = vmatprep.subr.mxu0 0.0
    %437 = vmatpush1.msra.mxu0 0.0
    %438 = vmatprep.subr.mxu0 0.0
    %439 = vmatpush1.msra.mxu0 0.0
    %440 = vmatprep.subr.mxu0 0.0
    %441 = vmatpush1.msra.mxu0 0.0
    %442 = vmatprep.subr.mxu0 0.0
    %443 = vmatpush1.msra.mxu0 0.0
    %444 = vmatprep.mubr.f32.mxu0 0.0
    %445 = vmatmul.mubr.f32.gmra.mrb[0].mxu0 %v127
    %v446 = vpop.f32.mrb[0].mxu0
    %v447 = vadd.f32 0.0, %v446
    %v448 = vpop.f32.mrb[0].mxu0
    %v449 = vadd.f32 0.0, %v448
    %450 = vmatprep.mubr.f32.mxu0 0.0
    %451 = vmatmul.mubr.f32.gmra.mrb[0].mxu0 %v130
    %v452 = vpop.f32.mrb[0].mxu0
    %v453 = vadd.f32 0.0, %v452
    %v454 = vpop.f32.mrb[0].mxu0
    %v455 = vadd.f32 0.0, %v454
    %456 = vdwg.mxu0
    %457 = vrot.lane.b32.xlu0 %v74, 127
    %v458 = vpop.permute.xlu0 %457
    %459 = vrot.lane.b32.xlu0 %v82, 127
    %v460 = vpop.permute.xlu0 %459
    %461 = vrot.lane.b32.xlu0 %v81, 127
    %v462 = vpop.permute.xlu0 %461
    %463 = vrot.lane.b32.xlu0 %v83, 127
    %v464 = vpop.permute.xlu0 %463
    %465 = vrot.lane.b32.xlu0 %v91, 127
    %v466 = vpop.permute.xlu0 %465
    %467 = vrot.lane.b32.xlu0 %v99, 127
    %v468 = vpop.permute.xlu0 %467
    %469 = vrot.lane.b32.xlu0 %v98, 127
    %v470 = vpop.permute.xlu0 %469
    %471 = vrot.lane.b32.xlu0 %v100, 127
    %v472 = vpop.permute.xlu0 %471
    %vm473 = vcmask 1039360
    %v474 = vsel %vm473, %v458, %v460
    %v475 = vsel %vm473, %v460, %v462
    %v476 = vsel %vm473, %v462, %v464
    %v477 = vsel %vm473, %v464, %v466
    %v478 = vsel %vm473, %v466, %v468
    %v479 = vsel %vm473, %v468, %v470
    %v480 = vsel %vm473, %v470, %v472
    %v482 = vsel %vm125, %v58, 0
    %v485 = vsel %vm125, %v59, 0
    %v487 = vsel %vm132, %v474, 0
    %v489 = vsel %vm132, %v475, 0
    %v491 = vsel %vm132, %v476, 0
    %v493 = vsel %vm132, %v477, 0
    %v495 = vsel %vm132, %v478, 0
    %v497 = vsel %vm132, %v479, 0
    %v499 = vsel %vm132, %v480, 0
    %v501 = vsel %vm132, %v472, 0
    %503 = vmatprep.subr.mxu0 %v489
    %504 = vmatpush1.msra.mxu0 %v487
    %505 = vmatprep.subr.mxu0 0.0
    %506 = vmatpush1.msra.mxu0 0.0
    %507 = vmatprep.subr.mxu0 0.0
    %508 = vmatpush1.msra.mxu0 0.0
    %509 = vmatprep.subr.mxu0 0.0
    %510 = vmatpush1.msra.mxu0 0.0
    %511 = vmatprep.subr.mxu0 0.0
    %512 = vmatpush1.msra.mxu0 0.0
    %513 = vmatprep.subr.mxu0 0.0
    %514 = vmatpush1.msra.mxu0 0.0
    %515 = vmatprep.subr.mxu0 0.0
    %516 = vmatpush1.msra.mxu0 0.0
    %517 = vmatprep.subr.mxu0 0.0
    %518 = vmatpush1.msra.mxu0 0.0
    %519 = vmatprep.subr.mxu0 0.0
    %520 = vmatpush1.msra.mxu0 0.0
    %521 = vmatprep.subr.mxu0 0.0
    %522 = vmatpush1.msra.mxu0 0.0
    %523 = vmatprep.subr.mxu0 0.0
    %524 = vmatpush1.msra.mxu0 0.0
    %525 = vmatprep.subr.mxu0 0.0
    %526 = vmatpush1.msra.mxu0 0.0
    %527 = vmatprep.subr.mxu0 0.0
    %528 = vmatpush1.msra.mxu0 0.0
    %529 = vmatprep.subr.mxu0 0.0
    %530 = vmatpush1.msra.mxu0 0.0
    %531 = vmatprep.subr.mxu0 0.0
    %532 = vmatpush1.msra.mxu0 0.0
    %533 = vmatprep.subr.mxu0 0.0
    %534 = vmatpush1.msra.mxu0 0.0
    %535 = vmatprep.subr.mxu0 0.0
    %536 = vmatpush1.msra.mxu0 0.0
    %537 = vmatprep.subr.mxu0 0.0
    %538 = vmatpush1.msra.mxu0 0.0
    %539 = vmatprep.subr.mxu0 0.0
    %540 = vmatpush1.msra.mxu0 0.0
    %541 = vmatprep.subr.mxu0 0.0
    %542 = vmatpush1.msra.mxu0 0.0
    %543 = vmatprep.subr.mxu0 0.0
    %544 = vmatpush1.msra.mxu0 0.0
    %545 = vmatprep.subr.mxu0 0.0
    %546 = vmatpush1.msra.mxu0 0.0
    %547 = vmatprep.subr.mxu0 0.0
    %548 = vmatpush1.msra.mxu0 0.0
    %549 = vmatprep.subr.mxu0 0.0
    %550 = vmatpush1.msra.mxu0 0.0
    %551 = vmatprep.subr.mxu0 0.0
    %552 = vmatpush1.msra.mxu0 0.0
    %553 = vmatprep.subr.mxu0 0.0
    %554 = vmatpush1.msra.mxu0 0.0
    %555 = vmatprep.subr.mxu0 0.0
    %556 = vmatpush1.msra.mxu0 0.0
    %557 = vmatprep.subr.mxu0 0.0
    %558 = vmatpush1.msra.mxu0 0.0
    %559 = vmatprep.subr.mxu0 0.0
    %560 = vmatpush1.msra.mxu0 0.0
    %561 = vmatprep.subr.mxu0 0.0
    %562 = vmatpush1.msra.mxu0 0.0
    %563 = vmatprep.subr.mxu0 0.0
    %564 = vmatpush1.msra.mxu0 0.0
    %565 = vmatprep.subr.mxu0 0.0
    %566 = vmatpush1.msra.mxu0 0.0
    %567 = vmatprep.mubr.f32.mxu0 0.0
    %568 = vmatmul.mubr.f32.gmra.mrb[0].mxu0 %v482
    %v569 = vpop.f32.mrb[0].mxu0
    %v570 = vadd.f32 %v216, %v569
    %v571 = vpop.f32.mrb[0].mxu0
    %v572 = vadd.f32 %v218, %v571
    %573 = vmatprep.mubr.f32.mxu0 0.0
    %574 = vmatmul.mubr.f32.gmra.mrb[0].mxu0 %v485
    %v575 = vpop.f32.mrb[0].mxu0
    %v576 = vadd.f32 %v222, %v575
    %v577 = vpop.f32.mrb[0].mxu0
    %v578 = vadd.f32 %v224, %v577
    %579 = vdwg.mxu0
    %580 = vmatprep.subr.mxu0 %v493
    %581 = vmatpush1.msra.mxu0 %v491
    %582 = vmatprep.subr.mxu0 0.0
    %583 = vmatpush1.msra.mxu0 0.0
    %584 = vmatprep.subr.mxu0 0.0
    %585 = vmatpush1.msra.mxu0 0.0
    %586 = vmatprep.subr.mxu0 0.0
    %587 = vmatpush1.msra.mxu0 0.0
    %588 = vmatprep.subr.mxu0 0.0
    %589 = vmatpush1.msra.mxu0 0.0
    %590 = vmatprep.subr.mxu0 0.0
    %591 = vmatpush1.msra.mxu0 0.0
    %592 = vmatprep.subr.mxu0 0.0
    %593 = vmatpush1.msra.mxu0 0.0
    %594 = vmatprep.subr.mxu0 0.0
    %595 = vmatpush1.msra.mxu0 0.0
    %596 = vmatprep.subr.mxu0 0.0
    %597 = vmatpush1.msra.mxu0 0.0
    %598 = vmatprep.subr.mxu0 0.0
    %599 = vmatpush1.msra.mxu0 0.0
    %600 = vmatprep.subr.mxu0 0.0
    %601 = vmatpush1.msra.mxu0 0.0
    %602 = vmatprep.subr.mxu0 0.0
    %603 = vmatpush1.msra.mxu0 0.0
    %604 = vmatprep.subr.mxu0 0.0
    %605 = vmatpush1.msra.mxu0 0.0
    %606 = vmatprep.subr.mxu0 0.0
    %607 = vmatpush1.msra.mxu0 0.0
    %608 = vmatprep.subr.mxu0 0.0
    %609 = vmatpush1.msra.mxu0 0.0
    %610 = vmatprep.subr.mxu0 0.0
    %611 = vmatpush1.msra.mxu0 0.0
    %612 = vmatprep.subr.mxu0 0.0
    %613 = vmatpush1.msra.mxu0 0.0
    %614 = vmatprep.subr.mxu0 0.0
    %615 = vmatpush1.msra.mxu0 0.0
    %616 = vmatprep.subr.mxu0 0.0
    %617 = vmatpush1.msra.mxu0 0.0
    %618 = vmatprep.subr.mxu0 0.0
    %619 = vmatpush1.msra.mxu0 0.0
    %620 = vmatprep.subr.mxu0 0.0
    %621 = vmatpush1.msra.mxu0 0.0
    %622 = vmatprep.subr.mxu0 0.0
    %623 = vmatpush1.msra.mxu0 0.0
    %624 = vmatprep.subr.mxu0 0.0
    %625 = vmatpush1.msra.mxu0 0.0
    %626 = vmatprep.subr.mxu0 0.0
    %627 = vmatpush1.msra.mxu0 0.0
    %628 = vmatprep.subr.mxu0 0.0
    %629 = vmatpush1.msra.mxu0 0.0
    %630 = vmatprep.subr.mxu0 0.0
    %631 = vmatpush1.msra.mxu0 0.0
    %632 = vmatprep.subr.mxu0 0.0
    %633 = vmatpush1.msra.mxu0 0.0
    %634 = vmatprep.subr.mxu0 0.0
    %635 = vmatpush1.msra.mxu0 0.0
    %636 = vmatprep.subr.mxu0 0.0
    %637 = vmatpush1.msra.mxu0 0.0
    %638 = vmatprep.subr.mxu0 0.0
    %639 = vmatpush1.msra.mxu0 0.0
    %640 = vmatprep.subr.mxu0 0.0
    %641 = vmatpush1.msra.mxu0 0.0
    %642 = vmatprep.subr.mxu0 0.0
    %643 = vmatpush1.msra.mxu0 0.0
    %644 = vmatprep.mubr.f32.mxu0 0.0
    %645 = vmatmul.mubr.f32.gmra.mrb[0].mxu0 %v482
    %v646 = vpop.f32.mrb[0].mxu0
    %v647 = vadd.f32 %v293, %v646
    %v648 = vpop.f32.mrb[0].mxu0
    %v649 = vadd.f32 %v295, %v648
    %650 = vmatprep.mubr.f32.mxu0 0.0
    %651 = vmatmul.mubr.f32.gmra.mrb[0].mxu0 %v485
    %v652 = vpop.f32.mrb[0].mxu0
    %v653 = vadd.f32 %v299, %v652
    %v654 = vpop.f32.mrb[0].mxu0
    %v655 = vadd.f32 %v301, %v654
    %656 = vdwg.mxu0
    %657 = vmatprep.subr.mxu0 %v497
    %658 = vmatpush1.msra.mxu0 %v495
    %659 = vmatprep.subr.mxu0 0.0
    %660 = vmatpush1.msra.mxu0 0.0
    %661 = vmatprep.subr.mxu0 0.0
    %662 = vmatpush1.msra.mxu0 0.0
    %663 = vmatprep.subr.mxu0 0.0
    %664 = vmatpush1.msra.mxu0 0.0
    %665 = vmatprep.subr.mxu0 0.0
    %666 = vmatpush1.msra.mxu0 0.0
    %667 = vmatprep.subr.mxu0 0.0
    %668 = vmatpush1.msra.mxu0 0.0
    %669 = vmatprep.subr.mxu0 0.0
    %670 = vmatpush1.msra.mxu0 0.0
    %671 = vmatprep.subr.mxu0 0.0
    %672 = vmatpush1.msra.mxu0 0.0
    %673 = vmatprep.subr.mxu0 0.0
    %674 = vmatpush1.msra.mxu0 0.0
    %675 = vmatprep.subr.mxu0 0.0
    %676 = vmatpush1.msra.mxu0 0.0
    %677 = vmatprep.subr.mxu0 0.0
    %678 = vmatpush1.msra.mxu0 0.0
    %679 = vmatprep.subr.mxu0 0.0
    %680 = vmatpush1.msra.mxu0 0.0
    %681 = vmatprep.subr.mxu0 0.0
    %682 = vmatpush1.msra.mxu0 0.0
    %683 = vmatprep.subr.mxu0 0.0
    %684 = vmatpush1.msra.mxu0 0.0
    %685 = vmatprep.subr.mxu0 0.0
    %686 = vmatpush1.msra.mxu0 0.0
    %687 = vmatprep.subr.mxu0 0.0
    %688 = vmatpush1.msra.mxu0 0.0
    %689 = vmatprep.subr.mxu0 0.0
    %690 = vmatpush1.msra.mxu0 0.0
    %691 = vmatprep.subr.mxu0 0.0
    %692 = vmatpush1.msra.mxu0 0.0
    %693 = vmatprep.subr.mxu0 0.0
    %694 = vmatpush1.msra.mxu0 0.0
    %695 = vmatprep.subr.mxu0 0.0
    %696 = vmatpush1.msra.mxu0 0.0
    %697 = vmatprep.subr.mxu0 0.0
    %698 = vmatpush1.msra.mxu0 0.0
    %699 = vmatprep.subr.mxu0 0.0
    %700 = vmatpush1.msra.mxu0 0.0
    %701 = vmatprep.subr.mxu0 0.0
    %702 = vmatpush1.msra.mxu0 0.0
    %703 = vmatprep.subr.mxu0 0.0
    %704 = vmatpush1.msra.mxu0 0.0
    %705 = vmatprep.subr.mxu0 0.0
    %706 = vmatpush1.msra.mxu0 0.0
    %707 = vmatprep.subr.mxu0 0.0
    %708 = vmatpush1.msra.mxu0 0.0
    %709 = vmatprep.subr.mxu0 0.0
    %710 = vmatpush1.msra.mxu0 0.0
    %711 = vmatprep.subr.mxu0 0.0
    %712 = vmatpush1.msra.mxu0 0.0
    %713 = vmatprep.subr.mxu0 0.0
    %714 = vmatpush1.msra.mxu0 0.0
    %715 = vmatprep.subr.mxu0 0.0
    %716 = vmatpush1.msra.mxu0 0.0
    %717 = vmatprep.subr.mxu0 0.0
    %718 = vmatpush1.msra.mxu0 0.0
    %719 = vmatprep.subr.mxu0 0.0
    %720 = vmatpush1.msra.mxu0 0.0
    %721 = vmatprep.mubr.f32.mxu0 0.0
    %722 = vmatmul.mubr.f32.gmra.mrb[0].mxu0 %v482
    %v723 = vpop.f32.mrb[0].mxu0
    %v724 = vadd.f32 %v370, %v723
    %v725 = vpop.f32.mrb[0].mxu0
    %v726 = vadd.f32 %v372, %v725
    %727 = vmatprep.mubr.f32.mxu0 0.0
    %728 = vmatmul.mubr.f32.gmra.mrb[0].mxu0 %v485
    %v729 = vpop.f32.mrb[0].mxu0
    %v730 = vadd.f32 %v376, %v729
    %v731 = vpop.f32.mrb[0].mxu0
    %v732 = vadd.f32 %v378, %v731
    %733 = vdwg.mxu0
    %734 = vmatprep.subr.mxu0 %v501
    %735 = vmatpush1.msra.mxu0 %v499
    %736 = vmatprep.subr.mxu0 0.0
    %737 = vmatpush1.msra.mxu0 0.0
    %738 = vmatprep.subr.mxu0 0.0
    %739 = vmatpush1.msra.mxu0 0.0
    %740 = vmatprep.subr.mxu0 0.0
    %741 = vmatpush1.msra.mxu0 0.0
    %742 = vmatprep.subr.mxu0 0.0
    %743 = vmatpush1.msra.mxu0 0.0
    %744 = vmatprep.subr.mxu0 0.0
    %745 = vmatpush1.msra.mxu0 0.0
    %746 = vmatprep.subr.mxu0 0.0
    %747 = vmatpush1.msra.mxu0 0.0
    %748 = vmatprep.subr.mxu0 0.0
    %749 = vmatpush1.msra.mxu0 0.0
    %750 = vmatprep.subr.mxu0 0.0
    %751 = vmatpush1.msra.mxu0 0.0
    %752 = vmatprep.subr.mxu0 0.0
    %753 = vmatpush1.msra.mxu0 0.0
    %754 = vmatprep.subr.mxu0 0.0
    %755 = vmatpush1.msra.mxu0 0.0
    %756 = vmatprep.subr.mxu0 0.0
    %757 = vmatpush1.msra.mxu0 0.0
    %758 = vmatprep.subr.mxu0 0.0
    %759 = vmatpush1.msra.mxu0 0.0
    %760 = vmatprep.subr.mxu0 0.0
    %761 = vmatpush1.msra.mxu0 0.0
    %762 = vmatprep.subr.mxu0 0.0
    %763 = vmatpush1.msra.mxu0 0.0
    %764 = vmatprep.subr.mxu0 0.0
    %765 = vmatpush1.msra.mxu0 0.0
    %766 = vmatprep.subr.mxu0 0.0
    %767 = vmatpush1.msra.mxu0 0.0
    %768 = vmatprep.subr.mxu0 0.0
    %769 = vmatpush1.msra.mxu0 0.0
    %770 = vmatprep.subr.mxu0 0.0
    %771 = vmatpush1.msra.mxu0 0.0
    %772 = vmatprep.subr.mxu0 0.0
    %773 = vmatpush1.msra.mxu0 0.0
    %774 = vmatprep.subr.mxu0 0.0
    %775 = vmatpush1.msra.mxu0 0.0
    %776 = vmatprep.subr.mxu0 0.0
    %777 = vmatpush1.msra.mxu0 0.0
    %778 = vmatprep.subr.mxu0 0.0
    %779 = vmatpush1.msra.mxu0 0.0
    %780 = vmatprep.subr.mxu0 0.0
    %781 = vmatpush1.msra.mxu0 0.0
    %782 = vmatprep.subr.mxu0 0.0
    %783 = vmatpush1.msra.mxu0 0.0
    %784 = vmatprep.subr.mxu0 0.0
    %785 = vmatpush1.msra.mxu0 0.0
    %786 = vmatprep.subr.mxu0 0.0
    %787 = vmatpush1.msra.mxu0 0.0
    %788 = vmatprep.subr.mxu0 0.0
    %789 = vmatpush1.msra.mxu0 0.0
    %790 = vmatprep.subr.mxu0 0.0
    %791 = vmatpush1.msra.mxu0 0.0
    %792 = vmatprep.subr.mxu0 0.0
    %793 = vmatpush1.msra.mxu0 0.0
    %794 = vmatprep.subr.mxu0 0.0
    %795 = vmatpush1.msra.mxu0 0.0
    %796 = vmatprep.subr.mxu0 0.0
    %797 = vmatpush1.msra.mxu0 0.0
    %798 = vmatprep.mubr.f32.mxu0 0.0
    %799 = vmatmul.mubr.f32.gmra.mrb[0].mxu0 %v482
    %v800 = vpop.f32.mrb[0].mxu0
    %v801 = vadd.f32 %v447, %v800
    %v802 = vpop.f32.mrb[0].mxu0
    %v803 = vadd.f32 %v449, %v802
    %804 = vmatprep.mubr.f32.mxu0 0.0
    %805 = vmatmul.mubr.f32.gmra.mrb[0].mxu0 %v485
    %v806 = vpop.f32.mrb[0].mxu0
    %v807 = vadd.f32 %v453, %v806
    %v808 = vpop.f32.mrb[0].mxu0
    %v809 = vadd.f32 %v455, %v808
    %810 = vdwg.mxu0
    %s811 = scalar_lea.vmem %s1, 32
    %v812 = vld [vmem:[%s811] sm:$0xff]
    %v813 = vld [vmem:[%s811 + $0x8] sm:$0xff]
    %v814 = vld [vmem:[%s0] sm:$0xff]
    %v815 = vld [vmem:[%s0 + $0x8] sm:$0xff]
    %v818 = vcombine.high %v814, %v814
    %v820 = vunpack.c.l.s4 1983009808
    %v821 = vunpack.c.0.s8 %v820
    %v822 = vlaneseq
    %v823 = vshrl.u32 %v822, 7
    %v824 = vsub.s32 %v821, %v823
    %v825 = vrot.slane %v814, %v824
    %v827 = vunpack.c.l.s4 1983009808
    %v828 = vunpack.c.0.s8 %v827
    %v829 = vlaneseq
    %v830 = vshrl.u32 %v829, 7
    %v831 = vsub.s32 %v828, %v830
    %v832 = vrot.slane %v818, %v831
    %v833 = vcombine.high %v825, %v825
    %v834 = vcombine.high %v832, %v832
    %v835 = vcombine.high %v815, %v815
    %v837 = vunpack.c.l.s4 1983009808
    %v838 = vunpack.c.0.s8 %v837
    %v839 = vlaneseq
    %v840 = vshrl.u32 %v839, 7
    %v841 = vsub.s32 %v838, %v840
    %v842 = vrot.slane %v815, %v841
    %v844 = vunpack.c.l.s4 1983009808
    %v845 = vunpack.c.0.s8 %v844
    %v846 = vlaneseq
    %v847 = vshrl.u32 %v846, 7
    %v848 = vsub.s32 %v845, %v847
    %v849 = vrot.slane %v835, %v848
    %v850 = vcombine.high %v842, %v842
    %v851 = vcombine.high %v849, %v849
    %852 = vrot.lane.b32.xlu0 %v825, 125
    %v853 = vpop.permute.xlu0 %852
    %854 = vrot.lane.b32.xlu0 %v833, 125
    %v855 = vpop.permute.xlu0 %854
    %856 = vrot.lane.b32.xlu0 %v832, 125
    %v857 = vpop.permute.xlu0 %856
    %858 = vrot.lane.b32.xlu0 %v834, 125
    %v859 = vpop.permute.xlu0 %858
    %860 = vrot.lane.b32.xlu0 %v842, 125
    %v861 = vpop.permute.xlu0 %860
    %862 = vrot.lane.b32.xlu0 %v850, 125
    %v863 = vpop.permute.xlu0 %862
    %864 = vrot.lane.b32.xlu0 %v849, 125
    %v865 = vpop.permute.xlu0 %864
    %866 = vrot.lane.b32.xlu0 %v851, 125
    %v867 = vpop.permute.xlu0 %866
    %vm868 = vcmask 1022976
    %v869 = vsel %vm868, %v853, %v855
    %v870 = vsel %vm868, %v855, %v857
    %v871 = vsel %vm868, %v857, %v859
    %v872 = vsel %vm868, %v859, %v861
    %v873 = vsel %vm868, %v861, %v863
    %v874 = vsel %vm868, %v863, %v865
    %v875 = vsel %vm868, %v865, %v867
    %v877 = vsel %vm125, %v812, 0
    %v880 = vsel %vm125, %v813, 0
    %v882 = vsel %vm132, %v869, 0
    %v884 = vsel %vm132, %v870, 0
    %v886 = vsel %vm132, %v871, 0
    %v888 = vsel %vm132, %v872, 0
    %v890 = vsel %vm132, %v873, 0
    %v892 = vsel %vm132, %v874, 0
    %v894 = vsel %vm132, %v875, 0
    %v896 = vsel %vm132, %v867, 0
    %898 = vmatprep.subr.mxu0 %v884
    %899 = vmatpush1.msra.mxu0 %v882
    %900 = vmatprep.subr.mxu0 0.0
    %901 = vmatpush1.msra.mxu0 0.0
    %902 = vmatprep.subr.mxu0 0.0
    %903 = vmatpush1.msra.mxu0 0.0
    %904 = vmatprep.subr.mxu0 0.0
    %905 = vmatpush1.msra.mxu0 0.0
    %906 = vmatprep.subr.mxu0 0.0
    %907 = vmatpush1.msra.mxu0 0.0
    %908 = vmatprep.subr.mxu0 0.0
    %909 = vmatpush1.msra.mxu0 0.0
    %910 = vmatprep.subr.mxu0 0.0
    %911 = vmatpush1.msra.mxu0 0.0
    %912 = vmatprep.subr.mxu0 0.0
    %913 = vmatpush1.msra.mxu0 0.0
    %914 = vmatprep.subr.mxu0 0.0
    %915 = vmatpush1.msra.mxu0 0.0
    %916 = vmatprep.subr.mxu0 0.0
    %917 = vmatpush1.msra.mxu0 0.0
    %918 = vmatprep.subr.mxu0 0.0
    %919 = vmatpush1.msra.mxu0 0.0
    %920 = vmatprep.subr.mxu0 0.0
    %921 = vmatpush1.msra.mxu0 0.0
    %922 = vmatprep.subr.mxu0 0.0
    %923 = vmatpush1.msra.mxu0 0.0
    %924 = vmatprep.subr.mxu0 0.0
    %925 = vmatpush1.msra.mxu0 0.0
    %926 = vmatprep.subr.mxu0 0.0
    %927 = vmatpush1.msra.mxu0 0.0
    %928 = vmatprep.subr.mxu0 0.0
    %929 = vmatpush1.msra.mxu0 0.0
    %930 = vmatprep.subr.mxu0 0.0
    %931 = vmatpush1.msra.mxu0 0.0
    %932 = vmatprep.subr.mxu0 0.0
    %933 = vmatpush1.msra.mxu0 0.0
    %934 = vmatprep.subr.mxu0 0.0
    %935 = vmatpush1.msra.mxu0 0.0
    %936 = vmatprep.subr.mxu0 0.0
    %937 = vmatpush1.msra.mxu0 0.0
    %938 = vmatprep.subr.mxu0 0.0
    %939 = vmatpush1.msra.mxu0 0.0
    %940 = vmatprep.subr.mxu0 0.0
    %941 = vmatpush1.msra.mxu0 0.0
    %942 = vmatprep.subr.mxu0 0.0
    %943 = vmatpush1.msra.mxu0 0.0
    %944 = vmatprep.subr.mxu0 0.0
    %945 = vmatpush1.msra.mxu0 0.0
    %946 = vmatprep.subr.mxu0 0.0
    %947 = vmatpush1.msra.mxu0 0.0
    %948 = vmatprep.subr.mxu0 0.0
    %949 = vmatpush1.msra.mxu0 0.0
    %950 = vmatprep.subr.mxu0 0.0
    %951 = vmatpush1.msra.mxu0 0.0
    %952 = vmatprep.subr.mxu0 0.0
    %953 = vmatpush1.msra.mxu0 0.0
    %954 = vmatprep.subr.mxu0 0.0
    %955 = vmatpush1.msra.mxu0 0.0
    %956 = vmatprep.subr.mxu0 0.0
    %957 = vmatpush1.msra.mxu0 0.0
    %958 = vmatprep.subr.mxu0 0.0
    %959 = vmatpush1.msra.mxu0 0.0
    %960 = vmatprep.subr.mxu0 0.0
    %961 = vmatpush1.msra.mxu0 0.0
    %962 = vmatprep.mubr.f32.mxu0 0.0
    %963 = vmatmul.mubr.f32.gmra.mrb[0].mxu0 %v877
    %v964 = vpop.f32.mrb[0].mxu0
    %v965 = vadd.f32 0.0, %v964
    %v966 = vpop.f32.mrb[0].mxu0
    %v967 = vadd.f32 0.0, %v966
    %968 = vmatprep.mubr.f32.mxu0 0.0
    %969 = vmatmul.mubr.f32.gmra.mrb[0].mxu0 %v880
    %v970 = vpop.f32.mrb[0].mxu0
    %v971 = vadd.f32 0.0, %v970
    %v972 = vpop.f32.mrb[0].mxu0
    %v973 = vadd.f32 0.0, %v972
    %974 = vdwg.mxu0
    %975 = vmatprep.subr.mxu0 %v888
    %976 = vmatpush1.msra.mxu0 %v886
    %977 = vmatprep.subr.mxu0 0.0
    %978 = vmatpush1.msra.mxu0 0.0
    %979 = vmatprep.subr.mxu0 0.0
    %980 = vmatpush1.msra.mxu0 0.0
    %981 = vmatprep.subr.mxu0 0.0
    %982 = vmatpush1.msra.mxu0 0.0
    %983 = vmatprep.subr.mxu0 0.0
    %984 = vmatpush1.msra.mxu0 0.0
    %985 = vmatprep.subr.mxu0 0.0
    %986 = vmatpush1.msra.mxu0 0.0
    %987 = vmatprep.subr.mxu0 0.0
    %988 = vmatpush1.msra.mxu0 0.0
    %989 = vmatprep.subr.mxu0 0.0
    %990 = vmatpush1.msra.mxu0 0.0
    %991 = vmatprep.subr.mxu0 0.0
    %992 = vmatpush1.msra.mxu0 0.0
    %993 = vmatprep.subr.mxu0 0.0
    %994 = vmatpush1.msra.mxu0 0.0
    %995 = vmatprep.subr.mxu0 0.0
    %996 = vmatpush1.msra.mxu0 0.0
    %997 = vmatprep.subr.mxu0 0.0
    %998 = vmatpush1.msra.mxu0 0.0
    %999 = vmatprep.subr.mxu0 0.0
    %1000 = vmatpush1.msra.mxu0 0.0
    %1001 = vmatprep.subr.mxu0 0.0
    %1002 = vmatpush1.msra.mxu0 0.0
    %1003 = vmatprep.subr.mxu0 0.0
    %1004 = vmatpush1.msra.mxu0 0.0
    %1005 = vmatprep.subr.mxu0 0.0
    %1006 = vmatpush1.msra.mxu0 0.0
    %1007 = vmatprep.subr.mxu0 0.0
    %1008 = vmatpush1.msra.mxu0 0.0
    %1009 = vmatprep.subr.mxu0 0.0
    %1010 = vmatpush1.msra.mxu0 0.0
    %1011 = vmatprep.subr.mxu0 0.0
    %1012 = vmatpush1.msra.mxu0 0.0
    %1013 = vmatprep.subr.mxu0 0.0
    %1014 = vmatpush1.msra.mxu0 0.0
    %1015 = vmatprep.subr.mxu0 0.0
    %1016 = vmatpush1.msra.mxu0 0.0
    %1017 = vmatprep.subr.mxu0 0.0
    %1018 = vmatpush1.msra.mxu0 0.0
    %1019 = vmatprep.subr.mxu0 0.0
    %1020 = vmatpush1.msra.mxu0 0.0
    %1021 = vmatprep.subr.mxu0 0.0
    %1022 = vmatpush1.msra.mxu0 0.0
    %1023 = vmatprep.subr.mxu0 0.0
    %1024 = vmatpush1.msra.mxu0 0.0
    %1025 = vmatprep.subr.mxu0 0.0
    %1026 = vmatpush1.msra.mxu0 0.0
    %1027 = vmatprep.subr.mxu0 0.0
    %1028 = vmatpush1.msra.mxu0 0.0
    %1029 = vmatprep.subr.mxu0 0.0
    %1030 = vmatpush1.msra.mxu0 0.0
    %1031 = vmatprep.subr.mxu0 0.0
    %1032 = vmatpush1.msra.mxu0 0.0
    %1033 = vmatprep.subr.mxu0 0.0
    %1034 = vmatpush1.msra.mxu0 0.0
    %1035 = vmatprep.subr.mxu0 0.0
    %1036 = vmatpush1.msra.mxu0 0.0
    %1037 = vmatprep.subr.mxu0 0.0
    %1038 = vmatpush1.msra.mxu0 0.0
    %1039 = vmatprep.mubr.f32.mxu0 0.0
    %1040 = vmatmul.mubr.f32.gmra.mrb[0].mxu0 %v877
    %v1041 = vpop.f32.mrb[0].mxu0
    %v1042 = vadd.f32 0.0, %v1041
    %v1043 = vpop.f32.mrb[0].mxu0
    %v1044 = vadd.f32 0.0, %v1043
    %1045 = vmatprep.mubr.f32.mxu0 0.0
    %1046 = vmatmul.mubr.f32.gmra.mrb[0].mxu0 %v880
    %v1047 = vpop.f32.mrb[0].mxu0
    %v1048 = vadd.f32 0.0, %v1047
    %v1049 = vpop.f32.mrb[0].mxu0
    %v1050 = vadd.f32 0.0, %v1049
    %1051 = vdwg.mxu0
    %1052 = vmatprep.subr.mxu0 %v892
    %1053 = vmatpush1.msra.mxu0 %v890
    %1054 = vmatprep.subr.mxu0 0.0
    %1055 = vmatpush1.msra.mxu0 0.0
    %1056 = vmatprep.subr.mxu0 0.0
    %1057 = vmatpush1.msra.mxu0 0.0
    %1058 = vmatprep.subr.mxu0 0.0
    %1059 = vmatpush1.msra.mxu0 0.0
    %1060 = vmatprep.subr.mxu0 0.0
    %1061 = vmatpush1.msra.mxu0 0.0
    %1062 = vmatprep.subr.mxu0 0.0
    %1063 = vmatpush1.msra.mxu0 0.0
    %1064 = vmatprep.subr.mxu0 0.0
    %1065 = vmatpush1.msra.mxu0 0.0
    %1066 = vmatprep.subr.mxu0 0.0
    %1067 = vmatpush1.msra.mxu0 0.0
    %1068 = vmatprep.subr.mxu0 0.0
    %1069 = vmatpush1.msra.mxu0 0.0
    %1070 = vmatprep.subr.mxu0 0.0
    %1071 = vmatpush1.msra.mxu0 0.0
    %1072 = vmatprep.subr.mxu0 0.0
    %1073 = vmatpush1.msra.mxu0 0.0
    %1074 = vmatprep.subr.mxu0 0.0
    %1075 = vmatpush1.msra.mxu0 0.0
    %1076 = vmatprep.subr.mxu0 0.0
    %1077 = vmatpush1.msra.mxu0 0.0
    %1078 = vmatprep.subr.mxu0 0.0
    %1079 = vmatpush1.msra.mxu0 0.0
    %1080 = vmatprep.subr.mxu0 0.0
    %1081 = vmatpush1.msra.mxu0 0.0
    %1082 = vmatprep.subr.mxu0 0.0
    %1083 = vmatpush1.msra.mxu0 0.0
    %1084 = vmatprep.subr.mxu0 0.0
    %1085 = vmatpush1.msra.mxu0 0.0
    %1086 = vmatprep.subr.mxu0 0.0
    %1087 = vmatpush1.msra.mxu0 0.0
    %1088 = vmatprep.subr.mxu0 0.0
    %1089 = vmatpush1.msra.mxu0 0.0
    %1090 = vmatprep.subr.mxu0 0.0
    %1091 = vmatpush1.msra.mxu0 0.0
    %1092 = vmatprep.subr.mxu0 0.0
    %1093 = vmatpush1.msra.mxu0 0.0
    %1094 = vmatprep.subr.mxu0 0.0
    %1095 = vmatpush1.msra.mxu0 0.0
    %1096 = vmatprep.subr.mxu0 0.0
    %1097 = vmatpush1.msra.mxu0 0.0
    %1098 = vmatprep.subr.mxu0 0.0
    %1099 = vmatpush1.msra.mxu0 0.0
    %1100 = vmatprep.subr.mxu0 0.0
    %1101 = vmatpush1.msra.mxu0 0.0
    %1102 = vmatprep.subr.mxu0 0.0
    %1103 = vmatpush1.msra.mxu0 0.0
    %1104 = vmatprep.subr.mxu0 0.0
    %1105 = vmatpush1.msra.mxu0 0.0
    %1106 = vmatprep.subr.mxu0 0.0
    %1107 = vmatpush1.msra.mxu0 0.0
    %1108 = vmatprep.subr.mxu0 0.0
    %1109 = vmatpush1.msra.mxu0 0.0
    %1110 = vmatprep.subr.mxu0 0.0
    %1111 = vmatpush1.msra.mxu0 0.0
    %1112 = vmatprep.subr.mxu0 0.0
    %1113 = vmatpush1.msra.mxu0 0.0
    %1114 = vmatprep.subr.mxu0 0.0
    %1115 = vmatpush1.msra.mxu0 0.0
    %1116 = vmatprep.mubr.f32.mxu0 0.0
    %1117 = vmatmul.mubr.f32.gmra.mrb[0].mxu0 %v877
    %v1118 = vpop.f32.mrb[0].mxu0
    %v1119 = vadd.f32 0.0, %v1118
    %v1120 = vpop.f32.mrb[0].mxu0
    %v1121 = vadd.f32 0.0, %v1120
    %1122 = vmatprep.mubr.f32.mxu0 0.0
    %1123 = vmatmul.mubr.f32.gmra.mrb[0].mxu0 %v880
    %v1124 = vpop.f32.mrb[0].mxu0
    %v1125 = vadd.f32 0.0, %v1124
    %v1126 = vpop.f32.mrb[0].mxu0
    %v1127 = vadd.f32 0.0, %v1126
    %1128 = vdwg.mxu0
    %1129 = vmatprep.subr.mxu0 %v896
    %1130 = vmatpush1.msra.mxu0 %v894
    %1131 = vmatprep.subr.mxu0 0.0
    %1132 = vmatpush1.msra.mxu0 0.0
    %1133 = vmatprep.subr.mxu0 0.0
    %1134 = vmatpush1.msra.mxu0 0.0
    %1135 = vmatprep.subr.mxu0 0.0
    %1136 = vmatpush1.msra.mxu0 0.0
    %1137 = vmatprep.subr.mxu0 0.0
    %1138 = vmatpush1.msra.mxu0 0.0
    %1139 = vmatprep.subr.mxu0 0.0
    %1140 = vmatpush1.msra.mxu0 0.0
    %1141 = vmatprep.subr.mxu0 0.0
    %1142 = vmatpush1.msra.mxu0 0.0
    %1143 = vmatprep.subr.mxu0 0.0
    %1144 = vmatpush1.msra.mxu0 0.0
    %1145 = vmatprep.subr.mxu0 0.0
    %1146 = vmatpush1.msra.mxu0 0.0
    %1147 = vmatprep.subr.mxu0 0.0
    %1148 = vmatpush1.msra.mxu0 0.0
    %1149 = vmatprep.subr.mxu0 0.0
    %1150 = vmatpush1.msra.mxu0 0.0
    %1151 = vmatprep.subr.mxu0 0.0
    %1152 = vmatpush1.msra.mxu0 0.0
    %1153 = vmatprep.subr.mxu0 0.0
    %1154 = vmatpush1.msra.mxu0 0.0
    %1155 = vmatprep.subr.mxu0 0.0
    %1156 = vmatpush1.msra.mxu0 0.0
    %1157 = vmatprep.subr.mxu0 0.0
    %1158 = vmatpush1.msra.mxu0 0.0
    %1159 = vmatprep.subr.mxu0 0.0
    %1160 = vmatpush1.msra.mxu0 0.0
    %1161 = vmatprep.subr.mxu0 0.0
    %1162 = vmatpush1.msra.mxu0 0.0
    %1163 = vmatprep.subr.mxu0 0.0
    %1164 = vmatpush1.msra.mxu0 0.0
    %1165 = vmatprep.subr.mxu0 0.0
    %1166 = vmatpush1.msra.mxu0 0.0
    %1167 = vmatprep.subr.mxu0 0.0
    %1168 = vmatpush1.msra.mxu0 0.0
    %1169 = vmatprep.subr.mxu0 0.0
    %1170 = vmatpush1.msra.mxu0 0.0
    %1171 = vmatprep.subr.mxu0 0.0
    %1172 = vmatpush1.msra.mxu0 0.0
    %1173 = vmatprep.subr.mxu0 0.0
    %1174 = vmatpush1.msra.mxu0 0.0
    %1175 = vmatprep.subr.mxu0 0.0
    %1176 = vmatpush1.msra.mxu0 0.0
    %1177 = vmatprep.subr.mxu0 0.0
    %1178 = vmatpush1.msra.mxu0 0.0
    %1179 = vmatprep.subr.mxu0 0.0
    %1180 = vmatpush1.msra.mxu0 0.0
    %1181 = vmatprep.subr.mxu0 0.0
    %1182 = vmatpush1.msra.mxu0 0.0
    %1183 = vmatprep.subr.mxu0 0.0
    %1184 = vmatpush1.msra.mxu0 0.0
    %1185 = vmatprep.subr.mxu0 0.0
    %1186 = vmatpush1.msra.mxu0 0.0
    %1187 = vmatprep.subr.mxu0 0.0
    %1188 = vmatpush1.msra.mxu0 0.0
    %1189 = vmatprep.subr.mxu0 0.0
    %1190 = vmatpush1.msra.mxu0 0.0
    %1191 = vmatprep.subr.mxu0 0.0
    %1192 = vmatpush1.msra.mxu0 0.0
    %1193 = vmatprep.mubr.f32.mxu0 0.0
    %1194 = vmatmul.mubr.f32.gmra.mrb[0].mxu0 %v877
    %v1195 = vpop.f32.mrb[0].mxu0
    %v1196 = vadd.f32 0.0, %v1195
    %v1197 = vpop.f32.mrb[0].mxu0
    %v1198 = vadd.f32 0.0, %v1197
    %1199 = vmatprep.mubr.f32.mxu0 0.0
    %1200 = vmatmul.mubr.f32.gmra.mrb[0].mxu0 %v880
    %v1201 = vpop.f32.mrb[0].mxu0
    %v1202 = vadd.f32 0.0, %v1201
    %v1203 = vpop.f32.mrb[0].mxu0
    %v1204 = vadd.f32 0.0, %v1203
    %1205 = vdwg.mxu0
    %v1206 = vadd.f32 %v570, %v965
    %v1207 = vadd.f32 %v572, %v967
    %v1208 = vadd.f32 %v647, %v1042
    %v1209 = vadd.f32 %v649, %v1044
    %v1210 = vadd.f32 %v724, %v1119
    %v1211 = vadd.f32 %v726, %v1121
    %v1212 = vadd.f32 %v801, %v1196
    %v1213 = vadd.f32 %v803, %v1198
    %v1214 = vadd.f32 %v576, %v971
    %v1215 = vadd.f32 %v578, %v973
    %v1216 = vadd.f32 %v653, %v1048
    %v1217 = vadd.f32 %v655, %v1050
    %v1218 = vadd.f32 %v730, %v1125
    %v1219 = vadd.f32 %v732, %v1127
    %v1220 = vadd.f32 %v807, %v1202
    %v1221 = vadd.f32 %v809, %v1204
    %s1222 = scalar_lea.vmem %s1, 48
    %v1223 = vld [vmem:[%s1222] sm:$0xff]
    %v1224 = vld [vmem:[%s1222 + $0x8] sm:$0xff]
    %v1225 = vld [vmem:[%s0] sm:$0xff]
    %v1226 = vld [vmem:[%s0 + $0x8] sm:$0xff]
    %v1229 = vcombine.high %v1225, %v1225
    %v1231 = vunpack.c.l.s4 1983009808
    %v1232 = vunpack.c.0.s8 %v1231
    %v1233 = vlaneseq
    %v1234 = vshrl.u32 %v1233, 7
    %v1235 = vsub.s32 %v1232, %v1234
    %v1236 = vrot.slane %v1225, %v1235
    %v1238 = vunpack.c.l.s4 1983009808
    %v1239 = vunpack.c.0.s8 %v1238
    %v1240 = vlaneseq
    %v1241 = vshrl.u32 %v1240, 7
    %v1242 = vsub.s32 %v1239, %v1241
    %v1243 = vrot.slane %v1229, %v1242
    %v1244 = vcombine.high %v1236, %v1236
    %v1245 = vcombine.high %v1243, %v1243
    %v1246 = vcombine.high %v1226, %v1226
    %v1248 = vunpack.c.l.s4 1983009808
    %v1249 = vunpack.c.0.s8 %v1248
    %v1250 = vlaneseq
    %v1251 = vshrl.u32 %v1250, 7
    %v1252 = vsub.s32 %v1249, %v1251
    %v1253 = vrot.slane %v1226, %v1252
    %v1255 = vunpack.c.l.s4 1983009808
    %v1256 = vunpack.c.0.s8 %v1255
    %v1257 = vlaneseq
    %v1258 = vshrl.u32 %v1257, 7
    %v1259 = vsub.s32 %v1256, %v1258
    %v1260 = vrot.slane %v1246, %v1259
    %v1261 = vcombine.high %v1253, %v1253
    %v1262 = vcombine.high %v1260, %v1260
    %1263 = vrot.lane.b32.xlu0 %v1236, 97
    %v1264 = vpop.permute.xlu0 %1263
    %1265 = vrot.lane.b32.xlu0 %v1244, 97
    %v1266 = vpop.permute.xlu0 %1265
    %1267 = vrot.lane.b32.xlu0 %v1243, 97
    %v1268 = vpop.permute.xlu0 %1267
    %1269 = vrot.lane.b32.xlu0 %v1245, 97
    %v1270 = vpop.permute.xlu0 %1269
    %1271 = vrot.lane.b32.xlu0 %v1253, 97
    %v1272 = vpop.permute.xlu0 %1271
    %1273 = vrot.lane.b32.xlu0 %v1261, 97
    %v1274 = vpop.permute.xlu0 %1273
    %1275 = vrot.lane.b32.xlu0 %v1260, 97
    %v1276 = vpop.permute.xlu0 %1275
    %1277 = vrot.lane.b32.xlu0 %v1262, 97
    %v1278 = vpop.permute.xlu0 %1277
    %vm1279 = vcmask 793600
    %v1280 = vsel %vm1279, %v1264, %v1266
    %v1281 = vsel %vm1279, %v1266, %v1268
    %v1282 = vsel %vm1279, %v1268, %v1270
    %v1283 = vsel %vm1279, %v1270, %v1272
    %v1284 = vsel %vm1279, %v1272, %v1274
    %v1285 = vsel %vm1279, %v1274, %v1276
    %v1286 = vsel %vm1279, %v1276, %v1278
    %v1288 = vsel %vm125, %v1223, 0
    %v1291 = vsel %vm125, %v1224, 0
    %v1293 = vsel %vm132, %v1280, 0
    %v1295 = vsel %vm132, %v1281, 0
    %v1297 = vsel %vm132, %v1282, 0
    %v1299 = vsel %vm132, %v1283, 0
    %v1301 = vsel %vm132, %v1284, 0
    %v1303 = vsel %vm132, %v1285, 0
    %v1305 = vsel %vm132, %v1286, 0
    %v1307 = vsel %vm132, %v1278, 0
    %1309 = vmatprep.subr.mxu0 %v1295
    %1310 = vmatpush1.msra.mxu0 %v1293
    %1311 = vmatprep.subr.mxu0 0.0
    %1312 = vmatpush1.msra.mxu0 0.0
    %1313 = vmatprep.subr.mxu0 0.0
    %1314 = vmatpush1.msra.mxu0 0.0
    %1315 = vmatprep.subr.mxu0 0.0
    %1316 = vmatpush1.msra.mxu0 0.0
    %1317 = vmatprep.subr.mxu0 0.0
    %1318 = vmatpush1.msra.mxu0 0.0
    %1319 = vmatprep.subr.mxu0 0.0
    %1320 = vmatpush1.msra.mxu0 0.0
    %1321 = vmatprep.subr.mxu0 0.0
    %1322 = vmatpush1.msra.mxu0 0.0
    %1323 = vmatprep.subr.mxu0 0.0
    %1324 = vmatpush1.msra.mxu0 0.0
    %1325 = vmatprep.subr.mxu0 0.0
    %1326 = vmatpush1.msra.mxu0 0.0
    %1327 = vmatprep.subr.mxu0 0.0
    %1328 = vmatpush1.msra.mxu0 0.0
    %1329 = vmatprep.subr.mxu0 0.0
    %1330 = vmatpush1.msra.mxu0 0.0
    %1331 = vmatprep.subr.mxu0 0.0
    %1332 = vmatpush1.msra.mxu0 0.0
    %1333 = vmatprep.subr.mxu0 0.0
    %1334 = vmatpush1.msra.mxu0 0.0
    %1335 = vmatprep.subr.mxu0 0.0
    %1336 = vmatpush1.msra.mxu0 0.0
    %1337 = vmatprep.subr.mxu0 0.0
    %1338 = vmatpush1.msra.mxu0 0.0
    %1339 = vmatprep.subr.mxu0 0.0
    %1340 = vmatpush1.msra.mxu0 0.0
    %1341 = vmatprep.subr.mxu0 0.0
    %1342 = vmatpush1.msra.mxu0 0.0
    %1343 = vmatprep.subr.mxu0 0.0
    %1344 = vmatpush1.msra.mxu0 0.0
    %1345 = vmatprep.subr.mxu0 0.0
    %1346 = vmatpush1.msra.mxu0 0.0
    %1347 = vmatprep.subr.mxu0 0.0
    %1348 = vmatpush1.msra.mxu0 0.0
    %1349 = vmatprep.subr.mxu0 0.0
    %1350 = vmatpush1.msra.mxu0 0.0
    %1351 = vmatprep.subr.mxu0 0.0
    %1352 = vmatpush1.msra.mxu0 0.0
    %1353 = vmatprep.subr.mxu0 0.0
    %1354 = vmatpush1.msra.mxu0 0.0
    %1355 = vmatprep.subr.mxu0 0.0
    %1356 = vmatpush1.msra.mxu0 0.0
    %1357 = vmatprep.subr.mxu0 0.0
    %1358 = vmatpush1.msra.mxu0 0.0
    %1359 = vmatprep.subr.mxu0 0.0
    %1360 = vmatpush1.msra.mxu0 0.0
    %1361 = vmatprep.subr.mxu0 0.0
    %1362 = vmatpush1.msra.mxu0 0.0
    %1363 = vmatprep.subr.mxu0 0.0
    %1364 = vmatpush1.msra.mxu0 0.0
    %1365 = vmatprep.subr.mxu0 0.0
    %1366 = vmatpush1.msra.mxu0 0.0
    %1367 = vmatprep.subr.mxu0 0.0
    %1368 = vmatpush1.msra.mxu0 0.0
    %1369 = vmatprep.subr.mxu0 0.0
    %1370 = vmatpush1.msra.mxu0 0.0
    %1371 = vmatprep.subr.mxu0 0.0
    %1372 = vmatpush1.msra.mxu0 0.0
    %1373 = vmatprep.mubr.f32.mxu0 0.0
    %1374 = vmatmul.mubr.f32.gmra.mrb[0].mxu0 %v1288
    %v1375 = vpop.f32.mrb[0].mxu0
    %v1376 = vadd.f32 0.0, %v1375
    %v1377 = vpop.f32.mrb[0].mxu0
    %v1378 = vadd.f32 0.0, %v1377
    %1379 = vmatprep.mubr.f32.mxu0 0.0
    %1380 = vmatmul.mubr.f32.gmra.mrb[0].mxu0 %v1291
    %v1381 = vpop.f32.mrb[0].mxu0
    %v1382 = vadd.f32 0.0, %v1381
    %v1383 = vpop.f32.mrb[0].mxu0
    %v1384 = vadd.f32 0.0, %v1383
    %1385 = vdwg.mxu0
    %1386 = vmatprep.subr.mxu0 %v1299
    %1387 = vmatpush1.msra.mxu0 %v1297
    %1388 = vmatprep.subr.mxu0 0.0
    %1389 = vmatpush1.msra.mxu0 0.0
    %1390 = vmatprep.subr.mxu0 0.0
    %1391 = vmatpush1.msra.mxu0 0.0
    %1392 = vmatprep.subr.mxu0 0.0
    %1393 = vmatpush1.msra.mxu0 0.0
    %1394 = vmatprep.subr.mxu0 0.0
    %1395 = vmatpush1.msra.mxu0 0.0
    %1396 = vmatprep.subr.mxu0 0.0
    %1397 = vmatpush1.msra.mxu0 0.0
    %1398 = vmatprep.subr.mxu0 0.0
    %1399 = vmatpush1.msra.mxu0 0.0
    %1400 = vmatprep.subr.mxu0 0.0
    %1401 = vmatpush1.msra.mxu0 0.0
    %1402 = vmatprep.subr.mxu0 0.0
    %1403 = vmatpush1.msra.mxu0 0.0
    %1404 = vmatprep.subr.mxu0 0.0
    %1405 = vmatpush1.msra.mxu0 0.0
    %1406 = vmatprep.subr.mxu0 0.0
    %1407 = vmatpush1.msra.mxu0 0.0
    %1408 = vmatprep.subr.mxu0 0.0
    %1409 = vmatpush1.msra.mxu0 0.0
    %1410 = vmatprep.subr.mxu0 0.0
    %1411 = vmatpush1.msra.mxu0 0.0
    %1412 = vmatprep.subr.mxu0 0.0
    %1413 = vmatpush1.msra.mxu0 0.0
    %1414 = vmatprep.subr.mxu0 0.0
    %1415 = vmatpush1.msra.mxu0 0.0
    %1416 = vmatprep.subr.mxu0 0.0
    %1417 = vmatpush1.msra.mxu0 0.0
    %1418 = vmatprep.subr.mxu0 0.0
    %1419 = vmatpush1.msra.mxu0 0.0
    %1420 = vmatprep.subr.mxu0 0.0
    %1421 = vmatpush1.msra.mxu0 0.0
    %1422 = vmatprep.subr.mxu0 0.0
    %1423 = vmatpush1.msra.mxu0 0.0
    %1424 = vmatprep.subr.mxu0 0.0
    %1425 = vmatpush1.msra.mxu0 0.0
    %1426 = vmatprep.subr.mxu0 0.0
    %1427 = vmatpush1.msra.mxu0 0.0
    %1428 = vmatprep.subr.mxu0 0.0
    %1429 = vmatpush1.msra.mxu0 0.0
    %1430 = vmatprep.subr.mxu0 0.0
    %1431 = vmatpush1.msra.mxu0 0.0
    %1432 = vmatprep.subr.mxu0 0.0
    %1433 = vmatpush1.msra.mxu0 0.0
    %1434 = vmatprep.subr.mxu0 0.0
    %1435 = vmatpush1.msra.mxu0 0.0
    %1436 = vmatprep.subr.mxu0 0.0
    %1437 = vmatpush1.msra.mxu0 0.0
    %1438 = vmatprep.subr.mxu0 0.0
    %1439 = vmatpush1.msra.mxu0 0.0
    %1440 = vmatprep.subr.mxu0 0.0
    %1441 = vmatpush1.msra.mxu0 0.0
    %1442 = vmatprep.subr.mxu0 0.0
    %1443 = vmatpush1.msra.mxu0 0.0
    %1444 = vmatprep.subr.mxu0 0.0
    %1445 = vmatpush1.msra.mxu0 0.0
    %1446 = vmatprep.subr.mxu0 0.0
    %1447 = vmatpush1.msra.mxu0 0.0
    %1448 = vmatprep.subr.mxu0 0.0
    %1449 = vmatpush1.msra.mxu0 0.0
    %1450 = vmatprep.mubr.f32.mxu0 0.0
    %1451 = vmatmul.mubr.f32.gmra.mrb[0].mxu0 %v1288
    %v1452 = vpop.f32.mrb[0].mxu0
    %v1453 = vadd.f32 0.0, %v1452
    %v1454 = vpop.f32.mrb[0].mxu0
    %v1455 = vadd.f32 0.0, %v1454
    %1456 = vmatprep.mubr.f32.mxu0 0.0
    %1457 = vmatmul.mubr.f32.gmra.mrb[0].mxu0 %v1291
    %v1458 = vpop.f32.mrb[0].mxu0
    %v1459 = vadd.f32 0.0, %v1458
    %v1460 = vpop.f32.mrb[0].mxu0
    %v1461 = vadd.f32 0.0, %v1460
    %1462 = vdwg.mxu0
    %1463 = vmatprep.subr.mxu0 %v1303
    %1464 = vmatpush1.msra.mxu0 %v1301
    %1465 = vmatprep.subr.mxu0 0.0
    %1466 = vmatpush1.msra.mxu0 0.0
    %1467 = vmatprep.subr.mxu0 0.0
    %1468 = vmatpush1.msra.mxu0 0.0
    %1469 = vmatprep.subr.mxu0 0.0
    %1470 = vmatpush1.msra.mxu0 0.0
    %1471 = vmatprep.subr.mxu0 0.0
    %1472 = vmatpush1.msra.mxu0 0.0
    %1473 = vmatprep.subr.mxu0 0.0
    %1474 = vmatpush1.msra.mxu0 0.0
    %1475 = vmatprep.subr.mxu0 0.0
    %1476 = vmatpush1.msra.mxu0 0.0
    %1477 = vmatprep.subr.mxu0 0.0
    %1478 = vmatpush1.msra.mxu0 0.0
    %1479 = vmatprep.subr.mxu0 0.0
    %1480 = vmatpush1.msra.mxu0 0.0
    %1481 = vmatprep.subr.mxu0 0.0
    %1482 = vmatpush1.msra.mxu0 0.0
    %1483 = vmatprep.subr.mxu0 0.0
    %1484 = vmatpush1.msra.mxu0 0.0
    %1485 = vmatprep.subr.mxu0 0.0
    %1486 = vmatpush1.msra.mxu0 0.0
    %1487 = vmatprep.subr.mxu0 0.0
    %1488 = vmatpush1.msra.mxu0 0.0
    %1489 = vmatprep.subr.mxu0 0.0
    %1490 = vmatpush1.msra.mxu0 0.0
    %1491 = vmatprep.subr.mxu0 0.0
    %1492 = vmatpush1.msra.mxu0 0.0
    %1493 = vmatprep.subr.mxu0 0.0
    %1494 = vmatpush1.msra.mxu0 0.0
    %1495 = vmatprep.subr.mxu0 0.0
    %1496 = vmatpush1.msra.mxu0 0.0
    %1497 = vmatprep.subr.mxu0 0.0
    %1498 = vmatpush1.msra.mxu0 0.0
    %1499 = vmatprep.subr.mxu0 0.0
    %1500 = vmatpush1.msra.mxu0 0.0
    %1501 = vmatprep.subr.mxu0 0.0
    %1502 = vmatpush1.msra.mxu0 0.0
    %1503 = vmatprep.subr.mxu0 0.0
    %1504 = vmatpush1.msra.mxu0 0.0
    %1505 = vmatprep.subr.mxu0 0.0
    %1506 = vmatpush1.msra.mxu0 0.0
    %1507 = vmatprep.subr.mxu0 0.0
    %1508 = vmatpush1.msra.mxu0 0.0
    %1509 = vmatprep.subr.mxu0 0.0
    %1510 = vmatpush1.msra.mxu0 0.0
    %1511 = vmatprep.subr.mxu0 0.0
    %1512 = vmatpush1.msra.mxu0 0.0
    %1513 = vmatprep.subr.mxu0 0.0
    %1514 = vmatpush1.msra.mxu0 0.0
    %1515 = vmatprep.subr.mxu0 0.0
    %1516 = vmatpush1.msra.mxu0 0.0
    %1517 = vmatprep.subr.mxu0 0.0
    %1518 = vmatpush1.msra.mxu0 0.0
    %1519 = vmatprep.subr.mxu0 0.0
    %1520 = vmatpush1.msra.mxu0 0.0
    %1521 = vmatprep.subr.mxu0 0.0
    %1522 = vmatpush1.msra.mxu0 0.0
    %1523 = vmatprep.subr.mxu0 0.0
    %1524 = vmatpush1.msra.mxu0 0.0
    %1525 = vmatprep.subr.mxu0 0.0
    %1526 = vmatpush1.msra.mxu0 0.0
    %1527 = vmatprep.mubr.f32.mxu0 0.0
    %1528 = vmatmul.mubr.f32.gmra.mrb[0].mxu0 %v1288
    %v1529 = vpop.f32.mrb[0].mxu0
    %v1530 = vadd.f32 0.0, %v1529
    %v1531 = vpop.f32.mrb[0].mxu0
    %v1532 = vadd.f32 0.0, %v1531
    %1533 = vmatprep.mubr.f32.mxu0 0.0
    %1534 = vmatmul.mubr.f32.gmra.mrb[0].mxu0 %v1291
    %v1535 = vpop.f32.mrb[0].mxu0
    %v1536 = vadd.f32 0.0, %v1535
    %v1537 = vpop.f32.mrb[0].mxu0
    %v1538 = vadd.f32 0.0, %v1537
    %1539 = vdwg.mxu0
    %1540 = vmatprep.subr.mxu0 %v1307
    %1541 = vmatpush1.msra.mxu0 %v1305
    %1542 = vmatprep.subr.mxu0 0.0
    %1543 = vmatpush1.msra.mxu0 0.0
    %1544 = vmatprep.subr.mxu0 0.0
    %1545 = vmatpush1.msra.mxu0 0.0
    %1546 = vmatprep.subr.mxu0 0.0
    %1547 = vmatpush1.msra.mxu0 0.0
    %1548 = vmatprep.subr.mxu0 0.0
    %1549 = vmatpush1.msra.mxu0 0.0
    %1550 = vmatprep.subr.mxu0 0.0
    %1551 = vmatpush1.msra.mxu0 0.0
    %1552 = vmatprep.subr.mxu0 0.0
    %1553 = vmatpush1.msra.mxu0 0.0
    %1554 = vmatprep.subr.mxu0 0.0
    %1555 = vmatpush1.msra.mxu0 0.0
    %1556 = vmatprep.subr.mxu0 0.0
    %1557 = vmatpush1.msra.mxu0 0.0
    %1558 = vmatprep.subr.mxu0 0.0
    %1559 = vmatpush1.msra.mxu0 0.0
    %1560 = vmatprep.subr.mxu0 0.0
    %1561 = vmatpush1.msra.mxu0 0.0
    %1562 = vmatprep.subr.mxu0 0.0
    %1563 = vmatpush1.msra.mxu0 0.0
    %1564 = vmatprep.subr.mxu0 0.0
    %1565 = vmatpush1.msra.mxu0 0.0
    %1566 = vmatprep.subr.mxu0 0.0
    %1567 = vmatpush1.msra.mxu0 0.0
    %1568 = vmatprep.subr.mxu0 0.0
    %1569 = vmatpush1.msra.mxu0 0.0
    %1570 = vmatprep.subr.mxu0 0.0
    %1571 = vmatpush1.msra.mxu0 0.0
    %1572 = vmatprep.subr.mxu0 0.0
    %1573 = vmatpush1.msra.mxu0 0.0
    %1574 = vmatprep.subr.mxu0 0.0
    %1575 = vmatpush1.msra.mxu0 0.0
    %1576 = vmatprep.subr.mxu0 0.0
    %1577 = vmatpush1.msra.mxu0 0.0
    %1578 = vmatprep.subr.mxu0 0.0
    %1579 = vmatpush1.msra.mxu0 0.0
    %1580 = vmatprep.subr.mxu0 0.0
    %1581 = vmatpush1.msra.mxu0 0.0
    %1582 = vmatprep.subr.mxu0 0.0
    %1583 = vmatpush1.msra.mxu0 0.0
    %1584 = vmatprep.subr.mxu0 0.0
    %1585 = vmatpush1.msra.mxu0 0.0
    %1586 = vmatprep.subr.mxu0 0.0
    %1587 = vmatpush1.msra.mxu0 0.0
    %1588 = vmatprep.subr.mxu0 0.0
    %1589 = vmatpush1.msra.mxu0 0.0
    %1590 = vmatprep.subr.mxu0 0.0
    %1591 = vmatpush1.msra.mxu0 0.0
    %1592 = vmatprep.subr.mxu0 0.0
    %1593 = vmatpush1.msra.mxu0 0.0
    %1594 = vmatprep.subr.mxu0 0.0
    %1595 = vmatpush1.msra.mxu0 0.0
    %1596 = vmatprep.subr.mxu0 0.0
    %1597 = vmatpush1.msra.mxu0 0.0
    %1598 = vmatprep.subr.mxu0 0.0
    %1599 = vmatpush1.msra.mxu0 0.0
    %1600 = vmatprep.subr.mxu0 0.0
    %1601 = vmatpush1.msra.mxu0 0.0
    %1602 = vmatprep.subr.mxu0 0.0
    %1603 = vmatpush1.msra.mxu0 0.0
    %1604 = vmatprep.mubr.f32.mxu0 0.0
    %1605 = vmatmul.mubr.f32.gmra.mrb[0].mxu0 %v1288
    %v1606 = vpop.f32.mrb[0].mxu0
    %v1607 = vadd.f32 0.0, %v1606
    %v1608 = vpop.f32.mrb[0].mxu0
    %v1609 = vadd.f32 0.0, %v1608
    %1610 = vmatprep.mubr.f32.mxu0 0.0
    %1611 = vmatmul.mubr.f32.gmra.mrb[0].mxu0 %v1291
    %v1612 = vpop.f32.mrb[0].mxu0
    %v1613 = vadd.f32 0.0, %v1612
    %v1614 = vpop.f32.mrb[0].mxu0
    %v1615 = vadd.f32 0.0, %v1614
    %1616 = vdwg.mxu0
    %v1617 = vadd.f32 %v1206, %v1376
    %v1618 = vadd.f32 %v1207, %v1378
    %v1619 = vadd.f32 %v1208, %v1453
    %v1620 = vadd.f32 %v1209, %v1455
    %v1621 = vadd.f32 %v1210, %v1530
    %v1622 = vadd.f32 %v1211, %v1532
    %v1623 = vadd.f32 %v1212, %v1607
    %v1624 = vadd.f32 %v1213, %v1609
    %v1625 = vadd.f32 %v1214, %v1382
    %v1626 = vadd.f32 %v1215, %v1384
    %v1627 = vadd.f32 %v1216, %v1459
    %v1628 = vadd.f32 %v1217, %v1461
    %v1629 = vadd.f32 %v1218, %v1536
    %v1630 = vadd.f32 %v1219, %v1538
    %v1631 = vadd.f32 %v1220, %v1613
    %v1632 = vadd.f32 %v1221, %v1615
    %s1633 = scalar_lea.vmem %s1, 64
    %v1634 = vld [vmem:[%s1633] sm:$0xff]
    %v1635 = vld [vmem:[%s1633 + $0x8] sm:$0xff]
    %v1636 = vld [vmem:[%s0] sm:$0xff]
    %v1637 = vld [vmem:[%s0 + $0x8] sm:$0xff]
    %v1640 = vcombine.high %v1636, %v1636
    %v1642 = vunpack.c.l.s4 1983009808
    %v1643 = vunpack.c.0.s8 %v1642
    %v1644 = vlaneseq
    %v1645 = vshrl.u32 %v1644, 7
    %v1646 = vsub.s32 %v1643, %v1645
    %v1647 = vrot.slane %v1636, %v1646
    %v1649 = vunpack.c.l.s4 1983009808
    %v1650 = vunpack.c.0.s8 %v1649
    %v1651 = vlaneseq
    %v1652 = vshrl.u32 %v1651, 7
    %v1653 = vsub.s32 %v1650, %v1652
    %v1654 = vrot.slane %v1640, %v1653
    %v1655 = vcombine.high %v1647, %v1647
    %v1656 = vcombine.high %v1654, %v1654
    %v1657 = vcombine.high %v1637, %v1637
    %v1659 = vunpack.c.l.s4 1983009808
    %v1660 = vunpack.c.0.s8 %v1659
    %v1661 = vlaneseq
    %v1662 = vshrl.u32 %v1661, 7
    %v1663 = vsub.s32 %v1660, %v1662
    %v1664 = vrot.slane %v1637, %v1663
    %v1666 = vunpack.c.l.s4 1983009808
    %v1667 = vunpack.c.0.s8 %v1666
    %v1668 = vlaneseq
    %v1669 = vshrl.u32 %v1668, 7
    %v1670 = vsub.s32 %v1667, %v1669
    %v1671 = vrot.slane %v1657, %v1670
    %v1672 = vcombine.high %v1664, %v1664
    %v1673 = vcombine.high %v1671, %v1671
    %1674 = vrot.lane.b32.xlu0 %v1647, 96
    %v1675 = vpop.permute.xlu0 %1674
    %1676 = vrot.lane.b32.xlu0 %v1655, 96
    %v1677 = vpop.permute.xlu0 %1676
    %1678 = vrot.lane.b32.xlu0 %v1654, 96
    %v1679 = vpop.permute.xlu0 %1678
    %1680 = vrot.lane.b32.xlu0 %v1656, 96
    %v1681 = vpop.permute.xlu0 %1680
    %1682 = vrot.lane.b32.xlu0 %v1664, 96
    %v1683 = vpop.permute.xlu0 %1682
    %1684 = vrot.lane.b32.xlu0 %v1672, 96
    %v1685 = vpop.permute.xlu0 %1684
    %1686 = vrot.lane.b32.xlu0 %v1671, 96
    %v1687 = vpop.permute.xlu0 %1686
    %1688 = vrot.lane.b32.xlu0 %v1673, 96
    %v1689 = vpop.permute.xlu0 %1688
    %vm1690 = vcmask 785408
    %v1691 = vsel %vm1690, %v1675, %v1677
    %v1692 = vsel %vm1690, %v1677, %v1679
    %v1693 = vsel %vm1690, %v1679, %v1681
    %v1694 = vsel %vm1690, %v1681, %v1683
    %v1695 = vsel %vm1690, %v1683, %v1685
    %v1696 = vsel %vm1690, %v1685, %v1687
    %v1697 = vsel %vm1690, %v1687, %v1689
    %v1699 = vsel %vm125, %v1634, 0
    %v1702 = vsel %vm125, %v1635, 0
    %v1704 = vsel %vm132, %v1691, 0
    %v1706 = vsel %vm132, %v1692, 0
    %v1708 = vsel %vm132, %v1693, 0
    %v1710 = vsel %vm132, %v1694, 0
    %v1712 = vsel %vm132, %v1695, 0
    %v1714 = vsel %vm132, %v1696, 0
    %v1716 = vsel %vm132, %v1697, 0
    %v1718 = vsel %vm132, %v1689, 0
    %1720 = vmatprep.subr.mxu0 %v1706
    %1721 = vmatpush1.msra.mxu0 %v1704
    %1722 = vmatprep.subr.mxu0 0.0
    %1723 = vmatpush1.msra.mxu0 0.0
    %1724 = vmatprep.subr.mxu0 0.0
    %1725 = vmatpush1.msra.mxu0 0.0
    %1726 = vmatprep.subr.mxu0 0.0
    %1727 = vmatpush1.msra.mxu0 0.0
    %1728 = vmatprep.subr.mxu0 0.0
    %1729 = vmatpush1.msra.mxu0 0.0
    %1730 = vmatprep.subr.mxu0 0.0
    %1731 = vmatpush1.msra.mxu0 0.0
    %1732 = vmatprep.subr.mxu0 0.0
    %1733 = vmatpush1.msra.mxu0 0.0
    %1734 = vmatprep.subr.mxu0 0.0
    %1735 = vmatpush1.msra.mxu0 0.0
    %1736 = vmatprep.subr.mxu0 0.0
    %1737 = vmatpush1.msra.mxu0 0.0
    %1738 = vmatprep.subr.mxu0 0.0
    %1739 = vmatpush1.msra.mxu0 0.0
    %1740 = vmatprep.subr.mxu0 0.0
    %1741 = vmatpush1.msra.mxu0 0.0
    %1742 = vmatprep.subr.mxu0 0.0
    %1743 = vmatpush1.msra.mxu0 0.0
    %1744 = vmatprep.subr.mxu0 0.0
    %1745 = vmatpush1.msra.mxu0 0.0
    %1746 = vmatprep.subr.mxu0 0.0
    %1747 = vmatpush1.msra.mxu0 0.0
    %1748 = vmatprep.subr.mxu0 0.0
    %1749 = vmatpush1.msra.mxu0 0.0
    %1750 = vmatprep.subr.mxu0 0.0
    %1751 = vmatpush1.msra.mxu0 0.0
    %1752 = vmatprep.subr.mxu0 0.0
    %1753 = vmatpush1.msra.mxu0 0.0
    %1754 = vmatprep.subr.mxu0 0.0
    %1755 = vmatpush1.msra.mxu0 0.0
    %1756 = vmatprep.subr.mxu0 0.0
    %1757 = vmatpush1.msra.mxu0 0.0
    %1758 = vmatprep.subr.mxu0 0.0
    %1759 = vmatpush1.msra.mxu0 0.0
    %1760 = vmatprep.subr.mxu0 0.0
    %1761 = vmatpush1.msra.mxu0 0.0
    %1762 = vmatprep.subr.mxu0 0.0
    %1763 = vmatpush1.msra.mxu0 0.0
    %1764 = vmatprep.subr.mxu0 0.0
    %1765 = vmatpush1.msra.mxu0 0.0
    %1766 = vmatprep.subr.mxu0 0.0
    %1767 = vmatpush1.msra.mxu0 0.0
    %1768 = vmatprep.subr.mxu0 0.0
    %1769 = vmatpush1.msra.mxu0 0.0
    %1770 = vmatprep.subr.mxu0 0.0
    %1771 = vmatpush1.msra.mxu0 0.0
    %1772 = vmatprep.subr.mxu0 0.0
    %1773 = vmatpush1.msra.mxu0 0.0
    %1774 = vmatprep.subr.mxu0 0.0
    %1775 = vmatpush1.msra.mxu0 0.0
    %1776 = vmatprep.subr.mxu0 0.0
    %1777 = vmatpush1.msra.mxu0 0.0
    %1778 = vmatprep.subr.mxu0 0.0
    %1779 = vmatpush1.msra.mxu0 0.0
    %1780 = vmatprep.subr.mxu0 0.0
    %1781 = vmatpush1.msra.mxu0 0.0
    %1782 = vmatprep.subr.mxu0 0.0
    %1783 = vmatpush1.msra.mxu0 0.0
    %1784 = vmatprep.mubr.f32.mxu0 0.0
    %1785 = vmatmul.mubr.f32.gmra.mrb[0].mxu0 %v1699
    %v1786 = vpop.f32.mrb[0].mxu0
    %v1787 = vadd.f32 0.0, %v1786
    %v1788 = vpop.f32.mrb[0].mxu0
    %v1789 = vadd.f32 0.0, %v1788
    %1790 = vmatprep.mubr.f32.mxu0 0.0
    %1791 = vmatmul.mubr.f32.gmra.mrb[0].mxu0 %v1702
    %v1792 = vpop.f32.mrb[0].mxu0
    %v1793 = vadd.f32 0.0, %v1792
    %v1794 = vpop.f32.mrb[0].mxu0
    %v1795 = vadd.f32 0.0, %v1794
    %1796 = vdwg.mxu0
    %1797 = vmatprep.subr.mxu0 %v1710
    %1798 = vmatpush1.msra.mxu0 %v1708
    %1799 = vmatprep.subr.mxu0 0.0
    %1800 = vmatpush1.msra.mxu0 0.0
    %1801 = vmatprep.subr.mxu0 0.0
    %1802 = vmatpush1.msra.mxu0 0.0
    %1803 = vmatprep.subr.mxu0 0.0
    %1804 = vmatpush1.msra.mxu0 0.0
    %1805 = vmatprep.subr.mxu0 0.0
    %1806 = vmatpush1.msra.mxu0 0.0
    %1807 = vmatprep.subr.mxu0 0.0
    %1808 = vmatpush1.msra.mxu0 0.0
    %1809 = vmatprep.subr.mxu0 0.0
    %1810 = vmatpush1.msra.mxu0 0.0
    %1811 = vmatprep.subr.mxu0 0.0
    %1812 = vmatpush1.msra.mxu0 0.0
    %1813 = vmatprep.subr.mxu0 0.0
    %1814 = vmatpush1.msra.mxu0 0.0
    %1815 = vmatprep.subr.mxu0 0.0
    %1816 = vmatpush1.msra.mxu0 0.0
    %1817 = vmatprep.subr.mxu0 0.0
    %1818 = vmatpush1.msra.mxu0 0.0
    %1819 = vmatprep.subr.mxu0 0.0
    %1820 = vmatpush1.msra.mxu0 0.0
    %1821 = vmatprep.subr.mxu0 0.0
    %1822 = vmatpush1.msra.mxu0 0.0
    %1823 = vmatprep.subr.mxu0 0.0
    %1824 = vmatpush1.msra.mxu0 0.0
    %1825 = vmatprep.subr.mxu0 0.0
    %1826 = vmatpush1.msra.mxu0 0.0
    %1827 = vmatprep.subr.mxu0 0.0
    %1828 = vmatpush1.msra.mxu0 0.0
    %1829 = vmatprep.subr.mxu0 0.0
    %1830 = vmatpush1.msra.mxu0 0.0
    %1831 = vmatprep.subr.mxu0 0.0
    %1832 = vmatpush1.msra.mxu0 0.0
    %1833 = vmatprep.subr.mxu0 0.0
    %1834 = vmatpush1.msra.mxu0 0.0
    %1835 = vmatprep.subr.mxu0 0.0
    %1836 = vmatpush1.msra.mxu0 0.0
    %1837 = vmatprep.subr.mxu0 0.0
    %1838 = vmatpush1.msra.mxu0 0.0
    %1839 = vmatprep.subr.mxu0 0.0
    %1840 = vmatpush1.msra.mxu0 0.0
    %1841 = vmatprep.subr.mxu0 0.0
    %1842 = vmatpush1.msra.mxu0 0.0
    %1843 = vmatprep.subr.mxu0 0.0
    %1844 = vmatpush1.msra.mxu0 0.0
    %1845 = vmatprep.subr.mxu0 0.0
    %1846 = vmatpush1.msra.mxu0 0.0
    %1847 = vmatprep.subr.mxu0 0.0
    %1848 = vmatpush1.msra.mxu0 0.0
    %1849 = vmatprep.subr.mxu0 0.0
    %1850 = vmatpush1.msra.mxu0 0.0
    %1851 = vmatprep.subr.mxu0 0.0
    %1852 = vmatpush1.msra.mxu0 0.0
    %1853 = vmatprep.subr.mxu0 0.0
    %1854 = vmatpush1.msra.mxu0 0.0
    %1855 = vmatprep.subr.mxu0 0.0
    %1856 = vmatpush1.msra.mxu0 0.0
    %1857 = vmatprep.subr.mxu0 0.0
    %1858 = vmatpush1.msra.mxu0 0.0
    %1859 = vmatprep.subr.mxu0 0.0
    %1860 = vmatpush1.msra.mxu0 0.0
    %1861 = vmatprep.mubr.f32.mxu0 0.0
    %1862 = vmatmul.mubr.f32.gmra.mrb[0].mxu0 %v1699
    %v1863 = vpop.f32.mrb[0].mxu0
    %v1864 = vadd.f32 0.0, %v1863
    %v1865 = vpop.f32.mrb[0].mxu0
    %v1866 = vadd.f32 0.0, %v1865
    %1867 = vmatprep.mubr.f32.mxu0 0.0
    %1868 = vmatmul.mubr.f32.gmra.mrb[0].mxu0 %v1702
    %v1869 = vpop.f32.mrb[0].mxu0
    %v1870 = vadd.f32 0.0, %v1869
    %v1871 = vpop.f32.mrb[0].mxu0
    %v1872 = vadd.f32 0.0, %v1871
    %1873 = vdwg.mxu0
    %1874 = vmatprep.subr.mxu0 %v1714
    %1875 = vmatpush1.msra.mxu0 %v1712
    %1876 = vmatprep.subr.mxu0 0.0
    %1877 = vmatpush1.msra.mxu0 0.0
    %1878 = vmatprep.subr.mxu0 0.0
    %1879 = vmatpush1.msra.mxu0 0.0
    %1880 = vmatprep.subr.mxu0 0.0
    %1881 = vmatpush1.msra.mxu0 0.0
    %1882 = vmatprep.subr.mxu0 0.0
    %1883 = vmatpush1.msra.mxu0 0.0
    %1884 = vmatprep.subr.mxu0 0.0
    %1885 = vmatpush1.msra.mxu0 0.0
    %1886 = vmatprep.subr.mxu0 0.0
    %1887 = vmatpush1.msra.mxu0 0.0
    %1888 = vmatprep.subr.mxu0 0.0
    %1889 = vmatpush1.msra.mxu0 0.0
    %1890 = vmatprep.subr.mxu0 0.0
    %1891 = vmatpush1.msra.mxu0 0.0
    %1892 = vmatprep.subr.mxu0 0.0
    %1893 = vmatpush1.msra.mxu0 0.0
    %1894 = vmatprep.subr.mxu0 0.0
    %1895 = vmatpush1.msra.mxu0 0.0
    %1896 = vmatprep.subr.mxu0 0.0
    %1897 = vmatpush1.msra.mxu0 0.0
    %1898 = vmatprep.subr.mxu0 0.0
    %1899 = vmatpush1.msra.mxu0 0.0
    %1900 = vmatprep.subr.mxu0 0.0
    %1901 = vmatpush1.msra.mxu0 0.0
    %1902 = vmatprep.subr.mxu0 0.0
    %1903 = vmatpush1.msra.mxu0 0.0
    %1904 = vmatprep.subr.mxu0 0.0
    %1905 = vmatpush1.msra.mxu0 0.0
    %1906 = vmatprep.subr.mxu0 0.0
    %1907 = vmatpush1.msra.mxu0 0.0
    %1908 = vmatprep.subr.mxu0 0.0
    %1909 = vmatpush1.msra.mxu0 0.0
    %1910 = vmatprep.subr.mxu0 0.0
    %1911 = vmatpush1.msra.mxu0 0.0
    %1912 = vmatprep.subr.mxu0 0.0
    %1913 = vmatpush1.msra.mxu0 0.0
    %1914 = vmatprep.subr.mxu0 0.0
    %1915 = vmatpush1.msra.mxu0 0.0
    %1916 = vmatprep.subr.mxu0 0.0
    %1917 = vmatpush1.msra.mxu0 0.0
    %1918 = vmatprep.subr.mxu0 0.0
    %1919 = vmatpush1.msra.mxu0 0.0
    %1920 = vmatprep.subr.mxu0 0.0
    %1921 = vmatpush1.msra.mxu0 0.0
    %1922 = vmatprep.subr.mxu0 0.0
    %1923 = vmatpush1.msra.mxu0 0.0
    %1924 = vmatprep.subr.mxu0 0.0
    %1925 = vmatpush1.msra.mxu0 0.0
    %1926 = vmatprep.subr.mxu0 0.0
    %1927 = vmatpush1.msra.mxu0 0.0
    %1928 = vmatprep.subr.mxu0 0.0
    %1929 = vmatpush1.msra.mxu0 0.0
    %1930 = vmatprep.subr.mxu0 0.0
    %1931 = vmatpush1.msra.mxu0 0.0
    %1932 = vmatprep.subr.mxu0 0.0
    %1933 = vmatpush1.msra.mxu0 0.0
    %1934 = vmatprep.subr.mxu0 0.0
    %1935 = vmatpush1.msra.mxu0 0.0
    %1936 = vmatprep.subr.mxu0 0.0
    %1937 = vmatpush1.msra.mxu0 0.0
    %1938 = vmatprep.mubr.f32.mxu0 0.0
    %1939 = vmatmul.mubr.f32.gmra.mrb[0].mxu0 %v1699
    %v1940 = vpop.f32.mrb[0].mxu0
    %v1941 = vadd.f32 0.0, %v1940
    %v1942 = vpop.f32.mrb[0].mxu0
    %v1943 = vadd.f32 0.0, %v1942
    %1944 = vmatprep.mubr.f32.mxu0 0.0
    %1945 = vmatmul.mubr.f32.gmra.mrb[0].mxu0 %v1702
    %v1946 = vpop.f32.mrb[0].mxu0
    %v1947 = vadd.f32 0.0, %v1946
    %v1948 = vpop.f32.mrb[0].mxu0
    %v1949 = vadd.f32 0.0, %v1948
    %1950 = vdwg.mxu0
    %1951 = vmatprep.subr.mxu0 %v1718
    %1952 = vmatpush1.msra.mxu0 %v1716
    %1953 = vmatprep.subr.mxu0 0.0
    %1954 = vmatpush1.msra.mxu0 0.0
    %1955 = vmatprep.subr.mxu0 0.0
    %1956 = vmatpush1.msra.mxu0 0.0
    %1957 = vmatprep.subr.mxu0 0.0
    %1958 = vmatpush1.msra.mxu0 0.0
    %1959 = vmatprep.subr.mxu0 0.0
    %1960 = vmatpush1.msra.mxu0 0.0
    %1961 = vmatprep.subr.mxu0 0.0
    %1962 = vmatpush1.msra.mxu0 0.0
    %1963 = vmatprep.subr.mxu0 0.0
    %1964 = vmatpush1.msra.mxu0 0.0
    %1965 = vmatprep.subr.mxu0 0.0
    %1966 = vmatpush1.msra.mxu0 0.0
    %1967 = vmatprep.subr.mxu0 0.0
    %1968 = vmatpush1.msra.mxu0 0.0
    %1969 = vmatprep.subr.mxu0 0.0
    %1970 = vmatpush1.msra.mxu0 0.0
    %1971 = vmatprep.subr.mxu0 0.0
    %1972 = vmatpush1.msra.mxu0 0.0
    %1973 = vmatprep.subr.mxu0 0.0
    %1974 = vmatpush1.msra.mxu0 0.0
    %1975 = vmatprep.subr.mxu0 0.0
    %1976 = vmatpush1.msra.mxu0 0.0
    %1977 = vmatprep.subr.mxu0 0.0
    %1978 = vmatpush1.msra.mxu0 0.0
    %1979 = vmatprep.subr.mxu0 0.0
    %1980 = vmatpush1.msra.mxu0 0.0
    %1981 = vmatprep.subr.mxu0 0.0
    %1982 = vmatpush1.msra.mxu0 0.0
    %1983 = vmatprep.subr.mxu0 0.0
    %1984 = vmatpush1.msra.mxu0 0.0
    %1985 = vmatprep.subr.mxu0 0.0
    %1986 = vmatpush1.msra.mxu0 0.0
    %1987 = vmatprep.subr.mxu0 0.0
    %1988 = vmatpush1.msra.mxu0 0.0
    %1989 = vmatprep.subr.mxu0 0.0
    %1990 = vmatpush1.msra.mxu0 0.0
    %1991 = vmatprep.subr.mxu0 0.0
    %1992 = vmatpush1.msra.mxu0 0.0
    %1993 = vmatprep.subr.mxu0 0.0
    %1994 = vmatpush1.msra.mxu0 0.0
    %1995 = vmatprep.subr.mxu0 0.0
    %1996 = vmatpush1.msra.mxu0 0.0
    %1997 = vmatprep.subr.mxu0 0.0
    %1998 = vmatpush1.msra.mxu0 0.0
    %1999 = vmatprep.subr.mxu0 0.0
    %2000 = vmatpush1.msra.mxu0 0.0
    %2001 = vmatprep.subr.mxu0 0.0
    %2002 = vmatpush1.msra.mxu0 0.0
    %2003 = vmatprep.subr.mxu0 0.0
    %2004 = vmatpush1.msra.mxu0 0.0
    %2005 = vmatprep.subr.mxu0 0.0
    %2006 = vmatpush1.msra.mxu0 0.0
    %2007 = vmatprep.subr.mxu0 0.0
    %2008 = vmatpush1.msra.mxu0 0.0
    %2009 = vmatprep.subr.mxu0 0.0
    %2010 = vmatpush1.msra.mxu0 0.0
    %2011 = vmatprep.subr.mxu0 0.0
    %2012 = vmatpush1.msra.mxu0 0.0
    %2013 = vmatprep.subr.mxu0 0.0
    %2014 = vmatpush1.msra.mxu0 0.0
    %2015 = vmatprep.mubr.f32.mxu0 0.0
    %2016 = vmatmul.mubr.f32.gmra.mrb[0].mxu0 %v1699
    %v2017 = vpop.f32.mrb[0].mxu0
    %v2018 = vadd.f32 0.0, %v2017
    %v2019 = vpop.f32.mrb[0].mxu0
    %v2020 = vadd.f32 0.0, %v2019
    %2021 = vmatprep.mubr.f32.mxu0 0.0
    %2022 = vmatmul.mubr.f32.gmra.mrb[0].mxu0 %v1702
    %v2023 = vpop.f32.mrb[0].mxu0
    %v2024 = vadd.f32 0.0, %v2023
    %v2025 = vpop.f32.mrb[0].mxu0
    %v2026 = vadd.f32 0.0, %v2025
    %2027 = vdwg.mxu0
    %v2028 = vadd.f32 %v1617, %v1787
    %v2029 = vadd.f32 %v1618, %v1789
    %v2030 = vadd.f32 %v1619, %v1864
    %v2031 = vadd.f32 %v1620, %v1866
    %v2032 = vadd.f32 %v1621, %v1941
    %v2033 = vadd.f32 %v1622, %v1943
    %v2034 = vadd.f32 %v1623, %v2018
    %v2035 = vadd.f32 %v1624, %v2020
    %v2036 = vadd.f32 %v1625, %v1793
    %v2037 = vadd.f32 %v1626, %v1795
    %v2038 = vadd.f32 %v1627, %v1870
    %v2039 = vadd.f32 %v1628, %v1872
    %v2040 = vadd.f32 %v1629, %v1947
    %v2041 = vadd.f32 %v1630, %v1949
    %v2042 = vadd.f32 %v1631, %v2024
    %v2043 = vadd.f32 %v1632, %v2026
    %s2044 = scalar_lea.vmem %s1, 80
    %v2045 = vld [vmem:[%s2044] sm:$0xff]
    %v2046 = vld [vmem:[%s2044 + $0x8] sm:$0xff]
    %v2047 = vld [vmem:[%s0] sm:$0xff]
    %v2048 = vld [vmem:[%s0 + $0x8] sm:$0xff]
    %v2051 = vcombine.high %v2047, %v2047
    %v2053 = vunpack.c.l.s4 1983009808
    %v2054 = vunpack.c.0.s8 %v2053
    %v2055 = vlaneseq
    %v2056 = vshrl.u32 %v2055, 7
    %v2057 = vsub.s32 %v2054, %v2056
    %v2058 = vrot.slane %v2047, %v2057
    %v2060 = vunpack.c.l.s4 1983009808
    %v2061 = vunpack.c.0.s8 %v2060
    %v2062 = vlaneseq
    %v2063 = vshrl.u32 %v2062, 7
    %v2064 = vsub.s32 %v2061, %v2063
    %v2065 = vrot.slane %v2051, %v2064
    %v2066 = vcombine.high %v2058, %v2058
    %v2067 = vcombine.high %v2065, %v2065
    %v2068 = vcombine.high %v2048, %v2048
    %v2070 = vunpack.c.l.s4 1983009808
    %v2071 = vunpack.c.0.s8 %v2070
    %v2072 = vlaneseq
    %v2073 = vshrl.u32 %v2072, 7
    %v2074 = vsub.s32 %v2071, %v2073
    %v2075 = vrot.slane %v2048, %v2074
    %v2077 = vunpack.c.l.s4 1983009808
    %v2078 = vunpack.c.0.s8 %v2077
    %v2079 = vlaneseq
    %v2080 = vshrl.u32 %v2079, 7
    %v2081 = vsub.s32 %v2078, %v2080
    %v2082 = vrot.slane %v2068, %v2081
    %v2083 = vcombine.high %v2075, %v2075
    %v2084 = vcombine.high %v2082, %v2082
    %2085 = vrot.lane.b32.xlu0 %v2058, 95
    %v2086 = vpop.permute.xlu0 %2085
    %2087 = vrot.lane.b32.xlu0 %v2066, 95
    %v2088 = vpop.permute.xlu0 %2087
    %2089 = vrot.lane.b32.xlu0 %v2065, 95
    %v2090 = vpop.permute.xlu0 %2089
    %2091 = vrot.lane.b32.xlu0 %v2067, 95
    %v2092 = vpop.permute.xlu0 %2091
    %2093 = vrot.lane.b32.xlu0 %v2075, 95
    %v2094 = vpop.permute.xlu0 %2093
    %2095 = vrot.lane.b32.xlu0 %v2083, 95
    %v2096 = vpop.permute.xlu0 %2095
    %2097 = vrot.lane.b32.xlu0 %v2082, 95
    %v2098 = vpop.permute.xlu0 %2097
    %2099 = vrot.lane.b32.xlu0 %v2084, 95
    %v2100 = vpop.permute.xlu0 %2099
    %vm2101 = vcmask 777216
    %v2102 = vsel %vm2101, %v2086, %v2088
    %v2103 = vsel %vm2101, %v2088, %v2090
    %v2104 = vsel %vm2101, %v2090, %v2092
    %v2105 = vsel %vm2101, %v2092, %v2094
    %v2106 = vsel %vm2101, %v2094, %v2096
    %v2107 = vsel %vm2101, %v2096, %v2098
    %v2108 = vsel %vm2101, %v2098, %v2100
    %v2110 = vsel %vm125, %v2045, 0
    %v2113 = vsel %vm125, %v2046, 0
    %v2115 = vsel %vm132, %v2102, 0
    %v2117 = vsel %vm132, %v2103, 0
    %v2119 = vsel %vm132, %v2104, 0
    %v2121 = vsel %vm132, %v2105, 0
    %v2123 = vsel %vm132, %v2106, 0
    %v2125 = vsel %vm132, %v2107, 0
    %v2127 = vsel %vm132, %v2108, 0
    %v2129 = vsel %vm132, %v2100, 0
    %2131 = vmatprep.subr.mxu0 %v2117
    %2132 = vmatpush1.msra.mxu0 %v2115
    %2133 = vmatprep.subr.mxu0 0.0
    %2134 = vmatpush1.msra.mxu0 0.0
    %2135 = vmatprep.subr.mxu0 0.0
    %2136 = vmatpush1.msra.mxu0 0.0
    %2137 = vmatprep.subr.mxu0 0.0
    %2138 = vmatpush1.msra.mxu0 0.0
    %2139 = vmatprep.subr.mxu0 0.0
    %2140 = vmatpush1.msra.mxu0 0.0
    %2141 = vmatprep.subr.mxu0 0.0
    %2142 = vmatpush1.msra.mxu0 0.0
    %2143 = vmatprep.subr.mxu0 0.0
    %2144 = vmatpush1.msra.mxu0 0.0
    %2145 = vmatprep.subr.mxu0 0.0
    %2146 = vmatpush1.msra.mxu0 0.0
    %2147 = vmatprep.subr.mxu0 0.0
    %2148 = vmatpush1.msra.mxu0 0.0
    %2149 = vmatprep.subr.mxu0 0.0
    %2150 = vmatpush1.msra.mxu0 0.0
    %2151 = vmatprep.subr.mxu0 0.0
    %2152 = vmatpush1.msra.mxu0 0.0
    %2153 = vmatprep.subr.mxu0 0.0
    %2154 = vmatpush1.msra.mxu0 0.0
    %2155 = vmatprep.subr.mxu0 0.0
    %2156 = vmatpush1.msra.mxu0 0.0
    %2157 = vmatprep.subr.mxu0 0.0
    %2158 = vmatpush1.msra.mxu0 0.0
    %2159 = vmatprep.subr.mxu0 0.0
    %2160 = vmatpush1.msra.mxu0 0.0
    %2161 = vmatprep.subr.mxu0 0.0
    %2162 = vmatpush1.msra.mxu0 0.0
    %2163 = vmatprep.subr.mxu0 0.0
    %2164 = vmatpush1.msra.mxu0 0.0
    %2165 = vmatprep.subr.mxu0 0.0
    %2166 = vmatpush1.msra.mxu0 0.0
    %2167 = vmatprep.subr.mxu0 0.0
    %2168 = vmatpush1.msra.mxu0 0.0
    %2169 = vmatprep.subr.mxu0 0.0
    %2170 = vmatpush1.msra.mxu0 0.0
    %2171 = vmatprep.subr.mxu0 0.0
    %2172 = vmatpush1.msra.mxu0 0.0
    %2173 = vmatprep.subr.mxu0 0.0
    %2174 = vmatpush1.msra.mxu0 0.0
    %2175 = vmatprep.subr.mxu0 0.0
    %2176 = vmatpush1.msra.mxu0 0.0
    %2177 = vmatprep.subr.mxu0 0.0
    %2178 = vmatpush1.msra.mxu0 0.0
    %2179 = vmatprep.subr.mxu0 0.0
    %2180 = vmatpush1.msra.mxu0 0.0
    %2181 = vmatprep.subr.mxu0 0.0
    %2182 = vmatpush1.msra.mxu0 0.0
    %2183 = vmatprep.subr.mxu0 0.0
    %2184 = vmatpush1.msra.mxu0 0.0
    %2185 = vmatprep.subr.mxu0 0.0
    %2186 = vmatpush1.msra.mxu0 0.0
    %2187 = vmatprep.subr.mxu0 0.0
    %2188 = vmatpush1.msra.mxu0 0.0
    %2189 = vmatprep.subr.mxu0 0.0
    %2190 = vmatpush1.msra.mxu0 0.0
    %2191 = vmatprep.subr.mxu0 0.0
    %2192 = vmatpush1.msra.mxu0 0.0
    %2193 = vmatprep.subr.mxu0 0.0
    %2194 = vmatpush1.msra.mxu0 0.0
    %2195 = vmatprep.mubr.f32.mxu0 0.0
    %2196 = vmatmul.mubr.f32.gmra.mrb[0].mxu0 %v2110
    %v2197 = vpop.f32.mrb[0].mxu0
    %v2198 = vadd.f32 0.0, %v2197
    %v2199 = vpop.f32.mrb[0].mxu0
    %v2200 = vadd.f32 0.0, %v2199
    %2201 = vmatprep.mubr.f32.mxu0 0.0
    %2202 = vmatmul.mubr.f32.gmra.mrb[0].mxu0 %v2113
    %v2203 = vpop.f32.mrb[0].mxu0
    %v2204 = vadd.f32 0.0, %v2203
    %v2205 = vpop.f32.mrb[0].mxu0
    %v2206 = vadd.f32 0.0, %v2205
    %2207 = vdwg.mxu0
    %2208 = vmatprep.subr.mxu0 %v2121
    %2209 = vmatpush1.msra.mxu0 %v2119
    %2210 = vmatprep.subr.mxu0 0.0
    %2211 = vmatpush1.msra.mxu0 0.0
    %2212 = vmatprep.subr.mxu0 0.0
    %2213 = vmatpush1.msra.mxu0 0.0
    %2214 = vmatprep.subr.mxu0 0.0
    %2215 = vmatpush1.msra.mxu0 0.0
    %2216 = vmatprep.subr.mxu0 0.0
    %2217 = vmatpush1.msra.mxu0 0.0
    %2218 = vmatprep.subr.mxu0 0.0
    %2219 = vmatpush1.msra.mxu0 0.0
    %2220 = vmatprep.subr.mxu0 0.0
    %2221 = vmatpush1.msra.mxu0 0.0
    %2222 = vmatprep.subr.mxu0 0.0
    %2223 = vmatpush1.msra.mxu0 0.0
    %2224 = vmatprep.subr.mxu0 0.0
    %2225 = vmatpush1.msra.mxu0 0.0
    %2226 = vmatprep.subr.mxu0 0.0
    %2227 = vmatpush1.msra.mxu0 0.0
    %2228 = vmatprep.subr.mxu0 0.0
    %2229 = vmatpush1.msra.mxu0 0.0
    %2230 = vmatprep.subr.mxu0 0.0
    %2231 = vmatpush1.msra.mxu0 0.0
    %2232 = vmatprep.subr.mxu0 0.0
    %2233 = vmatpush1.msra.mxu0 0.0
    %2234 = vmatprep.subr.mxu0 0.0
    %2235 = vmatpush1.msra.mxu0 0.0
    %2236 = vmatprep.subr.mxu0 0.0
    %2237 = vmatpush1.msra.mxu0 0.0
    %2238 = vmatprep.subr.mxu0 0.0
    %2239 = vmatpush1.msra.mxu0 0.0
    %2240 = vmatprep.subr.mxu0 0.0
    %2241 = vmatpush1.msra.mxu0 0.0
    %2242 = vmatprep.subr.mxu0 0.0
    %2243 = vmatpush1.msra.mxu0 0.0
    %2244 = vmatprep.subr.mxu0 0.0
    %2245 = vmatpush1.msra.mxu0 0.0
    %2246 = vmatprep.subr.mxu0 0.0
    %2247 = vmatpush1.msra.mxu0 0.0
    %2248 = vmatprep.subr.mxu0 0.0
    %2249 = vmatpush1.msra.mxu0 0.0
    %2250 = vmatprep.subr.mxu0 0.0
    %2251 = vmatpush1.msra.mxu0 0.0
    %2252 = vmatprep.subr.mxu0 0.0
    %2253 = vmatpush1.msra.mxu0 0.0
    %2254 = vmatprep.subr.mxu0 0.0
    %2255 = vmatpush1.msra.mxu0 0.0
    %2256 = vmatprep.subr.mxu0 0.0
    %2257 = vmatpush1.msra.mxu0 0.0
    %2258 = vmatprep.subr.mxu0 0.0
    %2259 = vmatpush1.msra.mxu0 0.0
    %2260 = vmatprep.subr.mxu0 0.0
    %2261 = vmatpush1.msra.mxu0 0.0
    %2262 = vmatprep.subr.mxu0 0.0
    %2263 = vmatpush1.msra.mxu0 0.0
    %2264 = vmatprep.subr.mxu0 0.0
    %2265 = vmatpush1.msra.mxu0 0.0
    %2266 = vmatprep.subr.mxu0 0.0
    %2267 = vmatpush1.msra.mxu0 0.0
    %2268 = vmatprep.subr.mxu0 0.0
    %2269 = vmatpush1.msra.mxu0 0.0
    %2270 = vmatprep.subr.mxu0 0.0
    %2271 = vmatpush1.msra.mxu0 0.0
    %2272 = vmatprep.mubr.f32.mxu0 0.0
    %2273 = vmatmul.mubr.f32.gmra.mrb[0].mxu0 %v2110
    %v2274 = vpop.f32.mrb[0].mxu0
    %v2275 = vadd.f32 0.0, %v2274
    %v2276 = vpop.f32.mrb[0].mxu0
    %v2277 = vadd.f32 0.0, %v2276
    %2278 = vmatprep.mubr.f32.mxu0 0.0
    %2279 = vmatmul.mubr.f32.gmra.mrb[0].mxu0 %v2113
    %v2280 = vpop.f32.mrb[0].mxu0
    %v2281 = vadd.f32 0.0, %v2280
    %v2282 = vpop.f32.mrb[0].mxu0
    %v2283 = vadd.f32 0.0, %v2282
    %2284 = vdwg.mxu0
    %2285 = vmatprep.subr.mxu0 %v2125
    %2286 = vmatpush1.msra.mxu0 %v2123
    %2287 = vmatprep.subr.mxu0 0.0
    %2288 = vmatpush1.msra.mxu0 0.0
    %2289 = vmatprep.subr.mxu0 0.0
    %2290 = vmatpush1.msra.mxu0 0.0
    %2291 = vmatprep.subr.mxu0 0.0
    %2292 = vmatpush1.msra.mxu0 0.0
    %2293 = vmatprep.subr.mxu0 0.0
    %2294 = vmatpush1.msra.mxu0 0.0
    %2295 = vmatprep.subr.mxu0 0.0
    %2296 = vmatpush1.msra.mxu0 0.0
    %2297 = vmatprep.subr.mxu0 0.0
    %2298 = vmatpush1.msra.mxu0 0.0
    %2299 = vmatprep.subr.mxu0 0.0
    %2300 = vmatpush1.msra.mxu0 0.0
    %2301 = vmatprep.subr.mxu0 0.0
    %2302 = vmatpush1.msra.mxu0 0.0
    %2303 = vmatprep.subr.mxu0 0.0
    %2304 = vmatpush1.msra.mxu0 0.0
    %2305 = vmatprep.subr.mxu0 0.0
    %2306 = vmatpush1.msra.mxu0 0.0
    %2307 = vmatprep.subr.mxu0 0.0
    %2308 = vmatpush1.msra.mxu0 0.0
    %2309 = vmatprep.subr.mxu0 0.0
    %2310 = vmatpush1.msra.mxu0 0.0
    %2311 = vmatprep.subr.mxu0 0.0
    %2312 = vmatpush1.msra.mxu0 0.0
    %2313 = vmatprep.subr.mxu0 0.0
    %2314 = vmatpush1.msra.mxu0 0.0
    %2315 = vmatprep.subr.mxu0 0.0
    %2316 = vmatpush1.msra.mxu0 0.0
    %2317 = vmatprep.subr.mxu0 0.0
    %2318 = vmatpush1.msra.mxu0 0.0
    %2319 = vmatprep.subr.mxu0 0.0
    %2320 = vmatpush1.msra.mxu0 0.0
    %2321 = vmatprep.subr.mxu0 0.0
    %2322 = vmatpush1.msra.mxu0 0.0
    %2323 = vmatprep.subr.mxu0 0.0
    %2324 = vmatpush1.msra.mxu0 0.0
    %2325 = vmatprep.subr.mxu0 0.0
    %2326 = vmatpush1.msra.mxu0 0.0
    %2327 = vmatprep.subr.mxu0 0.0
    %2328 = vmatpush1.msra.mxu0 0.0
    %2329 = vmatprep.subr.mxu0 0.0
    %2330 = vmatpush1.msra.mxu0 0.0
    %2331 = vmatprep.subr.mxu0 0.0
    %2332 = vmatpush1.msra.mxu0 0.0
    %2333 = vmatprep.subr.mxu0 0.0
    %2334 = vmatpush1.msra.mxu0 0.0
    %2335 = vmatprep.subr.mxu0 0.0
    %2336 = vmatpush1.msra.mxu0 0.0
    %2337 = vmatprep.subr.mxu0 0.0
    %2338 = vmatpush1.msra.mxu0 0.0
    %2339 = vmatprep.subr.mxu0 0.0
    %2340 = vmatpush1.msra.mxu0 0.0
    %2341 = vmatprep.subr.mxu0 0.0
    %2342 = vmatpush1.msra.mxu0 0.0
    %2343 = vmatprep.subr.mxu0 0.0
    %2344 = vmatpush1.msra.mxu0 0.0
    %2345 = vmatprep.subr.mxu0 0.0
    %2346 = vmatpush1.msra.mxu0 0.0
    %2347 = vmatprep.subr.mxu0 0.0
    %2348 = vmatpush1.msra.mxu0 0.0
    %2349 = vmatprep.mubr.f32.mxu0 0.0
    %2350 = vmatmul.mubr.f32.gmra.mrb[0].mxu0 %v2110
    %v2351 = vpop.f32.mrb[0].mxu0
    %v2352 = vadd.f32 0.0, %v2351
    %v2353 = vpop.f32.mrb[0].mxu0
    %v2354 = vadd.f32 0.0, %v2353
    %2355 = vmatprep.mubr.f32.mxu0 0.0
    %2356 = vmatmul.mubr.f32.gmra.mrb[0].mxu0 %v2113
    %v2357 = vpop.f32.mrb[0].mxu0
    %v2358 = vadd.f32 0.0, %v2357
    %v2359 = vpop.f32.mrb[0].mxu0
    %v2360 = vadd.f32 0.0, %v2359
    %2361 = vdwg.mxu0
    %2362 = vmatprep.subr.mxu0 %v2129
    %2363 = vmatpush1.msra.mxu0 %v2127
    %2364 = vmatprep.subr.mxu0 0.0
    %2365 = vmatpush1.msra.mxu0 0.0
    %2366 = vmatprep.subr.mxu0 0.0
    %2367 = vmatpush1.msra.mxu0 0.0
    %2368 = vmatprep.subr.mxu0 0.0
    %2369 = vmatpush1.msra.mxu0 0.0
    %2370 = vmatprep.subr.mxu0 0.0
    %2371 = vmatpush1.msra.mxu0 0.0
    %2372 = vmatprep.subr.mxu0 0.0
    %2373 = vmatpush1.msra.mxu0 0.0
    %2374 = vmatprep.subr.mxu0 0.0
    %2375 = vmatpush1.msra.mxu0 0.0
    %2376 = vmatprep.subr.mxu0 0.0
    %2377 = vmatpush1.msra.mxu0 0.0
    %2378 = vmatprep.subr.mxu0 0.0
    %2379 = vmatpush1.msra.mxu0 0.0
    %2380 = vmatprep.subr.mxu0 0.0
    %2381 = vmatpush1.msra.mxu0 0.0
    %2382 = vmatprep.subr.mxu0 0.0
    %2383 = vmatpush1.msra.mxu0 0.0
    %2384 = vmatprep.subr.mxu0 0.0
    %2385 = vmatpush1.msra.mxu0 0.0
    %2386 = vmatprep.subr.mxu0 0.0
    %2387 = vmatpush1.msra.mxu0 0.0
    %2388 = vmatprep.subr.mxu0 0.0
    %2389 = vmatpush1.msra.mxu0 0.0
    %2390 = vmatprep.subr.mxu0 0.0
    %2391 = vmatpush1.msra.mxu0 0.0
    %2392 = vmatprep.subr.mxu0 0.0
    %2393 = vmatpush1.msra.mxu0 0.0
    %2394 = vmatprep.subr.mxu0 0.0
    %2395 = vmatpush1.msra.mxu0 0.0
    %2396 = vmatprep.subr.mxu0 0.0
    %2397 = vmatpush1.msra.mxu0 0.0
    %2398 = vmatprep.subr.mxu0 0.0
    %2399 = vmatpush1.msra.mxu0 0.0
    %2400 = vmatprep.subr.mxu0 0.0
    %2401 = vmatpush1.msra.mxu0 0.0
    %2402 = vmatprep.subr.mxu0 0.0
    %2403 = vmatpush1.msra.mxu0 0.0
    %2404 = vmatprep.subr.mxu0 0.0
    %2405 = vmatpush1.msra.mxu0 0.0
    %2406 = vmatprep.subr.mxu0 0.0
    %2407 = vmatpush1.msra.mxu0 0.0
    %2408 = vmatprep.subr.mxu0 0.0
    %2409 = vmatpush1.msra.mxu0 0.0
    %2410 = vmatprep.subr.mxu0 0.0
    %2411 = vmatpush1.msra.mxu0 0.0
    %2412 = vmatprep.subr.mxu0 0.0
    %2413 = vmatpush1.msra.mxu0 0.0
    %2414 = vmatprep.subr.mxu0 0.0
    %2415 = vmatpush1.msra.mxu0 0.0
    %2416 = vmatprep.subr.mxu0 0.0
    %2417 = vmatpush1.msra.mxu0 0.0
    %2418 = vmatprep.subr.mxu0 0.0
    %2419 = vmatpush1.msra.mxu0 0.0
    %2420 = vmatprep.subr.mxu0 0.0
    %2421 = vmatpush1.msra.mxu0 0.0
    %2422 = vmatprep.subr.mxu0 0.0
    %2423 = vmatpush1.msra.mxu0 0.0
    %2424 = vmatprep.subr.mxu0 0.0
    %2425 = vmatpush1.msra.mxu0 0.0
    %2426 = vmatprep.mubr.f32.mxu0 0.0
    %2427 = vmatmul.mubr.f32.gmra.mrb[0].mxu0 %v2110
    %v2428 = vpop.f32.mrb[0].mxu0
    %v2429 = vadd.f32 0.0, %v2428
    %v2430 = vpop.f32.mrb[0].mxu0
    %v2431 = vadd.f32 0.0, %v2430
    %2432 = vmatprep.mubr.f32.mxu0 0.0
    %2433 = vmatmul.mubr.f32.gmra.mrb[0].mxu0 %v2113
    %v2434 = vpop.f32.mrb[0].mxu0
    %v2435 = vadd.f32 0.0, %v2434
    %v2436 = vpop.f32.mrb[0].mxu0
    %v2437 = vadd.f32 0.0, %v2436
    %2438 = vdwg.mxu0
    %v2439 = vadd.f32 %v2028, %v2198
    %v2440 = vadd.f32 %v2029, %v2200
    %v2441 = vadd.f32 %v2030, %v2275
    %v2442 = vadd.f32 %v2031, %v2277
    %v2443 = vadd.f32 %v2032, %v2352
    %v2444 = vadd.f32 %v2033, %v2354
    %v2445 = vadd.f32 %v2034, %v2429
    %v2446 = vadd.f32 %v2035, %v2431
    %v2447 = vadd.f32 %v2036, %v2204
    %v2448 = vadd.f32 %v2037, %v2206
    %v2449 = vadd.f32 %v2038, %v2281
    %v2450 = vadd.f32 %v2039, %v2283
    %v2451 = vadd.f32 %v2040, %v2358
    %v2452 = vadd.f32 %v2041, %v2360
    %v2453 = vadd.f32 %v2042, %v2435
    %v2454 = vadd.f32 %v2043, %v2437
    %s2455 = scalar_lea.vmem %s1, 96
    %v2456 = vld [vmem:[%s2455] sm:$0xff]
    %v2457 = vld [vmem:[%s2455 + $0x8] sm:$0xff]
    %v2458 = vld [vmem:[%s0] sm:$0xff]
    %v2459 = vld [vmem:[%s0 + $0x8] sm:$0xff]
    %v2462 = vcombine.high %v2458, %v2458
    %v2464 = vunpack.c.l.s4 1983009808
    %v2465 = vunpack.c.0.s8 %v2464
    %v2466 = vlaneseq
    %v2467 = vshrl.u32 %v2466, 7
    %v2468 = vsub.s32 %v2465, %v2467
    %v2469 = vrot.slane %v2458, %v2468
    %v2471 = vunpack.c.l.s4 1983009808
    %v2472 = vunpack.c.0.s8 %v2471
    %v2473 = vlaneseq
    %v2474 = vshrl.u32 %v2473, 7
    %v2475 = vsub.s32 %v2472, %v2474
    %v2476 = vrot.slane %v2462, %v2475
    %v2477 = vcombine.high %v2469, %v2469
    %v2478 = vcombine.high %v2476, %v2476
    %v2479 = vcombine.high %v2459, %v2459
    %v2481 = vunpack.c.l.s4 1983009808
    %v2482 = vunpack.c.0.s8 %v2481
    %v2483 = vlaneseq
    %v2484 = vshrl.u32 %v2483, 7
    %v2485 = vsub.s32 %v2482, %v2484
    %v2486 = vrot.slane %v2459, %v2485
    %v2488 = vunpack.c.l.s4 1983009808
    %v2489 = vunpack.c.0.s8 %v2488
    %v2490 = vlaneseq
    %v2491 = vshrl.u32 %v2490, 7
    %v2492 = vsub.s32 %v2489, %v2491
    %v2493 = vrot.slane %v2479, %v2492
    %v2494 = vcombine.high %v2486, %v2486
    %v2495 = vcombine.high %v2493, %v2493
    %2496 = vrot.lane.b32.xlu0 %v2469, 67
    %v2497 = vpop.permute.xlu0 %2496
    %2498 = vrot.lane.b32.xlu0 %v2477, 67
    %v2499 = vpop.permute.xlu0 %2498
    %2500 = vrot.lane.b32.xlu0 %v2476, 67
    %v2501 = vpop.permute.xlu0 %2500
    %2502 = vrot.lane.b32.xlu0 %v2478, 67
    %v2503 = vpop.permute.xlu0 %2502
    %2504 = vrot.lane.b32.xlu0 %v2486, 67
    %v2505 = vpop.permute.xlu0 %2504
    %2506 = vrot.lane.b32.xlu0 %v2494, 67
    %v2507 = vpop.permute.xlu0 %2506
    %2508 = vrot.lane.b32.xlu0 %v2493, 67
    %v2509 = vpop.permute.xlu0 %2508
    %2510 = vrot.lane.b32.xlu0 %v2495, 67
    %v2511 = vpop.permute.xlu0 %2510
    %vm2512 = vcmask 547840
    %v2513 = vsel %vm2512, %v2497, %v2499
    %v2514 = vsel %vm2512, %v2499, %v2501
    %v2515 = vsel %vm2512, %v2501, %v2503
    %v2516 = vsel %vm2512, %v2503, %v2505
    %v2517 = vsel %vm2512, %v2505, %v2507
    %v2518 = vsel %vm2512, %v2507, %v2509
    %v2519 = vsel %vm2512, %v2509, %v2511
    %v2521 = vsel %vm125, %v2456, 0
    %v2524 = vsel %vm125, %v2457, 0
    %v2526 = vsel %vm132, %v2513, 0
    %v2528 = vsel %vm132, %v2514, 0
    %v2530 = vsel %vm132, %v2515, 0
    %v2532 = vsel %vm132, %v2516, 0
    %v2534 = vsel %vm132, %v2517, 0
    %v2536 = vsel %vm132, %v2518, 0
    %v2538 = vsel %vm132, %v2519, 0
    %v2540 = vsel %vm132, %v2511, 0
    %2542 = vmatprep.subr.mxu0 %v2528
    %2543 = vmatpush1.msra.mxu0 %v2526
    %2544 = vmatprep.subr.mxu0 0.0
    %2545 = vmatpush1.msra.mxu0 0.0
    %2546 = vmatprep.subr.mxu0 0.0
    %2547 = vmatpush1.msra.mxu0 0.0
    %2548 = vmatprep.subr.mxu0 0.0
    %2549 = vmatpush1.msra.mxu0 0.0
    %2550 = vmatprep.subr.mxu0 0.0
    %2551 = vmatpush1.msra.mxu0 0.0
    %2552 = vmatprep.subr.mxu0 0.0
    %2553 = vmatpush1.msra.mxu0 0.0
    %2554 = vmatprep.subr.mxu0 0.0
    %2555 = vmatpush1.msra.mxu0 0.0
    %2556 = vmatprep.subr.mxu0 0.0
    %2557 = vmatpush1.msra.mxu0 0.0
    %2558 = vmatprep.subr.mxu0 0.0
    %2559 = vmatpush1.msra.mxu0 0.0
    %2560 = vmatprep.subr.mxu0 0.0
    %2561 = vmatpush1.msra.mxu0 0.0
    %2562 = vmatprep.subr.mxu0 0.0
    %2563 = vmatpush1.msra.mxu0 0.0
    %2564 = vmatprep.subr.mxu0 0.0
    %2565 = vmatpush1.msra.mxu0 0.0
    %2566 = vmatprep.subr.mxu0 0.0
    %2567 = vmatpush1.msra.mxu0 0.0
    %2568 = vmatprep.subr.mxu0 0.0
    %2569 = vmatpush1.msra.mxu0 0.0
    %2570 = vmatprep.subr.mxu0 0.0
    %2571 = vmatpush1.msra.mxu0 0.0
    %2572 = vmatprep.subr.mxu0 0.0
    %2573 = vmatpush1.msra.mxu0 0.0
    %2574 = vmatprep.subr.mxu0 0.0
    %2575 = vmatpush1.msra.mxu0 0.0
    %2576 = vmatprep.subr.mxu0 0.0
    %2577 = vmatpush1.msra.mxu0 0.0
    %2578 = vmatprep.subr.mxu0 0.0
    %2579 = vmatpush1.msra.mxu0 0.0
    %2580 = vmatprep.subr.mxu0 0.0
    %2581 = vmatpush1.msra.mxu0 0.0
    %2582 = vmatprep.subr.mxu0 0.0
    %2583 = vmatpush1.msra.mxu0 0.0
    %2584 = vmatprep.subr.mxu0 0.0
    %2585 = vmatpush1.msra.mxu0 0.0
    %2586 = vmatprep.subr.mxu0 0.0
    %2587 = vmatpush1.msra.mxu0 0.0
    %2588 = vmatprep.subr.mxu0 0.0
    %2589 = vmatpush1.msra.mxu0 0.0
    %2590 = vmatprep.subr.mxu0 0.0
    %2591 = vmatpush1.msra.mxu0 0.0
    %2592 = vmatprep.subr.mxu0 0.0
    %2593 = vmatpush1.msra.mxu0 0.0
    %2594 = vmatprep.subr.mxu0 0.0
    %2595 = vmatpush1.msra.mxu0 0.0
    %2596 = vmatprep.subr.mxu0 0.0
    %2597 = vmatpush1.msra.mxu0 0.0
    %2598 = vmatprep.subr.mxu0 0.0
    %2599 = vmatpush1.msra.mxu0 0.0
    %2600 = vmatprep.subr.mxu0 0.0
    %2601 = vmatpush1.msra.mxu0 0.0
    %2602 = vmatprep.subr.mxu0 0.0
    %2603 = vmatpush1.msra.mxu0 0.0
    %2604 = vmatprep.subr.mxu0 0.0
    %2605 = vmatpush1.msra.mxu0 0.0
    %2606 = vmatprep.mubr.f32.mxu0 0.0
    %2607 = vmatmul.mubr.f32.gmra.mrb[0].mxu0 %v2521
    %v2608 = vpop.f32.mrb[0].mxu0
    %v2609 = vadd.f32 0.0, %v2608
    %v2610 = vpop.f32.mrb[0].mxu0
    %v2611 = vadd.f32 0.0, %v2610
    %2612 = vmatprep.mubr.f32.mxu0 0.0
    %2613 = vmatmul.mubr.f32.gmra.mrb[0].mxu0 %v2524
    %v2614 = vpop.f32.mrb[0].mxu0
    %v2615 = vadd.f32 0.0, %v2614
    %v2616 = vpop.f32.mrb[0].mxu0
    %v2617 = vadd.f32 0.0, %v2616
    %2618 = vdwg.mxu0
    %2619 = vmatprep.subr.mxu0 %v2532
    %2620 = vmatpush1.msra.mxu0 %v2530
    %2621 = vmatprep.subr.mxu0 0.0
    %2622 = vmatpush1.msra.mxu0 0.0
    %2623 = vmatprep.subr.mxu0 0.0
    %2624 = vmatpush1.msra.mxu0 0.0
    %2625 = vmatprep.subr.mxu0 0.0
    %2626 = vmatpush1.msra.mxu0 0.0
    %2627 = vmatprep.subr.mxu0 0.0
    %2628 = vmatpush1.msra.mxu0 0.0
    %2629 = vmatprep.subr.mxu0 0.0
    %2630 = vmatpush1.msra.mxu0 0.0
    %2631 = vmatprep.subr.mxu0 0.0
    %2632 = vmatpush1.msra.mxu0 0.0
    %2633 = vmatprep.subr.mxu0 0.0
    %2634 = vmatpush1.msra.mxu0 0.0
    %2635 = vmatprep.subr.mxu0 0.0
    %2636 = vmatpush1.msra.mxu0 0.0
    %2637 = vmatprep.subr.mxu0 0.0
    %2638 = vmatpush1.msra.mxu0 0.0
    %2639 = vmatprep.subr.mxu0 0.0
    %2640 = vmatpush1.msra.mxu0 0.0
    %2641 = vmatprep.subr.mxu0 0.0
    %2642 = vmatpush1.msra.mxu0 0.0
    %2643 = vmatprep.subr.mxu0 0.0
    %2644 = vmatpush1.msra.mxu0 0.0
    %2645 = vmatprep.subr.mxu0 0.0
    %2646 = vmatpush1.msra.mxu0 0.0
    %2647 = vmatprep.subr.mxu0 0.0
    %2648 = vmatpush1.msra.mxu0 0.0
    %2649 = vmatprep.subr.mxu0 0.0
    %2650 = vmatpush1.msra.mxu0 0.0
    %2651 = vmatprep.subr.mxu0 0.0
    %2652 = vmatpush1.msra.mxu0 0.0
    %2653 = vmatprep.subr.mxu0 0.0
    %2654 = vmatpush1.msra.mxu0 0.0
    %2655 = vmatprep.subr.mxu0 0.0
    %2656 = vmatpush1.msra.mxu0 0.0
    %2657 = vmatprep.subr.mxu0 0.0
    %2658 = vmatpush1.msra.mxu0 0.0
    %2659 = vmatprep.subr.mxu0 0.0
    %2660 = vmatpush1.msra.mxu0 0.0
    %2661 = vmatprep.subr.mxu0 0.0
    %2662 = vmatpush1.msra.mxu0 0.0
    %2663 = vmatprep.subr.mxu0 0.0
    %2664 = vmatpush1.msra.mxu0 0.0
    %2665 = vmatprep.subr.mxu0 0.0
    %2666 = vmatpush1.msra.mxu0 0.0
    %2667 = vmatprep.subr.mxu0 0.0
    %2668 = vmatpush1.msra.mxu0 0.0
    %2669 = vmatprep.subr.mxu0 0.0
    %2670 = vmatpush1.msra.mxu0 0.0
    %2671 = vmatprep.subr.mxu0 0.0
    %2672 = vmatpush1.msra.mxu0 0.0
    %2673 = vmatprep.subr.mxu0 0.0
    %2674 = vmatpush1.msra.mxu0 0.0
    %2675 = vmatprep.subr.mxu0 0.0
    %2676 = vmatpush1.msra.mxu0 0.0
    %2677 = vmatprep.subr.mxu0 0.0
    %2678 = vmatpush1.msra.mxu0 0.0
    %2679 = vmatprep.subr.mxu0 0.0
    %2680 = vmatpush1.msra.mxu0 0.0
    %2681 = vmatprep.subr.mxu0 0.0
    %2682 = vmatpush1.msra.mxu0 0.0
    %2683 = vmatprep.mubr.f32.mxu0 0.0
    %2684 = vmatmul.mubr.f32.gmra.mrb[0].mxu0 %v2521
    %v2685 = vpop.f32.mrb[0].mxu0
    %v2686 = vadd.f32 0.0, %v2685
    %v2687 = vpop.f32.mrb[0].mxu0
    %v2688 = vadd.f32 0.0, %v2687
    %2689 = vmatprep.mubr.f32.mxu0 0.0
    %2690 = vmatmul.mubr.f32.gmra.mrb[0].mxu0 %v2524
    %v2691 = vpop.f32.mrb[0].mxu0
    %v2692 = vadd.f32 0.0, %v2691
    %v2693 = vpop.f32.mrb[0].mxu0
    %v2694 = vadd.f32 0.0, %v2693
    %2695 = vdwg.mxu0
    %2696 = vmatprep.subr.mxu0 %v2536
    %2697 = vmatpush1.msra.mxu0 %v2534
    %2698 = vmatprep.subr.mxu0 0.0
    %2699 = vmatpush1.msra.mxu0 0.0
    %2700 = vmatprep.subr.mxu0 0.0
    %2701 = vmatpush1.msra.mxu0 0.0
    %2702 = vmatprep.subr.mxu0 0.0
    %2703 = vmatpush1.msra.mxu0 0.0
    %2704 = vmatprep.subr.mxu0 0.0
    %2705 = vmatpush1.msra.mxu0 0.0
    %2706 = vmatprep.subr.mxu0 0.0
    %2707 = vmatpush1.msra.mxu0 0.0
    %2708 = vmatprep.subr.mxu0 0.0
    %2709 = vmatpush1.msra.mxu0 0.0
    %2710 = vmatprep.subr.mxu0 0.0
    %2711 = vmatpush1.msra.mxu0 0.0
    %2712 = vmatprep.subr.mxu0 0.0
    %2713 = vmatpush1.msra.mxu0 0.0
    %2714 = vmatprep.subr.mxu0 0.0
    %2715 = vmatpush1.msra.mxu0 0.0
    %2716 = vmatprep.subr.mxu0 0.0
    %2717 = vmatpush1.msra.mxu0 0.0
    %2718 = vmatprep.subr.mxu0 0.0
    %2719 = vmatpush1.msra.mxu0 0.0
    %2720 = vmatprep.subr.mxu0 0.0
    %2721 = vmatpush1.msra.mxu0 0.0
    %2722 = vmatprep.subr.mxu0 0.0
    %2723 = vmatpush1.msra.mxu0 0.0
    %2724 = vmatprep.subr.mxu0 0.0
    %2725 = vmatpush1.msra.mxu0 0.0
    %2726 = vmatprep.subr.mxu0 0.0
    %2727 = vmatpush1.msra.mxu0 0.0
    %2728 = vmatprep.subr.mxu0 0.0
    %2729 = vmatpush1.msra.mxu0 0.0
    %2730 = vmatprep.subr.mxu0 0.0
    %2731 = vmatpush1.msra.mxu0 0.0
    %2732 = vmatprep.subr.mxu0 0.0
    %2733 = vmatpush1.msra.mxu0 0.0
    %2734 = vmatprep.subr.mxu0 0.0
    %2735 = vmatpush1.msra.mxu0 0.0
    %2736 = vmatprep.subr.mxu0 0.0
    %2737 = vmatpush1.msra.mxu0 0.0
    %2738 = vmatprep.subr.mxu0 0.0
    %2739 = vmatpush1.msra.mxu0 0.0
    %2740 = vmatprep.subr.mxu0 0.0
    %2741 = vmatpush1.msra.mxu0 0.0
    %2742 = vmatprep.subr.mxu0 0.0
    %2743 = vmatpush1.msra.mxu0 0.0
    %2744 = vmatprep.subr.mxu0 0.0
    %2745 = vmatpush1.msra.mxu0 0.0
    %2746 = vmatprep.subr.mxu0 0.0
    %2747 = vmatpush1.msra.mxu0 0.0
    %2748 = vmatprep.subr.mxu0 0.0
    %2749 = vmatpush1.msra.mxu0 0.0
    %2750 = vmatprep.subr.mxu0 0.0
    %2751 = vmatpush1.msra.mxu0 0.0
    %2752 = vmatprep.subr.mxu0 0.0
    %2753 = vmatpush1.msra.mxu0 0.0
    %2754 = vmatprep.subr.mxu0 0.0
    %2755 = vmatpush1.msra.mxu0 0.0
    %2756 = vmatprep.subr.mxu0 0.0
    %2757 = vmatpush1.msra.mxu0 0.0
    %2758 = vmatprep.subr.mxu0 0.0
    %2759 = vmatpush1.msra.mxu0 0.0
    %2760 = vmatprep.mubr.f32.mxu0 0.0
    %2761 = vmatmul.mubr.f32.gmra.mrb[0].mxu0 %v2521
    %v2762 = vpop.f32.mrb[0].mxu0
    %v2763 = vadd.f32 0.0, %v2762
    %v2764 = vpop.f32.mrb[0].mxu0
    %v2765 = vadd.f32 0.0, %v2764
    %2766 = vmatprep.mubr.f32.mxu0 0.0
    %2767 = vmatmul.mubr.f32.gmra.mrb[0].mxu0 %v2524
    %v2768 = vpop.f32.mrb[0].mxu0
    %v2769 = vadd.f32 0.0, %v2768
    %v2770 = vpop.f32.mrb[0].mxu0
    %v2771 = vadd.f32 0.0, %v2770
    %2772 = vdwg.mxu0
    %2773 = vmatprep.subr.mxu0 %v2540
    %2774 = vmatpush1.msra.mxu0 %v2538
    %2775 = vmatprep.subr.mxu0 0.0
    %2776 = vmatpush1.msra.mxu0 0.0
    %2777 = vmatprep.subr.mxu0 0.0
    %2778 = vmatpush1.msra.mxu0 0.0
    %2779 = vmatprep.subr.mxu0 0.0
    %2780 = vmatpush1.msra.mxu0 0.0
    %2781 = vmatprep.subr.mxu0 0.0
    %2782 = vmatpush1.msra.mxu0 0.0
    %2783 = vmatprep.subr.mxu0 0.0
    %2784 = vmatpush1.msra.mxu0 0.0
    %2785 = vmatprep.subr.mxu0 0.0
    %2786 = vmatpush1.msra.mxu0 0.0
    %2787 = vmatprep.subr.mxu0 0.0
    %2788 = vmatpush1.msra.mxu0 0.0
    %2789 = vmatprep.subr.mxu0 0.0
    %2790 = vmatpush1.msra.mxu0 0.0
    %2791 = vmatprep.subr.mxu0 0.0
    %2792 = vmatpush1.msra.mxu0 0.0
    %2793 = vmatprep.subr.mxu0 0.0
    %2794 = vmatpush1.msra.mxu0 0.0
    %2795 = vmatprep.subr.mxu0 0.0
    %2796 = vmatpush1.msra.mxu0 0.0
    %2797 = vmatprep.subr.mxu0 0.0
    %2798 = vmatpush1.msra.mxu0 0.0
    %2799 = vmatprep.subr.mxu0 0.0
    %2800 = vmatpush1.msra.mxu0 0.0
    %2801 = vmatprep.subr.mxu0 0.0
    %2802 = vmatpush1.msra.mxu0 0.0
    %2803 = vmatprep.subr.mxu0 0.0
    %2804 = vmatpush1.msra.mxu0 0.0
    %2805 = vmatprep.subr.mxu0 0.0
    %2806 = vmatpush1.msra.mxu0 0.0
    %2807 = vmatprep.subr.mxu0 0.0
    %2808 = vmatpush1.msra.mxu0 0.0
    %2809 = vmatprep.subr.mxu0 0.0
    %2810 = vmatpush1.msra.mxu0 0.0
    %2811 = vmatprep.subr.mxu0 0.0
    %2812 = vmatpush1.msra.mxu0 0.0
    %2813 = vmatprep.subr.mxu0 0.0
    %2814 = vmatpush1.msra.mxu0 0.0
    %2815 = vmatprep.subr.mxu0 0.0
    %2816 = vmatpush1.msra.mxu0 0.0
    %2817 = vmatprep.subr.mxu0 0.0
    %2818 = vmatpush1.msra.mxu0 0.0
    %2819 = vmatprep.subr.mxu0 0.0
    %2820 = vmatpush1.msra.mxu0 0.0
    %2821 = vmatprep.subr.mxu0 0.0
    %2822 = vmatpush1.msra.mxu0 0.0
    %2823 = vmatprep.subr.mxu0 0.0
    %2824 = vmatpush1.msra.mxu0 0.0
    %2825 = vmatprep.subr.mxu0 0.0
    %2826 = vmatpush1.msra.mxu0 0.0
    %2827 = vmatprep.subr.mxu0 0.0
    %2828 = vmatpush1.msra.mxu0 0.0
    %2829 = vmatprep.subr.mxu0 0.0
    %2830 = vmatpush1.msra.mxu0 0.0
    %2831 = vmatprep.subr.mxu0 0.0
    %2832 = vmatpush1.msra.mxu0 0.0
    %2833 = vmatprep.subr.mxu0 0.0
    %2834 = vmatpush1.msra.mxu0 0.0
    %2835 = vmatprep.subr.mxu0 0.0
    %2836 = vmatpush1.msra.mxu0 0.0
    %2837 = vmatprep.mubr.f32.mxu0 0.0
    %2838 = vmatmul.mubr.f32.gmra.mrb[0].mxu0 %v2521
    %v2839 = vpop.f32.mrb[0].mxu0
    %v2840 = vadd.f32 0.0, %v2839
    %v2841 = vpop.f32.mrb[0].mxu0
    %v2842 = vadd.f32 0.0, %v2841
    %2843 = vmatprep.mubr.f32.mxu0 0.0
    %2844 = vmatmul.mubr.f32.gmra.mrb[0].mxu0 %v2524
    %v2845 = vpop.f32.mrb[0].mxu0
    %v2846 = vadd.f32 0.0, %v2845
    %v2847 = vpop.f32.mrb[0].mxu0
    %v2848 = vadd.f32 0.0, %v2847
    %2849 = vdwg.mxu0
    %v2850 = vadd.f32 %v2439, %v2609
    %v2851 = vadd.f32 %v2440, %v2611
    %v2852 = vadd.f32 %v2441, %v2686
    %v2853 = vadd.f32 %v2442, %v2688
    %v2854 = vadd.f32 %v2443, %v2763
    %v2855 = vadd.f32 %v2444, %v2765
    %v2856 = vadd.f32 %v2445, %v2840
    %v2857 = vadd.f32 %v2446, %v2842
    %v2858 = vadd.f32 %v2447, %v2615
    %v2859 = vadd.f32 %v2448, %v2617
    %v2860 = vadd.f32 %v2449, %v2692
    %v2861 = vadd.f32 %v2450, %v2694
    %v2862 = vadd.f32 %v2451, %v2769
    %v2863 = vadd.f32 %v2452, %v2771
    %v2864 = vadd.f32 %v2453, %v2846
    %v2865 = vadd.f32 %v2454, %v2848
    %s2866 = scalar_lea.vmem %s1, 112
    %v2867 = vld [vmem:[%s2866] sm:$0xff]
    %v2868 = vld [vmem:[%s2866 + $0x8] sm:$0xff]
    %v2869 = vld [vmem:[%s0] sm:$0xff]
    %v2870 = vld [vmem:[%s0 + $0x8] sm:$0xff]
    %v2873 = vcombine.high %v2869, %v2869
    %v2875 = vunpack.c.l.s4 1983009808
    %v2876 = vunpack.c.0.s8 %v2875
    %v2877 = vlaneseq
    %v2878 = vshrl.u32 %v2877, 7
    %v2879 = vsub.s32 %v2876, %v2878
    %v2880 = vrot.slane %v2869, %v2879
    %v2882 = vunpack.c.l.s4 1983009808
    %v2883 = vunpack.c.0.s8 %v2882
    %v2884 = vlaneseq
    %v2885 = vshrl.u32 %v2884, 7
    %v2886 = vsub.s32 %v2883, %v2885
    %v2887 = vrot.slane %v2873, %v2886
    %v2888 = vcombine.high %v2880, %v2880
    %v2889 = vcombine.high %v2887, %v2887
    %v2890 = vcombine.high %v2870, %v2870
    %v2892 = vunpack.c.l.s4 1983009808
    %v2893 = vunpack.c.0.s8 %v2892
    %v2894 = vlaneseq
    %v2895 = vshrl.u32 %v2894, 7
    %v2896 = vsub.s32 %v2893, %v2895
    %v2897 = vrot.slane %v2870, %v2896
    %v2899 = vunpack.c.l.s4 1983009808
    %v2900 = vunpack.c.0.s8 %v2899
    %v2901 = vlaneseq
    %v2902 = vshrl.u32 %v2901, 7
    %v2903 = vsub.s32 %v2900, %v2902
    %v2904 = vrot.slane %v2890, %v2903
    %v2905 = vcombine.high %v2897, %v2897
    %v2906 = vcombine.high %v2904, %v2904
    %2907 = vrot.lane.b32.xlu0 %v2880, 66
    %v2908 = vpop.permute.xlu0 %2907
    %2909 = vrot.lane.b32.xlu0 %v2888, 66
    %v2910 = vpop.permute.xlu0 %2909
    %2911 = vrot.lane.b32.xlu0 %v2887, 66
    %v2912 = vpop.permute.xlu0 %2911
    %2913 = vrot.lane.b32.xlu0 %v2889, 66
    %v2914 = vpop.permute.xlu0 %2913
    %2915 = vrot.lane.b32.xlu0 %v2897, 66
    %v2916 = vpop.permute.xlu0 %2915
    %2917 = vrot.lane.b32.xlu0 %v2905, 66
    %v2918 = vpop.permute.xlu0 %2917
    %2919 = vrot.lane.b32.xlu0 %v2904, 66
    %v2920 = vpop.permute.xlu0 %2919
    %2921 = vrot.lane.b32.xlu0 %v2906, 66
    %v2922 = vpop.permute.xlu0 %2921
    %vm2923 = vcmask 539648
    %v2924 = vsel %vm2923, %v2908, %v2910
    %v2925 = vsel %vm2923, %v2910, %v2912
    %v2926 = vsel %vm2923, %v2912, %v2914
    %v2927 = vsel %vm2923, %v2914, %v2916
    %v2928 = vsel %vm2923, %v2916, %v2918
    %v2929 = vsel %vm2923, %v2918, %v2920
    %v2930 = vsel %vm2923, %v2920, %v2922
    %v2932 = vsel %vm125, %v2867, 0
    %v2935 = vsel %vm125, %v2868, 0
    %v2937 = vsel %vm132, %v2924, 0
    %v2939 = vsel %vm132, %v2925, 0
    %v2941 = vsel %vm132, %v2926, 0
    %v2943 = vsel %vm132, %v2927, 0
    %v2945 = vsel %vm132, %v2928, 0
    %v2947 = vsel %vm132, %v2929, 0
    %v2949 = vsel %vm132, %v2930, 0
    %v2951 = vsel %vm132, %v2922, 0
    %2953 = vmatprep.subr.mxu0 %v2939
    %2954 = vmatpush1.msra.mxu0 %v2937
    %2955 = vmatprep.subr.mxu0 0.0
    %2956 = vmatpush1.msra.mxu0 0.0
    %2957 = vmatprep.subr.mxu0 0.0
    %2958 = vmatpush1.msra.mxu0 0.0
    %2959 = vmatprep.subr.mxu0 0.0
    %2960 = vmatpush1.msra.mxu0 0.0
    %2961 = vmatprep.subr.mxu0 0.0
    %2962 = vmatpush1.msra.mxu0 0.0
    %2963 = vmatprep.subr.mxu0 0.0
    %2964 = vmatpush1.msra.mxu0 0.0
    %2965 = vmatprep.subr.mxu0 0.0
    %2966 = vmatpush1.msra.mxu0 0.0
    %2967 = vmatprep.subr.mxu0 0.0
    %2968 = vmatpush1.msra.mxu0 0.0
    %2969 = vmatprep.subr.mxu0 0.0
    %2970 = vmatpush1.msra.mxu0 0.0
    %2971 = vmatprep.subr.mxu0 0.0
    %2972 = vmatpush1.msra.mxu0 0.0
    %2973 = vmatprep.subr.mxu0 0.0
    %2974 = vmatpush1.msra.mxu0 0.0
    %2975 = vmatprep.subr.mxu0 0.0
    %2976 = vmatpush1.msra.mxu0 0.0
    %2977 = vmatprep.subr.mxu0 0.0
    %2978 = vmatpush1.msra.mxu0 0.0
    %2979 = vmatprep.subr.mxu0 0.0
    %2980 = vmatpush1.msra.mxu0 0.0
    %2981 = vmatprep.subr.mxu0 0.0
    %2982 = vmatpush1.msra.mxu0 0.0
    %2983 = vmatprep.subr.mxu0 0.0
    %2984 = vmatpush1.msra.mxu0 0.0
    %2985 = vmatprep.subr.mxu0 0.0
    %2986 = vmatpush1.msra.mxu0 0.0
    %2987 = vmatprep.subr.mxu0 0.0
    %2988 = vmatpush1.msra.mxu0 0.0
    %2989 = vmatprep.subr.mxu0 0.0
    %2990 = vmatpush1.msra.mxu0 0.0
    %2991 = vmatprep.subr.mxu0 0.0
    %2992 = vmatpush1.msra.mxu0 0.0
    %2993 = vmatprep.subr.mxu0 0.0
    %2994 = vmatpush1.msra.mxu0 0.0
    %2995 = vmatprep.subr.mxu0 0.0
    %2996 = vmatpush1.msra.mxu0 0.0
    %2997 = vmatprep.subr.mxu0 0.0
    %2998 = vmatpush1.msra.mxu0 0.0
    %2999 = vmatprep.subr.mxu0 0.0
    %3000 = vmatpush1.msra.mxu0 0.0
    %3001 = vmatprep.subr.mxu0 0.0
    %3002 = vmatpush1.msra.mxu0 0.0
    %3003 = vmatprep.subr.mxu0 0.0
    %3004 = vmatpush1.msra.mxu0 0.0
    %3005 = vmatprep.subr.mxu0 0.0
    %3006 = vmatpush1.msra.mxu0 0.0
    %3007 = vmatprep.subr.mxu0 0.0
    %3008 = vmatpush1.msra.mxu0 0.0
    %3009 = vmatprep.subr.mxu0 0.0
    %3010 = vmatpush1.msra.mxu0 0.0
    %3011 = vmatprep.subr.mxu0 0.0
    %3012 = vmatpush1.msra.mxu0 0.0
    %3013 = vmatprep.subr.mxu0 0.0
    %3014 = vmatpush1.msra.mxu0 0.0
    %3015 = vmatprep.subr.mxu0 0.0
    %3016 = vmatpush1.msra.mxu0 0.0
    %3017 = vmatprep.mubr.f32.mxu0 0.0
    %3018 = vmatmul.mubr.f32.gmra.mrb[0].mxu0 %v2932
    %v3019 = vpop.f32.mrb[0].mxu0
    %v3020 = vadd.f32 0.0, %v3019
    %v3021 = vpop.f32.mrb[0].mxu0
    %v3022 = vadd.f32 0.0, %v3021
    %3023 = vmatprep.mubr.f32.mxu0 0.0
    %3024 = vmatmul.mubr.f32.gmra.mrb[0].mxu0 %v2935
    %v3025 = vpop.f32.mrb[0].mxu0
    %v3026 = vadd.f32 0.0, %v3025
    %v3027 = vpop.f32.mrb[0].mxu0
    %v3028 = vadd.f32 0.0, %v3027
    %3029 = vdwg.mxu0
    %3030 = vmatprep.subr.mxu0 %v2943
    %3031 = vmatpush1.msra.mxu0 %v2941
    %3032 = vmatprep.subr.mxu0 0.0
    %3033 = vmatpush1.msra.mxu0 0.0
    %3034 = vmatprep.subr.mxu0 0.0
    %3035 = vmatpush1.msra.mxu0 0.0
    %3036 = vmatprep.subr.mxu0 0.0
    %3037 = vmatpush1.msra.mxu0 0.0
    %3038 = vmatprep.subr.mxu0 0.0
    %3039 = vmatpush1.msra.mxu0 0.0
    %3040 = vmatprep.subr.mxu0 0.0
    %3041 = vmatpush1.msra.mxu0 0.0
    %3042 = vmatprep.subr.mxu0 0.0
    %3043 = vmatpush1.msra.mxu0 0.0
    %3044 = vmatprep.subr.mxu0 0.0
    %3045 = vmatpush1.msra.mxu0 0.0
    %3046 = vmatprep.subr.mxu0 0.0
    %3047 = vmatpush1.msra.mxu0 0.0
    %3048 = vmatprep.subr.mxu0 0.0
    %3049 = vmatpush1.msra.mxu0 0.0
    %3050 = vmatprep.subr.mxu0 0.0
    %3051 = vmatpush1.msra.mxu0 0.0
    %3052 = vmatprep.subr.mxu0 0.0
    %3053 = vmatpush1.msra.mxu0 0.0
    %3054 = vmatprep.subr.mxu0 0.0
    %3055 = vmatpush1.msra.mxu0 0.0
    %3056 = vmatprep.subr.mxu0 0.0
    %3057 = vmatpush1.msra.mxu0 0.0
    %3058 = vmatprep.subr.mxu0 0.0
    %3059 = vmatpush1.msra.mxu0 0.0
    %3060 = vmatprep.subr.mxu0 0.0
    %3061 = vmatpush1.msra.mxu0 0.0
    %3062 = vmatprep.subr.mxu0 0.0
    %3063 = vmatpush1.msra.mxu0 0.0
    %3064 = vmatprep.subr.mxu0 0.0
    %3065 = vmatpush1.msra.mxu0 0.0
    %3066 = vmatprep.subr.mxu0 0.0
    %3067 = vmatpush1.msra.mxu0 0.0
    %3068 = vmatprep.subr.mxu0 0.0
    %3069 = vmatpush1.msra.mxu0 0.0
    %3070 = vmatprep.subr.mxu0 0.0
    %3071 = vmatpush1.msra.mxu0 0.0
    %3072 = vmatprep.subr.mxu0 0.0
    %3073 = vmatpush1.msra.mxu0 0.0
    %3074 = vmatprep.subr.mxu0 0.0
    %3075 = vmatpush1.msra.mxu0 0.0
    %3076 = vmatprep.subr.mxu0 0.0
    %3077 = vmatpush1.msra.mxu0 0.0
    %3078 = vmatprep.subr.mxu0 0.0
    %3079 = vmatpush1.msra.mxu0 0.0
    %3080 = vmatprep.subr.mxu0 0.0
    %3081 = vmatpush1.msra.mxu0 0.0
    %3082 = vmatprep.subr.mxu0 0.0
    %3083 = vmatpush1.msra.mxu0 0.0
    %3084 = vmatprep.subr.mxu0 0.0
    %3085 = vmatpush1.msra.mxu0 0.0
    %3086 = vmatprep.subr.mxu0 0.0
    %3087 = vmatpush1.msra.mxu0 0.0
    %3088 = vmatprep.subr.mxu0 0.0
    %3089 = vmatpush1.msra.mxu0 0.0
    %3090 = vmatprep.subr.mxu0 0.0
    %3091 = vmatpush1.msra.mxu0 0.0
    %3092 = vmatprep.subr.mxu0 0.0
    %3093 = vmatpush1.msra.mxu0 0.0
    %3094 = vmatprep.mubr.f32.mxu0 0.0
    %3095 = vmatmul.mubr.f32.gmra.mrb[0].mxu0 %v2932
    %v3096 = vpop.f32.mrb[0].mxu0
    %v3097 = vadd.f32 0.0, %v3096
    %v3098 = vpop.f32.mrb[0].mxu0
    %v3099 = vadd.f32 0.0, %v3098
    %3100 = vmatprep.mubr.f32.mxu0 0.0
    %3101 = vmatmul.mubr.f32.gmra.mrb[0].mxu0 %v2935
    %v3102 = vpop.f32.mrb[0].mxu0
    %v3103 = vadd.f32 0.0, %v3102
    %v3104 = vpop.f32.mrb[0].mxu0
    %v3105 = vadd.f32 0.0, %v3104
    %3106 = vdwg.mxu0
    %3107 = vmatprep.subr.mxu0 %v2947
    %3108 = vmatpush1.msra.mxu0 %v2945
    %3109 = vmatprep.subr.mxu0 0.0
    %3110 = vmatpush1.msra.mxu0 0.0
    %3111 = vmatprep.subr.mxu0 0.0
    %3112 = vmatpush1.msra.mxu0 0.0
    %3113 = vmatprep.subr.mxu0 0.0
    %3114 = vmatpush1.msra.mxu0 0.0
    %3115 = vmatprep.subr.mxu0 0.0
    %3116 = vmatpush1.msra.mxu0 0.0
    %3117 = vmatprep.subr.mxu0 0.0
    %3118 = vmatpush1.msra.mxu0 0.0
    %3119 = vmatprep.subr.mxu0 0.0
    %3120 = vmatpush1.msra.mxu0 0.0
    %3121 = vmatprep.subr.mxu0 0.0
    %3122 = vmatpush1.msra.mxu0 0.0
    %3123 = vmatprep.subr.mxu0 0.0
    %3124 = vmatpush1.msra.mxu0 0.0
    %3125 = vmatprep.subr.mxu0 0.0
    %3126 = vmatpush1.msra.mxu0 0.0
    %3127 = vmatprep.subr.mxu0 0.0
    %3128 = vmatpush1.msra.mxu0 0.0
    %3129 = vmatprep.subr.mxu0 0.0
    %3130 = vmatpush1.msra.mxu0 0.0
    %3131 = vmatprep.subr.mxu0 0.0
    %3132 = vmatpush1.msra.mxu0 0.0
    %3133 = vmatprep.subr.mxu0 0.0
    %3134 = vmatpush1.msra.mxu0 0.0
    %3135 = vmatprep.subr.mxu0 0.0
    %3136 = vmatpush1.msra.mxu0 0.0
    %3137 = vmatprep.subr.mxu0 0.0
    %3138 = vmatpush1.msra.mxu0 0.0
    %3139 = vmatprep.subr.mxu0 0.0
    %3140 = vmatpush1.msra.mxu0 0.0
    %3141 = vmatprep.subr.mxu0 0.0
    %3142 = vmatpush1.msra.mxu0 0.0
    %3143 = vmatprep.subr.mxu0 0.0
    %3144 = vmatpush1.msra.mxu0 0.0
    %3145 = vmatprep.subr.mxu0 0.0
    %3146 = vmatpush1.msra.mxu0 0.0
    %3147 = vmatprep.subr.mxu0 0.0
    %3148 = vmatpush1.msra.mxu0 0.0
    %3149 = vmatprep.subr.mxu0 0.0
    %3150 = vmatpush1.msra.mxu0 0.0
    %3151 = vmatprep.subr.mxu0 0.0
    %3152 = vmatpush1.msra.mxu0 0.0
    %3153 = vmatprep.subr.mxu0 0.0
    %3154 = vmatpush1.msra.mxu0 0.0
    %3155 = vmatprep.subr.mxu0 0.0
    %3156 = vmatpush1.msra.mxu0 0.0
    %3157 = vmatprep.subr.mxu0 0.0
    %3158 = vmatpush1.msra.mxu0 0.0
    %3159 = vmatprep.subr.mxu0 0.0
    %3160 = vmatpush1.msra.mxu0 0.0
    %3161 = vmatprep.subr.mxu0 0.0
    %3162 = vmatpush1.msra.mxu0 0.0
    %3163 = vmatprep.subr.mxu0 0.0
    %3164 = vmatpush1.msra.mxu0 0.0
    %3165 = vmatprep.subr.mxu0 0.0
    %3166 = vmatpush1.msra.mxu0 0.0
    %3167 = vmatprep.subr.mxu0 0.0
    %3168 = vmatpush1.msra.mxu0 0.0
    %3169 = vmatprep.subr.mxu0 0.0
    %3170 = vmatpush1.msra.mxu0 0.0
    %3171 = vmatprep.mubr.f32.mxu0 0.0
    %3172 = vmatmul.mubr.f32.gmra.mrb[0].mxu0 %v2932
    %v3173 = vpop.f32.mrb[0].mxu0
    %v3174 = vadd.f32 0.0, %v3173
    %v3175 = vpop.f32.mrb[0].mxu0
    %v3176 = vadd.f32 0.0, %v3175
    %3177 = vmatprep.mubr.f32.mxu0 0.0
    %3178 = vmatmul.mubr.f32.gmra.mrb[0].mxu0 %v2935
    %v3179 = vpop.f32.mrb[0].mxu0
    %v3180 = vadd.f32 0.0, %v3179
    %v3181 = vpop.f32.mrb[0].mxu0
    %v3182 = vadd.f32 0.0, %v3181
    %3183 = vdwg.mxu0
    %3184 = vmatprep.subr.mxu0 %v2951
    %3185 = vmatpush1.msra.mxu0 %v2949
    %3186 = vmatprep.subr.mxu0 0.0
    %3187 = vmatpush1.msra.mxu0 0.0
    %3188 = vmatprep.subr.mxu0 0.0
    %3189 = vmatpush1.msra.mxu0 0.0
    %3190 = vmatprep.subr.mxu0 0.0
    %3191 = vmatpush1.msra.mxu0 0.0
    %3192 = vmatprep.subr.mxu0 0.0
    %3193 = vmatpush1.msra.mxu0 0.0
    %3194 = vmatprep.subr.mxu0 0.0
    %3195 = vmatpush1.msra.mxu0 0.0
    %3196 = vmatprep.subr.mxu0 0.0
    %3197 = vmatpush1.msra.mxu0 0.0
    %3198 = vmatprep.subr.mxu0 0.0
    %3199 = vmatpush1.msra.mxu0 0.0
    %3200 = vmatprep.subr.mxu0 0.0
    %3201 = vmatpush1.msra.mxu0 0.0
    %3202 = vmatprep.subr.mxu0 0.0
    %3203 = vmatpush1.msra.mxu0 0.0
    %3204 = vmatprep.subr.mxu0 0.0
    %3205 = vmatpush1.msra.mxu0 0.0
    %3206 = vmatprep.subr.mxu0 0.0
    %3207 = vmatpush1.msra.mxu0 0.0
    %3208 = vmatprep.subr.mxu0 0.0
    %3209 = vmatpush1.msra.mxu0 0.0
    %3210 = vmatprep.subr.mxu0 0.0
    %3211 = vmatpush1.msra.mxu0 0.0
    %3212 = vmatprep.subr.mxu0 0.0
    %3213 = vmatpush1.msra.mxu0 0.0
    %3214 = vmatprep.subr.mxu0 0.0
    %3215 = vmatpush1.msra.mxu0 0.0
    %3216 = vmatprep.subr.mxu0 0.0
    %3217 = vmatpush1.msra.mxu0 0.0
    %3218 = vmatprep.subr.mxu0 0.0
    %3219 = vmatpush1.msra.mxu0 0.0
    %3220 = vmatprep.subr.mxu0 0.0
    %3221 = vmatpush1.msra.mxu0 0.0
    %3222 = vmatprep.subr.mxu0 0.0
    %3223 = vmatpush1.msra.mxu0 0.0
    %3224 = vmatprep.subr.mxu0 0.0
    %3225 = vmatpush1.msra.mxu0 0.0
    %3226 = vmatprep.subr.mxu0 0.0
    %3227 = vmatpush1.msra.mxu0 0.0
    %3228 = vmatprep.subr.mxu0 0.0
    %3229 = vmatpush1.msra.mxu0 0.0
    %3230 = vmatprep.subr.mxu0 0.0
    %3231 = vmatpush1.msra.mxu0 0.0
    %3232 = vmatprep.subr.mxu0 0.0
    %3233 = vmatpush1.msra.mxu0 0.0
    %3234 = vmatprep.subr.mxu0 0.0
    %3235 = vmatpush1.msra.mxu0 0.0
    %3236 = vmatprep.subr.mxu0 0.0
    %3237 = vmatpush1.msra.mxu0 0.0
    %3238 = vmatprep.subr.mxu0 0.0
    %3239 = vmatpush1.msra.mxu0 0.0
    %3240 = vmatprep.subr.mxu0 0.0
    %3241 = vmatpush1.msra.mxu0 0.0
    %3242 = vmatprep.subr.mxu0 0.0
    %3243 = vmatpush1.msra.mxu0 0.0
    %3244 = vmatprep.subr.mxu0 0.0
    %3245 = vmatpush1.msra.mxu0 0.0
    %3246 = vmatprep.subr.mxu0 0.0
    %3247 = vmatpush1.msra.mxu0 0.0
    %3248 = vmatprep.mubr.f32.mxu0 0.0
    %3249 = vmatmul.mubr.f32.gmra.mrb[0].mxu0 %v2932
    %v3250 = vpop.f32.mrb[0].mxu0
    %v3251 = vadd.f32 0.0, %v3250
    %v3252 = vpop.f32.mrb[0].mxu0
    %v3253 = vadd.f32 0.0, %v3252
    %3254 = vmatprep.mubr.f32.mxu0 0.0
    %3255 = vmatmul.mubr.f32.gmra.mrb[0].mxu0 %v2935
    %v3256 = vpop.f32.mrb[0].mxu0
    %v3257 = vadd.f32 0.0, %v3256
    %v3258 = vpop.f32.mrb[0].mxu0
    %v3259 = vadd.f32 0.0, %v3258
    %3260 = vdwg.mxu0
    %v3261 = vadd.f32 %v2850, %v3020
    %v3262 = vadd.f32 %v2851, %v3022
    %v3263 = vadd.f32 %v2852, %v3097
    %v3264 = vadd.f32 %v2853, %v3099
    %v3265 = vadd.f32 %v2854, %v3174
    %v3266 = vadd.f32 %v2855, %v3176
    %v3267 = vadd.f32 %v2856, %v3251
    %v3268 = vadd.f32 %v2857, %v3253
    %v3269 = vadd.f32 %v2858, %v3026
    %v3270 = vadd.f32 %v2859, %v3028
    %v3271 = vadd.f32 %v2860, %v3103
    %v3272 = vadd.f32 %v2861, %v3105
    %v3273 = vadd.f32 %v2862, %v3180
    %v3274 = vadd.f32 %v2863, %v3182
    %v3275 = vadd.f32 %v2864, %v3257
    %v3276 = vadd.f32 %v2865, %v3259
    %s3277 = scalar_lea.vmem %s1, 128
    %v3278 = vld [vmem:[%s3277] sm:$0xff]
    %v3279 = vld [vmem:[%s3277 + $0x8] sm:$0xff]
    %v3280 = vld [vmem:[%s0] sm:$0xff]
    %v3281 = vld [vmem:[%s0 + $0x8] sm:$0xff]
    %v3284 = vcombine.high %v3280, %v3280
    %v3286 = vunpack.c.l.s4 1983009808
    %v3287 = vunpack.c.0.s8 %v3286
    %v3288 = vlaneseq
    %v3289 = vshrl.u32 %v3288, 7
    %v3290 = vsub.s32 %v3287, %v3289
    %v3291 = vrot.slane %v3280, %v3290
    %v3293 = vunpack.c.l.s4 1983009808
    %v3294 = vunpack.c.0.s8 %v3293
    %v3295 = vlaneseq
    %v3296 = vshrl.u32 %v3295, 7
    %v3297 = vsub.s32 %v3294, %v3296
    %v3298 = vrot.slane %v3284, %v3297
    %v3299 = vcombine.high %v3291, %v3291
    %v3300 = vcombine.high %v3298, %v3298
    %v3301 = vcombine.high %v3281, %v3281
    %v3303 = vunpack.c.l.s4 1983009808
    %v3304 = vunpack.c.0.s8 %v3303
    %v3305 = vlaneseq
    %v3306 = vshrl.u32 %v3305, 7
    %v3307 = vsub.s32 %v3304, %v3306
    %v3308 = vrot.slane %v3281, %v3307
    %v3310 = vunpack.c.l.s4 1983009808
    %v3311 = vunpack.c.0.s8 %v3310
    %v3312 = vlaneseq
    %v3313 = vshrl.u32 %v3312, 7
    %v3314 = vsub.s32 %v3311, %v3313
    %v3315 = vrot.slane %v3301, %v3314
    %v3316 = vcombine.high %v3308, %v3308
    %v3317 = vcombine.high %v3315, %v3315
    %3318 = vrot.lane.b32.xlu0 %v3291, 65
    %v3319 = vpop.permute.xlu0 %3318
    %3320 = vrot.lane.b32.xlu0 %v3299, 65
    %v3321 = vpop.permute.xlu0 %3320
    %3322 = vrot.lane.b32.xlu0 %v3298, 65
    %v3323 = vpop.permute.xlu0 %3322
    %3324 = vrot.lane.b32.xlu0 %v3300, 65
    %v3325 = vpop.permute.xlu0 %3324
    %3326 = vrot.lane.b32.xlu0 %v3308, 65
    %v3327 = vpop.permute.xlu0 %3326
    %3328 = vrot.lane.b32.xlu0 %v3316, 65
    %v3329 = vpop.permute.xlu0 %3328
    %3330 = vrot.lane.b32.xlu0 %v3315, 65
    %v3331 = vpop.permute.xlu0 %3330
    %3332 = vrot.lane.b32.xlu0 %v3317, 65
    %v3333 = vpop.permute.xlu0 %3332
    %vm3334 = vcmask 531456
    %v3335 = vsel %vm3334, %v3319, %v3321
    %v3336 = vsel %vm3334, %v3321, %v3323
    %v3337 = vsel %vm3334, %v3323, %v3325
    %v3338 = vsel %vm3334, %v3325, %v3327
    %v3339 = vsel %vm3334, %v3327, %v3329
    %v3340 = vsel %vm3334, %v3329, %v3331
    %v3341 = vsel %vm3334, %v3331, %v3333
    %v3343 = vsel %vm125, %v3278, 0
    %v3346 = vsel %vm125, %v3279, 0
    %v3348 = vsel %vm132, %v3335, 0
    %v3350 = vsel %vm132, %v3336, 0
    %v3352 = vsel %vm132, %v3337, 0
    %v3354 = vsel %vm132, %v3338, 0
    %v3356 = vsel %vm132, %v3339, 0
    %v3358 = vsel %vm132, %v3340, 0
    %v3360 = vsel %vm132, %v3341, 0
    %v3362 = vsel %vm132, %v3333, 0
    %3364 = vmatprep.subr.mxu0 %v3350
    %3365 = vmatpush1.msra.mxu0 %v3348
    %3366 = vmatprep.subr.mxu0 0.0
    %3367 = vmatpush1.msra.mxu0 0.0
    %3368 = vmatprep.subr.mxu0 0.0
    %3369 = vmatpush1.msra.mxu0 0.0
    %3370 = vmatprep.subr.mxu0 0.0
    %3371 = vmatpush1.msra.mxu0 0.0
    %3372 = vmatprep.subr.mxu0 0.0
    %3373 = vmatpush1.msra.mxu0 0.0
    %3374 = vmatprep.subr.mxu0 0.0
    %3375 = vmatpush1.msra.mxu0 0.0
    %3376 = vmatprep.subr.mxu0 0.0
    %3377 = vmatpush1.msra.mxu0 0.0
    %3378 = vmatprep.subr.mxu0 0.0
    %3379 = vmatpush1.msra.mxu0 0.0
    %3380 = vmatprep.subr.mxu0 0.0
    %3381 = vmatpush1.msra.mxu0 0.0
    %3382 = vmatprep.subr.mxu0 0.0
    %3383 = vmatpush1.msra.mxu0 0.0
    %3384 = vmatprep.subr.mxu0 0.0
    %3385 = vmatpush1.msra.mxu0 0.0
    %3386 = vmatprep.subr.mxu0 0.0
    %3387 = vmatpush1.msra.mxu0 0.0
    %3388 = vmatprep.subr.mxu0 0.0
    %3389 = vmatpush1.msra.mxu0 0.0
    %3390 = vmatprep.subr.mxu0 0.0
    %3391 = vmatpush1.msra.mxu0 0.0
    %3392 = vmatprep.subr.mxu0 0.0
    %3393 = vmatpush1.msra.mxu0 0.0
    %3394 = vmatprep.subr.mxu0 0.0
    %3395 = vmatpush1.msra.mxu0 0.0
    %3396 = vmatprep.subr.mxu0 0.0
    %3397 = vmatpush1.msra.mxu0 0.0
    %3398 = vmatprep.subr.mxu0 0.0
    %3399 = vmatpush1.msra.mxu0 0.0
    %3400 = vmatprep.subr.mxu0 0.0
    %3401 = vmatpush1.msra.mxu0 0.0
    %3402 = vmatprep.subr.mxu0 0.0
    %3403 = vmatpush1.msra.mxu0 0.0
    %3404 = vmatprep.subr.mxu0 0.0
    %3405 = vmatpush1.msra.mxu0 0.0
    %3406 = vmatprep.subr.mxu0 0.0
    %3407 = vmatpush1.msra.mxu0 0.0
    %3408 = vmatprep.subr.mxu0 0.0
    %3409 = vmatpush1.msra.mxu0 0.0
    %3410 = vmatprep.subr.mxu0 0.0
    %3411 = vmatpush1.msra.mxu0 0.0
    %3412 = vmatprep.subr.mxu0 0.0
    %3413 = vmatpush1.msra.mxu0 0.0
    %3414 = vmatprep.subr.mxu0 0.0
    %3415 = vmatpush1.msra.mxu0 0.0
    %3416 = vmatprep.subr.mxu0 0.0
    %3417 = vmatpush1.msra.mxu0 0.0
    %3418 = vmatprep.subr.mxu0 0.0
    %3419 = vmatpush1.msra.mxu0 0.0
    %3420 = vmatprep.subr.mxu0 0.0
    %3421 = vmatpush1.msra.mxu0 0.0
    %3422 = vmatprep.subr.mxu0 0.0
    %3423 = vmatpush1.msra.mxu0 0.0
    %3424 = vmatprep.subr.mxu0 0.0
    %3425 = vmatpush1.msra.mxu0 0.0
    %3426 = vmatprep.subr.mxu0 0.0
    %3427 = vmatpush1.msra.mxu0 0.0
    %3428 = vmatprep.mubr.f32.mxu0 0.0
    %3429 = vmatmul.mubr.f32.gmra.mrb[0].mxu0 %v3343
    %v3430 = vpop.f32.mrb[0].mxu0
    %v3431 = vadd.f32 0.0, %v3430
    %v3432 = vpop.f32.mrb[0].mxu0
    %v3433 = vadd.f32 0.0, %v3432
    %3434 = vmatprep.mubr.f32.mxu0 0.0
    %3435 = vmatmul.mubr.f32.gmra.mrb[0].mxu0 %v3346
    %v3436 = vpop.f32.mrb[0].mxu0
    %v3437 = vadd.f32 0.0, %v3436
    %v3438 = vpop.f32.mrb[0].mxu0
    %v3439 = vadd.f32 0.0, %v3438
    %3440 = vdwg.mxu0
    %3441 = vmatprep.subr.mxu0 %v3354
    %3442 = vmatpush1.msra.mxu0 %v3352
    %3443 = vmatprep.subr.mxu0 0.0
    %3444 = vmatpush1.msra.mxu0 0.0
    %3445 = vmatprep.subr.mxu0 0.0
    %3446 = vmatpush1.msra.mxu0 0.0
    %3447 = vmatprep.subr.mxu0 0.0
    %3448 = vmatpush1.msra.mxu0 0.0
    %3449 = vmatprep.subr.mxu0 0.0
    %3450 = vmatpush1.msra.mxu0 0.0
    %3451 = vmatprep.subr.mxu0 0.0
    %3452 = vmatpush1.msra.mxu0 0.0
    %3453 = vmatprep.subr.mxu0 0.0
    %3454 = vmatpush1.msra.mxu0 0.0
    %3455 = vmatprep.subr.mxu0 0.0
    %3456 = vmatpush1.msra.mxu0 0.0
    %3457 = vmatprep.subr.mxu0 0.0
    %3458 = vmatpush1.msra.mxu0 0.0
    %3459 = vmatprep.subr.mxu0 0.0
    %3460 = vmatpush1.msra.mxu0 0.0
    %3461 = vmatprep.subr.mxu0 0.0
    %3462 = vmatpush1.msra.mxu0 0.0
    %3463 = vmatprep.subr.mxu0 0.0
    %3464 = vmatpush1.msra.mxu0 0.0
    %3465 = vmatprep.subr.mxu0 0.0
    %3466 = vmatpush1.msra.mxu0 0.0
    %3467 = vmatprep.subr.mxu0 0.0
    %3468 = vmatpush1.msra.mxu0 0.0
    %3469 = vmatprep.subr.mxu0 0.0
    %3470 = vmatpush1.msra.mxu0 0.0
    %3471 = vmatprep.subr.mxu0 0.0
    %3472 = vmatpush1.msra.mxu0 0.0
    %3473 = vmatprep.subr.mxu0 0.0
    %3474 = vmatpush1.msra.mxu0 0.0
    %3475 = vmatprep.subr.mxu0 0.0
    %3476 = vmatpush1.msra.mxu0 0.0
    %3477 = vmatprep.subr.mxu0 0.0
    %3478 = vmatpush1.msra.mxu0 0.0
    %3479 = vmatprep.subr.mxu0 0.0
    %3480 = vmatpush1.msra.mxu0 0.0
    %3481 = vmatprep.subr.mxu0 0.0
    %3482 = vmatpush1.msra.mxu0 0.0
    %3483 = vmatprep.subr.mxu0 0.0
    %3484 = vmatpush1.msra.mxu0 0.0
    %3485 = vmatprep.subr.mxu0 0.0
    %3486 = vmatpush1.msra.mxu0 0.0
    %3487 = vmatprep.subr.mxu0 0.0
    %3488 = vmatpush1.msra.mxu0 0.0
    %3489 = vmatprep.subr.mxu0 0.0
    %3490 = vmatpush1.msra.mxu0 0.0
    %3491 = vmatprep.subr.mxu0 0.0
    %3492 = vmatpush1.msra.mxu0 0.0
    %3493 = vmatprep.subr.mxu0 0.0
    %3494 = vmatpush1.msra.mxu0 0.0
    %3495 = vmatprep.subr.mxu0 0.0
    %3496 = vmatpush1.msra.mxu0 0.0
    %3497 = vmatprep.subr.mxu0 0.0
    %3498 = vmatpush1.msra.mxu0 0.0
    %3499 = vmatprep.subr.mxu0 0.0
    %3500 = vmatpush1.msra.mxu0 0.0
    %3501 = vmatprep.subr.mxu0 0.0
    %3502 = vmatpush1.msra.mxu0 0.0
    %3503 = vmatprep.subr.mxu0 0.0
    %3504 = vmatpush1.msra.mxu0 0.0
    %3505 = vmatprep.mubr.f32.mxu0 0.0
    %3506 = vmatmul.mubr.f32.gmra.mrb[0].mxu0 %v3343
    %v3507 = vpop.f32.mrb[0].mxu0
    %v3508 = vadd.f32 0.0, %v3507
    %v3509 = vpop.f32.mrb[0].mxu0
    %v3510 = vadd.f32 0.0, %v3509
    %3511 = vmatprep.mubr.f32.mxu0 0.0
    %3512 = vmatmul.mubr.f32.gmra.mrb[0].mxu0 %v3346
    %v3513 = vpop.f32.mrb[0].mxu0
    %v3514 = vadd.f32 0.0, %v3513
    %v3515 = vpop.f32.mrb[0].mxu0
    %v3516 = vadd.f32 0.0, %v3515
    %3517 = vdwg.mxu0
    %3518 = vmatprep.subr.mxu0 %v3358
    %3519 = vmatpush1.msra.mxu0 %v3356
    %3520 = vmatprep.subr.mxu0 0.0
    %3521 = vmatpush1.msra.mxu0 0.0
    %3522 = vmatprep.subr.mxu0 0.0
    %3523 = vmatpush1.msra.mxu0 0.0
    %3524 = vmatprep.subr.mxu0 0.0
    %3525 = vmatpush1.msra.mxu0 0.0
    %3526 = vmatprep.subr.mxu0 0.0
    %3527 = vmatpush1.msra.mxu0 0.0
    %3528 = vmatprep.subr.mxu0 0.0
    %3529 = vmatpush1.msra.mxu0 0.0
    %3530 = vmatprep.subr.mxu0 0.0
    %3531 = vmatpush1.msra.mxu0 0.0
    %3532 = vmatprep.subr.mxu0 0.0
    %3533 = vmatpush1.msra.mxu0 0.0
    %3534 = vmatprep.subr.mxu0 0.0
    %3535 = vmatpush1.msra.mxu0 0.0
    %3536 = vmatprep.subr.mxu0 0.0
    %3537 = vmatpush1.msra.mxu0 0.0
    %3538 = vmatprep.subr.mxu0 0.0
    %3539 = vmatpush1.msra.mxu0 0.0
    %3540 = vmatprep.subr.mxu0 0.0
    %3541 = vmatpush1.msra.mxu0 0.0
    %3542 = vmatprep.subr.mxu0 0.0
    %3543 = vmatpush1.msra.mxu0 0.0
    %3544 = vmatprep.subr.mxu0 0.0
    %3545 = vmatpush1.msra.mxu0 0.0
    %3546 = vmatprep.subr.mxu0 0.0
    %3547 = vmatpush1.msra.mxu0 0.0
    %3548 = vmatprep.subr.mxu0 0.0
    %3549 = vmatpush1.msra.mxu0 0.0
    %3550 = vmatprep.subr.mxu0 0.0
    %3551 = vmatpush1.msra.mxu0 0.0
    %3552 = vmatprep.subr.mxu0 0.0
    %3553 = vmatpush1.msra.mxu0 0.0
    %3554 = vmatprep.subr.mxu0 0.0
    %3555 = vmatpush1.msra.mxu0 0.0
    %3556 = vmatprep.subr.mxu0 0.0
    %3557 = vmatpush1.msra.mxu0 0.0
    %3558 = vmatprep.subr.mxu0 0.0
    %3559 = vmatpush1.msra.mxu0 0.0
    %3560 = vmatprep.subr.mxu0 0.0
    %3561 = vmatpush1.msra.mxu0 0.0
    %3562 = vmatprep.subr.mxu0 0.0
    %3563 = vmatpush1.msra.mxu0 0.0
    %3564 = vmatprep.subr.mxu0 0.0
    %3565 = vmatpush1.msra.mxu0 0.0
    %3566 = vmatprep.subr.mxu0 0.0
    %3567 = vmatpush1.msra.mxu0 0.0
    %3568 = vmatprep.subr.mxu0 0.0
    %3569 = vmatpush1.msra.mxu0 0.0
    %3570 = vmatprep.subr.mxu0 0.0
    %3571 = vmatpush1.msra.mxu0 0.0
    %3572 = vmatprep.subr.mxu0 0.0
    %3573 = vmatpush1.msra.mxu0 0.0
    %3574 = vmatprep.subr.mxu0 0.0
    %3575 = vmatpush1.msra.mxu0 0.0
    %3576 = vmatprep.subr.mxu0 0.0
    %3577 = vmatpush1.msra.mxu0 0.0
    %3578 = vmatprep.subr.mxu0 0.0
    %3579 = vmatpush1.msra.mxu0 0.0
    %3580 = vmatprep.subr.mxu0 0.0
    %3581 = vmatpush1.msra.mxu0 0.0
    %3582 = vmatprep.mubr.f32.mxu0 0.0
    %3583 = vmatmul.mubr.f32.gmra.mrb[0].mxu0 %v3343
    %v3584 = vpop.f32.mrb[0].mxu0
    %v3585 = vadd.f32 0.0, %v3584
    %v3586 = vpop.f32.mrb[0].mxu0
    %v3587 = vadd.f32 0.0, %v3586
    %3588 = vmatprep.mubr.f32.mxu0 0.0
    %3589 = vmatmul.mubr.f32.gmra.mrb[0].mxu0 %v3346
    %v3590 = vpop.f32.mrb[0].mxu0
    %v3591 = vadd.f32 0.0, %v3590
    %v3592 = vpop.f32.mrb[0].mxu0
    %v3593 = vadd.f32 0.0, %v3592
    %3594 = vdwg.mxu0
    %3595 = vmatprep.subr.mxu0 %v3362
    %3596 = vmatpush1.msra.mxu0 %v3360
    %3597 = vmatprep.subr.mxu0 0.0
    %3598 = vmatpush1.msra.mxu0 0.0
    %3599 = vmatprep.subr.mxu0 0.0
    %3600 = vmatpush1.msra.mxu0 0.0
    %3601 = vmatprep.subr.mxu0 0.0
    %3602 = vmatpush1.msra.mxu0 0.0
    %3603 = vmatprep.subr.mxu0 0.0
    %3604 = vmatpush1.msra.mxu0 0.0
    %3605 = vmatprep.subr.mxu0 0.0
    %3606 = vmatpush1.msra.mxu0 0.0
    %3607 = vmatprep.subr.mxu0 0.0
    %3608 = vmatpush1.msra.mxu0 0.0
    %3609 = vmatprep.subr.mxu0 0.0
    %3610 = vmatpush1.msra.mxu0 0.0
    %3611 = vmatprep.subr.mxu0 0.0
    %3612 = vmatpush1.msra.mxu0 0.0
    %3613 = vmatprep.subr.mxu0 0.0
    %3614 = vmatpush1.msra.mxu0 0.0
    %3615 = vmatprep.subr.mxu0 0.0
    %3616 = vmatpush1.msra.mxu0 0.0
    %3617 = vmatprep.subr.mxu0 0.0
    %3618 = vmatpush1.msra.mxu0 0.0
    %3619 = vmatprep.subr.mxu0 0.0
    %3620 = vmatpush1.msra.mxu0 0.0
    %3621 = vmatprep.subr.mxu0 0.0
    %3622 = vmatpush1.msra.mxu0 0.0
    %3623 = vmatprep.subr.mxu0 0.0
    %3624 = vmatpush1.msra.mxu0 0.0
    %3625 = vmatprep.subr.mxu0 0.0
    %3626 = vmatpush1.msra.mxu0 0.0
    %3627 = vmatprep.subr.mxu0 0.0
    %3628 = vmatpush1.msra.mxu0 0.0
    %3629 = vmatprep.subr.mxu0 0.0
    %3630 = vmatpush1.msra.mxu0 0.0
    %3631 = vmatprep.subr.mxu0 0.0
    %3632 = vmatpush1.msra.mxu0 0.0
    %3633 = vmatprep.subr.mxu0 0.0
    %3634 = vmatpush1.msra.mxu0 0.0
    %3635 = vmatprep.subr.mxu0 0.0
    %3636 = vmatpush1.msra.mxu0 0.0
    %3637 = vmatprep.subr.mxu0 0.0
    %3638 = vmatpush1.msra.mxu0 0.0
    %3639 = vmatprep.subr.mxu0 0.0
    %3640 = vmatpush1.msra.mxu0 0.0
    %3641 = vmatprep.subr.mxu0 0.0
    %3642 = vmatpush1.msra.mxu0 0.0
    %3643 = vmatprep.subr.mxu0 0.0
    %3644 = vmatpush1.msra.mxu0 0.0
    %3645 = vmatprep.subr.mxu0 0.0
    %3646 = vmatpush1.msra.mxu0 0.0
    %3647 = vmatprep.subr.mxu0 0.0
    %3648 = vmatpush1.msra.mxu0 0.0
    %3649 = vmatprep.subr.mxu0 0.0
    %3650 = vmatpush1.msra.mxu0 0.0
    %3651 = vmatprep.subr.mxu0 0.0
    %3652 = vmatpush1.msra.mxu0 0.0
    %3653 = vmatprep.subr.mxu0 0.0
    %3654 = vmatpush1.msra.mxu0 0.0
    %3655 = vmatprep.subr.mxu0 0.0
    %3656 = vmatpush1.msra.mxu0 0.0
    %3657 = vmatprep.subr.mxu0 0.0
    %3658 = vmatpush1.msra.mxu0 0.0
    %3659 = vmatprep.mubr.f32.mxu0 0.0
    %3660 = vmatmul.mubr.f32.gmra.mrb[0].mxu0 %v3343
    %v3661 = vpop.f32.mrb[0].mxu0
    %v3662 = vadd.f32 0.0, %v3661
    %v3663 = vpop.f32.mrb[0].mxu0
    %v3664 = vadd.f32 0.0, %v3663
    %3665 = vmatprep.mubr.f32.mxu0 0.0
    %3666 = vmatmul.mubr.f32.gmra.mrb[0].mxu0 %v3346
    %v3667 = vpop.f32.mrb[0].mxu0
    %v3668 = vadd.f32 0.0, %v3667
    %v3669 = vpop.f32.mrb[0].mxu0
    %v3670 = vadd.f32 0.0, %v3669
    %3671 = vdwg.mxu0
    %v3672 = vadd.f32 %v3261, %v3431
    %v3673 = vadd.f32 %v3262, %v3433
    %v3674 = vadd.f32 %v3263, %v3508
    %v3675 = vadd.f32 %v3264, %v3510
    %v3676 = vadd.f32 %v3265, %v3585
    %v3677 = vadd.f32 %v3266, %v3587
    %v3678 = vadd.f32 %v3267, %v3662
    %v3679 = vadd.f32 %v3268, %v3664
    %v3680 = vadd.f32 %v3269, %v3437
    %v3681 = vadd.f32 %v3270, %v3439
    %v3682 = vadd.f32 %v3271, %v3514
    %v3683 = vadd.f32 %v3272, %v3516
    %v3684 = vadd.f32 %v3273, %v3591
    %v3685 = vadd.f32 %v3274, %v3593
    %v3686 = vadd.f32 %v3275, %v3668
    %v3687 = vadd.f32 %v3276, %v3670
    %v3688 = vld [vmem:[%s2] sm:$0xff]
    %v3689 = vld [vmem:[%s2 + $0x8] sm:$0xff]
    %3691 = vset.pattern.permute.xlu0 0
    %3692 = vperm.xlu0 %3691, %v3688
    %v3693 = vpop.permute.xlu0 %3692
    %3696 = vset.pattern.permute.xlu0 0
    %3697 = vperm.xlu0 %3696, %v3689
    %v3698 = vpop.permute.xlu0 %3697
    %v3700 = vadd.f32 %v3672, %v3693
    %v3701 = vadd.f32 %v3673, %v3693
    %v3702 = vadd.f32 %v3674, %v3693
    %v3703 = vadd.f32 %v3675, %v3693
    %v3704 = vadd.f32 %v3676, %v3693
    %v3705 = vadd.f32 %v3677, %v3693
    %v3706 = vadd.f32 %v3678, %v3693
    %v3707 = vadd.f32 %v3679, %v3693
    %v3708 = vadd.f32 %v3680, %v3698
    %v3709 = vadd.f32 %v3681, %v3698
    %v3710 = vadd.f32 %v3682, %v3698
    %v3711 = vadd.f32 %v3683, %v3698
    %v3712 = vadd.f32 %v3684, %v3698
    %v3713 = vadd.f32 %v3685, %v3698
    %v3714 = vadd.f32 %v3686, %v3698
    %v3715 = vadd.f32 %v3687, %v3698
    %v3716 = vmax.f32 %v3700, 0.0
    %v3717 = vmax.f32 %v3701, 0.0
    %v3718 = vmax.f32 %v3702, 0.0
    %v3719 = vmax.f32 %v3703, 0.0
    %v3720 = vmax.f32 %v3704, 0.0
    %v3721 = vmax.f32 %v3705, 0.0
    %v3722 = vmax.f32 %v3706, 0.0
    %v3723 = vmax.f32 %v3707, 0.0
    %v3724 = vmax.f32 %v3708, 0.0
    %v3725 = vmax.f32 %v3709, 0.0
    %v3726 = vmax.f32 %v3710, 0.0
    %v3727 = vmax.f32 %v3711, 0.0
    %v3728 = vmax.f32 %v3712, 0.0
    %v3729 = vmax.f32 %v3713, 0.0
    %v3730 = vmax.f32 %v3714, 0.0
    %v3731 = vmax.f32 %v3715, 0.0
    %v3732 = vld [vmem:[#allocation4] sm:$0xff]
    %v3734 = vlaneseq
    %v3735 = vshrl.u32 %v3734, 7
    %v3736 = vsub.s32 0, %v3735
    %v3737 = vrot.slane %v3732, %v3736
    %v3738 = vlaneseq
    %v3739 = vshrl.u32 %v3738, 7
    %v3740 = vsub.s32 1, %v3739
    %v3741 = vrot.slane %v3732, %v3740
    %v3742 = vlaneseq
    %v3743 = vshrl.u32 %v3742, 7
    %v3744 = vsub.s32 2, %v3743
    %v3745 = vrot.slane %v3732, %v3744
    %v3746 = vlaneseq
    %v3747 = vshrl.u32 %v3746, 7
    %v3748 = vsub.s32 3, %v3747
    %v3749 = vrot.slane %v3732, %v3748
    %v3750 = vlaneseq
    %v3751 = vshrl.u32 %v3750, 7
    %v3752 = vsub.s32 4, %v3751
    %v3753 = vrot.slane %v3732, %v3752
    %v3754 = vlaneseq
    %v3755 = vshrl.u32 %v3754, 7
    %v3756 = vsub.s32 5, %v3755
    %v3757 = vrot.slane %v3732, %v3756
    %v3758 = vlaneseq
    %v3759 = vshrl.u32 %v3758, 7
    %v3760 = vsub.s32 6, %v3759
    %v3761 = vrot.slane %v3732, %v3760
    %v3762 = vlaneseq
    %v3763 = vshrl.u32 %v3762, 7
    %v3764 = vsub.s32 7, %v3763
    %v3765 = vrot.slane %v3732, %v3764
    %v3774 = vmul.f32 %v3716, %v3737
    %v3775 = vmul.f32 %v3717, %v3741
    %v3776 = vmul.f32 %v3718, %v3745
    %v3777 = vmul.f32 %v3719, %v3749
    %v3778 = vmul.f32 %v3720, %v3753
    %v3779 = vmul.f32 %v3721, %v3757
    %v3780 = vmul.f32 %v3722, %v3761
    %v3781 = vmul.f32 %v3723, %v3765
    %v3782 = vmul.f32 %v3724, %v3737
    %v3783 = vmul.f32 %v3725, %v3741
    %v3784 = vmul.f32 %v3726, %v3745
    %v3785 = vmul.f32 %v3727, %v3749
    %v3786 = vmul.f32 %v3728, %v3753
    %v3787 = vmul.f32 %v3729, %v3757
    %v3788 = vmul.f32 %v3730, %v3761
    %v3789 = vmul.f32 %v3731, %v3765
    %3806 = vrot.lane.b32.xlu0 %v3774, 32
    %v3807 = vpop.permute.xlu0 %3806
    %3808 = vrot.lane.b32.xlu0 %v3775, 32
    %v3809 = vpop.permute.xlu0 %3808
    %3810 = vrot.lane.b32.xlu0 %v3776, 32
    %v3811 = vpop.permute.xlu0 %3810
    %3812 = vrot.lane.b32.xlu0 %v3777, 32
    %v3813 = vpop.permute.xlu0 %3812
    %3814 = vrot.lane.b32.xlu0 %v3778, 32
    %v3815 = vpop.permute.xlu0 %3814
    %3816 = vrot.lane.b32.xlu0 %v3779, 32
    %v3817 = vpop.permute.xlu0 %3816
    %3818 = vrot.lane.b32.xlu0 %v3780, 32
    %v3819 = vpop.permute.xlu0 %3818
    %3820 = vrot.lane.b32.xlu0 %v3781, 32
    %v3821 = vpop.permute.xlu0 %3820
    %3822 = vrot.lane.b32.xlu0 %v3782, 32
    %v3823 = vpop.permute.xlu0 %3822
    %3824 = vrot.lane.b32.xlu0 %v3783, 32
    %v3825 = vpop.permute.xlu0 %3824
    %3826 = vrot.lane.b32.xlu0 %v3784, 32
    %v3827 = vpop.permute.xlu0 %3826
    %3828 = vrot.lane.b32.xlu0 %v3785, 32
    %v3829 = vpop.permute.xlu0 %3828
    %3830 = vrot.lane.b32.xlu0 %v3786, 32
    %v3831 = vpop.permute.xlu0 %3830
    %3832 = vrot.lane.b32.xlu0 %v3787, 32
    %v3833 = vpop.permute.xlu0 %3832
    %3834 = vrot.lane.b32.xlu0 %v3788, 32
    %v3835 = vpop.permute.xlu0 %3834
    %3836 = vrot.lane.b32.xlu0 %v3789, 32
    %v3837 = vpop.permute.xlu0 %3836
    %v3838 = vsel %vm44, %v3807, %v3809
    %v3839 = vsel %vm44, %v3809, %v3811
    %v3840 = vsel %vm44, %v3811, %v3813
    %v3841 = vsel %vm44, %v3813, %v3815
    %v3842 = vsel %vm44, %v3815, %v3817
    %v3843 = vsel %vm44, %v3817, %v3819
    %v3844 = vsel %vm44, %v3819, %v3821
    %v3845 = vsel %vm44, %v3823, %v3825
    %v3846 = vsel %vm44, %v3825, %v3827
    %v3847 = vsel %vm44, %v3827, %v3829
    %v3848 = vsel %vm44, %v3829, %v3831
    %v3849 = vsel %vm44, %v3831, %v3833
    %v3850 = vsel %vm44, %v3833, %v3835
    %v3851 = vsel %vm44, %v3835, %v3837
    %vm3868 = vcmask 1047808
    %3869 = vst.msk [vmem:[#allocation2] sm:$0xff] %vm3868, %v3807
    %3870 = vst [vmem:[#allocation2 + $0x8] sm:$0xff] %v3838
    %3871 = vst [vmem:[#allocation2 + $0x10] sm:$0xff] %v3839
    %3872 = vst [vmem:[#allocation2 + $0x18] sm:$0xff] %v3840
    %3873 = vst [vmem:[#allocation2 + $0x20] sm:$0xff] %v3841
    %3874 = vst [vmem:[#allocation2 + $0x28] sm:$0xff] %v3842
    %3875 = vst [vmem:[#allocation2 + $0x30] sm:$0xff] %v3843
    %vm3876 = vcmask 293888
    %3877 = vst.msk [vmem:[#allocation2 + $0x38] sm:$0xff] %vm3876, %v3844
    %3878 = vst.msk [vmem:[#allocation2 + $0x40] sm:$0xff] %vm3868, %v3823
    %3879 = vst [vmem:[#allocation2 + $0x48] sm:$0xff] %v3845
    %3880 = vst [vmem:[#allocation2 + $0x50] sm:$0xff] %v3846
    %3881 = vst [vmem:[#allocation2 + $0x58] sm:$0xff] %v3847
    %3882 = vst [vmem:[#allocation2 + $0x60] sm:$0xff] %v3848
    %3883 = vst [vmem:[#allocation2 + $0x68] sm:$0xff] %v3849
    %3884 = vst [vmem:[#allocation2 + $0x70] sm:$0xff] %v3850
    %3885 = vst.msk [vmem:[#allocation2 + $0x78] sm:$0xff] %vm3876, %v3851
    %v3886 = vld [vmem:[%s3] sm:$0xff]
    %v3887 = vld [vmem:[%s3 + $0x8] sm:$0xff]
    %v3888 = vld [vmem:[%s3 + $0x10] sm:$0xff]
    %v3889 = vld [vmem:[%s3 + $0x18] sm:$0xff]
    %v3890 = vld [vmem:[#allocation2] sm:$0xff]
    %v3891 = vld [vmem:[#allocation2 + $0x8] sm:$0xff]
    %v3892 = vld [vmem:[#allocation2 + $0x10] sm:$0xff]
    %v3893 = vld [vmem:[#allocation2 + $0x18] sm:$0xff]
    %v3894 = vld [vmem:[#allocation2 + $0x20] sm:$0xff]
    %v3895 = vld [vmem:[#allocation2 + $0x28] sm:$0xff]
    %v3896 = vld [vmem:[#allocation2 + $0x30] sm:$0xff]
    %v3897 = vld [vmem:[#allocation2 + $0x38] sm:$0xff]
    %v3898 = vld [vmem:[#allocation2 + $0x40] sm:$0xff]
    %v3899 = vld [vmem:[#allocation2 + $0x48] sm:$0xff]
    %v3900 = vld [vmem:[#allocation2 + $0x50] sm:$0xff]
    %v3901 = vld [vmem:[#allocation2 + $0x58] sm:$0xff]
    %v3902 = vld [vmem:[#allocation2 + $0x60] sm:$0xff]
    %v3903 = vld [vmem:[#allocation2 + $0x68] sm:$0xff]
    %v3904 = vld [vmem:[#allocation2 + $0x70] sm:$0xff]
    %v3905 = vld [vmem:[#allocation2 + $0x78] sm:$0xff]
    %s3906 = scalar_lea.vmem %s3, 32
    %v3907 = vld [vmem:[%s3906] sm:$0xff]
    %v3908 = vld [vmem:[%s3906 + $0x8] sm:$0xff]
    %v3909 = vld [vmem:[%s3906 + $0x10] sm:$0xff]
    %v3910 = vld [vmem:[%s3906 + $0x18] sm:$0xff]
    %3927 = vrot.lane.b32.xlu0 %v3890, 126
    %v3928 = vpop.permute.xlu0 %3927
    %3929 = vrot.lane.b32.xlu0 %v3891, 126
    %v3930 = vpop.permute.xlu0 %3929
    %3931 = vrot.lane.b32.xlu0 %v3892, 126
    %v3932 = vpop.permute.xlu0 %3931
    %3933 = vrot.lane.b32.xlu0 %v3893, 126
    %v3934 = vpop.permute.xlu0 %3933
    %3935 = vrot.lane.b32.xlu0 %v3894, 126
    %v3936 = vpop.permute.xlu0 %3935
    %3937 = vrot.lane.b32.xlu0 %v3895, 126
    %v3938 = vpop.permute.xlu0 %3937
    %3939 = vrot.lane.b32.xlu0 %v3896, 126
    %v3940 = vpop.permute.xlu0 %3939
    %3941 = vrot.lane.b32.xlu0 %v3897, 126
    %v3942 = vpop.permute.xlu0 %3941
    %3943 = vrot.lane.b32.xlu0 %v3898, 126
    %v3944 = vpop.permute.xlu0 %3943
    %3945 = vrot.lane.b32.xlu0 %v3899, 126
    %v3946 = vpop.permute.xlu0 %3945
    %3947 = vrot.lane.b32.xlu0 %v3900, 126
    %v3948 = vpop.permute.xlu0 %3947
    %3949 = vrot.lane.b32.xlu0 %v3901, 126
    %v3950 = vpop.permute.xlu0 %3949
    %3951 = vrot.lane.b32.xlu0 %v3902, 126
    %v3952 = vpop.permute.xlu0 %3951
    %3953 = vrot.lane.b32.xlu0 %v3903, 126
    %v3954 = vpop.permute.xlu0 %3953
    %3955 = vrot.lane.b32.xlu0 %v3904, 126
    %v3956 = vpop.permute.xlu0 %3955
    %3957 = vrot.lane.b32.xlu0 %v3905, 126
    %v3958 = vpop.permute.xlu0 %3957
    %v3959 = vsel %vm117, %v3928, %v3930
    %v3960 = vsel %vm117, %v3930, %v3932
    %v3961 = vsel %vm117, %v3932, %v3934
    %v3962 = vsel %vm117, %v3934, %v3936
    %v3963 = vsel %vm117, %v3936, %v3938
    %v3964 = vsel %vm117, %v3938, %v3940
    %v3965 = vsel %vm117, %v3940, %v3942
    %v3966 = vsel %vm117, %v3944, %v3946
    %v3967 = vsel %vm117, %v3946, %v3948
    %v3968 = vsel %vm117, %v3948, %v3950
    %v3969 = vsel %vm117, %v3950, %v3952
    %v3970 = vsel %vm117, %v3952, %v3954
    %v3971 = vsel %vm117, %v3954, %v3956
    %v3972 = vsel %vm117, %v3956, %v3958
    %vm3989 = vcmask 130048
    %v3991 = vsel %vm3989, %v3907, 0
    %v3994 = vsel %vm3989, %v3908, 0
    %v3997 = vsel %vm3989, %v3909, 0
    %v4000 = vsel %vm3989, %v3910, 0
    %4002 = vmatprep.subr.mxu0 %v3960
    %4003 = vmatpush1.msra.mxu0 %v3959
    %4004 = vmatprep.subr.mxu0 %v3967
    %4005 = vmatpush1.msra.mxu0 %v3966
    %4006 = vmatprep.subr.mxu0 0.0
    %4007 = vmatpush1.msra.mxu0 0.0
    %4008 = vmatprep.subr.mxu0 0.0
    %4009 = vmatpush1.msra.mxu0 0.0
    %4010 = vmatprep.subr.mxu0 0.0
    %4011 = vmatpush1.msra.mxu0 0.0
    %4012 = vmatprep.subr.mxu0 0.0
    %4013 = vmatpush1.msra.mxu0 0.0
    %4014 = vmatprep.subr.mxu0 0.0
    %4015 = vmatpush1.msra.mxu0 0.0
    %4016 = vmatprep.subr.mxu0 0.0
    %4017 = vmatpush1.msra.mxu0 0.0
    %4018 = vmatprep.subr.mxu0 0.0
    %4019 = vmatpush1.msra.mxu0 0.0
    %4020 = vmatprep.subr.mxu0 0.0
    %4021 = vmatpush1.msra.mxu0 0.0
    %4022 = vmatprep.subr.mxu0 0.0
    %4023 = vmatpush1.msra.mxu0 0.0
    %4024 = vmatprep.subr.mxu0 0.0
    %4025 = vmatpush1.msra.mxu0 0.0
    %4026 = vmatprep.subr.mxu0 0.0
    %4027 = vmatpush1.msra.mxu0 0.0
    %4028 = vmatprep.subr.mxu0 0.0
    %4029 = vmatpush1.msra.mxu0 0.0
    %4030 = vmatprep.subr.mxu0 0.0
    %4031 = vmatpush1.msra.mxu0 0.0
    %4032 = vmatprep.subr.mxu0 0.0
    %4033 = vmatpush1.msra.mxu0 0.0
    %4034 = vmatprep.subr.mxu0 0.0
    %4035 = vmatpush1.msra.mxu0 0.0
    %4036 = vmatprep.subr.mxu0 0.0
    %4037 = vmatpush1.msra.mxu0 0.0
    %4038 = vmatprep.subr.mxu0 0.0
    %4039 = vmatpush1.msra.mxu0 0.0
    %4040 = vmatprep.subr.mxu0 0.0
    %4041 = vmatpush1.msra.mxu0 0.0
    %4042 = vmatprep.subr.mxu0 0.0
    %4043 = vmatpush1.msra.mxu0 0.0
    %4044 = vmatprep.subr.mxu0 0.0
    %4045 = vmatpush1.msra.mxu0 0.0
    %4046 = vmatprep.subr.mxu0 0.0
    %4047 = vmatpush1.msra.mxu0 0.0
    %4048 = vmatprep.subr.mxu0 0.0
    %4049 = vmatpush1.msra.mxu0 0.0
    %4050 = vmatprep.subr.mxu0 0.0
    %4051 = vmatpush1.msra.mxu0 0.0
    %4052 = vmatprep.subr.mxu0 0.0
    %4053 = vmatpush1.msra.mxu0 0.0
    %4054 = vmatprep.subr.mxu0 0.0
    %4055 = vmatpush1.msra.mxu0 0.0
    %4056 = vmatprep.subr.mxu0 0.0
    %4057 = vmatpush1.msra.mxu0 0.0
    %4058 = vmatprep.subr.mxu0 0.0
    %4059 = vmatpush1.msra.mxu0 0.0
    %4060 = vmatprep.subr.mxu0 0.0
    %4061 = vmatpush1.msra.mxu0 0.0
    %4062 = vmatprep.subr.mxu0 0.0
    %4063 = vmatpush1.msra.mxu0 0.0
    %4064 = vmatprep.subr.mxu0 0.0
    %4065 = vmatpush1.msra.mxu0 0.0
    %4066 = vmatprep.mubr.f32.mxu0 0.0
    %4067 = vmatmul.mubr.f32.gmra.mrb[0].mxu0 %v3991
    %v4068 = vpop.f32.mrb[0].mxu0
    %v4069 = vadd.f32 0.0, %v4068
    %v4070 = vpop.f32.mrb[0].mxu0
    %v4071 = vadd.f32 0.0, %v4070
    %4072 = vmatprep.mubr.f32.mxu0 0.0
    %4073 = vmatmul.mubr.f32.gmra.mrb[0].mxu0 %v3994
    %v4074 = vpop.f32.mrb[0].mxu0
    %v4075 = vadd.f32 0.0, %v4074
    %v4076 = vpop.f32.mrb[0].mxu0
    %v4077 = vadd.f32 0.0, %v4076
    %4078 = vmatprep.mubr.f32.mxu0 0.0
    %4079 = vmatmul.mubr.f32.gmra.mrb[0].mxu0 %v3997
    %v4080 = vpop.f32.mrb[0].mxu0
    %v4081 = vadd.f32 0.0, %v4080
    %v4082 = vpop.f32.mrb[0].mxu0
    %v4083 = vadd.f32 0.0, %v4082
    %4084 = vmatprep.mubr.f32.mxu0 0.0
    %4085 = vmatmul.mubr.f32.gmra.mrb[0].mxu0 %v4000
    %v4086 = vpop.f32.mrb[0].mxu0
    %v4087 = vadd.f32 0.0, %v4086
    %v4088 = vpop.f32.mrb[0].mxu0
    %v4089 = vadd.f32 0.0, %v4088
    %4090 = vdwg.mxu0
    %4091 = vmatprep.subr.mxu0 %v3962
    %4092 = vmatpush1.msra.mxu0 %v3961
    %4093 = vmatprep.subr.mxu0 %v3969
    %4094 = vmatpush1.msra.mxu0 %v3968
    %4095 = vmatprep.subr.mxu0 0.0
    %4096 = vmatpush1.msra.mxu0 0.0
    %4097 = vmatprep.subr.mxu0 0.0
    %4098 = vmatpush1.msra.mxu0 0.0
    %4099 = vmatprep.subr.mxu0 0.0
    %4100 = vmatpush1.msra.mxu0 0.0
    %4101 = vmatprep.subr.mxu0 0.0
    %4102 = vmatpush1.msra.mxu0 0.0
    %4103 = vmatprep.subr.mxu0 0.0
    %4104 = vmatpush1.msra.mxu0 0.0
    %4105 = vmatprep.subr.mxu0 0.0
    %4106 = vmatpush1.msra.mxu0 0.0
    %4107 = vmatprep.subr.mxu0 0.0
    %4108 = vmatpush1.msra.mxu0 0.0
    %4109 = vmatprep.subr.mxu0 0.0
    %4110 = vmatpush1.msra.mxu0 0.0
    %4111 = vmatprep.subr.mxu0 0.0
    %4112 = vmatpush1.msra.mxu0 0.0
    %4113 = vmatprep.subr.mxu0 0.0
    %4114 = vmatpush1.msra.mxu0 0.0
    %4115 = vmatprep.subr.mxu0 0.0
    %4116 = vmatpush1.msra.mxu0 0.0
    %4117 = vmatprep.subr.mxu0 0.0
    %4118 = vmatpush1.msra.mxu0 0.0
    %4119 = vmatprep.subr.mxu0 0.0
    %4120 = vmatpush1.msra.mxu0 0.0
    %4121 = vmatprep.subr.mxu0 0.0
    %4122 = vmatpush1.msra.mxu0 0.0
    %4123 = vmatprep.subr.mxu0 0.0
    %4124 = vmatpush1.msra.mxu0 0.0
    %4125 = vmatprep.subr.mxu0 0.0
    %4126 = vmatpush1.msra.mxu0 0.0
    %4127 = vmatprep.subr.mxu0 0.0
    %4128 = vmatpush1.msra.mxu0 0.0
    %4129 = vmatprep.subr.mxu0 0.0
    %4130 = vmatpush1.msra.mxu0 0.0
    %4131 = vmatprep.subr.mxu0 0.0
    %4132 = vmatpush1.msra.mxu0 0.0
    %4133 = vmatprep.subr.mxu0 0.0
    %4134 = vmatpush1.msra.mxu0 0.0
    %4135 = vmatprep.subr.mxu0 0.0
    %4136 = vmatpush1.msra.mxu0 0.0
    %4137 = vmatprep.subr.mxu0 0.0
    %4138 = vmatpush1.msra.mxu0 0.0
    %4139 = vmatprep.subr.mxu0 0.0
    %4140 = vmatpush1.msra.mxu0 0.0
    %4141 = vmatprep.subr.mxu0 0.0
    %4142 = vmatpush1.msra.mxu0 0.0
    %4143 = vmatprep.subr.mxu0 0.0
    %4144 = vmatpush1.msra.mxu0 0.0
    %4145 = vmatprep.subr.mxu0 0.0
    %4146 = vmatpush1.msra.mxu0 0.0
    %4147 = vmatprep.subr.mxu0 0.0
    %4148 = vmatpush1.msra.mxu0 0.0
    %4149 = vmatprep.subr.mxu0 0.0
    %4150 = vmatpush1.msra.mxu0 0.0
    %4151 = vmatprep.subr.mxu0 0.0
    %4152 = vmatpush1.msra.mxu0 0.0
    %4153 = vmatprep.subr.mxu0 0.0
    %4154 = vmatpush1.msra.mxu0 0.0
    %4155 = vmatprep.mubr.f32.mxu0 0.0
    %4156 = vmatmul.mubr.f32.gmra.mrb[0].mxu0 %v3991
    %v4157 = vpop.f32.mrb[0].mxu0
    %v4158 = vadd.f32 0.0, %v4157
    %v4159 = vpop.f32.mrb[0].mxu0
    %v4160 = vadd.f32 0.0, %v4159
    %4161 = vmatprep.mubr.f32.mxu0 0.0
    %4162 = vmatmul.mubr.f32.gmra.mrb[0].mxu0 %v3994
    %v4163 = vpop.f32.mrb[0].mxu0
    %v4164 = vadd.f32 0.0, %v4163
    %v4165 = vpop.f32.mrb[0].mxu0
    %v4166 = vadd.f32 0.0, %v4165
    %4167 = vmatprep.mubr.f32.mxu0 0.0
    %4168 = vmatmul.mubr.f32.gmra.mrb[0].mxu0 %v3997
    %v4169 = vpop.f32.mrb[0].mxu0
    %v4170 = vadd.f32 0.0, %v4169
    %v4171 = vpop.f32.mrb[0].mxu0
    %v4172 = vadd.f32 0.0, %v4171
    %4173 = vmatprep.mubr.f32.mxu0 0.0
    %4174 = vmatmul.mubr.f32.gmra.mrb[0].mxu0 %v4000
    %v4175 = vpop.f32.mrb[0].mxu0
    %v4176 = vadd.f32 0.0, %v4175
    %v4177 = vpop.f32.mrb[0].mxu0
    %v4178 = vadd.f32 0.0, %v4177
    %4179 = vdwg.mxu0
    %4180 = vmatprep.subr.mxu0 %v3964
    %4181 = vmatpush1.msra.mxu0 %v3963
    %4182 = vmatprep.subr.mxu0 %v3971
    %4183 = vmatpush1.msra.mxu0 %v3970
    %4184 = vmatprep.subr.mxu0 0.0
    %4185 = vmatpush1.msra.mxu0 0.0
    %4186 = vmatprep.subr.mxu0 0.0
    %4187 = vmatpush1.msra.mxu0 0.0
    %4188 = vmatprep.subr.mxu0 0.0
    %4189 = vmatpush1.msra.mxu0 0.0
    %4190 = vmatprep.subr.mxu0 0.0
    %4191 = vmatpush1.msra.mxu0 0.0
    %4192 = vmatprep.subr.mxu0 0.0
    %4193 = vmatpush1.msra.mxu0 0.0
    %4194 = vmatprep.subr.mxu0 0.0
    %4195 = vmatpush1.msra.mxu0 0.0
    %4196 = vmatprep.subr.mxu0 0.0
    %4197 = vmatpush1.msra.mxu0 0.0
    %4198 = vmatprep.subr.mxu0 0.0
    %4199 = vmatpush1.msra.mxu0 0.0
    %4200 = vmatprep.subr.mxu0 0.0
    %4201 = vmatpush1.msra.mxu0 0.0
    %4202 = vmatprep.subr.mxu0 0.0
    %4203 = vmatpush1.msra.mxu0 0.0
    %4204 = vmatprep.subr.mxu0 0.0
    %4205 = vmatpush1.msra.mxu0 0.0
    %4206 = vmatprep.subr.mxu0 0.0
    %4207 = vmatpush1.msra.mxu0 0.0
    %4208 = vmatprep.subr.mxu0 0.0
    %4209 = vmatpush1.msra.mxu0 0.0
    %4210 = vmatprep.subr.mxu0 0.0
    %4211 = vmatpush1.msra.mxu0 0.0
    %4212 = vmatprep.subr.mxu0 0.0
    %4213 = vmatpush1.msra.mxu0 0.0
    %4214 = vmatprep.subr.mxu0 0.0
    %4215 = vmatpush1.msra.mxu0 0.0
    %4216 = vmatprep.subr.mxu0 0.0
    %4217 = vmatpush1.msra.mxu0 0.0
    %4218 = vmatprep.subr.mxu0 0.0
    %4219 = vmatpush1.msra.mxu0 0.0
    %4220 = vmatprep.subr.mxu0 0.0
    %4221 = vmatpush1.msra.mxu0 0.0
    %4222 = vmatprep.subr.mxu0 0.0
    %4223 = vmatpush1.msra.mxu0 0.0
    %4224 = vmatprep.subr.mxu0 0.0
    %4225 = vmatpush1.msra.mxu0 0.0
    %4226 = vmatprep.subr.mxu0 0.0
    %4227 = vmatpush1.msra.mxu0 0.0
    %4228 = vmatprep.subr.mxu0 0.0
    %4229 = vmatpush1.msra.mxu0 0.0
    %4230 = vmatprep.subr.mxu0 0.0
    %4231 = vmatpush1.msra.mxu0 0.0
    %4232 = vmatprep.subr.mxu0 0.0
    %4233 = vmatpush1.msra.mxu0 0.0
    %4234 = vmatprep.subr.mxu0 0.0
    %4235 = vmatpush1.msra.mxu0 0.0
    %4236 = vmatprep.subr.mxu0 0.0
    %4237 = vmatpush1.msra.mxu0 0.0
    %4238 = vmatprep.subr.mxu0 0.0
    %4239 = vmatpush1.msra.mxu0 0.0
    %4240 = vmatprep.subr.mxu0 0.0
    %4241 = vmatpush1.msra.mxu0 0.0
    %4242 = vmatprep.subr.mxu0 0.0
    %4243 = vmatpush1.msra.mxu0 0.0
    %4244 = vmatprep.mubr.f32.mxu0 0.0
    %4245 = vmatmul.mubr.f32.gmra.mrb[0].mxu0 %v3991
    %v4246 = vpop.f32.mrb[0].mxu0
    %v4247 = vadd.f32 0.0, %v4246
    %v4248 = vpop.f32.mrb[0].mxu0
    %v4249 = vadd.f32 0.0, %v4248
    %4250 = vmatprep.mubr.f32.mxu0 0.0
    %4251 = vmatmul.mubr.f32.gmra.mrb[0].mxu0 %v3994
    %v4252 = vpop.f32.mrb[0].mxu0
    %v4253 = vadd.f32 0.0, %v4252
    %v4254 = vpop.f32.mrb[0].mxu0
    %v4255 = vadd.f32 0.0, %v4254
    %4256 = vmatprep.mubr.f32.mxu0 0.0
    %4257 = vmatmul.mubr.f32.gmra.mrb[0].mxu0 %v3997
    %v4258 = vpop.f32.mrb[0].mxu0
    %v4259 = vadd.f32 0.0, %v4258
    %v4260 = vpop.f32.mrb[0].mxu0
    %v4261 = vadd.f32 0.0, %v4260
    %4262 = vmatprep.mubr.f32.mxu0 0.0
    %4263 = vmatmul.mubr.f32.gmra.mrb[0].mxu0 %v4000
    %v4264 = vpop.f32.mrb[0].mxu0
    %v4265 = vadd.f32 0.0, %v4264
    %v4266 = vpop.f32.mrb[0].mxu0
    %v4267 = vadd.f32 0.0, %v4266
    %4268 = vdwg.mxu0
    %4269 = vmatprep.subr.mxu0 %v3942
    %4270 = vmatpush1.msra.mxu0 %v3965
    %4271 = vmatprep.subr.mxu0 %v3958
    %4272 = vmatpush1.msra.mxu0 %v3972
    %4273 = vmatprep.subr.mxu0 0.0
    %4274 = vmatpush1.msra.mxu0 0.0
    %4275 = vmatprep.subr.mxu0 0.0
    %4276 = vmatpush1.msra.mxu0 0.0
    %4277 = vmatprep.subr.mxu0 0.0
    %4278 = vmatpush1.msra.mxu0 0.0
    %4279 = vmatprep.subr.mxu0 0.0
    %4280 = vmatpush1.msra.mxu0 0.0
    %4281 = vmatprep.subr.mxu0 0.0
    %4282 = vmatpush1.msra.mxu0 0.0
    %4283 = vmatprep.subr.mxu0 0.0
    %4284 = vmatpush1.msra.mxu0 0.0
    %4285 = vmatprep.subr.mxu0 0.0
    %4286 = vmatpush1.msra.mxu0 0.0
    %4287 = vmatprep.subr.mxu0 0.0
    %4288 = vmatpush1.msra.mxu0 0.0
    %4289 = vmatprep.subr.mxu0 0.0
    %4290 = vmatpush1.msra.mxu0 0.0
    %4291 = vmatprep.subr.mxu0 0.0
    %4292 = vmatpush1.msra.mxu0 0.0
    %4293 = vmatprep.subr.mxu0 0.0
    %4294 = vmatpush1.msra.mxu0 0.0
    %4295 = vmatprep.subr.mxu0 0.0
    %4296 = vmatpush1.msra.mxu0 0.0
    %4297 = vmatprep.subr.mxu0 0.0
    %4298 = vmatpush1.msra.mxu0 0.0
    %4299 = vmatprep.subr.mxu0 0.0
    %4300 = vmatpush1.msra.mxu0 0.0
    %4301 = vmatprep.subr.mxu0 0.0
    %4302 = vmatpush1.msra.mxu0 0.0
    %4303 = vmatprep.subr.mxu0 0.0
    %4304 = vmatpush1.msra.mxu0 0.0
    %4305 = vmatprep.subr.mxu0 0.0
    %4306 = vmatpush1.msra.mxu0 0.0
    %4307 = vmatprep.subr.mxu0 0.0
    %4308 = vmatpush1.msra.mxu0 0.0
    %4309 = vmatprep.subr.mxu0 0.0
    %4310 = vmatpush1.msra.mxu0 0.0
    %4311 = vmatprep.subr.mxu0 0.0
    %4312 = vmatpush1.msra.mxu0 0.0
    %4313 = vmatprep.subr.mxu0 0.0
    %4314 = vmatpush1.msra.mxu0 0.0
    %4315 = vmatprep.subr.mxu0 0.0
    %4316 = vmatpush1.msra.mxu0 0.0
    %4317 = vmatprep.subr.mxu0 0.0
    %4318 = vmatpush1.msra.mxu0 0.0
    %4319 = vmatprep.subr.mxu0 0.0
    %4320 = vmatpush1.msra.mxu0 0.0
    %4321 = vmatprep.subr.mxu0 0.0
    %4322 = vmatpush1.msra.mxu0 0.0
    %4323 = vmatprep.subr.mxu0 0.0
    %4324 = vmatpush1.msra.mxu0 0.0
    %4325 = vmatprep.subr.mxu0 0.0
    %4326 = vmatpush1.msra.mxu0 0.0
    %4327 = vmatprep.subr.mxu0 0.0
    %4328 = vmatpush1.msra.mxu0 0.0
    %4329 = vmatprep.subr.mxu0 0.0
    %4330 = vmatpush1.msra.mxu0 0.0
    %4331 = vmatprep.subr.mxu0 0.0
    %4332 = vmatpush1.msra.mxu0 0.0
    %4333 = vmatprep.mubr.f32.mxu0 0.0
    %4334 = vmatmul.mubr.f32.gmra.mrb[0].mxu0 %v3991
    %v4335 = vpop.f32.mrb[0].mxu0
    %v4336 = vadd.f32 0.0, %v4335
    %v4337 = vpop.f32.mrb[0].mxu0
    %v4338 = vadd.f32 0.0, %v4337
    %4339 = vmatprep.mubr.f32.mxu0 0.0
    %4340 = vmatmul.mubr.f32.gmra.mrb[0].mxu0 %v3994
    %v4341 = vpop.f32.mrb[0].mxu0
    %v4342 = vadd.f32 0.0, %v4341
    %v4343 = vpop.f32.mrb[0].mxu0
    %v4344 = vadd.f32 0.0, %v4343
    %4345 = vmatprep.mubr.f32.mxu0 0.0
    %4346 = vmatmul.mubr.f32.gmra.mrb[0].mxu0 %v3997
    %v4347 = vpop.f32.mrb[0].mxu0
    %v4348 = vadd.f32 0.0, %v4347
    %v4349 = vpop.f32.mrb[0].mxu0
    %v4350 = vadd.f32 0.0, %v4349
    %4351 = vmatprep.mubr.f32.mxu0 0.0
    %4352 = vmatmul.mubr.f32.gmra.mrb[0].mxu0 %v4000
    %v4353 = vpop.f32.mrb[0].mxu0
    %v4354 = vadd.f32 0.0, %v4353
    %v4355 = vpop.f32.mrb[0].mxu0
    %v4356 = vadd.f32 0.0, %v4355
    %4357 = vdwg.mxu0
    %4358 = vrot.lane.b32.xlu0 %v3890, 127
    %v4359 = vpop.permute.xlu0 %4358
    %4360 = vrot.lane.b32.xlu0 %v3891, 127
    %v4361 = vpop.permute.xlu0 %4360
    %4362 = vrot.lane.b32.xlu0 %v3892, 127
    %v4363 = vpop.permute.xlu0 %4362
    %4364 = vrot.lane.b32.xlu0 %v3893, 127
    %v4365 = vpop.permute.xlu0 %4364
    %4366 = vrot.lane.b32.xlu0 %v3894, 127
    %v4367 = vpop.permute.xlu0 %4366
    %4368 = vrot.lane.b32.xlu0 %v3895, 127
    %v4369 = vpop.permute.xlu0 %4368
    %4370 = vrot.lane.b32.xlu0 %v3896, 127
    %v4371 = vpop.permute.xlu0 %4370
    %4372 = vrot.lane.b32.xlu0 %v3897, 127
    %v4373 = vpop.permute.xlu0 %4372
    %4374 = vrot.lane.b32.xlu0 %v3898, 127
    %v4375 = vpop.permute.xlu0 %4374
    %4376 = vrot.lane.b32.xlu0 %v3899, 127
    %v4377 = vpop.permute.xlu0 %4376
    %4378 = vrot.lane.b32.xlu0 %v3900, 127
    %v4379 = vpop.permute.xlu0 %4378
    %4380 = vrot.lane.b32.xlu0 %v3901, 127
    %v4381 = vpop.permute.xlu0 %4380
    %4382 = vrot.lane.b32.xlu0 %v3902, 127
    %v4383 = vpop.permute.xlu0 %4382
    %4384 = vrot.lane.b32.xlu0 %v3903, 127
    %v4385 = vpop.permute.xlu0 %4384
    %4386 = vrot.lane.b32.xlu0 %v3904, 127
    %v4387 = vpop.permute.xlu0 %4386
    %4388 = vrot.lane.b32.xlu0 %v3905, 127
    %v4389 = vpop.permute.xlu0 %4388
    %v4390 = vsel %vm473, %v4359, %v4361
    %v4391 = vsel %vm473, %v4361, %v4363
    %v4392 = vsel %vm473, %v4363, %v4365
    %v4393 = vsel %vm473, %v4365, %v4367
    %v4394 = vsel %vm473, %v4367, %v4369
    %v4395 = vsel %vm473, %v4369, %v4371
    %v4396 = vsel %vm473, %v4371, %v4373
    %v4397 = vsel %vm473, %v4375, %v4377
    %v4398 = vsel %vm473, %v4377, %v4379
    %v4399 = vsel %vm473, %v4379, %v4381
    %v4400 = vsel %vm473, %v4381, %v4383
    %v4401 = vsel %vm473, %v4383, %v4385
    %v4402 = vsel %vm473, %v4385, %v4387
    %v4403 = vsel %vm473, %v4387, %v4389
    %v4421 = vsel %vm3989, %v3886, 0
    %v4424 = vsel %vm3989, %v3887, 0
    %v4427 = vsel %vm3989, %v3888, 0
    %v4430 = vsel %vm3989, %v3889, 0
    %4432 = vmatprep.subr.mxu0 %v4391
    %4433 = vmatpush1.msra.mxu0 %v4390
    %4434 = vmatprep.subr.mxu0 %v4398
    %4435 = vmatpush1.msra.mxu0 %v4397
    %4436 = vmatprep.subr.mxu0 0.0
    %4437 = vmatpush1.msra.mxu0 0.0
    %4438 = vmatprep.subr.mxu0 0.0
    %4439 = vmatpush1.msra.mxu0 0.0
    %4440 = vmatprep.subr.mxu0 0.0
    %4441 = vmatpush1.msra.mxu0 0.0
    %4442 = vmatprep.subr.mxu0 0.0
    %4443 = vmatpush1.msra.mxu0 0.0
    %4444 = vmatprep.subr.mxu0 0.0
    %4445 = vmatpush1.msra.mxu0 0.0
    %4446 = vmatprep.subr.mxu0 0.0
    %4447 = vmatpush1.msra.mxu0 0.0
    %4448 = vmatprep.subr.mxu0 0.0
    %4449 = vmatpush1.msra.mxu0 0.0
    %4450 = vmatprep.subr.mxu0 0.0
    %4451 = vmatpush1.msra.mxu0 0.0
    %4452 = vmatprep.subr.mxu0 0.0
    %4453 = vmatpush1.msra.mxu0 0.0
    %4454 = vmatprep.subr.mxu0 0.0
    %4455 = vmatpush1.msra.mxu0 0.0
    %4456 = vmatprep.subr.mxu0 0.0
    %4457 = vmatpush1.msra.mxu0 0.0
    %4458 = vmatprep.subr.mxu0 0.0
    %4459 = vmatpush1.msra.mxu0 0.0
    %4460 = vmatprep.subr.mxu0 0.0
    %4461 = vmatpush1.msra.mxu0 0.0
    %4462 = vmatprep.subr.mxu0 0.0
    %4463 = vmatpush1.msra.mxu0 0.0
    %4464 = vmatprep.subr.mxu0 0.0
    %4465 = vmatpush1.msra.mxu0 0.0
    %4466 = vmatprep.subr.mxu0 0.0
    %4467 = vmatpush1.msra.mxu0 0.0
    %4468 = vmatprep.subr.mxu0 0.0
    %4469 = vmatpush1.msra.mxu0 0.0
    %4470 = vmatprep.subr.mxu0 0.0
    %4471 = vmatpush1.msra.mxu0 0.0
    %4472 = vmatprep.subr.mxu0 0.0
    %4473 = vmatpush1.msra.mxu0 0.0
    %4474 = vmatprep.subr.mxu0 0.0
    %4475 = vmatpush1.msra.mxu0 0.0
    %4476 = vmatprep.subr.mxu0 0.0
    %4477 = vmatpush1.msra.mxu0 0.0
    %4478 = vmatprep.subr.mxu0 0.0
    %4479 = vmatpush1.msra.mxu0 0.0
    %4480 = vmatprep.subr.mxu0 0.0
    %4481 = vmatpush1.msra.mxu0 0.0
    %4482 = vmatprep.subr.mxu0 0.0
    %4483 = vmatpush1.msra.mxu0 0.0
    %4484 = vmatprep.subr.mxu0 0.0
    %4485 = vmatpush1.msra.mxu0 0.0
    %4486 = vmatprep.subr.mxu0 0.0
    %4487 = vmatpush1.msra.mxu0 0.0
    %4488 = vmatprep.subr.mxu0 0.0
    %4489 = vmatpush1.msra.mxu0 0.0
    %4490 = vmatprep.subr.mxu0 0.0
    %4491 = vmatpush1.msra.mxu0 0.0
    %4492 = vmatprep.subr.mxu0 0.0
    %4493 = vmatpush1.msra.mxu0 0.0
    %4494 = vmatprep.subr.mxu0 0.0
    %4495 = vmatpush1.msra.mxu0 0.0
    %4496 = vmatprep.mubr.f32.mxu0 0.0
    %4497 = vmatmul.mubr.f32.gmra.mrb[0].mxu0 %v4421
    %v4498 = vpop.f32.mrb[0].mxu0
    %v4499 = vadd.f32 %v4069, %v4498
    %v4500 = vpop.f32.mrb[0].mxu0
    %v4501 = vadd.f32 %v4071, %v4500
    %4502 = vmatprep.mubr.f32.mxu0 0.0
    %4503 = vmatmul.mubr.f32.gmra.mrb[0].mxu0 %v4424
    %v4504 = vpop.f32.mrb[0].mxu0
    %v4505 = vadd.f32 %v4075, %v4504
    %v4506 = vpop.f32.mrb[0].mxu0
    %v4507 = vadd.f32 %v4077, %v4506
    %4508 = vmatprep.mubr.f32.mxu0 0.0
    %4509 = vmatmul.mubr.f32.gmra.mrb[0].mxu0 %v4427
    %v4510 = vpop.f32.mrb[0].mxu0
    %v4511 = vadd.f32 %v4081, %v4510
    %v4512 = vpop.f32.mrb[0].mxu0
    %v4513 = vadd.f32 %v4083, %v4512
    %4514 = vmatprep.mubr.f32.mxu0 0.0
    %4515 = vmatmul.mubr.f32.gmra.mrb[0].mxu0 %v4430
    %v4516 = vpop.f32.mrb[0].mxu0
    %v4517 = vadd.f32 %v4087, %v4516
    %v4518 = vpop.f32.mrb[0].mxu0
    %v4519 = vadd.f32 %v4089, %v4518
    %4520 = vdwg.mxu0
    %4521 = vmatprep.subr.mxu0 %v4393
    %4522 = vmatpush1.msra.mxu0 %v4392
    %4523 = vmatprep.subr.mxu0 %v4400
    %4524 = vmatpush1.msra.mxu0 %v4399
    %4525 = vmatprep.subr.mxu0 0.0
    %4526 = vmatpush1.msra.mxu0 0.0
    %4527 = vmatprep.subr.mxu0 0.0
    %4528 = vmatpush1.msra.mxu0 0.0
    %4529 = vmatprep.subr.mxu0 0.0
    %4530 = vmatpush1.msra.mxu0 0.0
    %4531 = vmatprep.subr.mxu0 0.0
    %4532 = vmatpush1.msra.mxu0 0.0
    %4533 = vmatprep.subr.mxu0 0.0
    %4534 = vmatpush1.msra.mxu0 0.0
    %4535 = vmatprep.subr.mxu0 0.0
    %4536 = vmatpush1.msra.mxu0 0.0
    %4537 = vmatprep.subr.mxu0 0.0
    %4538 = vmatpush1.msra.mxu0 0.0
    %4539 = vmatprep.subr.mxu0 0.0
    %4540 = vmatpush1.msra.mxu0 0.0
    %4541 = vmatprep.subr.mxu0 0.0
    %4542 = vmatpush1.msra.mxu0 0.0
    %4543 = vmatprep.subr.mxu0 0.0
    %4544 = vmatpush1.msra.mxu0 0.0
    %4545 = vmatprep.subr.mxu0 0.0
    %4546 = vmatpush1.msra.mxu0 0.0
    %4547 = vmatprep.subr.mxu0 0.0
    %4548 = vmatpush1.msra.mxu0 0.0
    %4549 = vmatprep.subr.mxu0 0.0
    %4550 = vmatpush1.msra.mxu0 0.0
    %4551 = vmatprep.subr.mxu0 0.0
    %4552 = vmatpush1.msra.mxu0 0.0
    %4553 = vmatprep.subr.mxu0 0.0
    %4554 = vmatpush1.msra.mxu0 0.0
    %4555 = vmatprep.subr.mxu0 0.0
    %4556 = vmatpush1.msra.mxu0 0.0
    %4557 = vmatprep.subr.mxu0 0.0
    %4558 = vmatpush1.msra.mxu0 0.0
    %4559 = vmatprep.subr.mxu0 0.0
    %4560 = vmatpush1.msra.mxu0 0.0
    %4561 = vmatprep.subr.mxu0 0.0
    %4562 = vmatpush1.msra.mxu0 0.0
    %4563 = vmatprep.subr.mxu0 0.0
    %4564 = vmatpush1.msra.mxu0 0.0
    %4565 = vmatprep.subr.mxu0 0.0
    %4566 = vmatpush1.msra.mxu0 0.0
    %4567 = vmatprep.subr.mxu0 0.0
    %4568 = vmatpush1.msra.mxu0 0.0
    %4569 = vmatprep.subr.mxu0 0.0
    %4570 = vmatpush1.msra.mxu0 0.0
    %4571 = vmatprep.subr.mxu0 0.0
    %4572 = vmatpush1.msra.mxu0 0.0
    %4573 = vmatprep.subr.mxu0 0.0
    %4574 = vmatpush1.msra.mxu0 0.0
    %4575 = vmatprep.subr.mxu0 0.0
    %4576 = vmatpush1.msra.mxu0 0.0
    %4577 = vmatprep.subr.mxu0 0.0
    %4578 = vmatpush1.msra.mxu0 0.0
    %4579 = vmatprep.subr.mxu0 0.0
    %4580 = vmatpush1.msra.mxu0 0.0
    %4581 = vmatprep.subr.mxu0 0.0
    %4582 = vmatpush1.msra.mxu0 0.0
    %4583 = vmatprep.subr.mxu0 0.0
    %4584 = vmatpush1.msra.mxu0 0.0
    %4585 = vmatprep.mubr.f32.mxu0 0.0
    %4586 = vmatmul.mubr.f32.gmra.mrb[0].mxu0 %v4421
    %v4587 = vpop.f32.mrb[0].mxu0
    %v4588 = vadd.f32 %v4158, %v4587
    %v4589 = vpop.f32.mrb[0].mxu0
    %v4590 = vadd.f32 %v4160, %v4589
    %4591 = vmatprep.mubr.f32.mxu0 0.0
    %4592 = vmatmul.mubr.f32.gmra.mrb[0].mxu0 %v4424
    %v4593 = vpop.f32.mrb[0].mxu0
    %v4594 = vadd.f32 %v4164, %v4593
    %v4595 = vpop.f32.mrb[0].mxu0
    %v4596 = vadd.f32 %v4166, %v4595
    %4597 = vmatprep.mubr.f32.mxu0 0.0
    %4598 = vmatmul.mubr.f32.gmra.mrb[0].mxu0 %v4427
    %v4599 = vpop.f32.mrb[0].mxu0
    %v4600 = vadd.f32 %v4170, %v4599
    %v4601 = vpop.f32.mrb[0].mxu0
    %v4602 = vadd.f32 %v4172, %v4601
    %4603 = vmatprep.mubr.f32.mxu0 0.0
    %4604 = vmatmul.mubr.f32.gmra.mrb[0].mxu0 %v4430
    %v4605 = vpop.f32.mrb[0].mxu0
    %v4606 = vadd.f32 %v4176, %v4605
    %v4607 = vpop.f32.mrb[0].mxu0
    %v4608 = vadd.f32 %v4178, %v4607
    %4609 = vdwg.mxu0
    %4610 = vmatprep.subr.mxu0 %v4395
    %4611 = vmatpush1.msra.mxu0 %v4394
    %4612 = vmatprep.subr.mxu0 %v4402
    %4613 = vmatpush1.msra.mxu0 %v4401
    %4614 = vmatprep.subr.mxu0 0.0
    %4615 = vmatpush1.msra.mxu0 0.0
    %4616 = vmatprep.subr.mxu0 0.0
    %4617 = vmatpush1.msra.mxu0 0.0
    %4618 = vmatprep.subr.mxu0 0.0
    %4619 = vmatpush1.msra.mxu0 0.0
    %4620 = vmatprep.subr.mxu0 0.0
    %4621 = vmatpush1.msra.mxu0 0.0
    %4622 = vmatprep.subr.mxu0 0.0
    %4623 = vmatpush1.msra.mxu0 0.0
    %4624 = vmatprep.subr.mxu0 0.0
    %4625 = vmatpush1.msra.mxu0 0.0
    %4626 = vmatprep.subr.mxu0 0.0
    %4627 = vmatpush1.msra.mxu0 0.0
    %4628 = vmatprep.subr.mxu0 0.0
    %4629 = vmatpush1.msra.mxu0 0.0
    %4630 = vmatprep.subr.mxu0 0.0
    %4631 = vmatpush1.msra.mxu0 0.0
    %4632 = vmatprep.subr.mxu0 0.0
    %4633 = vmatpush1.msra.mxu0 0.0
    %4634 = vmatprep.subr.mxu0 0.0
    %4635 = vmatpush1.msra.mxu0 0.0
    %4636 = vmatprep.subr.mxu0 0.0
    %4637 = vmatpush1.msra.mxu0 0.0
    %4638 = vmatprep.subr.mxu0 0.0
    %4639 = vmatpush1.msra.mxu0 0.0
    %4640 = vmatprep.subr.mxu0 0.0
    %4641 = vmatpush1.msra.mxu0 0.0
    %4642 = vmatprep.subr.mxu0 0.0
    %4643 = vmatpush1.msra.mxu0 0.0
    %4644 = vmatprep.subr.mxu0 0.0
    %4645 = vmatpush1.msra.mxu0 0.0
    %4646 = vmatprep.subr.mxu0 0.0
    %4647 = vmatpush1.msra.mxu0 0.0
    %4648 = vmatprep.subr.mxu0 0.0
    %4649 = vmatpush1.msra.mxu0 0.0
    %4650 = vmatprep.subr.mxu0 0.0
    %4651 = vmatpush1.msra.mxu0 0.0
    %4652 = vmatprep.subr.mxu0 0.0
    %4653 = vmatpush1.msra.mxu0 0.0
    %4654 = vmatprep.subr.mxu0 0.0
    %4655 = vmatpush1.msra.mxu0 0.0
    %4656 = vmatprep.subr.mxu0 0.0
    %4657 = vmatpush1.msra.mxu0 0.0
    %4658 = vmatprep.subr.mxu0 0.0
    %4659 = vmatpush1.msra.mxu0 0.0
    %4660 = vmatprep.subr.mxu0 0.0
    %4661 = vmatpush1.msra.mxu0 0.0
    %4662 = vmatprep.subr.mxu0 0.0
    %4663 = vmatpush1.msra.mxu0 0.0
    %4664 = vmatprep.subr.mxu0 0.0
    %4665 = vmatpush1.msra.mxu0 0.0
    %4666 = vmatprep.subr.mxu0 0.0
    %4667 = vmatpush1.msra.mxu0 0.0
    %4668 = vmatprep.subr.mxu0 0.0
    %4669 = vmatpush1.msra.mxu0 0.0
    %4670 = vmatprep.subr.mxu0 0.0
    %4671 = vmatpush1.msra.mxu0 0.0
    %4672 = vmatprep.subr.mxu0 0.0
    %4673 = vmatpush1.msra.mxu0 0.0
    %4674 = vmatprep.mubr.f32.mxu0 0.0
    %4675 = vmatmul.mubr.f32.gmra.mrb[0].mxu0 %v4421
    %v4676 = vpop.f32.mrb[0].mxu0
    %v4677 = vadd.f32 %v4247, %v4676
    %v4678 = vpop.f32.mrb[0].mxu0
    %v4679 = vadd.f32 %v4249, %v4678
    %4680 = vmatprep.mubr.f32.mxu0 0.0
    %4681 = vmatmul.mubr.f32.gmra.mrb[0].mxu0 %v4424
    %v4682 = vpop.f32.mrb[0].mxu0
    %v4683 = vadd.f32 %v4253, %v4682
    %v4684 = vpop.f32.mrb[0].mxu0
    %v4685 = vadd.f32 %v4255, %v4684
    %4686 = vmatprep.mubr.f32.mxu0 0.0
    %4687 = vmatmul.mubr.f32.gmra.mrb[0].mxu0 %v4427
    %v4688 = vpop.f32.mrb[0].mxu0
    %v4689 = vadd.f32 %v4259, %v4688
    %v4690 = vpop.f32.mrb[0].mxu0
    %v4691 = vadd.f32 %v4261, %v4690
    %4692 = vmatprep.mubr.f32.mxu0 0.0
    %4693 = vmatmul.mubr.f32.gmra.mrb[0].mxu0 %v4430
    %v4694 = vpop.f32.mrb[0].mxu0
    %v4695 = vadd.f32 %v4265, %v4694
    %v4696 = vpop.f32.mrb[0].mxu0
    %v4697 = vadd.f32 %v4267, %v4696
    %4698 = vdwg.mxu0
    %4699 = vmatprep.subr.mxu0 %v4373
    %4700 = vmatpush1.msra.mxu0 %v4396
    %4701 = vmatprep.subr.mxu0 %v4389
    %4702 = vmatpush1.msra.mxu0 %v4403
    %4703 = vmatprep.subr.mxu0 0.0
    %4704 = vmatpush1.msra.mxu0 0.0
    %4705 = vmatprep.subr.mxu0 0.0
    %4706 = vmatpush1.msra.mxu0 0.0
    %4707 = vmatprep.subr.mxu0 0.0
    %4708 = vmatpush1.msra.mxu0 0.0
    %4709 = vmatprep.subr.mxu0 0.0
    %4710 = vmatpush1.msra.mxu0 0.0
    %4711 = vmatprep.subr.mxu0 0.0
    %4712 = vmatpush1.msra.mxu0 0.0
    %4713 = vmatprep.subr.mxu0 0.0
    %4714 = vmatpush1.msra.mxu0 0.0
    %4715 = vmatprep.subr.mxu0 0.0
    %4716 = vmatpush1.msra.mxu0 0.0
    %4717 = vmatprep.subr.mxu0 0.0
    %4718 = vmatpush1.msra.mxu0 0.0
    %4719 = vmatprep.subr.mxu0 0.0
    %4720 = vmatpush1.msra.mxu0 0.0
    %4721 = vmatprep.subr.mxu0 0.0
    %4722 = vmatpush1.msra.mxu0 0.0
    %4723 = vmatprep.subr.mxu0 0.0
    %4724 = vmatpush1.msra.mxu0 0.0
    %4725 = vmatprep.subr.mxu0 0.0
    %4726 = vmatpush1.msra.mxu0 0.0
    %4727 = vmatprep.subr.mxu0 0.0
    %4728 = vmatpush1.msra.mxu0 0.0
    %4729 = vmatprep.subr.mxu0 0.0
    %4730 = vmatpush1.msra.mxu0 0.0
    %4731 = vmatprep.subr.mxu0 0.0
    %4732 = vmatpush1.msra.mxu0 0.0
    %4733 = vmatprep.subr.mxu0 0.0
    %4734 = vmatpush1.msra.mxu0 0.0
    %4735 = vmatprep.subr.mxu0 0.0
    %4736 = vmatpush1.msra.mxu0 0.0
    %4737 = vmatprep.subr.mxu0 0.0
    %4738 = vmatpush1.msra.mxu0 0.0
    %4739 = vmatprep.subr.mxu0 0.0
    %4740 = vmatpush1.msra.mxu0 0.0
    %4741 = vmatprep.subr.mxu0 0.0
    %4742 = vmatpush1.msra.mxu0 0.0
    %4743 = vmatprep.subr.mxu0 0.0
    %4744 = vmatpush1.msra.mxu0 0.0
    %4745 = vmatprep.subr.mxu0 0.0
    %4746 = vmatpush1.msra.mxu0 0.0
    %4747 = vmatprep.subr.mxu0 0.0
    %4748 = vmatpush1.msra.mxu0 0.0
    %4749 = vmatprep.subr.mxu0 0.0
    %4750 = vmatpush1.msra.mxu0 0.0
    %4751 = vmatprep.subr.mxu0 0.0
    %4752 = vmatpush1.msra.mxu0 0.0
    %4753 = vmatprep.subr.mxu0 0.0
    %4754 = vmatpush1.msra.mxu0 0.0
    %4755 = vmatprep.subr.mxu0 0.0
    %4756 = vmatpush1.msra.mxu0 0.0
    %4757 = vmatprep.subr.mxu0 0.0
    %4758 = vmatpush1.msra.mxu0 0.0
    %4759 = vmatprep.subr.mxu0 0.0
    %4760 = vmatpush1.msra.mxu0 0.0
    %4761 = vmatprep.subr.mxu0 0.0
    %4762 = vmatpush1.msra.mxu0 0.0
    %4763 = vmatprep.mubr.f32.mxu0 0.0
    %4764 = vmatmul.mubr.f32.gmra.mrb[0].mxu0 %v4421
    %v4765 = vpop.f32.mrb[0].mxu0
    %v4766 = vadd.f32 %v4336, %v4765
    %v4767 = vpop.f32.mrb[0].mxu0
    %v4768 = vadd.f32 %v4338, %v4767
    %4769 = vmatprep.mubr.f32.mxu0 0.0
    %4770 = vmatmul.mubr.f32.gmra.mrb[0].mxu0 %v4424
    %v4771 = vpop.f32.mrb[0].mxu0
    %v4772 = vadd.f32 %v4342, %v4771
    %v4773 = vpop.f32.mrb[0].mxu0
    %v4774 = vadd.f32 %v4344, %v4773
    %4775 = vmatprep.mubr.f32.mxu0 0.0
    %4776 = vmatmul.mubr.f32.gmra.mrb[0].mxu0 %v4427
    %v4777 = vpop.f32.mrb[0].mxu0
    %v4778 = vadd.f32 %v4348, %v4777
    %v4779 = vpop.f32.mrb[0].mxu0
    %v4780 = vadd.f32 %v4350, %v4779
    %4781 = vmatprep.mubr.f32.mxu0 0.0
    %4782 = vmatmul.mubr.f32.gmra.mrb[0].mxu0 %v4430
    %v4783 = vpop.f32.mrb[0].mxu0
    %v4784 = vadd.f32 %v4354, %v4783
    %v4785 = vpop.f32.mrb[0].mxu0
    %v4786 = vadd.f32 %v4356, %v4785
    %4787 = vdwg.mxu0
    %s4788 = scalar_lea.vmem %s3, 64
    %v4789 = vld [vmem:[%s4788] sm:$0xff]
    %v4790 = vld [vmem:[%s4788 + $0x8] sm:$0xff]
    %v4791 = vld [vmem:[%s4788 + $0x10] sm:$0xff]
    %v4792 = vld [vmem:[%s4788 + $0x18] sm:$0xff]
    %4793 = vrot.lane.b32.xlu0 %v3890, 125
    %v4794 = vpop.permute.xlu0 %4793
    %4795 = vrot.lane.b32.xlu0 %v3891, 125
    %v4796 = vpop.permute.xlu0 %4795
    %4797 = vrot.lane.b32.xlu0 %v3892, 125
    %v4798 = vpop.permute.xlu0 %4797
    %4799 = vrot.lane.b32.xlu0 %v3893, 125
    %v4800 = vpop.permute.xlu0 %4799
    %4801 = vrot.lane.b32.xlu0 %v3894, 125
    %v4802 = vpop.permute.xlu0 %4801
    %4803 = vrot.lane.b32.xlu0 %v3895, 125
    %v4804 = vpop.permute.xlu0 %4803
    %4805 = vrot.lane.b32.xlu0 %v3896, 125
    %v4806 = vpop.permute.xlu0 %4805
    %4807 = vrot.lane.b32.xlu0 %v3897, 125
    %v4808 = vpop.permute.xlu0 %4807
    %4809 = vrot.lane.b32.xlu0 %v3898, 125
    %v4810 = vpop.permute.xlu0 %4809
    %4811 = vrot.lane.b32.xlu0 %v3899, 125
    %v4812 = vpop.permute.xlu0 %4811
    %4813 = vrot.lane.b32.xlu0 %v3900, 125
    %v4814 = vpop.permute.xlu0 %4813
    %4815 = vrot.lane.b32.xlu0 %v3901, 125
    %v4816 = vpop.permute.xlu0 %4815
    %4817 = vrot.lane.b32.xlu0 %v3902, 125
    %v4818 = vpop.permute.xlu0 %4817
    %4819 = vrot.lane.b32.xlu0 %v3903, 125
    %v4820 = vpop.permute.xlu0 %4819
    %4821 = vrot.lane.b32.xlu0 %v3904, 125
    %v4822 = vpop.permute.xlu0 %4821
    %4823 = vrot.lane.b32.xlu0 %v3905, 125
    %v4824 = vpop.permute.xlu0 %4823
    %v4825 = vsel %vm868, %v4794, %v4796
    %v4826 = vsel %vm868, %v4796, %v4798
    %v4827 = vsel %vm868, %v4798, %v4800
    %v4828 = vsel %vm868, %v4800, %v4802
    %v4829 = vsel %vm868, %v4802, %v4804
    %v4830 = vsel %vm868, %v4804, %v4806
    %v4831 = vsel %vm868, %v4806, %v4808
    %v4832 = vsel %vm868, %v4810, %v4812
    %v4833 = vsel %vm868, %v4812, %v4814
    %v4834 = vsel %vm868, %v4814, %v4816
    %v4835 = vsel %vm868, %v4816, %v4818
    %v4836 = vsel %vm868, %v4818, %v4820
    %v4837 = vsel %vm868, %v4820, %v4822
    %v4838 = vsel %vm868, %v4822, %v4824
    %v4856 = vsel %vm3989, %v4789, 0
    %v4859 = vsel %vm3989, %v4790, 0
    %v4862 = vsel %vm3989, %v4791, 0
    %v4865 = vsel %vm3989, %v4792, 0
    %4867 = vmatprep.subr.mxu0 %v4826
    %4868 = vmatpush1.msra.mxu0 %v4825
    %4869 = vmatprep.subr.mxu0 %v4833
    %4870 = vmatpush1.msra.mxu0 %v4832
    %4871 = vmatprep.subr.mxu0 0.0
    %4872 = vmatpush1.msra.mxu0 0.0
    %4873 = vmatprep.subr.mxu0 0.0
    %4874 = vmatpush1.msra.mxu0 0.0
    %4875 = vmatprep.subr.mxu0 0.0
    %4876 = vmatpush1.msra.mxu0 0.0
    %4877 = vmatprep.subr.mxu0 0.0
    %4878 = vmatpush1.msra.mxu0 0.0
    %4879 = vmatprep.subr.mxu0 0.0
    %4880 = vmatpush1.msra.mxu0 0.0
    %4881 = vmatprep.subr.mxu0 0.0
    %4882 = vmatpush1.msra.mxu0 0.0
    %4883 = vmatprep.subr.mxu0 0.0
    %4884 = vmatpush1.msra.mxu0 0.0
    %4885 = vmatprep.subr.mxu0 0.0
    %4886 = vmatpush1.msra.mxu0 0.0
    %4887 = vmatprep.subr.mxu0 0.0
    %4888 = vmatpush1.msra.mxu0 0.0
    %4889 = vmatprep.subr.mxu0 0.0
    %4890 = vmatpush1.msra.mxu0 0.0
    %4891 = vmatprep.subr.mxu0 0.0
    %4892 = vmatpush1.msra.mxu0 0.0
    %4893 = vmatprep.subr.mxu0 0.0
    %4894 = vmatpush1.msra.mxu0 0.0
    %4895 = vmatprep.subr.mxu0 0.0
    %4896 = vmatpush1.msra.mxu0 0.0
    %4897 = vmatprep.subr.mxu0 0.0
    %4898 = vmatpush1.msra.mxu0 0.0
    %4899 = vmatprep.subr.mxu0 0.0
    %4900 = vmatpush1.msra.mxu0 0.0
    %4901 = vmatprep.subr.mxu0 0.0
    %4902 = vmatpush1.msra.mxu0 0.0
    %4903 = vmatprep.subr.mxu0 0.0
    %4904 = vmatpush1.msra.mxu0 0.0
    %4905 = vmatprep.subr.mxu0 0.0
    %4906 = vmatpush1.msra.mxu0 0.0
    %4907 = vmatprep.subr.mxu0 0.0
    %4908 = vmatpush1.msra.mxu0 0.0
    %4909 = vmatprep.subr.mxu0 0.0
    %4910 = vmatpush1.msra.mxu0 0.0
    %4911 = vmatprep.subr.mxu0 0.0
    %4912 = vmatpush1.msra.mxu0 0.0
    %4913 = vmatprep.subr.mxu0 0.0
    %4914 = vmatpush1.msra.mxu0 0.0
    %4915 = vmatprep.subr.mxu0 0.0
    %4916 = vmatpush1.msra.mxu0 0.0
    %4917 = vmatprep.subr.mxu0 0.0
    %4918 = vmatpush1.msra.mxu0 0.0
    %4919 = vmatprep.subr.mxu0 0.0
    %4920 = vmatpush1.msra.mxu0 0.0
    %4921 = vmatprep.subr.mxu0 0.0
    %4922 = vmatpush1.msra.mxu0 0.0
    %4923 = vmatprep.subr.mxu0 0.0
    %4924 = vmatpush1.msra.mxu0 0.0
    %4925 = vmatprep.subr.mxu0 0.0
    %4926 = vmatpush1.msra.mxu0 0.0
    %4927 = vmatprep.subr.mxu0 0.0
    %4928 = vmatpush1.msra.mxu0 0.0
    %4929 = vmatprep.subr.mxu0 0.0
    %4930 = vmatpush1.msra.mxu0 0.0
    %4931 = vmatprep.mubr.f32.mxu0 0.0
    %4932 = vmatmul.mubr.f32.gmra.mrb[0].mxu0 %v4856
    %v4933 = vpop.f32.mrb[0].mxu0
    %v4934 = vadd.f32 0.0, %v4933
    %v4935 = vpop.f32.mrb[0].mxu0
    %v4936 = vadd.f32 0.0, %v4935
    %4937 = vmatprep.mubr.f32.mxu0 0.0
    %4938 = vmatmul.mubr.f32.gmra.mrb[0].mxu0 %v4859
    %v4939 = vpop.f32.mrb[0].mxu0
    %v4940 = vadd.f32 0.0, %v4939
    %v4941 = vpop.f32.mrb[0].mxu0
    %v4942 = vadd.f32 0.0, %v4941
    %4943 = vmatprep.mubr.f32.mxu0 0.0
    %4944 = vmatmul.mubr.f32.gmra.mrb[0].mxu0 %v4862
    %v4945 = vpop.f32.mrb[0].mxu0
    %v4946 = vadd.f32 0.0, %v4945
    %v4947 = vpop.f32.mrb[0].mxu0
    %v4948 = vadd.f32 0.0, %v4947
    %4949 = vmatprep.mubr.f32.mxu0 0.0
    %4950 = vmatmul.mubr.f32.gmra.mrb[0].mxu0 %v4865
    %v4951 = vpop.f32.mrb[0].mxu0
    %v4952 = vadd.f32 0.0, %v4951
    %v4953 = vpop.f32.mrb[0].mxu0
    %v4954 = vadd.f32 0.0, %v4953
    %4955 = vdwg.mxu0
    %4956 = vmatprep.subr.mxu0 %v4828
    %4957 = vmatpush1.msra.mxu0 %v4827
    %4958 = vmatprep.subr.mxu0 %v4835
    %4959 = vmatpush1.msra.mxu0 %v4834
    %4960 = vmatprep.subr.mxu0 0.0
    %4961 = vmatpush1.msra.mxu0 0.0
    %4962 = vmatprep.subr.mxu0 0.0
    %4963 = vmatpush1.msra.mxu0 0.0
    %4964 = vmatprep.subr.mxu0 0.0
    %4965 = vmatpush1.msra.mxu0 0.0
    %4966 = vmatprep.subr.mxu0 0.0
    %4967 = vmatpush1.msra.mxu0 0.0
    %4968 = vmatprep.subr.mxu0 0.0
    %4969 = vmatpush1.msra.mxu0 0.0
    %4970 = vmatprep.subr.mxu0 0.0
    %4971 = vmatpush1.msra.mxu0 0.0
    %4972 = vmatprep.subr.mxu0 0.0
    %4973 = vmatpush1.msra.mxu0 0.0
    %4974 = vmatprep.subr.mxu0 0.0
    %4975 = vmatpush1.msra.mxu0 0.0
    %4976 = vmatprep.subr.mxu0 0.0
    %4977 = vmatpush1.msra.mxu0 0.0
    %4978 = vmatprep.subr.mxu0 0.0
    %4979 = vmatpush1.msra.mxu0 0.0
    %4980 = vmatprep.subr.mxu0 0.0
    %4981 = vmatpush1.msra.mxu0 0.0
    %4982 = vmatprep.subr.mxu0 0.0
    %4983 = vmatpush1.msra.mxu0 0.0
    %4984 = vmatprep.subr.mxu0 0.0
    %4985 = vmatpush1.msra.mxu0 0.0
    %4986 = vmatprep.subr.mxu0 0.0
    %4987 = vmatpush1.msra.mxu0 0.0
    %4988 = vmatprep.subr.mxu0 0.0
    %4989 = vmatpush1.msra.mxu0 0.0
    %4990 = vmatprep.subr.mxu0 0.0
    %4991 = vmatpush1.msra.mxu0 0.0
    %4992 = vmatprep.subr.mxu0 0.0
    %4993 = vmatpush1.msra.mxu0 0.0
    %4994 = vmatprep.subr.mxu0 0.0
    %4995 = vmatpush1.msra.mxu0 0.0
    %4996 = vmatprep.subr.mxu0 0.0
    %4997 = vmatpush1.msra.mxu0 0.0
    %4998 = vmatprep.subr.mxu0 0.0
    %4999 = vmatpush1.msra.mxu0 0.0
    %5000 = vmatprep.subr.mxu0 0.0
    %5001 = vmatpush1.msra.mxu0 0.0
    %5002 = vmatprep.subr.mxu0 0.0
    %5003 = vmatpush1.msra.mxu0 0.0
    %5004 = vmatprep.subr.mxu0 0.0
    %5005 = vmatpush1.msra.mxu0 0.0
    %5006 = vmatprep.subr.mxu0 0.0
    %5007 = vmatpush1.msra.mxu0 0.0
    %5008 = vmatprep.subr.mxu0 0.0
    %5009 = vmatpush1.msra.mxu0 0.0
    %5010 = vmatprep.subr.mxu0 0.0
    %5011 = vmatpush1.msra.mxu0 0.0
    %5012 = vmatprep.subr.mxu0 0.0
    %5013 = vmatpush1.msra.mxu0 0.0
    %5014 = vmatprep.subr.mxu0 0.0
    %5015 = vmatpush1.msra.mxu0 0.0
    %5016 = vmatprep.subr.mxu0 0.0
    %5017 = vmatpush1.msra.mxu0 0.0
    %5018 = vmatprep.subr.mxu0 0.0
    %5019 = vmatpush1.msra.mxu0 0.0
    %5020 = vmatprep.mubr.f32.mxu0 0.0
    %5021 = vmatmul.mubr.f32.gmra.mrb[0].mxu0 %v4856
    %v5022 = vpop.f32.mrb[0].mxu0
    %v5023 = vadd.f32 0.0, %v5022
    %v5024 = vpop.f32.mrb[0].mxu0
    %v5025 = vadd.f32 0.0, %v5024
    %5026 = vmatprep.mubr.f32.mxu0 0.0
    %5027 = vmatmul.mubr.f32.gmra.mrb[0].mxu0 %v4859
    %v5028 = vpop.f32.mrb[0].mxu0
    %v5029 = vadd.f32 0.0, %v5028
    %v5030 = vpop.f32.mrb[0].mxu0
    %v5031 = vadd.f32 0.0, %v5030
    %5032 = vmatprep.mubr.f32.mxu0 0.0
    %5033 = vmatmul.mubr.f32.gmra.mrb[0].mxu0 %v4862
    %v5034 = vpop.f32.mrb[0].mxu0
    %v5035 = vadd.f32 0.0, %v5034
    %v5036 = vpop.f32.mrb[0].mxu0
    %v5037 = vadd.f32 0.0, %v5036
    %5038 = vmatprep.mubr.f32.mxu0 0.0
    %5039 = vmatmul.mubr.f32.gmra.mrb[0].mxu0 %v4865
    %v5040 = vpop.f32.mrb[0].mxu0
    %v5041 = vadd.f32 0.0, %v5040
    %v5042 = vpop.f32.mrb[0].mxu0
    %v5043 = vadd.f32 0.0, %v5042
    %5044 = vdwg.mxu0
    %5045 = vmatprep.subr.mxu0 %v4830
    %5046 = vmatpush1.msra.mxu0 %v4829
    %5047 = vmatprep.subr.mxu0 %v4837
    %5048 = vmatpush1.msra.mxu0 %v4836
    %5049 = vmatprep.subr.mxu0 0.0
    %5050 = vmatpush1.msra.mxu0 0.0
    %5051 = vmatprep.subr.mxu0 0.0
    %5052 = vmatpush1.msra.mxu0 0.0
    %5053 = vmatprep.subr.mxu0 0.0
    %5054 = vmatpush1.msra.mxu0 0.0
    %5055 = vmatprep.subr.mxu0 0.0
    %5056 = vmatpush1.msra.mxu0 0.0
    %5057 = vmatprep.subr.mxu0 0.0
    %5058 = vmatpush1.msra.mxu0 0.0
    %5059 = vmatprep.subr.mxu0 0.0
    %5060 = vmatpush1.msra.mxu0 0.0
    %5061 = vmatprep.subr.mxu0 0.0
    %5062 = vmatpush1.msra.mxu0 0.0
    %5063 = vmatprep.subr.mxu0 0.0
    %5064 = vmatpush1.msra.mxu0 0.0
    %5065 = vmatprep.subr.mxu0 0.0
    %5066 = vmatpush1.msra.mxu0 0.0
    %5067 = vmatprep.subr.mxu0 0.0
    %5068 = vmatpush1.msra.mxu0 0.0
    %5069 = vmatprep.subr.mxu0 0.0
    %5070 = vmatpush1.msra.mxu0 0.0
    %5071 = vmatprep.subr.mxu0 0.0
    %5072 = vmatpush1.msra.mxu0 0.0
    %5073 = vmatprep.subr.mxu0 0.0
    %5074 = vmatpush1.msra.mxu0 0.0
    %5075 = vmatprep.subr.mxu0 0.0
    %5076 = vmatpush1.msra.mxu0 0.0
    %5077 = vmatprep.subr.mxu0 0.0
    %5078 = vmatpush1.msra.mxu0 0.0
    %5079 = vmatprep.subr.mxu0 0.0
    %5080 = vmatpush1.msra.mxu0 0.0
    %5081 = vmatprep.subr.mxu0 0.0
    %5082 = vmatpush1.msra.mxu0 0.0
    %5083 = vmatprep.subr.mxu0 0.0
    %5084 = vmatpush1.msra.mxu0 0.0
    %5085 = vmatprep.subr.mxu0 0.0
    %5086 = vmatpush1.msra.mxu0 0.0
    %5087 = vmatprep.subr.mxu0 0.0
    %5088 = vmatpush1.msra.mxu0 0.0
    %5089 = vmatprep.subr.mxu0 0.0
    %5090 = vmatpush1.msra.mxu0 0.0
    %5091 = vmatprep.subr.mxu0 0.0
    %5092 = vmatpush1.msra.mxu0 0.0
    %5093 = vmatprep.subr.mxu0 0.0
    %5094 = vmatpush1.msra.mxu0 0.0
    %5095 = vmatprep.subr.mxu0 0.0
    %5096 = vmatpush1.msra.mxu0 0.0
    %5097 = vmatprep.subr.mxu0 0.0
    %5098 = vmatpush1.msra.mxu0 0.0
    %5099 = vmatprep.subr.mxu0 0.0
    %5100 = vmatpush1.msra.mxu0 0.0
    %5101 = vmatprep.subr.mxu0 0.0
    %5102 = vmatpush1.msra.mxu0 0.0
    %5103 = vmatprep.subr.mxu0 0.0
    %5104 = vmatpush1.msra.mxu0 0.0
    %5105 = vmatprep.subr.mxu0 0.0
    %5106 = vmatpush1.msra.mxu0 0.0
    %5107 = vmatprep.subr.mxu0 0.0
    %5108 = vmatpush1.msra.mxu0 0.0
    %5109 = vmatprep.mubr.f32.mxu0 0.0
    %5110 = vmatmul.mubr.f32.gmra.mrb[0].mxu0 %v4856
    %v5111 = vpop.f32.mrb[0].mxu0
    %v5112 = vadd.f32 0.0, %v5111
    %v5113 = vpop.f32.mrb[0].mxu0
    %v5114 = vadd.f32 0.0, %v5113
    %5115 = vmatprep.mubr.f32.mxu0 0.0
    %5116 = vmatmul.mubr.f32.gmra.mrb[0].mxu0 %v4859
    %v5117 = vpop.f32.mrb[0].mxu0
    %v5118 = vadd.f32 0.0, %v5117
    %v5119 = vpop.f32.mrb[0].mxu0
    %v5120 = vadd.f32 0.0, %v5119
    %5121 = vmatprep.mubr.f32.mxu0 0.0
    %5122 = vmatmul.mubr.f32.gmra.mrb[0].mxu0 %v4862
    %v5123 = vpop.f32.mrb[0].mxu0
    %v5124 = vadd.f32 0.0, %v5123
    %v5125 = vpop.f32.mrb[0].mxu0
    %v5126 = vadd.f32 0.0, %v5125
    %5127 = vmatprep.mubr.f32.mxu0 0.0
    %5128 = vmatmul.mubr.f32.gmra.mrb[0].mxu0 %v4865
    %v5129 = vpop.f32.mrb[0].mxu0
    %v5130 = vadd.f32 0.0, %v5129
    %v5131 = vpop.f32.mrb[0].mxu0
    %v5132 = vadd.f32 0.0, %v5131
    %5133 = vdwg.mxu0
    %5134 = vmatprep.subr.mxu0 %v4808
    %5135 = vmatpush1.msra.mxu0 %v4831
    %5136 = vmatprep.subr.mxu0 %v4824
    %5137 = vmatpush1.msra.mxu0 %v4838
    %5138 = vmatprep.subr.mxu0 0.0
    %5139 = vmatpush1.msra.mxu0 0.0
    %5140 = vmatprep.subr.mxu0 0.0
    %5141 = vmatpush1.msra.mxu0 0.0
    %5142 = vmatprep.subr.mxu0 0.0
    %5143 = vmatpush1.msra.mxu0 0.0
    %5144 = vmatprep.subr.mxu0 0.0
    %5145 = vmatpush1.msra.mxu0 0.0
    %5146 = vmatprep.subr.mxu0 0.0
    %5147 = vmatpush1.msra.mxu0 0.0
    %5148 = vmatprep.subr.mxu0 0.0
    %5149 = vmatpush1.msra.mxu0 0.0
    %5150 = vmatprep.subr.mxu0 0.0
    %5151 = vmatpush1.msra.mxu0 0.0
    %5152 = vmatprep.subr.mxu0 0.0
    %5153 = vmatpush1.msra.mxu0 0.0
    %5154 = vmatprep.subr.mxu0 0.0
    %5155 = vmatpush1.msra.mxu0 0.0
    %5156 = vmatprep.subr.mxu0 0.0
    %5157 = vmatpush1.msra.mxu0 0.0
    %5158 = vmatprep.subr.mxu0 0.0
    %5159 = vmatpush1.msra.mxu0 0.0
    %5160 = vmatprep.subr.mxu0 0.0
    %5161 = vmatpush1.msra.mxu0 0.0
    %5162 = vmatprep.subr.mxu0 0.0
    %5163 = vmatpush1.msra.mxu0 0.0
    %5164 = vmatprep.subr.mxu0 0.0
    %5165 = vmatpush1.msra.mxu0 0.0
    %5166 = vmatprep.subr.mxu0 0.0
    %5167 = vmatpush1.msra.mxu0 0.0
    %5168 = vmatprep.subr.mxu0 0.0
    %5169 = vmatpush1.msra.mxu0 0.0
    %5170 = vmatprep.subr.mxu0 0.0
    %5171 = vmatpush1.msra.mxu0 0.0
    %5172 = vmatprep.subr.mxu0 0.0
    %5173 = vmatpush1.msra.mxu0 0.0
    %5174 = vmatprep.subr.mxu0 0.0
    %5175 = vmatpush1.msra.mxu0 0.0
    %5176 = vmatprep.subr.mxu0 0.0
    %5177 = vmatpush1.msra.mxu0 0.0
    %5178 = vmatprep.subr.mxu0 0.0
    %5179 = vmatpush1.msra.mxu0 0.0
    %5180 = vmatprep.subr.mxu0 0.0
    %5181 = vmatpush1.msra.mxu0 0.0
    %5182 = vmatprep.subr.mxu0 0.0
    %5183 = vmatpush1.msra.mxu0 0.0
    %5184 = vmatprep.subr.mxu0 0.0
    %5185 = vmatpush1.msra.mxu0 0.0
    %5186 = vmatprep.subr.mxu0 0.0
    %5187 = vmatpush1.msra.mxu0 0.0
    %5188 = vmatprep.subr.mxu0 0.0
    %5189 = vmatpush1.msra.mxu0 0.0
    %5190 = vmatprep.subr.mxu0 0.0
    %5191 = vmatpush1.msra.mxu0 0.0
    %5192 = vmatprep.subr.mxu0 0.0
    %5193 = vmatpush1.msra.mxu0 0.0
    %5194 = vmatprep.subr.mxu0 0.0
    %5195 = vmatpush1.msra.mxu0 0.0
    %5196 = vmatprep.subr.mxu0 0.0
    %5197 = vmatpush1.msra.mxu0 0.0
    %5198 = vmatprep.mubr.f32.mxu0 0.0
    %5199 = vmatmul.mubr.f32.gmra.mrb[0].mxu0 %v4856
    %v5200 = vpop.f32.mrb[0].mxu0
    %v5201 = vadd.f32 0.0, %v5200
    %v5202 = vpop.f32.mrb[0].mxu0
    %v5203 = vadd.f32 0.0, %v5202
    %5204 = vmatprep.mubr.f32.mxu0 0.0
    %5205 = vmatmul.mubr.f32.gmra.mrb[0].mxu0 %v4859
    %v5206 = vpop.f32.mrb[0].mxu0
    %v5207 = vadd.f32 0.0, %v5206
    %v5208 = vpop.f32.mrb[0].mxu0
    %v5209 = vadd.f32 0.0, %v5208
    %5210 = vmatprep.mubr.f32.mxu0 0.0
    %5211 = vmatmul.mubr.f32.gmra.mrb[0].mxu0 %v4862
    %v5212 = vpop.f32.mrb[0].mxu0
    %v5213 = vadd.f32 0.0, %v5212
    %v5214 = vpop.f32.mrb[0].mxu0
    %v5215 = vadd.f32 0.0, %v5214
    %5216 = vmatprep.mubr.f32.mxu0 0.0
    %5217 = vmatmul.mubr.f32.gmra.mrb[0].mxu0 %v4865
    %v5218 = vpop.f32.mrb[0].mxu0
    %v5219 = vadd.f32 0.0, %v5218
    %v5220 = vpop.f32.mrb[0].mxu0
    %v5221 = vadd.f32 0.0, %v5220
    %5222 = vdwg.mxu0
    %v5223 = vadd.f32 %v4499, %v4934
    %v5224 = vadd.f32 %v4501, %v4936
    %v5225 = vadd.f32 %v4588, %v5023
    %v5226 = vadd.f32 %v4590, %v5025
    %v5227 = vadd.f32 %v4677, %v5112
    %v5228 = vadd.f32 %v4679, %v5114
    %v5229 = vadd.f32 %v4766, %v5201
    %v5230 = vadd.f32 %v4768, %v5203
    %v5231 = vadd.f32 %v4505, %v4940
    %v5232 = vadd.f32 %v4507, %v4942
    %v5233 = vadd.f32 %v4594, %v5029
    %v5234 = vadd.f32 %v4596, %v5031
    %v5235 = vadd.f32 %v4683, %v5118
    %v5236 = vadd.f32 %v4685, %v5120
    %v5237 = vadd.f32 %v4772, %v5207
    %v5238 = vadd.f32 %v4774, %v5209
    %v5239 = vadd.f32 %v4511, %v4946
    %v5240 = vadd.f32 %v4513, %v4948
    %v5241 = vadd.f32 %v4600, %v5035
    %v5242 = vadd.f32 %v4602, %v5037
    %v5243 = vadd.f32 %v4689, %v5124
    %v5244 = vadd.f32 %v4691, %v5126
    %v5245 = vadd.f32 %v4778, %v5213
    %v5246 = vadd.f32 %v4780, %v5215
    %v5247 = vadd.f32 %v4517, %v4952
    %v5248 = vadd.f32 %v4519, %v4954
    %v5249 = vadd.f32 %v4606, %v5041
    %v5250 = vadd.f32 %v4608, %v5043
    %v5251 = vadd.f32 %v4695, %v5130
    %v5252 = vadd.f32 %v4697, %v5132
    %v5253 = vadd.f32 %v4784, %v5219
    %v5254 = vadd.f32 %v4786, %v5221
    %s5255 = scalar_lea.vmem %s3, 96
    %v5256 = vld [vmem:[%s5255] sm:$0xff]
    %v5257 = vld [vmem:[%s5255 + $0x8] sm:$0xff]
    %v5258 = vld [vmem:[%s5255 + $0x10] sm:$0xff]
    %v5259 = vld [vmem:[%s5255 + $0x18] sm:$0xff]
    %5260 = vrot.lane.b32.xlu0 %v3890, 97
    %v5261 = vpop.permute.xlu0 %5260
    %5262 = vrot.lane.b32.xlu0 %v3891, 97
    %v5263 = vpop.permute.xlu0 %5262
    %5264 = vrot.lane.b32.xlu0 %v3892, 97
    %v5265 = vpop.permute.xlu0 %5264
    %5266 = vrot.lane.b32.xlu0 %v3893, 97
    %v5267 = vpop.permute.xlu0 %5266
    %5268 = vrot.lane.b32.xlu0 %v3894, 97
    %v5269 = vpop.permute.xlu0 %5268
    %5270 = vrot.lane.b32.xlu0 %v3895, 97
    %v5271 = vpop.permute.xlu0 %5270
    %5272 = vrot.lane.b32.xlu0 %v3896, 97
    %v5273 = vpop.permute.xlu0 %5272
    %5274 = vrot.lane.b32.xlu0 %v3897, 97
    %v5275 = vpop.permute.xlu0 %5274
    %5276 = vrot.lane.b32.xlu0 %v3898, 97
    %v5277 = vpop.permute.xlu0 %5276
    %5278 = vrot.lane.b32.xlu0 %v3899, 97
    %v5279 = vpop.permute.xlu0 %5278
    %5280 = vrot.lane.b32.xlu0 %v3900, 97
    %v5281 = vpop.permute.xlu0 %5280
    %5282 = vrot.lane.b32.xlu0 %v3901, 97
    %v5283 = vpop.permute.xlu0 %5282
    %5284 = vrot.lane.b32.xlu0 %v3902, 97
    %v5285 = vpop.permute.xlu0 %5284
    %5286 = vrot.lane.b32.xlu0 %v3903, 97
    %v5287 = vpop.permute.xlu0 %5286
    %5288 = vrot.lane.b32.xlu0 %v3904, 97
    %v5289 = vpop.permute.xlu0 %5288
    %5290 = vrot.lane.b32.xlu0 %v3905, 97
    %v5291 = vpop.permute.xlu0 %5290
    %v5292 = vsel %vm1279, %v5261, %v5263
    %v5293 = vsel %vm1279, %v5263, %v5265
    %v5294 = vsel %vm1279, %v5265, %v5267
    %v5295 = vsel %vm1279, %v5267, %v5269
    %v5296 = vsel %vm1279, %v5269, %v5271
    %v5297 = vsel %vm1279, %v5271, %v5273
    %v5298 = vsel %vm1279, %v5273, %v5275
    %v5299 = vsel %vm1279, %v5277, %v5279
    %v5300 = vsel %vm1279, %v5279, %v5281
    %v5301 = vsel %vm1279, %v5281, %v5283
    %v5302 = vsel %vm1279, %v5283, %v5285
    %v5303 = vsel %vm1279, %v5285, %v5287
    %v5304 = vsel %vm1279, %v5287, %v5289
    %v5305 = vsel %vm1279, %v5289, %v5291
    %v5323 = vsel %vm3989, %v5256, 0
    %v5326 = vsel %vm3989, %v5257, 0
    %v5329 = vsel %vm3989, %v5258, 0
    %v5332 = vsel %vm3989, %v5259, 0
    %5334 = vmatprep.subr.mxu0 %v5293
    %5335 = vmatpush1.msra.mxu0 %v5292
    %5336 = vmatprep.subr.mxu0 %v5300
    %5337 = vmatpush1.msra.mxu0 %v5299
    %5338 = vmatprep.subr.mxu0 0.0
    %5339 = vmatpush1.msra.mxu0 0.0
    %5340 = vmatprep.subr.mxu0 0.0
    %5341 = vmatpush1.msra.mxu0 0.0
    %5342 = vmatprep.subr.mxu0 0.0
    %5343 = vmatpush1.msra.mxu0 0.0
    %5344 = vmatprep.subr.mxu0 0.0
    %5345 = vmatpush1.msra.mxu0 0.0
    %5346 = vmatprep.subr.mxu0 0.0
    %5347 = vmatpush1.msra.mxu0 0.0
    %5348 = vmatprep.subr.mxu0 0.0
    %5349 = vmatpush1.msra.mxu0 0.0
    %5350 = vmatprep.subr.mxu0 0.0
    %5351 = vmatpush1.msra.mxu0 0.0
    %5352 = vmatprep.subr.mxu0 0.0
    %5353 = vmatpush1.msra.mxu0 0.0
    %5354 = vmatprep.subr.mxu0 0.0
    %5355 = vmatpush1.msra.mxu0 0.0
    %5356 = vmatprep.subr.mxu0 0.0
    %5357 = vmatpush1.msra.mxu0 0.0
    %5358 = vmatprep.subr.mxu0 0.0
    %5359 = vmatpush1.msra.mxu0 0.0
    %5360 = vmatprep.subr.mxu0 0.0
    %5361 = vmatpush1.msra.mxu0 0.0
    %5362 = vmatprep.subr.mxu0 0.0
    %5363 = vmatpush1.msra.mxu0 0.0
    %5364 = vmatprep.subr.mxu0 0.0
    %5365 = vmatpush1.msra.mxu0 0.0
    %5366 = vmatprep.subr.mxu0 0.0
    %5367 = vmatpush1.msra.mxu0 0.0
    %5368 = vmatprep.subr.mxu0 0.0
    %5369 = vmatpush1.msra.mxu0 0.0
    %5370 = vmatprep.subr.mxu0 0.0
    %5371 = vmatpush1.msra.mxu0 0.0
    %5372 = vmatprep.subr.mxu0 0.0
    %5373 = vmatpush1.msra.mxu0 0.0
    %5374 = vmatprep.subr.mxu0 0.0
    %5375 = vmatpush1.msra.mxu0 0.0
    %5376 = vmatprep.subr.mxu0 0.0
    %5377 = vmatpush1.msra.mxu0 0.0
    %5378 = vmatprep.subr.mxu0 0.0
    %5379 = vmatpush1.msra.mxu0 0.0
    %5380 = vmatprep.subr.mxu0 0.0
    %5381 = vmatpush1.msra.mxu0 0.0
    %5382 = vmatprep.subr.mxu0 0.0
    %5383 = vmatpush1.msra.mxu0 0.0
    %5384 = vmatprep.subr.mxu0 0.0
    %5385 = vmatpush1.msra.mxu0 0.0
    %5386 = vmatprep.subr.mxu0 0.0
    %5387 = vmatpush1.msra.mxu0 0.0
    %5388 = vmatprep.subr.mxu0 0.0
    %5389 = vmatpush1.msra.mxu0 0.0
    %5390 = vmatprep.subr.mxu0 0.0
    %5391 = vmatpush1.msra.mxu0 0.0
    %5392 = vmatprep.subr.mxu0 0.0
    %5393 = vmatpush1.msra.mxu0 0.0
    %5394 = vmatprep.subr.mxu0 0.0
    %5395 = vmatpush1.msra.mxu0 0.0
    %5396 = vmatprep.subr.mxu0 0.0
    %5397 = vmatpush1.msra.mxu0 0.0
    %5398 = vmatprep.mubr.f32.mxu0 0.0
    %5399 = vmatmul.mubr.f32.gmra.mrb[0].mxu0 %v5323
    %v5400 = vpop.f32.mrb[0].mxu0
    %v5401 = vadd.f32 0.0, %v5400
    %v5402 = vpop.f32.mrb[0].mxu0
    %v5403 = vadd.f32 0.0, %v5402
    %5404 = vmatprep.mubr.f32.mxu0 0.0
    %5405 = vmatmul.mubr.f32.gmra.mrb[0].mxu0 %v5326
    %v5406 = vpop.f32.mrb[0].mxu0
    %v5407 = vadd.f32 0.0, %v5406
    %v5408 = vpop.f32.mrb[0].mxu0
    %v5409 = vadd.f32 0.0, %v5408
    %5410 = vmatprep.mubr.f32.mxu0 0.0
    %5411 = vmatmul.mubr.f32.gmra.mrb[0].mxu0 %v5329
    %v5412 = vpop.f32.mrb[0].mxu0
    %v5413 = vadd.f32 0.0, %v5412
    %v5414 = vpop.f32.mrb[0].mxu0
    %v5415 = vadd.f32 0.0, %v5414
    %5416 = vmatprep.mubr.f32.mxu0 0.0
    %5417 = vmatmul.mubr.f32.gmra.mrb[0].mxu0 %v5332
    %v5418 = vpop.f32.mrb[0].mxu0
    %v5419 = vadd.f32 0.0, %v5418
    %v5420 = vpop.f32.mrb[0].mxu0
    %v5421 = vadd.f32 0.0, %v5420
    %5422 = vdwg.mxu0
    %5423 = vmatprep.subr.mxu0 %v5295
    %5424 = vmatpush1.msra.mxu0 %v5294
    %5425 = vmatprep.subr.mxu0 %v5302
    %5426 = vmatpush1.msra.mxu0 %v5301
    %5427 = vmatprep.subr.mxu0 0.0
    %5428 = vmatpush1.msra.mxu0 0.0
    %5429 = vmatprep.subr.mxu0 0.0
    %5430 = vmatpush1.msra.mxu0 0.0
    %5431 = vmatprep.subr.mxu0 0.0
    %5432 = vmatpush1.msra.mxu0 0.0
    %5433 = vmatprep.subr.mxu0 0.0
    %5434 = vmatpush1.msra.mxu0 0.0
    %5435 = vmatprep.subr.mxu0 0.0
    %5436 = vmatpush1.msra.mxu0 0.0
    %5437 = vmatprep.subr.mxu0 0.0
    %5438 = vmatpush1.msra.mxu0 0.0
    %5439 = vmatprep.subr.mxu0 0.0
    %5440 = vmatpush1.msra.mxu0 0.0
    %5441 = vmatprep.subr.mxu0 0.0
    %5442 = vmatpush1.msra.mxu0 0.0
    %5443 = vmatprep.subr.mxu0 0.0
    %5444 = vmatpush1.msra.mxu0 0.0
    %5445 = vmatprep.subr.mxu0 0.0
    %5446 = vmatpush1.msra.mxu0 0.0
    %5447 = vmatprep.subr.mxu0 0.0
    %5448 = vmatpush1.msra.mxu0 0.0
    %5449 = vmatprep.subr.mxu0 0.0
    %5450 = vmatpush1.msra.mxu0 0.0
    %5451 = vmatprep.subr.mxu0 0.0
    %5452 = vmatpush1.msra.mxu0 0.0
    %5453 = vmatprep.subr.mxu0 0.0
    %5454 = vmatpush1.msra.mxu0 0.0
    %5455 = vmatprep.subr.mxu0 0.0
    %5456 = vmatpush1.msra.mxu0 0.0
    %5457 = vmatprep.subr.mxu0 0.0
    %5458 = vmatpush1.msra.mxu0 0.0
    %5459 = vmatprep.subr.mxu0 0.0
    %5460 = vmatpush1.msra.mxu0 0.0
    %5461 = vmatprep.subr.mxu0 0.0
    %5462 = vmatpush1.msra.mxu0 0.0
    %5463 = vmatprep.subr.mxu0 0.0
    %5464 = vmatpush1.msra.mxu0 0.0
    %5465 = vmatprep.subr.mxu0 0.0
    %5466 = vmatpush1.msra.mxu0 0.0
    %5467 = vmatprep.subr.mxu0 0.0
    %5468 = vmatpush1.msra.mxu0 0.0
    %5469 = vmatprep.subr.mxu0 0.0
    %5470 = vmatpush1.msra.mxu0 0.0
    %5471 = vmatprep.subr.mxu0 0.0
    %5472 = vmatpush1.msra.mxu0 0.0
    %5473 = vmatprep.subr.mxu0 0.0
    %5474 = vmatpush1.msra.mxu0 0.0
    %5475 = vmatprep.subr.mxu0 0.0
    %5476 = vmatpush1.msra.mxu0 0.0
    %5477 = vmatprep.subr.mxu0 0.0
    %5478 = vmatpush1.msra.mxu0 0.0
    %5479 = vmatprep.subr.mxu0 0.0
    %5480 = vmatpush1.msra.mxu0 0.0
    %5481 = vmatprep.subr.mxu0 0.0
    %5482 = vmatpush1.msra.mxu0 0.0
    %5483 = vmatprep.subr.mxu0 0.0
    %5484 = vmatpush1.msra.mxu0 0.0
    %5485 = vmatprep.subr.mxu0 0.0
    %5486 = vmatpush1.msra.mxu0 0.0
    %5487 = vmatprep.mubr.f32.mxu0 0.0
    %5488 = vmatmul.mubr.f32.gmra.mrb[0].mxu0 %v5323
    %v5489 = vpop.f32.mrb[0].mxu0
    %v5490 = vadd.f32 0.0, %v5489
    %v5491 = vpop.f32.mrb[0].mxu0
    %v5492 = vadd.f32 0.0, %v5491
    %5493 = vmatprep.mubr.f32.mxu0 0.0
    %5494 = vmatmul.mubr.f32.gmra.mrb[0].mxu0 %v5326
    %v5495 = vpop.f32.mrb[0].mxu0
    %v5496 = vadd.f32 0.0, %v5495
    %v5497 = vpop.f32.mrb[0].mxu0
    %v5498 = vadd.f32 0.0, %v5497
    %5499 = vmatprep.mubr.f32.mxu0 0.0
    %5500 = vmatmul.mubr.f32.gmra.mrb[0].mxu0 %v5329
    %v5501 = vpop.f32.mrb[0].mxu0
    %v5502 = vadd.f32 0.0, %v5501
    %v5503 = vpop.f32.mrb[0].mxu0
    %v5504 = vadd.f32 0.0, %v5503
    %5505 = vmatprep.mubr.f32.mxu0 0.0
    %5506 = vmatmul.mubr.f32.gmra.mrb[0].mxu0 %v5332
    %v5507 = vpop.f32.mrb[0].mxu0
    %v5508 = vadd.f32 0.0, %v5507
    %v5509 = vpop.f32.mrb[0].mxu0
    %v5510 = vadd.f32 0.0, %v5509
    %5511 = vdwg.mxu0
    %5512 = vmatprep.subr.mxu0 %v5297
    %5513 = vmatpush1.msra.mxu0 %v5296
    %5514 = vmatprep.subr.mxu0 %v5304
    %5515 = vmatpush1.msra.mxu0 %v5303
    %5516 = vmatprep.subr.mxu0 0.0
    %5517 = vmatpush1.msra.mxu0 0.0
    %5518 = vmatprep.subr.mxu0 0.0
    %5519 = vmatpush1.msra.mxu0 0.0
    %5520 = vmatprep.subr.mxu0 0.0
    %5521 = vmatpush1.msra.mxu0 0.0
    %5522 = vmatprep.subr.mxu0 0.0
    %5523 = vmatpush1.msra.mxu0 0.0
    %5524 = vmatprep.subr.mxu0 0.0
    %5525 = vmatpush1.msra.mxu0 0.0
    %5526 = vmatprep.subr.mxu0 0.0
    %5527 = vmatpush1.msra.mxu0 0.0
    %5528 = vmatprep.subr.mxu0 0.0
    %5529 = vmatpush1.msra.mxu0 0.0
    %5530 = vmatprep.subr.mxu0 0.0
    %5531 = vmatpush1.msra.mxu0 0.0
    %5532 = vmatprep.subr.mxu0 0.0
    %5533 = vmatpush1.msra.mxu0 0.0
    %5534 = vmatprep.subr.mxu0 0.0
    %5535 = vmatpush1.msra.mxu0 0.0
    %5536 = vmatprep.subr.mxu0 0.0
    %5537 = vmatpush1.msra.mxu0 0.0
    %5538 = vmatprep.subr.mxu0 0.0
    %5539 = vmatpush1.msra.mxu0 0.0
    %5540 = vmatprep.subr.mxu0 0.0
    %5541 = vmatpush1.msra.mxu0 0.0
    %5542 = vmatprep.subr.mxu0 0.0
    %5543 = vmatpush1.msra.mxu0 0.0
    %5544 = vmatprep.subr.mxu0 0.0
    %5545 = vmatpush1.msra.mxu0 0.0
    %5546 = vmatprep.subr.mxu0 0.0
    %5547 = vmatpush1.msra.mxu0 0.0
    %5548 = vmatprep.subr.mxu0 0.0
    %5549 = vmatpush1.msra.mxu0 0.0
    %5550 = vmatprep.subr.mxu0 0.0
    %5551 = vmatpush1.msra.mxu0 0.0
    %5552 = vmatprep.subr.mxu0 0.0
    %5553 = vmatpush1.msra.mxu0 0.0
    %5554 = vmatprep.subr.mxu0 0.0
    %5555 = vmatpush1.msra.mxu0 0.0
    %5556 = vmatprep.subr.mxu0 0.0
    %5557 = vmatpush1.msra.mxu0 0.0
    %5558 = vmatprep.subr.mxu0 0.0
    %5559 = vmatpush1.msra.mxu0 0.0
    %5560 = vmatprep.subr.mxu0 0.0
    %5561 = vmatpush1.msra.mxu0 0.0
    %5562 = vmatprep.subr.mxu0 0.0
    %5563 = vmatpush1.msra.mxu0 0.0
    %5564 = vmatprep.subr.mxu0 0.0
    %5565 = vmatpush1.msra.mxu0 0.0
    %5566 = vmatprep.subr.mxu0 0.0
    %5567 = vmatpush1.msra.mxu0 0.0
    %5568 = vmatprep.subr.mxu0 0.0
    %5569 = vmatpush1.msra.mxu0 0.0
    %5570 = vmatprep.subr.mxu0 0.0
    %5571 = vmatpush1.msra.mxu0 0.0
    %5572 = vmatprep.subr.mxu0 0.0
    %5573 = vmatpush1.msra.mxu0 0.0
    %5574 = vmatprep.subr.mxu0 0.0
    %5575 = vmatpush1.msra.mxu0 0.0
    %5576 = vmatprep.mubr.f32.mxu0 0.0
    %5577 = vmatmul.mubr.f32.gmra.mrb[0].mxu0 %v5323
    %v5578 = vpop.f32.mrb[0].mxu0
    %v5579 = vadd.f32 0.0, %v5578
    %v5580 = vpop.f32.mrb[0].mxu0
    %v5581 = vadd.f32 0.0, %v5580
    %5582 = vmatprep.mubr.f32.mxu0 0.0
    %5583 = vmatmul.mubr.f32.gmra.mrb[0].mxu0 %v5326
    %v5584 = vpop.f32.mrb[0].mxu0
    %v5585 = vadd.f32 0.0, %v5584
    %v5586 = vpop.f32.mrb[0].mxu0
    %v5587 = vadd.f32 0.0, %v5586
    %5588 = vmatprep.mubr.f32.mxu0 0.0
    %5589 = vmatmul.mubr.f32.gmra.mrb[0].mxu0 %v5329
    %v5590 = vpop.f32.mrb[0].mxu0
    %v5591 = vadd.f32 0.0, %v5590
    %v5592 = vpop.f32.mrb[0].mxu0
    %v5593 = vadd.f32 0.0, %v5592
    %5594 = vmatprep.mubr.f32.mxu0 0.0
    %5595 = vmatmul.mubr.f32.gmra.mrb[0].mxu0 %v5332
    %v5596 = vpop.f32.mrb[0].mxu0
    %v5597 = vadd.f32 0.0, %v5596
    %v5598 = vpop.f32.mrb[0].mxu0
    %v5599 = vadd.f32 0.0, %v5598
    %5600 = vdwg.mxu0
    %5601 = vmatprep.subr.mxu0 %v5275
    %5602 = vmatpush1.msra.mxu0 %v5298
    %5603 = vmatprep.subr.mxu0 %v5291
    %5604 = vmatpush1.msra.mxu0 %v5305
    %5605 = vmatprep.subr.mxu0 0.0
    %5606 = vmatpush1.msra.mxu0 0.0
    %5607 = vmatprep.subr.mxu0 0.0
    %5608 = vmatpush1.msra.mxu0 0.0
    %5609 = vmatprep.subr.mxu0 0.0
    %5610 = vmatpush1.msra.mxu0 0.0
    %5611 = vmatprep.subr.mxu0 0.0
    %5612 = vmatpush1.msra.mxu0 0.0
    %5613 = vmatprep.subr.mxu0 0.0
    %5614 = vmatpush1.msra.mxu0 0.0
    %5615 = vmatprep.subr.mxu0 0.0
    %5616 = vmatpush1.msra.mxu0 0.0
    %5617 = vmatprep.subr.mxu0 0.0
    %5618 = vmatpush1.msra.mxu0 0.0
    %5619 = vmatprep.subr.mxu0 0.0
    %5620 = vmatpush1.msra.mxu0 0.0
    %5621 = vmatprep.subr.mxu0 0.0
    %5622 = vmatpush1.msra.mxu0 0.0
    %5623 = vmatprep.subr.mxu0 0.0
    %5624 = vmatpush1.msra.mxu0 0.0
    %5625 = vmatprep.subr.mxu0 0.0
    %5626 = vmatpush1.msra.mxu0 0.0
    %5627 = vmatprep.subr.mxu0 0.0
    %5628 = vmatpush1.msra.mxu0 0.0
    %5629 = vmatprep.subr.mxu0 0.0
    %5630 = vmatpush1.msra.mxu0 0.0
    %5631 = vmatprep.subr.mxu0 0.0
    %5632 = vmatpush1.msra.mxu0 0.0
    %5633 = vmatprep.subr.mxu0 0.0
    %5634 = vmatpush1.msra.mxu0 0.0
    %5635 = vmatprep.subr.mxu0 0.0
    %5636 = vmatpush1.msra.mxu0 0.0
    %5637 = vmatprep.subr.mxu0 0.0
    %5638 = vmatpush1.msra.mxu0 0.0
    %5639 = vmatprep.subr.mxu0 0.0
    %5640 = vmatpush1.msra.mxu0 0.0
    %5641 = vmatprep.subr.mxu0 0.0
    %5642 = vmatpush1.msra.mxu0 0.0
    %5643 = vmatprep.subr.mxu0 0.0
    %5644 = vmatpush1.msra.mxu0 0.0
    %5645 = vmatprep.subr.mxu0 0.0
    %5646 = vmatpush1.msra.mxu0 0.0
    %5647 = vmatprep.subr.mxu0 0.0
    %5648 = vmatpush1.msra.mxu0 0.0
    %5649 = vmatprep.subr.mxu0 0.0
    %5650 = vmatpush1.msra.mxu0 0.0
    %5651 = vmatprep.subr.mxu0 0.0
    %5652 = vmatpush1.msra.mxu0 0.0
    %5653 = vmatprep.subr.mxu0 0.0
    %5654 = vmatpush1.msra.mxu0 0.0
    %5655 = vmatprep.subr.mxu0 0.0
    %5656 = vmatpush1.msra.mxu0 0.0
    %5657 = vmatprep.subr.mxu0 0.0
    %5658 = vmatpush1.msra.mxu0 0.0
    %5659 = vmatprep.subr.mxu0 0.0
    %5660 = vmatpush1.msra.mxu0 0.0
    %5661 = vmatprep.subr.mxu0 0.0
    %5662 = vmatpush1.msra.mxu0 0.0
    %5663 = vmatprep.subr.mxu0 0.0
    %5664 = vmatpush1.msra.mxu0 0.0
    %5665 = vmatprep.mubr.f32.mxu0 0.0
    %5666 = vmatmul.mubr.f32.gmra.mrb[0].mxu0 %v5323
    %v5667 = vpop.f32.mrb[0].mxu0
    %v5668 = vadd.f32 0.0, %v5667
    %v5669 = vpop.f32.mrb[0].mxu0
    %v5670 = vadd.f32 0.0, %v5669
    %5671 = vmatprep.mubr.f32.mxu0 0.0
    %5672 = vmatmul.mubr.f32.gmra.mrb[0].mxu0 %v5326
    %v5673 = vpop.f32.mrb[0].mxu0
    %v5674 = vadd.f32 0.0, %v5673
    %v5675 = vpop.f32.mrb[0].mxu0
    %v5676 = vadd.f32 0.0, %v5675
    %5677 = vmatprep.mubr.f32.mxu0 0.0
    %5678 = vmatmul.mubr.f32.gmra.mrb[0].mxu0 %v5329
    %v5679 = vpop.f32.mrb[0].mxu0
    %v5680 = vadd.f32 0.0, %v5679
    %v5681 = vpop.f32.mrb[0].mxu0
    %v5682 = vadd.f32 0.0, %v5681
    %5683 = vmatprep.mubr.f32.mxu0 0.0
    %5684 = vmatmul.mubr.f32.gmra.mrb[0].mxu0 %v5332
    %v5685 = vpop.f32.mrb[0].mxu0
    %v5686 = vadd.f32 0.0, %v5685
    %v5687 = vpop.f32.mrb[0].mxu0
    %v5688 = vadd.f32 0.0, %v5687
    %5689 = vdwg.mxu0
    %v5690 = vadd.f32 %v5223, %v5401
    %v5691 = vadd.f32 %v5224, %v5403
    %v5692 = vadd.f32 %v5225, %v5490
    %v5693 = vadd.f32 %v5226, %v5492
    %v5694 = vadd.f32 %v5227, %v5579
    %v5695 = vadd.f32 %v5228, %v5581
    %v5696 = vadd.f32 %v5229, %v5668
    %v5697 = vadd.f32 %v5230, %v5670
    %v5698 = vadd.f32 %v5231, %v5407
    %v5699 = vadd.f32 %v5232, %v5409
    %v5700 = vadd.f32 %v5233, %v5496
    %v5701 = vadd.f32 %v5234, %v5498
    %v5702 = vadd.f32 %v5235, %v5585
    %v5703 = vadd.f32 %v5236, %v5587
    %v5704 = vadd.f32 %v5237, %v5674
    %v5705 = vadd.f32 %v5238, %v5676
    %v5706 = vadd.f32 %v5239, %v5413
    %v5707 = vadd.f32 %v5240, %v5415
    %v5708 = vadd.f32 %v5241, %v5502
    %v5709 = vadd.f32 %v5242, %v5504
    %v5710 = vadd.f32 %v5243, %v5591
    %v5711 = vadd.f32 %v5244, %v5593
    %v5712 = vadd.f32 %v5245, %v5680
    %v5713 = vadd.f32 %v5246, %v5682
    %v5714 = vadd.f32 %v5247, %v5419
    %v5715 = vadd.f32 %v5248, %v5421
    %v5716 = vadd.f32 %v5249, %v5508
    %v5717 = vadd.f32 %v5250, %v5510
    %v5718 = vadd.f32 %v5251, %v5597
    %v5719 = vadd.f32 %v5252, %v5599
    %v5720 = vadd.f32 %v5253, %v5686
    %v5721 = vadd.f32 %v5254, %v5688
    %s5722 = scalar_lea.vmem %s3, 128
    %v5723 = vld [vmem:[%s5722] sm:$0xff]
    %v5724 = vld [vmem:[%s5722 + $0x8] sm:$0xff]
    %v5725 = vld [vmem:[%s5722 + $0x10] sm:$0xff]
    %v5726 = vld [vmem:[%s5722 + $0x18] sm:$0xff]
    %5727 = vrot.lane.b32.xlu0 %v3890, 96
    %v5728 = vpop.permute.xlu0 %5727
    %5729 = vrot.lane.b32.xlu0 %v3891, 96
    %v5730 = vpop.permute.xlu0 %5729
    %5731 = vrot.lane.b32.xlu0 %v3892, 96
    %v5732 = vpop.permute.xlu0 %5731
    %5733 = vrot.lane.b32.xlu0 %v3893, 96
    %v5734 = vpop.permute.xlu0 %5733
    %5735 = vrot.lane.b32.xlu0 %v3894, 96
    %v5736 = vpop.permute.xlu0 %5735
    %5737 = vrot.lane.b32.xlu0 %v3895, 96
    %v5738 = vpop.permute.xlu0 %5737
    %5739 = vrot.lane.b32.xlu0 %v3896, 96
    %v5740 = vpop.permute.xlu0 %5739
    %5741 = vrot.lane.b32.xlu0 %v3897, 96
    %v5742 = vpop.permute.xlu0 %5741
    %5743 = vrot.lane.b32.xlu0 %v3898, 96
    %v5744 = vpop.permute.xlu0 %5743
    %5745 = vrot.lane.b32.xlu0 %v3899, 96
    %v5746 = vpop.permute.xlu0 %5745
    %5747 = vrot.lane.b32.xlu0 %v3900, 96
    %v5748 = vpop.permute.xlu0 %5747
    %5749 = vrot.lane.b32.xlu0 %v3901, 96
    %v5750 = vpop.permute.xlu0 %5749
    %5751 = vrot.lane.b32.xlu0 %v3902, 96
    %v5752 = vpop.permute.xlu0 %5751
    %5753 = vrot.lane.b32.xlu0 %v3903, 96
    %v5754 = vpop.permute.xlu0 %5753
    %5755 = vrot.lane.b32.xlu0 %v3904, 96
    %v5756 = vpop.permute.xlu0 %5755
    %5757 = vrot.lane.b32.xlu0 %v3905, 96
    %v5758 = vpop.permute.xlu0 %5757
    %v5759 = vsel %vm1690, %v5728, %v5730
    %v5760 = vsel %vm1690, %v5730, %v5732
    %v5761 = vsel %vm1690, %v5732, %v5734
    %v5762 = vsel %vm1690, %v5734, %v5736
    %v5763 = vsel %vm1690, %v5736, %v5738
    %v5764 = vsel %vm1690, %v5738, %v5740
    %v5765 = vsel %vm1690, %v5740, %v5742
    %v5766 = vsel %vm1690, %v5744, %v5746
    %v5767 = vsel %vm1690, %v5746, %v5748
    %v5768 = vsel %vm1690, %v5748, %v5750
    %v5769 = vsel %vm1690, %v5750, %v5752
    %v5770 = vsel %vm1690, %v5752, %v5754
    %v5771 = vsel %vm1690, %v5754, %v5756
    %v5772 = vsel %vm1690, %v5756, %v5758
    %v5790 = vsel %vm3989, %v5723, 0
    %v5793 = vsel %vm3989, %v5724, 0
    %v5796 = vsel %vm3989, %v5725, 0
    %v5799 = vsel %vm3989, %v5726, 0
    %5801 = vmatprep.subr.mxu0 %v5760
    %5802 = vmatpush1.msra.mxu0 %v5759
    %5803 = vmatprep.subr.mxu0 %v5767
    %5804 = vmatpush1.msra.mxu0 %v5766
    %5805 = vmatprep.subr.mxu0 0.0
    %5806 = vmatpush1.msra.mxu0 0.0
    %5807 = vmatprep.subr.mxu0 0.0
    %5808 = vmatpush1.msra.mxu0 0.0
    %5809 = vmatprep.subr.mxu0 0.0
    %5810 = vmatpush1.msra.mxu0 0.0
    %5811 = vmatprep.subr.mxu0 0.0
    %5812 = vmatpush1.msra.mxu0 0.0
    %5813 = vmatprep.subr.mxu0 0.0
    %5814 = vmatpush1.msra.mxu0 0.0
    %5815 = vmatprep.subr.mxu0 0.0
    %5816 = vmatpush1.msra.mxu0 0.0
    %5817 = vmatprep.subr.mxu0 0.0
    %5818 = vmatpush1.msra.mxu0 0.0
    %5819 = vmatprep.subr.mxu0 0.0
    %5820 = vmatpush1.msra.mxu0 0.0
    %5821 = vmatprep.subr.mxu0 0.0
    %5822 = vmatpush1.msra.mxu0 0.0
    %5823 = vmatprep.subr.mxu0 0.0
    %5824 = vmatpush1.msra.mxu0 0.0
    %5825 = vmatprep.subr.mxu0 0.0
    %5826 = vmatpush1.msra.mxu0 0.0
    %5827 = vmatprep.subr.mxu0 0.0
    %5828 = vmatpush1.msra.mxu0 0.0
    %5829 = vmatprep.subr.mxu0 0.0
    %5830 = vmatpush1.msra.mxu0 0.0
    %5831 = vmatprep.subr.mxu0 0.0
    %5832 = vmatpush1.msra.mxu0 0.0
    %5833 = vmatprep.subr.mxu0 0.0
    %5834 = vmatpush1.msra.mxu0 0.0
    %5835 = vmatprep.subr.mxu0 0.0
    %5836 = vmatpush1.msra.mxu0 0.0
    %5837 = vmatprep.subr.mxu0 0.0
    %5838 = vmatpush1.msra.mxu0 0.0
    %5839 = vmatprep.subr.mxu0 0.0
    %5840 = vmatpush1.msra.mxu0 0.0
    %5841 = vmatprep.subr.mxu0 0.0
    %5842 = vmatpush1.msra.mxu0 0.0
    %5843 = vmatprep.subr.mxu0 0.0
    %5844 = vmatpush1.msra.mxu0 0.0
    %5845 = vmatprep.subr.mxu0 0.0
    %5846 = vmatpush1.msra.mxu0 0.0
    %5847 = vmatprep.subr.mxu0 0.0
    %5848 = vmatpush1.msra.mxu0 0.0
    %5849 = vmatprep.subr.mxu0 0.0
    %5850 = vmatpush1.msra.mxu0 0.0
    %5851 = vmatprep.subr.mxu0 0.0
    %5852 = vmatpush1.msra.mxu0 0.0
    %5853 = vmatprep.subr.mxu0 0.0
    %5854 = vmatpush1.msra.mxu0 0.0
    %5855 = vmatprep.subr.mxu0 0.0
    %5856 = vmatpush1.msra.mxu0 0.0
    %5857 = vmatprep.subr.mxu0 0.0
    %5858 = vmatpush1.msra.mxu0 0.0
    %5859 = vmatprep.subr.mxu0 0.0
    %5860 = vmatpush1.msra.mxu0 0.0
    %5861 = vmatprep.subr.mxu0 0.0
    %5862 = vmatpush1.msra.mxu0 0.0
    %5863 = vmatprep.subr.mxu0 0.0
    %5864 = vmatpush1.msra.mxu0 0.0
    %5865 = vmatprep.mubr.f32.mxu0 0.0
    %5866 = vmatmul.mubr.f32.gmra.mrb[0].mxu0 %v5790
    %v5867 = vpop.f32.mrb[0].mxu0
    %v5868 = vadd.f32 0.0, %v5867
    %v5869 = vpop.f32.mrb[0].mxu0
    %v5870 = vadd.f32 0.0, %v5869
    %5871 = vmatprep.mubr.f32.mxu0 0.0
    %5872 = vmatmul.mubr.f32.gmra.mrb[0].mxu0 %v5793
    %v5873 = vpop.f32.mrb[0].mxu0
    %v5874 = vadd.f32 0.0, %v5873
    %v5875 = vpop.f32.mrb[0].mxu0
    %v5876 = vadd.f32 0.0, %v5875
    %5877 = vmatprep.mubr.f32.mxu0 0.0
    %5878 = vmatmul.mubr.f32.gmra.mrb[0].mxu0 %v5796
    %v5879 = vpop.f32.mrb[0].mxu0
    %v5880 = vadd.f32 0.0, %v5879
    %v5881 = vpop.f32.mrb[0].mxu0
    %v5882 = vadd.f32 0.0, %v5881
    %5883 = vmatprep.mubr.f32.mxu0 0.0
    %5884 = vmatmul.mubr.f32.gmra.mrb[0].mxu0 %v5799
    %v5885 = vpop.f32.mrb[0].mxu0
    %v5886 = vadd.f32 0.0, %v5885
    %v5887 = vpop.f32.mrb[0].mxu0
    %v5888 = vadd.f32 0.0, %v5887
    %5889 = vdwg.mxu0
    %5890 = vmatprep.subr.mxu0 %v5762
    %5891 = vmatpush1.msra.mxu0 %v5761
    %5892 = vmatprep.subr.mxu0 %v5769
    %5893 = vmatpush1.msra.mxu0 %v5768
    %5894 = vmatprep.subr.mxu0 0.0
    %5895 = vmatpush1.msra.mxu0 0.0
    %5896 = vmatprep.subr.mxu0 0.0
    %5897 = vmatpush1.msra.mxu0 0.0
    %5898 = vmatprep.subr.mxu0 0.0
    %5899 = vmatpush1.msra.mxu0 0.0
    %5900 = vmatprep.subr.mxu0 0.0
    %5901 = vmatpush1.msra.mxu0 0.0
    %5902 = vmatprep.subr.mxu0 0.0
    %5903 = vmatpush1.msra.mxu0 0.0
    %5904 = vmatprep.subr.mxu0 0.0
    %5905 = vmatpush1.msra.mxu0 0.0
    %5906 = vmatprep.subr.mxu0 0.0
    %5907 = vmatpush1.msra.mxu0 0.0
    %5908 = vmatprep.subr.mxu0 0.0
    %5909 = vmatpush1.msra.mxu0 0.0
    %5910 = vmatprep.subr.mxu0 0.0
    %5911 = vmatpush1.msra.mxu0 0.0
    %5912 = vmatprep.subr.mxu0 0.0
    %5913 = vmatpush1.msra.mxu0 0.0
    %5914 = vmatprep.subr.mxu0 0.0
    %5915 = vmatpush1.msra.mxu0 0.0
    %5916 = vmatprep.subr.mxu0 0.0
    %5917 = vmatpush1.msra.mxu0 0.0
    %5918 = vmatprep.subr.mxu0 0.0
    %5919 = vmatpush1.msra.mxu0 0.0
    %5920 = vmatprep.subr.mxu0 0.0
    %5921 = vmatpush1.msra.mxu0 0.0
    %5922 = vmatprep.subr.mxu0 0.0
    %5923 = vmatpush1.msra.mxu0 0.0
    %5924 = vmatprep.subr.mxu0 0.0
    %5925 = vmatpush1.msra.mxu0 0.0
    %5926 = vmatprep.subr.mxu0 0.0
    %5927 = vmatpush1.msra.mxu0 0.0
    %5928 = vmatprep.subr.mxu0 0.0
    %5929 = vmatpush1.msra.mxu0 0.0
    %5930 = vmatprep.subr.mxu0 0.0
    %5931 = vmatpush1.msra.mxu0 0.0
    %5932 = vmatprep.subr.mxu0 0.0
    %5933 = vmatpush1.msra.mxu0 0.0
    %5934 = vmatprep.subr.mxu0 0.0
    %5935 = vmatpush1.msra.mxu0 0.0
    %5936 = vmatprep.subr.mxu0 0.0
    %5937 = vmatpush1.msra.mxu0 0.0
    %5938 = vmatprep.subr.mxu0 0.0
    %5939 = vmatpush1.msra.mxu0 0.0
    %5940 = vmatprep.subr.mxu0 0.0
    %5941 = vmatpush1.msra.mxu0 0.0
    %5942 = vmatprep.subr.mxu0 0.0
    %5943 = vmatpush1.msra.mxu0 0.0
    %5944 = vmatprep.subr.mxu0 0.0
    %5945 = vmatpush1.msra.mxu0 0.0
    %5946 = vmatprep.subr.mxu0 0.0
    %5947 = vmatpush1.msra.mxu0 0.0
    %5948 = vmatprep.subr.mxu0 0.0
    %5949 = vmatpush1.msra.mxu0 0.0
    %5950 = vmatprep.subr.mxu0 0.0
    %5951 = vmatpush1.msra.mxu0 0.0
    %5952 = vmatprep.subr.mxu0 0.0
    %5953 = vmatpush1.msra.mxu0 0.0
    %5954 = vmatprep.mubr.f32.mxu0 0.0
    %5955 = vmatmul.mubr.f32.gmra.mrb[0].mxu0 %v5790
    %v5956 = vpop.f32.mrb[0].mxu0
    %v5957 = vadd.f32 0.0, %v5956
    %v5958 = vpop.f32.mrb[0].mxu0
    %v5959 = vadd.f32 0.0, %v5958
    %5960 = vmatprep.mubr.f32.mxu0 0.0
    %5961 = vmatmul.mubr.f32.gmra.mrb[0].mxu0 %v5793
    %v5962 = vpop.f32.mrb[0].mxu0
    %v5963 = vadd.f32 0.0, %v5962
    %v5964 = vpop.f32.mrb[0].mxu0
    %v5965 = vadd.f32 0.0, %v5964
    %5966 = vmatprep.mubr.f32.mxu0 0.0
    %5967 = vmatmul.mubr.f32.gmra.mrb[0].mxu0 %v5796
    %v5968 = vpop.f32.mrb[0].mxu0
    %v5969 = vadd.f32 0.0, %v5968
    %v5970 = vpop.f32.mrb[0].mxu0
    %v5971 = vadd.f32 0.0, %v5970
    %5972 = vmatprep.mubr.f32.mxu0 0.0
    %5973 = vmatmul.mubr.f32.gmra.mrb[0].mxu0 %v5799
    %v5974 = vpop.f32.mrb[0].mxu0
    %v5975 = vadd.f32 0.0, %v5974
    %v5976 = vpop.f32.mrb[0].mxu0
    %v5977 = vadd.f32 0.0, %v5976
    %5978 = vdwg.mxu0
    %5979 = vmatprep.subr.mxu0 %v5764
    %5980 = vmatpush1.msra.mxu0 %v5763
    %5981 = vmatprep.subr.mxu0 %v5771
    %5982 = vmatpush1.msra.mxu0 %v5770
    %5983 = vmatprep.subr.mxu0 0.0
    %5984 = vmatpush1.msra.mxu0 0.0
    %5985 = vmatprep.subr.mxu0 0.0
    %5986 = vmatpush1.msra.mxu0 0.0
    %5987 = vmatprep.subr.mxu0 0.0
    %5988 = vmatpush1.msra.mxu0 0.0
    %5989 = vmatprep.subr.mxu0 0.0
    %5990 = vmatpush1.msra.mxu0 0.0
    %5991 = vmatprep.subr.mxu0 0.0
    %5992 = vmatpush1.msra.mxu0 0.0
    %5993 = vmatprep.subr.mxu0 0.0
    %5994 = vmatpush1.msra.mxu0 0.0
    %5995 = vmatprep.subr.mxu0 0.0
    %5996 = vmatpush1.msra.mxu0 0.0
    %5997 = vmatprep.subr.mxu0 0.0
    %5998 = vmatpush1.msra.mxu0 0.0
    %5999 = vmatprep.subr.mxu0 0.0
    %6000 = vmatpush1.msra.mxu0 0.0
    %6001 = vmatprep.subr.mxu0 0.0
    %6002 = vmatpush1.msra.mxu0 0.0
    %6003 = vmatprep.subr.mxu0 0.0
    %6004 = vmatpush1.msra.mxu0 0.0
    %6005 = vmatprep.subr.mxu0 0.0
    %6006 = vmatpush1.msra.mxu0 0.0
    %6007 = vmatprep.subr.mxu0 0.0
    %6008 = vmatpush1.msra.mxu0 0.0
    %6009 = vmatprep.subr.mxu0 0.0
    %6010 = vmatpush1.msra.mxu0 0.0
    %6011 = vmatprep.subr.mxu0 0.0
    %6012 = vmatpush1.msra.mxu0 0.0
    %6013 = vmatprep.subr.mxu0 0.0
    %6014 = vmatpush1.msra.mxu0 0.0
    %6015 = vmatprep.subr.mxu0 0.0
    %6016 = vmatpush1.msra.mxu0 0.0
    %6017 = vmatprep.subr.mxu0 0.0
    %6018 = vmatpush1.msra.mxu0 0.0
    %6019 = vmatprep.subr.mxu0 0.0
    %6020 = vmatpush1.msra.mxu0 0.0
    %6021 = vmatprep.subr.mxu0 0.0
    %6022 = vmatpush1.msra.mxu0 0.0
    %6023 = vmatprep.subr.mxu0 0.0
    %6024 = vmatpush1.msra.mxu0 0.0
    %6025 = vmatprep.subr.mxu0 0.0
    %6026 = vmatpush1.msra.mxu0 0.0
    %6027 = vmatprep.subr.mxu0 0.0
    %6028 = vmatpush1.msra.mxu0 0.0
    %6029 = vmatprep.subr.mxu0 0.0
    %6030 = vmatpush1.msra.mxu0 0.0
    %6031 = vmatprep.subr.mxu0 0.0
    %6032 = vmatpush1.msra.mxu0 0.0
    %6033 = vmatprep.subr.mxu0 0.0
    %6034 = vmatpush1.msra.mxu0 0.0
    %6035 = vmatprep.subr.mxu0 0.0
    %6036 = vmatpush1.msra.mxu0 0.0
    %6037 = vmatprep.subr.mxu0 0.0
    %6038 = vmatpush1.msra.mxu0 0.0
    %6039 = vmatprep.subr.mxu0 0.0
    %6040 = vmatpush1.msra.mxu0 0.0
    %6041 = vmatprep.subr.mxu0 0.0
    %6042 = vmatpush1.msra.mxu0 0.0
    %6043 = vmatprep.mubr.f32.mxu0 0.0
    %6044 = vmatmul.mubr.f32.gmra.mrb[0].mxu0 %v5790
    %v6045 = vpop.f32.mrb[0].mxu0
    %v6046 = vadd.f32 0.0, %v6045
    %v6047 = vpop.f32.mrb[0].mxu0
    %v6048 = vadd.f32 0.0, %v6047
    %6049 = vmatprep.mubr.f32.mxu0 0.0
    %6050 = vmatmul.mubr.f32.gmra.mrb[0].mxu0 %v5793
    %v6051 = vpop.f32.mrb[0].mxu0
    %v6052 = vadd.f32 0.0, %v6051
    %v6053 = vpop.f32.mrb[0].mxu0
    %v6054 = vadd.f32 0.0, %v6053
    %6055 = vmatprep.mubr.f32.mxu0 0.0
    %6056 = vmatmul.mubr.f32.gmra.mrb[0].mxu0 %v5796
    %v6057 = vpop.f32.mrb[0].mxu0
    %v6058 = vadd.f32 0.0, %v6057
    %v6059 = vpop.f32.mrb[0].mxu0
    %v6060 = vadd.f32 0.0, %v6059
    %6061 = vmatprep.mubr.f32.mxu0 0.0
    %6062 = vmatmul.mubr.f32.gmra.mrb[0].mxu0 %v5799
    %v6063 = vpop.f32.mrb[0].mxu0
    %v6064 = vadd.f32 0.0, %v6063
    %v6065 = vpop.f32.mrb[0].mxu0
    %v6066 = vadd.f32 0.0, %v6065
    %6067 = vdwg.mxu0
    %6068 = vmatprep.subr.mxu0 %v5742
    %6069 = vmatpush1.msra.mxu0 %v5765
    %6070 = vmatprep.subr.mxu0 %v5758
    %6071 = vmatpush1.msra.mxu0 %v5772
    %6072 = vmatprep.subr.mxu0 0.0
    %6073 = vmatpush1.msra.mxu0 0.0
    %6074 = vmatprep.subr.mxu0 0.0
    %6075 = vmatpush1.msra.mxu0 0.0
    %6076 = vmatprep.subr.mxu0 0.0
    %6077 = vmatpush1.msra.mxu0 0.0
    %6078 = vmatprep.subr.mxu0 0.0
    %6079 = vmatpush1.msra.mxu0 0.0
    %6080 = vmatprep.subr.mxu0 0.0
    %6081 = vmatpush1.msra.mxu0 0.0
    %6082 = vmatprep.subr.mxu0 0.0
    %6083 = vmatpush1.msra.mxu0 0.0
    %6084 = vmatprep.subr.mxu0 0.0
    %6085 = vmatpush1.msra.mxu0 0.0
    %6086 = vmatprep.subr.mxu0 0.0
    %6087 = vmatpush1.msra.mxu0 0.0
    %6088 = vmatprep.subr.mxu0 0.0
    %6089 = vmatpush1.msra.mxu0 0.0
    %6090 = vmatprep.subr.mxu0 0.0
    %6091 = vmatpush1.msra.mxu0 0.0
    %6092 = vmatprep.subr.mxu0 0.0
    %6093 = vmatpush1.msra.mxu0 0.0
    %6094 = vmatprep.subr.mxu0 0.0
    %6095 = vmatpush1.msra.mxu0 0.0
    %6096 = vmatprep.subr.mxu0 0.0
    %6097 = vmatpush1.msra.mxu0 0.0
    %6098 = vmatprep.subr.mxu0 0.0
    %6099 = vmatpush1.msra.mxu0 0.0
    %6100 = vmatprep.subr.mxu0 0.0
    %6101 = vmatpush1.msra.mxu0 0.0
    %6102 = vmatprep.subr.mxu0 0.0
    %6103 = vmatpush1.msra.mxu0 0.0
    %6104 = vmatprep.subr.mxu0 0.0
    %6105 = vmatpush1.msra.mxu0 0.0
    %6106 = vmatprep.subr.mxu0 0.0
    %6107 = vmatpush1.msra.mxu0 0.0
    %6108 = vmatprep.subr.mxu0 0.0
    %6109 = vmatpush1.msra.mxu0 0.0
    %6110 = vmatprep.subr.mxu0 0.0
    %6111 = vmatpush1.msra.mxu0 0.0
    %6112 = vmatprep.subr.mxu0 0.0
    %6113 = vmatpush1.msra.mxu0 0.0
    %6114 = vmatprep.subr.mxu0 0.0
    %6115 = vmatpush1.msra.mxu0 0.0
    %6116 = vmatprep.subr.mxu0 0.0
    %6117 = vmatpush1.msra.mxu0 0.0
    %6118 = vmatprep.subr.mxu0 0.0
    %6119 = vmatpush1.msra.mxu0 0.0
    %6120 = vmatprep.subr.mxu0 0.0
    %6121 = vmatpush1.msra.mxu0 0.0
    %6122 = vmatprep.subr.mxu0 0.0
    %6123 = vmatpush1.msra.mxu0 0.0
    %6124 = vmatprep.subr.mxu0 0.0
    %6125 = vmatpush1.msra.mxu0 0.0
    %6126 = vmatprep.subr.mxu0 0.0
    %6127 = vmatpush1.msra.mxu0 0.0
    %6128 = vmatprep.subr.mxu0 0.0
    %6129 = vmatpush1.msra.mxu0 0.0
    %6130 = vmatprep.subr.mxu0 0.0
    %6131 = vmatpush1.msra.mxu0 0.0
    %6132 = vmatprep.mubr.f32.mxu0 0.0
    %6133 = vmatmul.mubr.f32.gmra.mrb[0].mxu0 %v5790
    %v6134 = vpop.f32.mrb[0].mxu0
    %v6135 = vadd.f32 0.0, %v6134
    %v6136 = vpop.f32.mrb[0].mxu0
    %v6137 = vadd.f32 0.0, %v6136
    %6138 = vmatprep.mubr.f32.mxu0 0.0
    %6139 = vmatmul.mubr.f32.gmra.mrb[0].mxu0 %v5793
    %v6140 = vpop.f32.mrb[0].mxu0
    %v6141 = vadd.f32 0.0, %v6140
    %v6142 = vpop.f32.mrb[0].mxu0
    %v6143 = vadd.f32 0.0, %v6142
    %6144 = vmatprep.mubr.f32.mxu0 0.0
    %6145 = vmatmul.mubr.f32.gmra.mrb[0].mxu0 %v5796
    %v6146 = vpop.f32.mrb[0].mxu0
    %v6147 = vadd.f32 0.0, %v6146
    %v6148 = vpop.f32.mrb[0].mxu0
    %v6149 = vadd.f32 0.0, %v6148
    %6150 = vmatprep.mubr.f32.mxu0 0.0
    %6151 = vmatmul.mubr.f32.gmra.mrb[0].mxu0 %v5799
    %v6152 = vpop.f32.mrb[0].mxu0
    %v6153 = vadd.f32 0.0, %v6152
    %v6154 = vpop.f32.mrb[0].mxu0
    %v6155 = vadd.f32 0.0, %v6154
    %6156 = vdwg.mxu0
    %v6157 = vadd.f32 %v5690, %v5868
    %v6158 = vadd.f32 %v5691, %v5870
    %v6159 = vadd.f32 %v5692, %v5957
    %v6160 = vadd.f32 %v5693, %v5959
    %v6161 = vadd.f32 %v5694, %v6046
    %v6162 = vadd.f32 %v5695, %v6048
    %v6163 = vadd.f32 %v5696, %v6135
    %v6164 = vadd.f32 %v5697, %v6137
    %v6165 = vadd.f32 %v5698, %v5874
    %v6166 = vadd.f32 %v5699, %v5876
    %v6167 = vadd.f32 %v5700, %v5963
    %v6168 = vadd.f32 %v5701, %v5965
    %v6169 = vadd.f32 %v5702, %v6052
    %v6170 = vadd.f32 %v5703, %v6054
    %v6171 = vadd.f32 %v5704, %v6141
    %v6172 = vadd.f32 %v5705, %v6143
    %v6173 = vadd.f32 %v5706, %v5880
    %v6174 = vadd.f32 %v5707, %v5882
    %v6175 = vadd.f32 %v5708, %v5969
    %v6176 = vadd.f32 %v5709, %v5971
    %v6177 = vadd.f32 %v5710, %v6058
    %v6178 = vadd.f32 %v5711, %v6060
    %v6179 = vadd.f32 %v5712, %v6147
    %v6180 = vadd.f32 %v5713, %v6149
    %v6181 = vadd.f32 %v5714, %v5886
    %v6182 = vadd.f32 %v5715, %v5888
    %v6183 = vadd.f32 %v5716, %v5975
    %v6184 = vadd.f32 %v5717, %v5977
    %v6185 = vadd.f32 %v5718, %v6064
    %v6186 = vadd.f32 %v5719, %v6066
    %v6187 = vadd.f32 %v5720, %v6153
    %v6188 = vadd.f32 %v5721, %v6155
    %s6189 = scalar_lea.vmem %s3, 160
    %v6190 = vld [vmem:[%s6189] sm:$0xff]
    %v6191 = vld [vmem:[%s6189 + $0x8] sm:$0xff]
    %v6192 = vld [vmem:[%s6189 + $0x10] sm:$0xff]
    %v6193 = vld [vmem:[%s6189 + $0x18] sm:$0xff]
    %6194 = vrot.lane.b32.xlu0 %v3890, 95
    %v6195 = vpop.permute.xlu0 %6194
    %6196 = vrot.lane.b32.xlu0 %v3891, 95
    %v6197 = vpop.permute.xlu0 %6196
    %6198 = vrot.lane.b32.xlu0 %v3892, 95
    %v6199 = vpop.permute.xlu0 %6198
    %6200 = vrot.lane.b32.xlu0 %v3893, 95
    %v6201 = vpop.permute.xlu0 %6200
    %6202 = vrot.lane.b32.xlu0 %v3894, 95
    %v6203 = vpop.permute.xlu0 %6202
    %6204 = vrot.lane.b32.xlu0 %v3895, 95
    %v6205 = vpop.permute.xlu0 %6204
    %6206 = vrot.lane.b32.xlu0 %v3896, 95
    %v6207 = vpop.permute.xlu0 %6206
    %6208 = vrot.lane.b32.xlu0 %v3897, 95
    %v6209 = vpop.permute.xlu0 %6208
    %6210 = vrot.lane.b32.xlu0 %v3898, 95
    %v6211 = vpop.permute.xlu0 %6210
    %6212 = vrot.lane.b32.xlu0 %v3899, 95
    %v6213 = vpop.permute.xlu0 %6212
    %6214 = vrot.lane.b32.xlu0 %v3900, 95
    %v6215 = vpop.permute.xlu0 %6214
    %6216 = vrot.lane.b32.xlu0 %v3901, 95
    %v6217 = vpop.permute.xlu0 %6216
    %6218 = vrot.lane.b32.xlu0 %v3902, 95
    %v6219 = vpop.permute.xlu0 %6218
    %6220 = vrot.lane.b32.xlu0 %v3903, 95
    %v6221 = vpop.permute.xlu0 %6220
    %6222 = vrot.lane.b32.xlu0 %v3904, 95
    %v6223 = vpop.permute.xlu0 %6222
    %6224 = vrot.lane.b32.xlu0 %v3905, 95
    %v6225 = vpop.permute.xlu0 %6224
    %v6226 = vsel %vm2101, %v6195, %v6197
    %v6227 = vsel %vm2101, %v6197, %v6199
    %v6228 = vsel %vm2101, %v6199, %v6201
    %v6229 = vsel %vm2101, %v6201, %v6203
    %v6230 = vsel %vm2101, %v6203, %v6205
    %v6231 = vsel %vm2101, %v6205, %v6207
    %v6232 = vsel %vm2101, %v6207, %v6209
    %v6233 = vsel %vm2101, %v6211, %v6213
    %v6234 = vsel %vm2101, %v6213, %v6215
    %v6235 = vsel %vm2101, %v6215, %v6217
    %v6236 = vsel %vm2101, %v6217, %v6219
    %v6237 = vsel %vm2101, %v6219, %v6221
    %v6238 = vsel %vm2101, %v6221, %v6223
    %v6239 = vsel %vm2101, %v6223, %v6225
    %v6257 = vsel %vm3989, %v6190, 0
    %v6260 = vsel %vm3989, %v6191, 0
    %v6263 = vsel %vm3989, %v6192, 0
    %v6266 = vsel %vm3989, %v6193, 0
    %6268 = vmatprep.subr.mxu0 %v6227
    %6269 = vmatpush1.msra.mxu0 %v6226
    %6270 = vmatprep.subr.mxu0 %v6234
    %6271 = vmatpush1.msra.mxu0 %v6233
    %6272 = vmatprep.subr.mxu0 0.0
    %6273 = vmatpush1.msra.mxu0 0.0
    %6274 = vmatprep.subr.mxu0 0.0
    %6275 = vmatpush1.msra.mxu0 0.0
    %6276 = vmatprep.subr.mxu0 0.0
    %6277 = vmatpush1.msra.mxu0 0.0
    %6278 = vmatprep.subr.mxu0 0.0
    %6279 = vmatpush1.msra.mxu0 0.0
    %6280 = vmatprep.subr.mxu0 0.0
    %6281 = vmatpush1.msra.mxu0 0.0
    %6282 = vmatprep.subr.mxu0 0.0
    %6283 = vmatpush1.msra.mxu0 0.0
    %6284 = vmatprep.subr.mxu0 0.0
    %6285 = vmatpush1.msra.mxu0 0.0
    %6286 = vmatprep.subr.mxu0 0.0
    %6287 = vmatpush1.msra.mxu0 0.0
    %6288 = vmatprep.subr.mxu0 0.0
    %6289 = vmatpush1.msra.mxu0 0.0
    %6290 = vmatprep.subr.mxu0 0.0
    %6291 = vmatpush1.msra.mxu0 0.0
    %6292 = vmatprep.subr.mxu0 0.0
    %6293 = vmatpush1.msra.mxu0 0.0
    %6294 = vmatprep.subr.mxu0 0.0
    %6295 = vmatpush1.msra.mxu0 0.0
    %6296 = vmatprep.subr.mxu0 0.0
    %6297 = vmatpush1.msra.mxu0 0.0
    %6298 = vmatprep.subr.mxu0 0.0
    %6299 = vmatpush1.msra.mxu0 0.0
    %6300 = vmatprep.subr.mxu0 0.0
    %6301 = vmatpush1.msra.mxu0 0.0
    %6302 = vmatprep.subr.mxu0 0.0
    %6303 = vmatpush1.msra.mxu0 0.0
    %6304 = vmatprep.subr.mxu0 0.0
    %6305 = vmatpush1.msra.mxu0 0.0
    %6306 = vmatprep.subr.mxu0 0.0
    %6307 = vmatpush1.msra.mxu0 0.0
    %6308 = vmatprep.subr.mxu0 0.0
    %6309 = vmatpush1.msra.mxu0 0.0
    %6310 = vmatprep.subr.mxu0 0.0
    %6311 = vmatpush1.msra.mxu0 0.0
    %6312 = vmatprep.subr.mxu0 0.0
    %6313 = vmatpush1.msra.mxu0 0.0
    %6314 = vmatprep.subr.mxu0 0.0
    %6315 = vmatpush1.msra.mxu0 0.0
    %6316 = vmatprep.subr.mxu0 0.0
    %6317 = vmatpush1.msra.mxu0 0.0
    %6318 = vmatprep.subr.mxu0 0.0
    %6319 = vmatpush1.msra.mxu0 0.0
    %6320 = vmatprep.subr.mxu0 0.0
    %6321 = vmatpush1.msra.mxu0 0.0
    %6322 = vmatprep.subr.mxu0 0.0
    %6323 = vmatpush1.msra.mxu0 0.0
    %6324 = vmatprep.subr.mxu0 0.0
    %6325 = vmatpush1.msra.mxu0 0.0
    %6326 = vmatprep.subr.mxu0 0.0
    %6327 = vmatpush1.msra.mxu0 0.0
    %6328 = vmatprep.subr.mxu0 0.0
    %6329 = vmatpush1.msra.mxu0 0.0
    %6330 = vmatprep.subr.mxu0 0.0
    %6331 = vmatpush1.msra.mxu0 0.0
    %6332 = vmatprep.mubr.f32.mxu0 0.0
    %6333 = vmatmul.mubr.f32.gmra.mrb[0].mxu0 %v6257
    %v6334 = vpop.f32.mrb[0].mxu0
    %v6335 = vadd.f32 0.0, %v6334
    %v6336 = vpop.f32.mrb[0].mxu0
    %v6337 = vadd.f32 0.0, %v6336
    %6338 = vmatprep.mubr.f32.mxu0 0.0
    %6339 = vmatmul.mubr.f32.gmra.mrb[0].mxu0 %v6260
    %v6340 = vpop.f32.mrb[0].mxu0
    %v6341 = vadd.f32 0.0, %v6340
    %v6342 = vpop.f32.mrb[0].mxu0
    %v6343 = vadd.f32 0.0, %v6342
    %6344 = vmatprep.mubr.f32.mxu0 0.0
    %6345 = vmatmul.mubr.f32.gmra.mrb[0].mxu0 %v6263
    %v6346 = vpop.f32.mrb[0].mxu0
    %v6347 = vadd.f32 0.0, %v6346
    %v6348 = vpop.f32.mrb[0].mxu0
    %v6349 = vadd.f32 0.0, %v6348
    %6350 = vmatprep.mubr.f32.mxu0 0.0
    %6351 = vmatmul.mubr.f32.gmra.mrb[0].mxu0 %v6266
    %v6352 = vpop.f32.mrb[0].mxu0
    %v6353 = vadd.f32 0.0, %v6352
    %v6354 = vpop.f32.mrb[0].mxu0
    %v6355 = vadd.f32 0.0, %v6354
    %6356 = vdwg.mxu0
    %6357 = vmatprep.subr.mxu0 %v6229
    %6358 = vmatpush1.msra.mxu0 %v6228
    %6359 = vmatprep.subr.mxu0 %v6236
    %6360 = vmatpush1.msra.mxu0 %v6235
    %6361 = vmatprep.subr.mxu0 0.0
    %6362 = vmatpush1.msra.mxu0 0.0
    %6363 = vmatprep.subr.mxu0 0.0
    %6364 = vmatpush1.msra.mxu0 0.0
    %6365 = vmatprep.subr.mxu0 0.0
    %6366 = vmatpush1.msra.mxu0 0.0
    %6367 = vmatprep.subr.mxu0 0.0
    %6368 = vmatpush1.msra.mxu0 0.0
    %6369 = vmatprep.subr.mxu0 0.0
    %6370 = vmatpush1.msra.mxu0 0.0
    %6371 = vmatprep.subr.mxu0 0.0
    %6372 = vmatpush1.msra.mxu0 0.0
    %6373 = vmatprep.subr.mxu0 0.0
    %6374 = vmatpush1.msra.mxu0 0.0
    %6375 = vmatprep.subr.mxu0 0.0
    %6376 = vmatpush1.msra.mxu0 0.0
    %6377 = vmatprep.subr.mxu0 0.0
    %6378 = vmatpush1.msra.mxu0 0.0
    %6379 = vmatprep.subr.mxu0 0.0
    %6380 = vmatpush1.msra.mxu0 0.0
    %6381 = vmatprep.subr.mxu0 0.0
    %6382 = vmatpush1.msra.mxu0 0.0
    %6383 = vmatprep.subr.mxu0 0.0
    %6384 = vmatpush1.msra.mxu0 0.0
    %6385 = vmatprep.subr.mxu0 0.0
    %6386 = vmatpush1.msra.mxu0 0.0
    %6387 = vmatprep.subr.mxu0 0.0
    %6388 = vmatpush1.msra.mxu0 0.0
    %6389 = vmatprep.subr.mxu0 0.0
    %6390 = vmatpush1.msra.mxu0 0.0
    %6391 = vmatprep.subr.mxu0 0.0
    %6392 = vmatpush1.msra.mxu0 0.0
    %6393 = vmatprep.subr.mxu0 0.0
    %6394 = vmatpush1.msra.mxu0 0.0
    %6395 = vmatprep.subr.mxu0 0.0
    %6396 = vmatpush1.msra.mxu0 0.0
    %6397 = vmatprep.subr.mxu0 0.0
    %6398 = vmatpush1.msra.mxu0 0.0
    %6399 = vmatprep.subr.mxu0 0.0
    %6400 = vmatpush1.msra.mxu0 0.0
    %6401 = vmatprep.subr.mxu0 0.0
    %6402 = vmatpush1.msra.mxu0 0.0
    %6403 = vmatprep.subr.mxu0 0.0
    %6404 = vmatpush1.msra.mxu0 0.0
    %6405 = vmatprep.subr.mxu0 0.0
    %6406 = vmatpush1.msra.mxu0 0.0
    %6407 = vmatprep.subr.mxu0 0.0
    %6408 = vmatpush1.msra.mxu0 0.0
    %6409 = vmatprep.subr.mxu0 0.0
    %6410 = vmatpush1.msra.mxu0 0.0
    %6411 = vmatprep.subr.mxu0 0.0
    %6412 = vmatpush1.msra.mxu0 0.0
    %6413 = vmatprep.subr.mxu0 0.0
    %6414 = vmatpush1.msra.mxu0 0.0
    %6415 = vmatprep.subr.mxu0 0.0
    %6416 = vmatpush1.msra.mxu0 0.0
    %6417 = vmatprep.subr.mxu0 0.0
    %6418 = vmatpush1.msra.mxu0 0.0
    %6419 = vmatprep.subr.mxu0 0.0
    %6420 = vmatpush1.msra.mxu0 0.0
    %6421 = vmatprep.mubr.f32.mxu0 0.0
    %6422 = vmatmul.mubr.f32.gmra.mrb[0].mxu0 %v6257
    %v6423 = vpop.f32.mrb[0].mxu0
    %v6424 = vadd.f32 0.0, %v6423
    %v6425 = vpop.f32.mrb[0].mxu0
    %v6426 = vadd.f32 0.0, %v6425
    %6427 = vmatprep.mubr.f32.mxu0 0.0
    %6428 = vmatmul.mubr.f32.gmra.mrb[0].mxu0 %v6260
    %v6429 = vpop.f32.mrb[0].mxu0
    %v6430 = vadd.f32 0.0, %v6429
    %v6431 = vpop.f32.mrb[0].mxu0
    %v6432 = vadd.f32 0.0, %v6431
    %6433 = vmatprep.mubr.f32.mxu0 0.0
    %6434 = vmatmul.mubr.f32.gmra.mrb[0].mxu0 %v6263
    %v6435 = vpop.f32.mrb[0].mxu0
    %v6436 = vadd.f32 0.0, %v6435
    %v6437 = vpop.f32.mrb[0].mxu0
    %v6438 = vadd.f32 0.0, %v6437
    %6439 = vmatprep.mubr.f32.mxu0 0.0
    %6440 = vmatmul.mubr.f32.gmra.mrb[0].mxu0 %v6266
    %v6441 = vpop.f32.mrb[0].mxu0
    %v6442 = vadd.f32 0.0, %v6441
    %v6443 = vpop.f32.mrb[0].mxu0
    %v6444 = vadd.f32 0.0, %v6443
    %6445 = vdwg.mxu0
    %6446 = vmatprep.subr.mxu0 %v6231
    %6447 = vmatpush1.msra.mxu0 %v6230
    %6448 = vmatprep.subr.mxu0 %v6238
    %6449 = vmatpush1.msra.mxu0 %v6237
    %6450 = vmatprep.subr.mxu0 0.0
    %6451 = vmatpush1.msra.mxu0 0.0
    %6452 = vmatprep.subr.mxu0 0.0
    %6453 = vmatpush1.msra.mxu0 0.0
    %6454 = vmatprep.subr.mxu0 0.0
    %6455 = vmatpush1.msra.mxu0 0.0
    %6456 = vmatprep.subr.mxu0 0.0
    %6457 = vmatpush1.msra.mxu0 0.0
    %6458 = vmatprep.subr.mxu0 0.0
    %6459 = vmatpush1.msra.mxu0 0.0
    %6460 = vmatprep.subr.mxu0 0.0
    %6461 = vmatpush1.msra.mxu0 0.0
    %6462 = vmatprep.subr.mxu0 0.0
    %6463 = vmatpush1.msra.mxu0 0.0
    %6464 = vmatprep.subr.mxu0 0.0
    %6465 = vmatpush1.msra.mxu0 0.0
    %6466 = vmatprep.subr.mxu0 0.0
    %6467 = vmatpush1.msra.mxu0 0.0
    %6468 = vmatprep.subr.mxu0 0.0
    %6469 = vmatpush1.msra.mxu0 0.0
    %6470 = vmatprep.subr.mxu0 0.0
    %6471 = vmatpush1.msra.mxu0 0.0
    %6472 = vmatprep.subr.mxu0 0.0
    %6473 = vmatpush1.msra.mxu0 0.0
    %6474 = vmatprep.subr.mxu0 0.0
    %6475 = vmatpush1.msra.mxu0 0.0
    %6476 = vmatprep.subr.mxu0 0.0
    %6477 = vmatpush1.msra.mxu0 0.0
    %6478 = vmatprep.subr.mxu0 0.0
    %6479 = vmatpush1.msra.mxu0 0.0
    %6480 = vmatprep.subr.mxu0 0.0
    %6481 = vmatpush1.msra.mxu0 0.0
    %6482 = vmatprep.subr.mxu0 0.0
    %6483 = vmatpush1.msra.mxu0 0.0
    %6484 = vmatprep.subr.mxu0 0.0
    %6485 = vmatpush1.msra.mxu0 0.0
    %6486 = vmatprep.subr.mxu0 0.0
    %6487 = vmatpush1.msra.mxu0 0.0
    %6488 = vmatprep.subr.mxu0 0.0
    %6489 = vmatpush1.msra.mxu0 0.0
    %6490 = vmatprep.subr.mxu0 0.0
    %6491 = vmatpush1.msra.mxu0 0.0
    %6492 = vmatprep.subr.mxu0 0.0
    %6493 = vmatpush1.msra.mxu0 0.0
    %6494 = vmatprep.subr.mxu0 0.0
    %6495 = vmatpush1.msra.mxu0 0.0
    %6496 = vmatprep.subr.mxu0 0.0
    %6497 = vmatpush1.msra.mxu0 0.0
    %6498 = vmatprep.subr.mxu0 0.0
    %6499 = vmatpush1.msra.mxu0 0.0
    %6500 = vmatprep.subr.mxu0 0.0
    %6501 = vmatpush1.msra.mxu0 0.0
    %6502 = vmatprep.subr.mxu0 0.0
    %6503 = vmatpush1.msra.mxu0 0.0
    %6504 = vmatprep.subr.mxu0 0.0
    %6505 = vmatpush1.msra.mxu0 0.0
    %6506 = vmatprep.subr.mxu0 0.0
    %6507 = vmatpush1.msra.mxu0 0.0
    %6508 = vmatprep.subr.mxu0 0.0
    %6509 = vmatpush1.msra.mxu0 0.0
    %6510 = vmatprep.mubr.f32.mxu0 0.0
    %6511 = vmatmul.mubr.f32.gmra.mrb[0].mxu0 %v6257
    %v6512 = vpop.f32.mrb[0].mxu0
    %v6513 = vadd.f32 0.0, %v6512
    %v6514 = vpop.f32.mrb[0].mxu0
    %v6515 = vadd.f32 0.0, %v6514
    %6516 = vmatprep.mubr.f32.mxu0 0.0
    %6517 = vmatmul.mubr.f32.gmra.mrb[0].mxu0 %v6260
    %v6518 = vpop.f32.mrb[0].mxu0
    %v6519 = vadd.f32 0.0, %v6518
    %v6520 = vpop.f32.mrb[0].mxu0
    %v6521 = vadd.f32 0.0, %v6520
    %6522 = vmatprep.mubr.f32.mxu0 0.0
    %6523 = vmatmul.mubr.f32.gmra.mrb[0].mxu0 %v6263
    %v6524 = vpop.f32.mrb[0].mxu0
    %v6525 = vadd.f32 0.0, %v6524
    %v6526 = vpop.f32.mrb[0].mxu0
    %v6527 = vadd.f32 0.0, %v6526
    %6528 = vmatprep.mubr.f32.mxu0 0.0
    %6529 = vmatmul.mubr.f32.gmra.mrb[0].mxu0 %v6266
    %v6530 = vpop.f32.mrb[0].mxu0
    %v6531 = vadd.f32 0.0, %v6530
    %v6532 = vpop.f32.mrb[0].mxu0
    %v6533 = vadd.f32 0.0, %v6532
    %6534 = vdwg.mxu0
    %6535 = vmatprep.subr.mxu0 %v6209
    %6536 = vmatpush1.msra.mxu0 %v6232
    %6537 = vmatprep.subr.mxu0 %v6225
    %6538 = vmatpush1.msra.mxu0 %v6239
    %6539 = vmatprep.subr.mxu0 0.0
    %6540 = vmatpush1.msra.mxu0 0.0
    %6541 = vmatprep.subr.mxu0 0.0
    %6542 = vmatpush1.msra.mxu0 0.0
    %6543 = vmatprep.subr.mxu0 0.0
    %6544 = vmatpush1.msra.mxu0 0.0
    %6545 = vmatprep.subr.mxu0 0.0
    %6546 = vmatpush1.msra.mxu0 0.0
    %6547 = vmatprep.subr.mxu0 0.0
    %6548 = vmatpush1.msra.mxu0 0.0
    %6549 = vmatprep.subr.mxu0 0.0
    %6550 = vmatpush1.msra.mxu0 0.0
    %6551 = vmatprep.subr.mxu0 0.0
    %6552 = vmatpush1.msra.mxu0 0.0
    %6553 = vmatprep.subr.mxu0 0.0
    %6554 = vmatpush1.msra.mxu0 0.0
    %6555 = vmatprep.subr.mxu0 0.0
    %6556 = vmatpush1.msra.mxu0 0.0
    %6557 = vmatprep.subr.mxu0 0.0
    %6558 = vmatpush1.msra.mxu0 0.0
    %6559 = vmatprep.subr.mxu0 0.0
    %6560 = vmatpush1.msra.mxu0 0.0
    %6561 = vmatprep.subr.mxu0 0.0
    %6562 = vmatpush1.msra.mxu0 0.0
    %6563 = vmatprep.subr.mxu0 0.0
    %6564 = vmatpush1.msra.mxu0 0.0
    %6565 = vmatprep.subr.mxu0 0.0
    %6566 = vmatpush1.msra.mxu0 0.0
    %6567 = vmatprep.subr.mxu0 0.0
    %6568 = vmatpush1.msra.mxu0 0.0
    %6569 = vmatprep.subr.mxu0 0.0
    %6570 = vmatpush1.msra.mxu0 0.0
    %6571 = vmatprep.subr.mxu0 0.0
    %6572 = vmatpush1.msra.mxu0 0.0
    %6573 = vmatprep.subr.mxu0 0.0
    %6574 = vmatpush1.msra.mxu0 0.0
    %6575 = vmatprep.subr.mxu0 0.0
    %6576 = vmatpush1.msra.mxu0 0.0
    %6577 = vmatprep.subr.mxu0 0.0
    %6578 = vmatpush1.msra.mxu0 0.0
    %6579 = vmatprep.subr.mxu0 0.0
    %6580 = vmatpush1.msra.mxu0 0.0
    %6581 = vmatprep.subr.mxu0 0.0
    %6582 = vmatpush1.msra.mxu0 0.0
    %6583 = vmatprep.subr.mxu0 0.0
    %6584 = vmatpush1.msra.mxu0 0.0
    %6585 = vmatprep.subr.mxu0 0.0
    %6586 = vmatpush1.msra.mxu0 0.0
    %6587 = vmatprep.subr.mxu0 0.0
    %6588 = vmatpush1.msra.mxu0 0.0
    %6589 = vmatprep.subr.mxu0 0.0
    %6590 = vmatpush1.msra.mxu0 0.0
    %6591 = vmatprep.subr.mxu0 0.0
    %6592 = vmatpush1.msra.mxu0 0.0
    %6593 = vmatprep.subr.mxu0 0.0
    %6594 = vmatpush1.msra.mxu0 0.0
    %6595 = vmatprep.subr.mxu0 0.0
    %6596 = vmatpush1.msra.mxu0 0.0
    %6597 = vmatprep.subr.mxu0 0.0
    %6598 = vmatpush1.msra.mxu0 0.0
    %6599 = vmatprep.mubr.f32.mxu0 0.0
    %6600 = vmatmul.mubr.f32.gmra.mrb[0].mxu0 %v6257
    %v6601 = vpop.f32.mrb[0].mxu0
    %v6602 = vadd.f32 0.0, %v6601
    %v6603 = vpop.f32.mrb[0].mxu0
    %v6604 = vadd.f32 0.0, %v6603
    %6605 = vmatprep.mubr.f32.mxu0 0.0
    %6606 = vmatmul.mubr.f32.gmra.mrb[0].mxu0 %v6260
    %v6607 = vpop.f32.mrb[0].mxu0
    %v6608 = vadd.f32 0.0, %v6607
    %v6609 = vpop.f32.mrb[0].mxu0
    %v6610 = vadd.f32 0.0, %v6609
    %6611 = vmatprep.mubr.f32.mxu0 0.0
    %6612 = vmatmul.mubr.f32.gmra.mrb[0].mxu0 %v6263
    %v6613 = vpop.f32.mrb[0].mxu0
    %v6614 = vadd.f32 0.0, %v6613
    %v6615 = vpop.f32.mrb[0].mxu0
    %v6616 = vadd.f32 0.0, %v6615
    %6617 = vmatprep.mubr.f32.mxu0 0.0
    %6618 = vmatmul.mubr.f32.gmra.mrb[0].mxu0 %v6266
    %v6619 = vpop.f32.mrb[0].mxu0
    %v6620 = vadd.f32 0.0, %v6619
    %v6621 = vpop.f32.mrb[0].mxu0
    %v6622 = vadd.f32 0.0, %v6621
    %6623 = vdwg.mxu0
    %v6624 = vadd.f32 %v6157, %v6335
    %v6625 = vadd.f32 %v6158, %v6337
    %v6626 = vadd.f32 %v6159, %v6424
    %v6627 = vadd.f32 %v6160, %v6426
    %v6628 = vadd.f32 %v6161, %v6513
    %v6629 = vadd.f32 %v6162, %v6515
    %v6630 = vadd.f32 %v6163, %v6602
    %v6631 = vadd.f32 %v6164, %v6604
    %v6632 = vadd.f32 %v6165, %v6341
    %v6633 = vadd.f32 %v6166, %v6343
    %v6634 = vadd.f32 %v6167, %v6430
    %v6635 = vadd.f32 %v6168, %v6432
    %v6636 = vadd.f32 %v6169, %v6519
    %v6637 = vadd.f32 %v6170, %v6521
    %v6638 = vadd.f32 %v6171, %v6608
    %v6639 = vadd.f32 %v6172, %v6610
    %v6640 = vadd.f32 %v6173, %v6347
    %v6641 = vadd.f32 %v6174, %v6349
    %v6642 = vadd.f32 %v6175, %v6436
    %v6643 = vadd.f32 %v6176, %v6438
    %v6644 = vadd.f32 %v6177, %v6525
    %v6645 = vadd.f32 %v6178, %v6527
    %v6646 = vadd.f32 %v6179, %v6614
    %v6647 = vadd.f32 %v6180, %v6616
    %v6648 = vadd.f32 %v6181, %v6353
    %v6649 = vadd.f32 %v6182, %v6355
    %v6650 = vadd.f32 %v6183, %v6442
    %v6651 = vadd.f32 %v6184, %v6444
    %v6652 = vadd.f32 %v6185, %v6531
    %v6653 = vadd.f32 %v6186, %v6533
    %v6654 = vadd.f32 %v6187, %v6620
    %v6655 = vadd.f32 %v6188, %v6622
    %s6656 = scalar_lea.vmem %s3, 192
    %v6657 = vld [vmem:[%s6656] sm:$0xff]
    %v6658 = vld [vmem:[%s6656 + $0x8] sm:$0xff]
    %v6659 = vld [vmem:[%s6656 + $0x10] sm:$0xff]
    %v6660 = vld [vmem:[%s6656 + $0x18] sm:$0xff]
    %6661 = vrot.lane.b32.xlu0 %v3890, 67
    %v6662 = vpop.permute.xlu0 %6661
    %6663 = vrot.lane.b32.xlu0 %v3891, 67
    %v6664 = vpop.permute.xlu0 %6663
    %6665 = vrot.lane.b32.xlu0 %v3892, 67
    %v6666 = vpop.permute.xlu0 %6665
    %6667 = vrot.lane.b32.xlu0 %v3893, 67
    %v6668 = vpop.permute.xlu0 %6667
    %6669 = vrot.lane.b32.xlu0 %v3894, 67
    %v6670 = vpop.permute.xlu0 %6669
    %6671 = vrot.lane.b32.xlu0 %v3895, 67
    %v6672 = vpop.permute.xlu0 %6671
    %6673 = vrot.lane.b32.xlu0 %v3896, 67
    %v6674 = vpop.permute.xlu0 %6673
    %6675 = vrot.lane.b32.xlu0 %v3897, 67
    %v6676 = vpop.permute.xlu0 %6675
    %6677 = vrot.lane.b32.xlu0 %v3898, 67
    %v6678 = vpop.permute.xlu0 %6677
    %6679 = vrot.lane.b32.xlu0 %v3899, 67
    %v6680 = vpop.permute.xlu0 %6679
    %6681 = vrot.lane.b32.xlu0 %v3900, 67
    %v6682 = vpop.permute.xlu0 %6681
    %6683 = vrot.lane.b32.xlu0 %v3901, 67
    %v6684 = vpop.permute.xlu0 %6683
    %6685 = vrot.lane.b32.xlu0 %v3902, 67
    %v6686 = vpop.permute.xlu0 %6685
    %6687 = vrot.lane.b32.xlu0 %v3903, 67
    %v6688 = vpop.permute.xlu0 %6687
    %6689 = vrot.lane.b32.xlu0 %v3904, 67
    %v6690 = vpop.permute.xlu0 %6689
    %6691 = vrot.lane.b32.xlu0 %v3905, 67
    %v6692 = vpop.permute.xlu0 %6691
    %v6693 = vsel %vm2512, %v6662, %v6664
    %v6694 = vsel %vm2512, %v6664, %v6666
    %v6695 = vsel %vm2512, %v6666, %v6668
    %v6696 = vsel %vm2512, %v6668, %v6670
    %v6697 = vsel %vm2512, %v6670, %v6672
    %v6698 = vsel %vm2512, %v6672, %v6674
    %v6699 = vsel %vm2512, %v6674, %v6676
    %v6700 = vsel %vm2512, %v6678, %v6680
    %v6701 = vsel %vm2512, %v6680, %v6682
    %v6702 = vsel %vm2512, %v6682, %v6684
    %v6703 = vsel %vm2512, %v6684, %v6686
    %v6704 = vsel %vm2512, %v6686, %v6688
    %v6705 = vsel %vm2512, %v6688, %v6690
    %v6706 = vsel %vm2512, %v6690, %v6692
    %v6724 = vsel %vm3989, %v6657, 0
    %v6727 = vsel %vm3989, %v6658, 0
    %v6730 = vsel %vm3989, %v6659, 0
    %v6733 = vsel %vm3989, %v6660, 0
    %6735 = vmatprep.subr.mxu0 %v6694
    %6736 = vmatpush1.msra.mxu0 %v6693
    %6737 = vmatprep.subr.mxu0 %v6701
    %6738 = vmatpush1.msra.mxu0 %v6700
    %6739 = vmatprep.subr.mxu0 0.0
    %6740 = vmatpush1.msra.mxu0 0.0
    %6741 = vmatprep.subr.mxu0 0.0
    %6742 = vmatpush1.msra.mxu0 0.0
    %6743 = vmatprep.subr.mxu0 0.0
    %6744 = vmatpush1.msra.mxu0 0.0
    %6745 = vmatprep.subr.mxu0 0.0
    %6746 = vmatpush1.msra.mxu0 0.0
    %6747 = vmatprep.subr.mxu0 0.0
    %6748 = vmatpush1.msra.mxu0 0.0
    %6749 = vmatprep.subr.mxu0 0.0
    %6750 = vmatpush1.msra.mxu0 0.0
    %6751 = vmatprep.subr.mxu0 0.0
    %6752 = vmatpush1.msra.mxu0 0.0
    %6753 = vmatprep.subr.mxu0 0.0
    %6754 = vmatpush1.msra.mxu0 0.0
    %6755 = vmatprep.subr.mxu0 0.0
    %6756 = vmatpush1.msra.mxu0 0.0
    %6757 = vmatprep.subr.mxu0 0.0
    %6758 = vmatpush1.msra.mxu0 0.0
    %6759 = vmatprep.subr.mxu0 0.0
    %6760 = vmatpush1.msra.mxu0 0.0
    %6761 = vmatprep.subr.mxu0 0.0
    %6762 = vmatpush1.msra.mxu0 0.0
    %6763 = vmatprep.subr.mxu0 0.0
    %6764 = vmatpush1.msra.mxu0 0.0
    %6765 = vmatprep.subr.mxu0 0.0
    %6766 = vmatpush1.msra.mxu0 0.0
    %6767 = vmatprep.subr.mxu0 0.0
    %6768 = vmatpush1.msra.mxu0 0.0
    %6769 = vmatprep.subr.mxu0 0.0
    %6770 = vmatpush1.msra.mxu0 0.0
    %6771 = vmatprep.subr.mxu0 0.0
    %6772 = vmatpush1.msra.mxu0 0.0
    %6773 = vmatprep.subr.mxu0 0.0
    %6774 = vmatpush1.msra.mxu0 0.0
    %6775 = vmatprep.subr.mxu0 0.0
    %6776 = vmatpush1.msra.mxu0 0.0
    %6777 = vmatprep.subr.mxu0 0.0
    %6778 = vmatpush1.msra.mxu0 0.0
    %6779 = vmatprep.subr.mxu0 0.0
    %6780 = vmatpush1.msra.mxu0 0.0
    %6781 = vmatprep.subr.mxu0 0.0
    %6782 = vmatpush1.msra.mxu0 0.0
    %6783 = vmatprep.subr.mxu0 0.0
    %6784 = vmatpush1.msra.mxu0 0.0
    %6785 = vmatprep.subr.mxu0 0.0
    %6786 = vmatpush1.msra.mxu0 0.0
    %6787 = vmatprep.subr.mxu0 0.0
    %6788 = vmatpush1.msra.mxu0 0.0
    %6789 = vmatprep.subr.mxu0 0.0
    %6790 = vmatpush1.msra.mxu0 0.0
    %6791 = vmatprep.subr.mxu0 0.0
    %6792 = vmatpush1.msra.mxu0 0.0
    %6793 = vmatprep.subr.mxu0 0.0
    %6794 = vmatpush1.msra.mxu0 0.0
    %6795 = vmatprep.subr.mxu0 0.0
    %6796 = vmatpush1.msra.mxu0 0.0
    %6797 = vmatprep.subr.mxu0 0.0
    %6798 = vmatpush1.msra.mxu0 0.0
    %6799 = vmatprep.mubr.f32.mxu0 0.0
    %6800 = vmatmul.mubr.f32.gmra.mrb[0].mxu0 %v6724
    %v6801 = vpop.f32.mrb[0].mxu0
    %v6802 = vadd.f32 0.0, %v6801
    %v6803 = vpop.f32.mrb[0].mxu0
    %v6804 = vadd.f32 0.0, %v6803
    %6805 = vmatprep.mubr.f32.mxu0 0.0
    %6806 = vmatmul.mubr.f32.gmra.mrb[0].mxu0 %v6727
    %v6807 = vpop.f32.mrb[0].mxu0
    %v6808 = vadd.f32 0.0, %v6807
    %v6809 = vpop.f32.mrb[0].mxu0
    %v6810 = vadd.f32 0.0, %v6809
    %6811 = vmatprep.mubr.f32.mxu0 0.0
    %6812 = vmatmul.mubr.f32.gmra.mrb[0].mxu0 %v6730
    %v6813 = vpop.f32.mrb[0].mxu0
    %v6814 = vadd.f32 0.0, %v6813
    %v6815 = vpop.f32.mrb[0].mxu0
    %v6816 = vadd.f32 0.0, %v6815
    %6817 = vmatprep.mubr.f32.mxu0 0.0
    %6818 = vmatmul.mubr.f32.gmra.mrb[0].mxu0 %v6733
    %v6819 = vpop.f32.mrb[0].mxu0
    %v6820 = vadd.f32 0.0, %v6819
    %v6821 = vpop.f32.mrb[0].mxu0
    %v6822 = vadd.f32 0.0, %v6821
    %6823 = vdwg.mxu0
    %6824 = vmatprep.subr.mxu0 %v6696
    %6825 = vmatpush1.msra.mxu0 %v6695
    %6826 = vmatprep.subr.mxu0 %v6703
    %6827 = vmatpush1.msra.mxu0 %v6702
    %6828 = vmatprep.subr.mxu0 0.0
    %6829 = vmatpush1.msra.mxu0 0.0
    %6830 = vmatprep.subr.mxu0 0.0
    %6831 = vmatpush1.msra.mxu0 0.0
    %6832 = vmatprep.subr.mxu0 0.0
    %6833 = vmatpush1.msra.mxu0 0.0
    %6834 = vmatprep.subr.mxu0 0.0
    %6835 = vmatpush1.msra.mxu0 0.0
    %6836 = vmatprep.subr.mxu0 0.0
    %6837 = vmatpush1.msra.mxu0 0.0
    %6838 = vmatprep.subr.mxu0 0.0
    %6839 = vmatpush1.msra.mxu0 0.0
    %6840 = vmatprep.subr.mxu0 0.0
    %6841 = vmatpush1.msra.mxu0 0.0
    %6842 = vmatprep.subr.mxu0 0.0
    %6843 = vmatpush1.msra.mxu0 0.0
    %6844 = vmatprep.subr.mxu0 0.0
    %6845 = vmatpush1.msra.mxu0 0.0
    %6846 = vmatprep.subr.mxu0 0.0
    %6847 = vmatpush1.msra.mxu0 0.0
    %6848 = vmatprep.subr.mxu0 0.0
    %6849 = vmatpush1.msra.mxu0 0.0
    %6850 = vmatprep.subr.mxu0 0.0
    %6851 = vmatpush1.msra.mxu0 0.0
    %6852 = vmatprep.subr.mxu0 0.0
    %6853 = vmatpush1.msra.mxu0 0.0
    %6854 = vmatprep.subr.mxu0 0.0
    %6855 = vmatpush1.msra.mxu0 0.0
    %6856 = vmatprep.subr.mxu0 0.0
    %6857 = vmatpush1.msra.mxu0 0.0
    %6858 = vmatprep.subr.mxu0 0.0
    %6859 = vmatpush1.msra.mxu0 0.0
    %6860 = vmatprep.subr.mxu0 0.0
    %6861 = vmatpush1.msra.mxu0 0.0
    %6862 = vmatprep.subr.mxu0 0.0
    %6863 = vmatpush1.msra.mxu0 0.0
    %6864 = vmatprep.subr.mxu0 0.0
    %6865 = vmatpush1.msra.mxu0 0.0
    %6866 = vmatprep.subr.mxu0 0.0
    %6867 = vmatpush1.msra.mxu0 0.0
    %6868 = vmatprep.subr.mxu0 0.0
    %6869 = vmatpush1.msra.mxu0 0.0
    %6870 = vmatprep.subr.mxu0 0.0
    %6871 = vmatpush1.msra.mxu0 0.0
    %6872 = vmatprep.subr.mxu0 0.0
    %6873 = vmatpush1.msra.mxu0 0.0
    %6874 = vmatprep.subr.mxu0 0.0
    %6875 = vmatpush1.msra.mxu0 0.0
    %6876 = vmatprep.subr.mxu0 0.0
    %6877 = vmatpush1.msra.mxu0 0.0
    %6878 = vmatprep.subr.mxu0 0.0
    %6879 = vmatpush1.msra.mxu0 0.0
    %6880 = vmatprep.subr.mxu0 0.0
    %6881 = vmatpush1.msra.mxu0 0.0
    %6882 = vmatprep.subr.mxu0 0.0
    %6883 = vmatpush1.msra.mxu0 0.0
    %6884 = vmatprep.subr.mxu0 0.0
    %6885 = vmatpush1.msra.mxu0 0.0
    %6886 = vmatprep.subr.mxu0 0.0
    %6887 = vmatpush1.msra.mxu0 0.0
    %6888 = vmatprep.mubr.f32.mxu0 0.0
    %6889 = vmatmul.mubr.f32.gmra.mrb[0].mxu0 %v6724
    %v6890 = vpop.f32.mrb[0].mxu0
    %v6891 = vadd.f32 0.0, %v6890
    %v6892 = vpop.f32.mrb[0].mxu0
    %v6893 = vadd.f32 0.0, %v6892
    %6894 = vmatprep.mubr.f32.mxu0 0.0
    %6895 = vmatmul.mubr.f32.gmra.mrb[0].mxu0 %v6727
    %v6896 = vpop.f32.mrb[0].mxu0
    %v6897 = vadd.f32 0.0, %v6896
    %v6898 = vpop.f32.mrb[0].mxu0
    %v6899 = vadd.f32 0.0, %v6898
    %6900 = vmatprep.mubr.f32.mxu0 0.0
    %6901 = vmatmul.mubr.f32.gmra.mrb[0].mxu0 %v6730
    %v6902 = vpop.f32.mrb[0].mxu0
    %v6903 = vadd.f32 0.0, %v6902
    %v6904 = vpop.f32.mrb[0].mxu0
    %v6905 = vadd.f32 0.0, %v6904
    %6906 = vmatprep.mubr.f32.mxu0 0.0
    %6907 = vmatmul.mubr.f32.gmra.mrb[0].mxu0 %v6733
    %v6908 = vpop.f32.mrb[0].mxu0
    %v6909 = vadd.f32 0.0, %v6908
    %v6910 = vpop.f32.mrb[0].mxu0
    %v6911 = vadd.f32 0.0, %v6910
    %6912 = vdwg.mxu0
    %6913 = vmatprep.subr.mxu0 %v6698
    %6914 = vmatpush1.msra.mxu0 %v6697
    %6915 = vmatprep.subr.mxu0 %v6705
    %6916 = vmatpush1.msra.mxu0 %v6704
    %6917 = vmatprep.subr.mxu0 0.0
    %6918 = vmatpush1.msra.mxu0 0.0
    %6919 = vmatprep.subr.mxu0 0.0
    %6920 = vmatpush1.msra.mxu0 0.0
    %6921 = vmatprep.subr.mxu0 0.0
    %6922 = vmatpush1.msra.mxu0 0.0
    %6923 = vmatprep.subr.mxu0 0.0
    %6924 = vmatpush1.msra.mxu0 0.0
    %6925 = vmatprep.subr.mxu0 0.0
    %6926 = vmatpush1.msra.mxu0 0.0
    %6927 = vmatprep.subr.mxu0 0.0
    %6928 = vmatpush1.msra.mxu0 0.0
    %6929 = vmatprep.subr.mxu0 0.0
    %6930 = vmatpush1.msra.mxu0 0.0
    %6931 = vmatprep.subr.mxu0 0.0
    %6932 = vmatpush1.msra.mxu0 0.0
    %6933 = vmatprep.subr.mxu0 0.0
    %6934 = vmatpush1.msra.mxu0 0.0
    %6935 = vmatprep.subr.mxu0 0.0
    %6936 = vmatpush1.msra.mxu0 0.0
    %6937 = vmatprep.subr.mxu0 0.0
    %6938 = vmatpush1.msra.mxu0 0.0
    %6939 = vmatprep.subr.mxu0 0.0
    %6940 = vmatpush1.msra.mxu0 0.0
    %6941 = vmatprep.subr.mxu0 0.0
    %6942 = vmatpush1.msra.mxu0 0.0
    %6943 = vmatprep.subr.mxu0 0.0
    %6944 = vmatpush1.msra.mxu0 0.0
    %6945 = vmatprep.subr.mxu0 0.0
    %6946 = vmatpush1.msra.mxu0 0.0
    %6947 = vmatprep.subr.mxu0 0.0
    %6948 = vmatpush1.msra.mxu0 0.0
    %6949 = vmatprep.subr.mxu0 0.0
    %6950 = vmatpush1.msra.mxu0 0.0
    %6951 = vmatprep.subr.mxu0 0.0
    %6952 = vmatpush1.msra.mxu0 0.0
    %6953 = vmatprep.subr.mxu0 0.0
    %6954 = vmatpush1.msra.mxu0 0.0
    %6955 = vmatprep.subr.mxu0 0.0
    %6956 = vmatpush1.msra.mxu0 0.0
    %6957 = vmatprep.subr.mxu0 0.0
    %6958 = vmatpush1.msra.mxu0 0.0
    %6959 = vmatprep.subr.mxu0 0.0
    %6960 = vmatpush1.msra.mxu0 0.0
    %6961 = vmatprep.subr.mxu0 0.0
    %6962 = vmatpush1.msra.mxu0 0.0
    %6963 = vmatprep.subr.mxu0 0.0
    %6964 = vmatpush1.msra.mxu0 0.0
    %6965 = vmatprep.subr.mxu0 0.0
    %6966 = vmatpush1.msra.mxu0 0.0
    %6967 = vmatprep.subr.mxu0 0.0
    %6968 = vmatpush1.msra.mxu0 0.0
    %6969 = vmatprep.subr.mxu0 0.0
    %6970 = vmatpush1.msra.mxu0 0.0
    %6971 = vmatprep.subr.mxu0 0.0
    %6972 = vmatpush1.msra.mxu0 0.0
    %6973 = vmatprep.subr.mxu0 0.0
    %6974 = vmatpush1.msra.mxu0 0.0
    %6975 = vmatprep.subr.mxu0 0.0
    %6976 = vmatpush1.msra.mxu0 0.0
    %6977 = vmatprep.mubr.f32.mxu0 0.0
    %6978 = vmatmul.mubr.f32.gmra.mrb[0].mxu0 %v6724
    %v6979 = vpop.f32.mrb[0].mxu0
    %v6980 = vadd.f32 0.0, %v6979
    %v6981 = vpop.f32.mrb[0].mxu0
    %v6982 = vadd.f32 0.0, %v6981
    %6983 = vmatprep.mubr.f32.mxu0 0.0
    %6984 = vmatmul.mubr.f32.gmra.mrb[0].mxu0 %v6727
    %v6985 = vpop.f32.mrb[0].mxu0
    %v6986 = vadd.f32 0.0, %v6985
    %v6987 = vpop.f32.mrb[0].mxu0
    %v6988 = vadd.f32 0.0, %v6987
    %6989 = vmatprep.mubr.f32.mxu0 0.0
    %6990 = vmatmul.mubr.f32.gmra.mrb[0].mxu0 %v6730
    %v6991 = vpop.f32.mrb[0].mxu0
    %v6992 = vadd.f32 0.0, %v6991
    %v6993 = vpop.f32.mrb[0].mxu0
    %v6994 = vadd.f32 0.0, %v6993
    %6995 = vmatprep.mubr.f32.mxu0 0.0
    %6996 = vmatmul.mubr.f32.gmra.mrb[0].mxu0 %v6733
    %v6997 = vpop.f32.mrb[0].mxu0
    %v6998 = vadd.f32 0.0, %v6997
    %v6999 = vpop.f32.mrb[0].mxu0
    %v7000 = vadd.f32 0.0, %v6999
    %7001 = vdwg.mxu0
    %7002 = vmatprep.subr.mxu0 %v6676
    %7003 = vmatpush1.msra.mxu0 %v6699
    %7004 = vmatprep.subr.mxu0 %v6692
    %7005 = vmatpush1.msra.mxu0 %v6706
    %7006 = vmatprep.subr.mxu0 0.0
    %7007 = vmatpush1.msra.mxu0 0.0
    %7008 = vmatprep.subr.mxu0 0.0
    %7009 = vmatpush1.msra.mxu0 0.0
    %7010 = vmatprep.subr.mxu0 0.0
    %7011 = vmatpush1.msra.mxu0 0.0
    %7012 = vmatprep.subr.mxu0 0.0
    %7013 = vmatpush1.msra.mxu0 0.0
    %7014 = vmatprep.subr.mxu0 0.0
    %7015 = vmatpush1.msra.mxu0 0.0
    %7016 = vmatprep.subr.mxu0 0.0
    %7017 = vmatpush1.msra.mxu0 0.0
    %7018 = vmatprep.subr.mxu0 0.0
    %7019 = vmatpush1.msra.mxu0 0.0
    %7020 = vmatprep.subr.mxu0 0.0
    %7021 = vmatpush1.msra.mxu0 0.0
    %7022 = vmatprep.subr.mxu0 0.0
    %7023 = vmatpush1.msra.mxu0 0.0
    %7024 = vmatprep.subr.mxu0 0.0
    %7025 = vmatpush1.msra.mxu0 0.0
    %7026 = vmatprep.subr.mxu0 0.0
    %7027 = vmatpush1.msra.mxu0 0.0
    %7028 = vmatprep.subr.mxu0 0.0
    %7029 = vmatpush1.msra.mxu0 0.0
    %7030 = vmatprep.subr.mxu0 0.0
    %7031 = vmatpush1.msra.mxu0 0.0
    %7032 = vmatprep.subr.mxu0 0.0
    %7033 = vmatpush1.msra.mxu0 0.0
    %7034 = vmatprep.subr.mxu0 0.0
    %7035 = vmatpush1.msra.mxu0 0.0
    %7036 = vmatprep.subr.mxu0 0.0
    %7037 = vmatpush1.msra.mxu0 0.0
    %7038 = vmatprep.subr.mxu0 0.0
    %7039 = vmatpush1.msra.mxu0 0.0
    %7040 = vmatprep.subr.mxu0 0.0
    %7041 = vmatpush1.msra.mxu0 0.0
    %7042 = vmatprep.subr.mxu0 0.0
    %7043 = vmatpush1.msra.mxu0 0.0
    %7044 = vmatprep.subr.mxu0 0.0
    %7045 = vmatpush1.msra.mxu0 0.0
    %7046 = vmatprep.subr.mxu0 0.0
    %7047 = vmatpush1.msra.mxu0 0.0
    %7048 = vmatprep.subr.mxu0 0.0
    %7049 = vmatpush1.msra.mxu0 0.0
    %7050 = vmatprep.subr.mxu0 0.0
    %7051 = vmatpush1.msra.mxu0 0.0
    %7052 = vmatprep.subr.mxu0 0.0
    %7053 = vmatpush1.msra.mxu0 0.0
    %7054 = vmatprep.subr.mxu0 0.0
    %7055 = vmatpush1.msra.mxu0 0.0
    %7056 = vmatprep.subr.mxu0 0.0
    %7057 = vmatpush1.msra.mxu0 0.0
    %7058 = vmatprep.subr.mxu0 0.0
    %7059 = vmatpush1.msra.mxu0 0.0
    %7060 = vmatprep.subr.mxu0 0.0
    %7061 = vmatpush1.msra.mxu0 0.0
    %7062 = vmatprep.subr.mxu0 0.0
    %7063 = vmatpush1.msra.mxu0 0.0
    %7064 = vmatprep.subr.mxu0 0.0
    %7065 = vmatpush1.msra.mxu0 0.0
    %7066 = vmatprep.mubr.f32.mxu0 0.0
    %7067 = vmatmul.mubr.f32.gmra.mrb[0].mxu0 %v6724
    %v7068 = vpop.f32.mrb[0].mxu0
    %v7069 = vadd.f32 0.0, %v7068
    %v7070 = vpop.f32.mrb[0].mxu0
    %v7071 = vadd.f32 0.0, %v7070
    %7072 = vmatprep.mubr.f32.mxu0 0.0
    %7073 = vmatmul.mubr.f32.gmra.mrb[0].mxu0 %v6727
    %v7074 = vpop.f32.mrb[0].mxu0
    %v7075 = vadd.f32 0.0, %v7074
    %v7076 = vpop.f32.mrb[0].mxu0
    %v7077 = vadd.f32 0.0, %v7076
    %7078 = vmatprep.mubr.f32.mxu0 0.0
    %7079 = vmatmul.mubr.f32.gmra.mrb[0].mxu0 %v6730
    %v7080 = vpop.f32.mrb[0].mxu0
    %v7081 = vadd.f32 0.0, %v7080
    %v7082 = vpop.f32.mrb[0].mxu0
    %v7083 = vadd.f32 0.0, %v7082
    %7084 = vmatprep.mubr.f32.mxu0 0.0
    %7085 = vmatmul.mubr.f32.gmra.mrb[0].mxu0 %v6733
    %v7086 = vpop.f32.mrb[0].mxu0
    %v7087 = vadd.f32 0.0, %v7086
    %v7088 = vpop.f32.mrb[0].mxu0
    %v7089 = vadd.f32 0.0, %v7088
    %7090 = vdwg.mxu0
    %v7091 = vadd.f32 %v6624, %v6802
    %v7092 = vadd.f32 %v6625, %v6804
    %v7093 = vadd.f32 %v6626, %v6891
    %v7094 = vadd.f32 %v6627, %v6893
    %v7095 = vadd.f32 %v6628, %v6980
    %v7096 = vadd.f32 %v6629, %v6982
    %v7097 = vadd.f32 %v6630, %v7069
    %v7098 = vadd.f32 %v6631, %v7071
    %v7099 = vadd.f32 %v6632, %v6808
    %v7100 = vadd.f32 %v6633, %v6810
    %v7101 = vadd.f32 %v6634, %v6897
    %v7102 = vadd.f32 %v6635, %v6899
    %v7103 = vadd.f32 %v6636, %v6986
    %v7104 = vadd.f32 %v6637, %v6988
    %v7105 = vadd.f32 %v6638, %v7075
    %v7106 = vadd.f32 %v6639, %v7077
    %v7107 = vadd.f32 %v6640, %v6814
    %v7108 = vadd.f32 %v6641, %v6816
    %v7109 = vadd.f32 %v6642, %v6903
    %v7110 = vadd.f32 %v6643, %v6905
    %v7111 = vadd.f32 %v6644, %v6992
    %v7112 = vadd.f32 %v6645, %v6994
    %v7113 = vadd.f32 %v6646, %v7081
    %v7114 = vadd.f32 %v6647, %v7083
    %v7115 = vadd.f32 %v6648, %v6820
    %v7116 = vadd.f32 %v6649, %v6822
    %v7117 = vadd.f32 %v6650, %v6909
    %v7118 = vadd.f32 %v6651, %v6911
    %v7119 = vadd.f32 %v6652, %v6998
    %v7120 = vadd.f32 %v6653, %v7000
    %v7121 = vadd.f32 %v6654, %v7087
    %v7122 = vadd.f32 %v6655, %v7089
    %s7123 = scalar_lea.vmem %s3, 224
    %v7124 = vld [vmem:[%s7123] sm:$0xff]
    %v7125 = vld [vmem:[%s7123 + $0x8] sm:$0xff]
    %v7126 = vld [vmem:[%s7123 + $0x10] sm:$0xff]
    %v7127 = vld [vmem:[%s7123 + $0x18] sm:$0xff]
    %7128 = vrot.lane.b32.xlu0 %v3890, 66
    %v7129 = vpop.permute.xlu0 %7128
    %7130 = vrot.lane.b32.xlu0 %v3891, 66
    %v7131 = vpop.permute.xlu0 %7130
    %7132 = vrot.lane.b32.xlu0 %v3892, 66
    %v7133 = vpop.permute.xlu0 %7132
    %7134 = vrot.lane.b32.xlu0 %v3893, 66
    %v7135 = vpop.permute.xlu0 %7134
    %7136 = vrot.lane.b32.xlu0 %v3894, 66
    %v7137 = vpop.permute.xlu0 %7136
    %7138 = vrot.lane.b32.xlu0 %v3895, 66
    %v7139 = vpop.permute.xlu0 %7138
    %7140 = vrot.lane.b32.xlu0 %v3896, 66
    %v7141 = vpop.permute.xlu0 %7140
    %7142 = vrot.lane.b32.xlu0 %v3897, 66
    %v7143 = vpop.permute.xlu0 %7142
    %7144 = vrot.lane.b32.xlu0 %v3898, 66
    %v7145 = vpop.permute.xlu0 %7144
    %7146 = vrot.lane.b32.xlu0 %v3899, 66
    %v7147 = vpop.permute.xlu0 %7146
    %7148 = vrot.lane.b32.xlu0 %v3900, 66
    %v7149 = vpop.permute.xlu0 %7148
    %7150 = vrot.lane.b32.xlu0 %v3901, 66
    %v7151 = vpop.permute.xlu0 %7150
    %7152 = vrot.lane.b32.xlu0 %v3902, 66
    %v7153 = vpop.permute.xlu0 %7152
    %7154 = vrot.lane.b32.xlu0 %v3903, 66
    %v7155 = vpop.permute.xlu0 %7154
    %7156 = vrot.lane.b32.xlu0 %v3904, 66
    %v7157 = vpop.permute.xlu0 %7156
    %7158 = vrot.lane.b32.xlu0 %v3905, 66
    %v7159 = vpop.permute.xlu0 %7158
    %v7160 = vsel %vm2923, %v7129, %v7131
    %v7161 = vsel %vm2923, %v7131, %v7133
    %v7162 = vsel %vm2923, %v7133, %v7135
    %v7163 = vsel %vm2923, %v7135, %v7137
    %v7164 = vsel %vm2923, %v7137, %v7139
    %v7165 = vsel %vm2923, %v7139, %v7141
    %v7166 = vsel %vm2923, %v7141, %v7143
    %v7167 = vsel %vm2923, %v7145, %v7147
    %v7168 = vsel %vm2923, %v7147, %v7149
    %v7169 = vsel %vm2923, %v7149, %v7151
    %v7170 = vsel %vm2923, %v7151, %v7153
    %v7171 = vsel %vm2923, %v7153, %v7155
    %v7172 = vsel %vm2923, %v7155, %v7157
    %v7173 = vsel %vm2923, %v7157, %v7159
    %v7191 = vsel %vm3989, %v7124, 0
    %v7194 = vsel %vm3989, %v7125, 0
    %v7197 = vsel %vm3989, %v7126, 0
    %v7200 = vsel %vm3989, %v7127, 0
    %7202 = vmatprep.subr.mxu0 %v7161
    %7203 = vmatpush1.msra.mxu0 %v7160
    %7204 = vmatprep.subr.mxu0 %v7168
    %7205 = vmatpush1.msra.mxu0 %v7167
    %7206 = vmatprep.subr.mxu0 0.0
    %7207 = vmatpush1.msra.mxu0 0.0
    %7208 = vmatprep.subr.mxu0 0.0
    %7209 = vmatpush1.msra.mxu0 0.0
    %7210 = vmatprep.subr.mxu0 0.0
    %7211 = vmatpush1.msra.mxu0 0.0
    %7212 = vmatprep.subr.mxu0 0.0
    %7213 = vmatpush1.msra.mxu0 0.0
    %7214 = vmatprep.subr.mxu0 0.0
    %7215 = vmatpush1.msra.mxu0 0.0
    %7216 = vmatprep.subr.mxu0 0.0
    %7217 = vmatpush1.msra.mxu0 0.0
    %7218 = vmatprep.subr.mxu0 0.0
    %7219 = vmatpush1.msra.mxu0 0.0
    %7220 = vmatprep.subr.mxu0 0.0
    %7221 = vmatpush1.msra.mxu0 0.0
    %7222 = vmatprep.subr.mxu0 0.0
    %7223 = vmatpush1.msra.mxu0 0.0
    %7224 = vmatprep.subr.mxu0 0.0
    %7225 = vmatpush1.msra.mxu0 0.0
    %7226 = vmatprep.subr.mxu0 0.0
    %7227 = vmatpush1.msra.mxu0 0.0
    %7228 = vmatprep.subr.mxu0 0.0
    %7229 = vmatpush1.msra.mxu0 0.0
    %7230 = vmatprep.subr.mxu0 0.0
    %7231 = vmatpush1.msra.mxu0 0.0
    %7232 = vmatprep.subr.mxu0 0.0
    %7233 = vmatpush1.msra.mxu0 0.0
    %7234 = vmatprep.subr.mxu0 0.0
    %7235 = vmatpush1.msra.mxu0 0.0
    %7236 = vmatprep.subr.mxu0 0.0
    %7237 = vmatpush1.msra.mxu0 0.0
    %7238 = vmatprep.subr.mxu0 0.0
    %7239 = vmatpush1.msra.mxu0 0.0
    %7240 = vmatprep.subr.mxu0 0.0
    %7241 = vmatpush1.msra.mxu0 0.0
    %7242 = vmatprep.subr.mxu0 0.0
    %7243 = vmatpush1.msra.mxu0 0.0
    %7244 = vmatprep.subr.mxu0 0.0
    %7245 = vmatpush1.msra.mxu0 0.0
    %7246 = vmatprep.subr.mxu0 0.0
    %7247 = vmatpush1.msra.mxu0 0.0
    %7248 = vmatprep.subr.mxu0 0.0
    %7249 = vmatpush1.msra.mxu0 0.0
    %7250 = vmatprep.subr.mxu0 0.0
    %7251 = vmatpush1.msra.mxu0 0.0
    %7252 = vmatprep.subr.mxu0 0.0
    %7253 = vmatpush1.msra.mxu0 0.0
    %7254 = vmatprep.subr.mxu0 0.0
    %7255 = vmatpush1.msra.mxu0 0.0
    %7256 = vmatprep.subr.mxu0 0.0
    %7257 = vmatpush1.msra.mxu0 0.0
    %7258 = vmatprep.subr.mxu0 0.0
    %7259 = vmatpush1.msra.mxu0 0.0
    %7260 = vmatprep.subr.mxu0 0.0
    %7261 = vmatpush1.msra.mxu0 0.0
    %7262 = vmatprep.subr.mxu0 0.0
    %7263 = vmatpush1.msra.mxu0 0.0
    %7264 = vmatprep.subr.mxu0 0.0
    %7265 = vmatpush1.msra.mxu0 0.0
    %7266 = vmatprep.mubr.f32.mxu0 0.0
    %7267 = vmatmul.mubr.f32.gmra.mrb[0].mxu0 %v7191
    %v7268 = vpop.f32.mrb[0].mxu0
    %v7269 = vadd.f32 0.0, %v7268
    %v7270 = vpop.f32.mrb[0].mxu0
    %v7271 = vadd.f32 0.0, %v7270
    %7272 = vmatprep.mubr.f32.mxu0 0.0
    %7273 = vmatmul.mubr.f32.gmra.mrb[0].mxu0 %v7194
    %v7274 = vpop.f32.mrb[0].mxu0
    %v7275 = vadd.f32 0.0, %v7274
    %v7276 = vpop.f32.mrb[0].mxu0
    %v7277 = vadd.f32 0.0, %v7276
    %7278 = vmatprep.mubr.f32.mxu0 0.0
    %7279 = vmatmul.mubr.f32.gmra.mrb[0].mxu0 %v7197
    %v7280 = vpop.f32.mrb[0].mxu0
    %v7281 = vadd.f32 0.0, %v7280
    %v7282 = vpop.f32.mrb[0].mxu0
    %v7283 = vadd.f32 0.0, %v7282
    %7284 = vmatprep.mubr.f32.mxu0 0.0
    %7285 = vmatmul.mubr.f32.gmra.mrb[0].mxu0 %v7200
    %v7286 = vpop.f32.mrb[0].mxu0
    %v7287 = vadd.f32 0.0, %v7286
    %v7288 = vpop.f32.mrb[0].mxu0
    %v7289 = vadd.f32 0.0, %v7288
    %7290 = vdwg.mxu0
    %7291 = vmatprep.subr.mxu0 %v7163
    %7292 = vmatpush1.msra.mxu0 %v7162
    %7293 = vmatprep.subr.mxu0 %v7170
    %7294 = vmatpush1.msra.mxu0 %v7169
    %7295 = vmatprep.subr.mxu0 0.0
    %7296 = vmatpush1.msra.mxu0 0.0
    %7297 = vmatprep.subr.mxu0 0.0
    %7298 = vmatpush1.msra.mxu0 0.0
    %7299 = vmatprep.subr.mxu0 0.0
    %7300 = vmatpush1.msra.mxu0 0.0
    %7301 = vmatprep.subr.mxu0 0.0
    %7302 = vmatpush1.msra.mxu0 0.0
    %7303 = vmatprep.subr.mxu0 0.0
    %7304 = vmatpush1.msra.mxu0 0.0
    %7305 = vmatprep.subr.mxu0 0.0
    %7306 = vmatpush1.msra.mxu0 0.0
    %7307 = vmatprep.subr.mxu0 0.0
    %7308 = vmatpush1.msra.mxu0 0.0
    %7309 = vmatprep.subr.mxu0 0.0
    %7310 = vmatpush1.msra.mxu0 0.0
    %7311 = vmatprep.subr.mxu0 0.0
    %7312 = vmatpush1.msra.mxu0 0.0
    %7313 = vmatprep.subr.mxu0 0.0
    %7314 = vmatpush1.msra.mxu0 0.0
    %7315 = vmatprep.subr.mxu0 0.0
    %7316 = vmatpush1.msra.mxu0 0.0
    %7317 = vmatprep.subr.mxu0 0.0
    %7318 = vmatpush1.msra.mxu0 0.0
    %7319 = vmatprep.subr.mxu0 0.0
    %7320 = vmatpush1.msra.mxu0 0.0
    %7321 = vmatprep.subr.mxu0 0.0
    %7322 = vmatpush1.msra.mxu0 0.0
    %7323 = vmatprep.subr.mxu0 0.0
    %7324 = vmatpush1.msra.mxu0 0.0
    %7325 = vmatprep.subr.mxu0 0.0
    %7326 = vmatpush1.msra.mxu0 0.0
    %7327 = vmatprep.subr.mxu0 0.0
    %7328 = vmatpush1.msra.mxu0 0.0
    %7329 = vmatprep.subr.mxu0 0.0
    %7330 = vmatpush1.msra.mxu0 0.0
    %7331 = vmatprep.subr.mxu0 0.0
    %7332 = vmatpush1.msra.mxu0 0.0
    %7333 = vmatprep.subr.mxu0 0.0
    %7334 = vmatpush1.msra.mxu0 0.0
    %7335 = vmatprep.subr.mxu0 0.0
    %7336 = vmatpush1.msra.mxu0 0.0
    %7337 = vmatprep.subr.mxu0 0.0
    %7338 = vmatpush1.msra.mxu0 0.0
    %7339 = vmatprep.subr.mxu0 0.0
    %7340 = vmatpush1.msra.mxu0 0.0
    %7341 = vmatprep.subr.mxu0 0.0
    %7342 = vmatpush1.msra.mxu0 0.0
    %7343 = vmatprep.subr.mxu0 0.0
    %7344 = vmatpush1.msra.mxu0 0.0
    %7345 = vmatprep.subr.mxu0 0.0
    %7346 = vmatpush1.msra.mxu0 0.0
    %7347 = vmatprep.subr.mxu0 0.0
    %7348 = vmatpush1.msra.mxu0 0.0
    %7349 = vmatprep.subr.mxu0 0.0
    %7350 = vmatpush1.msra.mxu0 0.0
    %7351 = vmatprep.subr.mxu0 0.0
    %7352 = vmatpush1.msra.mxu0 0.0
    %7353 = vmatprep.subr.mxu0 0.0
    %7354 = vmatpush1.msra.mxu0 0.0
    %7355 = vmatprep.mubr.f32.mxu0 0.0
    %7356 = vmatmul.mubr.f32.gmra.mrb[0].mxu0 %v7191
    %v7357 = vpop.f32.mrb[0].mxu0
    %v7358 = vadd.f32 0.0, %v7357
    %v7359 = vpop.f32.mrb[0].mxu0
    %v7360 = vadd.f32 0.0, %v7359
    %7361 = vmatprep.mubr.f32.mxu0 0.0
    %7362 = vmatmul.mubr.f32.gmra.mrb[0].mxu0 %v7194
    %v7363 = vpop.f32.mrb[0].mxu0
    %v7364 = vadd.f32 0.0, %v7363
    %v7365 = vpop.f32.mrb[0].mxu0
    %v7366 = vadd.f32 0.0, %v7365
    %7367 = vmatprep.mubr.f32.mxu0 0.0
    %7368 = vmatmul.mubr.f32.gmra.mrb[0].mxu0 %v7197
    %v7369 = vpop.f32.mrb[0].mxu0
    %v7370 = vadd.f32 0.0, %v7369
    %v7371 = vpop.f32.mrb[0].mxu0
    %v7372 = vadd.f32 0.0, %v7371
    %7373 = vmatprep.mubr.f32.mxu0 0.0
    %7374 = vmatmul.mubr.f32.gmra.mrb[0].mxu0 %v7200
    %v7375 = vpop.f32.mrb[0].mxu0
    %v7376 = vadd.f32 0.0, %v7375
    %v7377 = vpop.f32.mrb[0].mxu0
    %v7378 = vadd.f32 0.0, %v7377
    %7379 = vdwg.mxu0
    %7380 = vmatprep.subr.mxu0 %v7165
    %7381 = vmatpush1.msra.mxu0 %v7164
    %7382 = vmatprep.subr.mxu0 %v7172
    %7383 = vmatpush1.msra.mxu0 %v7171
    %7384 = vmatprep.subr.mxu0 0.0
    %7385 = vmatpush1.msra.mxu0 0.0
    %7386 = vmatprep.subr.mxu0 0.0
    %7387 = vmatpush1.msra.mxu0 0.0
    %7388 = vmatprep.subr.mxu0 0.0
    %7389 = vmatpush1.msra.mxu0 0.0
    %7390 = vmatprep.subr.mxu0 0.0
    %7391 = vmatpush1.msra.mxu0 0.0
    %7392 = vmatprep.subr.mxu0 0.0
    %7393 = vmatpush1.msra.mxu0 0.0
    %7394 = vmatprep.subr.mxu0 0.0
    %7395 = vmatpush1.msra.mxu0 0.0
    %7396 = vmatprep.subr.mxu0 0.0
    %7397 = vmatpush1.msra.mxu0 0.0
    %7398 = vmatprep.subr.mxu0 0.0
    %7399 = vmatpush1.msra.mxu0 0.0
    %7400 = vmatprep.subr.mxu0 0.0
    %7401 = vmatpush1.msra.mxu0 0.0
    %7402 = vmatprep.subr.mxu0 0.0
    %7403 = vmatpush1.msra.mxu0 0.0
    %7404 = vmatprep.subr.mxu0 0.0
    %7405 = vmatpush1.msra.mxu0 0.0
    %7406 = vmatprep.subr.mxu0 0.0
    %7407 = vmatpush1.msra.mxu0 0.0
    %7408 = vmatprep.subr.mxu0 0.0
    %7409 = vmatpush1.msra.mxu0 0.0
    %7410 = vmatprep.subr.mxu0 0.0
    %7411 = vmatpush1.msra.mxu0 0.0
    %7412 = vmatprep.subr.mxu0 0.0
    %7413 = vmatpush1.msra.mxu0 0.0
    %7414 = vmatprep.subr.mxu0 0.0
    %7415 = vmatpush1.msra.mxu0 0.0
    %7416 = vmatprep.subr.mxu0 0.0
    %7417 = vmatpush1.msra.mxu0 0.0
    %7418 = vmatprep.subr.mxu0 0.0
    %7419 = vmatpush1.msra.mxu0 0.0
    %7420 = vmatprep.subr.mxu0 0.0
    %7421 = vmatpush1.msra.mxu0 0.0
    %7422 = vmatprep.subr.mxu0 0.0
    %7423 = vmatpush1.msra.mxu0 0.0
    %7424 = vmatprep.subr.mxu0 0.0
    %7425 = vmatpush1.msra.mxu0 0.0
    %7426 = vmatprep.subr.mxu0 0.0
    %7427 = vmatpush1.msra.mxu0 0.0
    %7428 = vmatprep.subr.mxu0 0.0
    %7429 = vmatpush1.msra.mxu0 0.0
    %7430 = vmatprep.subr.mxu0 0.0
    %7431 = vmatpush1.msra.mxu0 0.0
    %7432 = vmatprep.subr.mxu0 0.0
    %7433 = vmatpush1.msra.mxu0 0.0
    %7434 = vmatprep.subr.mxu0 0.0
    %7435 = vmatpush1.msra.mxu0 0.0
    %7436 = vmatprep.subr.mxu0 0.0
    %7437 = vmatpush1.msra.mxu0 0.0
    %7438 = vmatprep.subr.mxu0 0.0
    %7439 = vmatpush1.msra.mxu0 0.0
    %7440 = vmatprep.subr.mxu0 0.0
    %7441 = vmatpush1.msra.mxu0 0.0
    %7442 = vmatprep.subr.mxu0 0.0
    %7443 = vmatpush1.msra.mxu0 0.0
    %7444 = vmatprep.mubr.f32.mxu0 0.0
    %7445 = vmatmul.mubr.f32.gmra.mrb[0].mxu0 %v7191
    %v7446 = vpop.f32.mrb[0].mxu0
    %v7447 = vadd.f32 0.0, %v7446
    %v7448 = vpop.f32.mrb[0].mxu0
    %v7449 = vadd.f32 0.0, %v7448
    %7450 = vmatprep.mubr.f32.mxu0 0.0
    %7451 = vmatmul.mubr.f32.gmra.mrb[0].mxu0 %v7194
    %v7452 = vpop.f32.mrb[0].mxu0
    %v7453 = vadd.f32 0.0, %v7452
    %v7454 = vpop.f32.mrb[0].mxu0
    %v7455 = vadd.f32 0.0, %v7454
    %7456 = vmatprep.mubr.f32.mxu0 0.0
    %7457 = vmatmul.mubr.f32.gmra.mrb[0].mxu0 %v7197
    %v7458 = vpop.f32.mrb[0].mxu0
    %v7459 = vadd.f32 0.0, %v7458
    %v7460 = vpop.f32.mrb[0].mxu0
    %v7461 = vadd.f32 0.0, %v7460
    %7462 = vmatprep.mubr.f32.mxu0 0.0
    %7463 = vmatmul.mubr.f32.gmra.mrb[0].mxu0 %v7200
    %v7464 = vpop.f32.mrb[0].mxu0
    %v7465 = vadd.f32 0.0, %v7464
    %v7466 = vpop.f32.mrb[0].mxu0
    %v7467 = vadd.f32 0.0, %v7466
    %7468 = vdwg.mxu0
    %7469 = vmatprep.subr.mxu0 %v7143
    %7470 = vmatpush1.msra.mxu0 %v7166
    %7471 = vmatprep.subr.mxu0 %v7159
    %7472 = vmatpush1.msra.mxu0 %v7173
    %7473 = vmatprep.subr.mxu0 0.0
    %7474 = vmatpush1.msra.mxu0 0.0
    %7475 = vmatprep.subr.mxu0 0.0
    %7476 = vmatpush1.msra.mxu0 0.0
    %7477 = vmatprep.subr.mxu0 0.0
    %7478 = vmatpush1.msra.mxu0 0.0
    %7479 = vmatprep.subr.mxu0 0.0
    %7480 = vmatpush1.msra.mxu0 0.0
    %7481 = vmatprep.subr.mxu0 0.0
    %7482 = vmatpush1.msra.mxu0 0.0
    %7483 = vmatprep.subr.mxu0 0.0
    %7484 = vmatpush1.msra.mxu0 0.0
    %7485 = vmatprep.subr.mxu0 0.0
    %7486 = vmatpush1.msra.mxu0 0.0
    %7487 = vmatprep.subr.mxu0 0.0
    %7488 = vmatpush1.msra.mxu0 0.0
    %7489 = vmatprep.subr.mxu0 0.0
    %7490 = vmatpush1.msra.mxu0 0.0
    %7491 = vmatprep.subr.mxu0 0.0
    %7492 = vmatpush1.msra.mxu0 0.0
    %7493 = vmatprep.subr.mxu0 0.0
    %7494 = vmatpush1.msra.mxu0 0.0
    %7495 = vmatprep.subr.mxu0 0.0
    %7496 = vmatpush1.msra.mxu0 0.0
    %7497 = vmatprep.subr.mxu0 0.0
    %7498 = vmatpush1.msra.mxu0 0.0
    %7499 = vmatprep.subr.mxu0 0.0
    %7500 = vmatpush1.msra.mxu0 0.0
    %7501 = vmatprep.subr.mxu0 0.0
    %7502 = vmatpush1.msra.mxu0 0.0
    %7503 = vmatprep.subr.mxu0 0.0
    %7504 = vmatpush1.msra.mxu0 0.0
    %7505 = vmatprep.subr.mxu0 0.0
    %7506 = vmatpush1.msra.mxu0 0.0
    %7507 = vmatprep.subr.mxu0 0.0
    %7508 = vmatpush1.msra.mxu0 0.0
    %7509 = vmatprep.subr.mxu0 0.0
    %7510 = vmatpush1.msra.mxu0 0.0
    %7511 = vmatprep.subr.mxu0 0.0
    %7512 = vmatpush1.msra.mxu0 0.0
    %7513 = vmatprep.subr.mxu0 0.0
    %7514 = vmatpush1.msra.mxu0 0.0
    %7515 = vmatprep.subr.mxu0 0.0
    %7516 = vmatpush1.msra.mxu0 0.0
    %7517 = vmatprep.subr.mxu0 0.0
    %7518 = vmatpush1.msra.mxu0 0.0
    %7519 = vmatprep.subr.mxu0 0.0
    %7520 = vmatpush1.msra.mxu0 0.0
    %7521 = vmatprep.subr.mxu0 0.0
    %7522 = vmatpush1.msra.mxu0 0.0
    %7523 = vmatprep.subr.mxu0 0.0
    %7524 = vmatpush1.msra.mxu0 0.0
    %7525 = vmatprep.subr.mxu0 0.0
    %7526 = vmatpush1.msra.mxu0 0.0
    %7527 = vmatprep.subr.mxu0 0.0
    %7528 = vmatpush1.msra.mxu0 0.0
    %7529 = vmatprep.subr.mxu0 0.0
    %7530 = vmatpush1.msra.mxu0 0.0
    %7531 = vmatprep.subr.mxu0 0.0
    %7532 = vmatpush1.msra.mxu0 0.0
    %7533 = vmatprep.mubr.f32.mxu0 0.0
    %7534 = vmatmul.mubr.f32.gmra.mrb[0].mxu0 %v7191
    %v7535 = vpop.f32.mrb[0].mxu0
    %v7536 = vadd.f32 0.0, %v7535
    %v7537 = vpop.f32.mrb[0].mxu0
    %v7538 = vadd.f32 0.0, %v7537
    %7539 = vmatprep.mubr.f32.mxu0 0.0
    %7540 = vmatmul.mubr.f32.gmra.mrb[0].mxu0 %v7194
    %v7541 = vpop.f32.mrb[0].mxu0
    %v7542 = vadd.f32 0.0, %v7541
    %v7543 = vpop.f32.mrb[0].mxu0
    %v7544 = vadd.f32 0.0, %v7543
    %7545 = vmatprep.mubr.f32.mxu0 0.0
    %7546 = vmatmul.mubr.f32.gmra.mrb[0].mxu0 %v7197
    %v7547 = vpop.f32.mrb[0].mxu0
    %v7548 = vadd.f32 0.0, %v7547
    %v7549 = vpop.f32.mrb[0].mxu0
    %v7550 = vadd.f32 0.0, %v7549
    %7551 = vmatprep.mubr.f32.mxu0 0.0
    %7552 = vmatmul.mubr.f32.gmra.mrb[0].mxu0 %v7200
    %v7553 = vpop.f32.mrb[0].mxu0
    %v7554 = vadd.f32 0.0, %v7553
    %v7555 = vpop.f32.mrb[0].mxu0
    %v7556 = vadd.f32 0.0, %v7555
    %7557 = vdwg.mxu0
    %v7558 = vadd.f32 %v7091, %v7269
    %v7559 = vadd.f32 %v7092, %v7271
    %v7560 = vadd.f32 %v7093, %v7358
    %v7561 = vadd.f32 %v7094, %v7360
    %v7562 = vadd.f32 %v7095, %v7447
    %v7563 = vadd.f32 %v7096, %v7449
    %v7564 = vadd.f32 %v7097, %v7536
    %v7565 = vadd.f32 %v7098, %v7538
    %v7566 = vadd.f32 %v7099, %v7275
    %v7567 = vadd.f32 %v7100, %v7277
    %v7568 = vadd.f32 %v7101, %v7364
    %v7569 = vadd.f32 %v7102, %v7366
    %v7570 = vadd.f32 %v7103, %v7453
    %v7571 = vadd.f32 %v7104, %v7455
    %v7572 = vadd.f32 %v7105, %v7542
    %v7573 = vadd.f32 %v7106, %v7544
    %v7574 = vadd.f32 %v7107, %v7281
    %v7575 = vadd.f32 %v7108, %v7283
    %v7576 = vadd.f32 %v7109, %v7370
    %v7577 = vadd.f32 %v7110, %v7372
    %v7578 = vadd.f32 %v7111, %v7459
    %v7579 = vadd.f32 %v7112, %v7461
    %v7580 = vadd.f32 %v7113, %v7548
    %v7581 = vadd.f32 %v7114, %v7550
    %v7582 = vadd.f32 %v7115, %v7287
    %v7583 = vadd.f32 %v7116, %v7289
    %v7584 = vadd.f32 %v7117, %v7376
    %v7585 = vadd.f32 %v7118, %v7378
    %v7586 = vadd.f32 %v7119, %v7465
    %v7587 = vadd.f32 %v7120, %v7467
    %v7588 = vadd.f32 %v7121, %v7554
    %v7589 = vadd.f32 %v7122, %v7556
    %s7590 = scalar_lea.vmem %s3, 256
    %v7591 = vld [vmem:[%s7590] sm:$0xff]
    %v7592 = vld [vmem:[%s7590 + $0x8] sm:$0xff]
    %v7593 = vld [vmem:[%s7590 + $0x10] sm:$0xff]
    %v7594 = vld [vmem:[%s7590 + $0x18] sm:$0xff]
    %7595 = vrot.lane.b32.xlu0 %v3890, 65
    %v7596 = vpop.permute.xlu0 %7595
    %7597 = vrot.lane.b32.xlu0 %v3891, 65
    %v7598 = vpop.permute.xlu0 %7597
    %7599 = vrot.lane.b32.xlu0 %v3892, 65
    %v7600 = vpop.permute.xlu0 %7599
    %7601 = vrot.lane.b32.xlu0 %v3893, 65
    %v7602 = vpop.permute.xlu0 %7601
    %7603 = vrot.lane.b32.xlu0 %v3894, 65
    %v7604 = vpop.permute.xlu0 %7603
    %7605 = vrot.lane.b32.xlu0 %v3895, 65
    %v7606 = vpop.permute.xlu0 %7605
    %7607 = vrot.lane.b32.xlu0 %v3896, 65
    %v7608 = vpop.permute.xlu0 %7607
    %7609 = vrot.lane.b32.xlu0 %v3897, 65
    %v7610 = vpop.permute.xlu0 %7609
    %7611 = vrot.lane.b32.xlu0 %v3898, 65
    %v7612 = vpop.permute.xlu0 %7611
    %7613 = vrot.lane.b32.xlu0 %v3899, 65
    %v7614 = vpop.permute.xlu0 %7613
    %7615 = vrot.lane.b32.xlu0 %v3900, 65
    %v7616 = vpop.permute.xlu0 %7615
    %7617 = vrot.lane.b32.xlu0 %v3901, 65
    %v7618 = vpop.permute.xlu0 %7617
    %7619 = vrot.lane.b32.xlu0 %v3902, 65
    %v7620 = vpop.permute.xlu0 %7619
    %7621 = vrot.lane.b32.xlu0 %v3903, 65
    %v7622 = vpop.permute.xlu0 %7621
    %7623 = vrot.lane.b32.xlu0 %v3904, 65
    %v7624 = vpop.permute.xlu0 %7623
    %7625 = vrot.lane.b32.xlu0 %v3905, 65
    %v7626 = vpop.permute.xlu0 %7625
    %v7627 = vsel %vm3334, %v7596, %v7598
    %v7628 = vsel %vm3334, %v7598, %v7600
    %v7629 = vsel %vm3334, %v7600, %v7602
    %v7630 = vsel %vm3334, %v7602, %v7604
    %v7631 = vsel %vm3334, %v7604, %v7606
    %v7632 = vsel %vm3334, %v7606, %v7608
    %v7633 = vsel %vm3334, %v7608, %v7610
    %v7634 = vsel %vm3334, %v7612, %v7614
    %v7635 = vsel %vm3334, %v7614, %v7616
    %v7636 = vsel %vm3334, %v7616, %v7618
    %v7637 = vsel %vm3334, %v7618, %v7620
    %v7638 = vsel %vm3334, %v7620, %v7622
    %v7639 = vsel %vm3334, %v7622, %v7624
    %v7640 = vsel %vm3334, %v7624, %v7626
    %v7658 = vsel %vm3989, %v7591, 0
    %v7661 = vsel %vm3989, %v7592, 0
    %v7664 = vsel %vm3989, %v7593, 0
    %v7667 = vsel %vm3989, %v7594, 0
    %7669 = vmatprep.subr.mxu0 %v7628
    %7670 = vmatpush1.msra.mxu0 %v7627
    %7671 = vmatprep.subr.mxu0 %v7635
    %7672 = vmatpush1.msra.mxu0 %v7634
    %7673 = vmatprep.subr.mxu0 0.0
    %7674 = vmatpush1.msra.mxu0 0.0
    %7675 = vmatprep.subr.mxu0 0.0
    %7676 = vmatpush1.msra.mxu0 0.0
    %7677 = vmatprep.subr.mxu0 0.0
    %7678 = vmatpush1.msra.mxu0 0.0
    %7679 = vmatprep.subr.mxu0 0.0
    %7680 = vmatpush1.msra.mxu0 0.0
    %7681 = vmatprep.subr.mxu0 0.0
    %7682 = vmatpush1.msra.mxu0 0.0
    %7683 = vmatprep.subr.mxu0 0.0
    %7684 = vmatpush1.msra.mxu0 0.0
    %7685 = vmatprep.subr.mxu0 0.0
    %7686 = vmatpush1.msra.mxu0 0.0
    %7687 = vmatprep.subr.mxu0 0.0
    %7688 = vmatpush1.msra.mxu0 0.0
    %7689 = vmatprep.subr.mxu0 0.0
    %7690 = vmatpush1.msra.mxu0 0.0
    %7691 = vmatprep.subr.mxu0 0.0
    %7692 = vmatpush1.msra.mxu0 0.0
    %7693 = vmatprep.subr.mxu0 0.0
    %7694 = vmatpush1.msra.mxu0 0.0
    %7695 = vmatprep.subr.mxu0 0.0
    %7696 = vmatpush1.msra.mxu0 0.0
    %7697 = vmatprep.subr.mxu0 0.0
    %7698 = vmatpush1.msra.mxu0 0.0
    %7699 = vmatprep.subr.mxu0 0.0
    %7700 = vmatpush1.msra.mxu0 0.0
    %7701 = vmatprep.subr.mxu0 0.0
    %7702 = vmatpush1.msra.mxu0 0.0
    %7703 = vmatprep.subr.mxu0 0.0
    %7704 = vmatpush1.msra.mxu0 0.0
    %7705 = vmatprep.subr.mxu0 0.0
    %7706 = vmatpush1.msra.mxu0 0.0
    %7707 = vmatprep.subr.mxu0 0.0
    %7708 = vmatpush1.msra.mxu0 0.0
    %7709 = vmatprep.subr.mxu0 0.0
    %7710 = vmatpush1.msra.mxu0 0.0
    %7711 = vmatprep.subr.mxu0 0.0
    %7712 = vmatpush1.msra.mxu0 0.0
    %7713 = vmatprep.subr.mxu0 0.0
    %7714 = vmatpush1.msra.mxu0 0.0
    %7715 = vmatprep.subr.mxu0 0.0
    %7716 = vmatpush1.msra.mxu0 0.0
    %7717 = vmatprep.subr.mxu0 0.0
    %7718 = vmatpush1.msra.mxu0 0.0
    %7719 = vmatprep.subr.mxu0 0.0
    %7720 = vmatpush1.msra.mxu0 0.0
    %7721 = vmatprep.subr.mxu0 0.0
    %7722 = vmatpush1.msra.mxu0 0.0
    %7723 = vmatprep.subr.mxu0 0.0
    %7724 = vmatpush1.msra.mxu0 0.0
    %7725 = vmatprep.subr.mxu0 0.0
    %7726 = vmatpush1.msra.mxu0 0.0
    %7727 = vmatprep.subr.mxu0 0.0
    %7728 = vmatpush1.msra.mxu0 0.0
    %7729 = vmatprep.subr.mxu0 0.0
    %7730 = vmatpush1.msra.mxu0 0.0
    %7731 = vmatprep.subr.mxu0 0.0
    %7732 = vmatpush1.msra.mxu0 0.0
    %7733 = vmatprep.mubr.f32.mxu0 0.0
    %7734 = vmatmul.mubr.f32.gmra.mrb[0].mxu0 %v7658
    %v7735 = vpop.f32.mrb[0].mxu0
    %v7736 = vadd.f32 0.0, %v7735
    %v7737 = vpop.f32.mrb[0].mxu0
    %v7738 = vadd.f32 0.0, %v7737
    %7739 = vmatprep.mubr.f32.mxu0 0.0
    %7740 = vmatmul.mubr.f32.gmra.mrb[0].mxu0 %v7661
    %v7741 = vpop.f32.mrb[0].mxu0
    %v7742 = vadd.f32 0.0, %v7741
    %v7743 = vpop.f32.mrb[0].mxu0
    %v7744 = vadd.f32 0.0, %v7743
    %7745 = vmatprep.mubr.f32.mxu0 0.0
    %7746 = vmatmul.mubr.f32.gmra.mrb[0].mxu0 %v7664
    %v7747 = vpop.f32.mrb[0].mxu0
    %v7748 = vadd.f32 0.0, %v7747
    %v7749 = vpop.f32.mrb[0].mxu0
    %v7750 = vadd.f32 0.0, %v7749
    %7751 = vmatprep.mubr.f32.mxu0 0.0
    %7752 = vmatmul.mubr.f32.gmra.mrb[0].mxu0 %v7667
    %v7753 = vpop.f32.mrb[0].mxu0
    %v7754 = vadd.f32 0.0, %v7753
    %v7755 = vpop.f32.mrb[0].mxu0
    %v7756 = vadd.f32 0.0, %v7755
    %7757 = vdwg.mxu0
    %7758 = vmatprep.subr.mxu0 %v7630
    %7759 = vmatpush1.msra.mxu0 %v7629
    %7760 = vmatprep.subr.mxu0 %v7637
    %7761 = vmatpush1.msra.mxu0 %v7636
    %7762 = vmatprep.subr.mxu0 0.0
    %7763 = vmatpush1.msra.mxu0 0.0
    %7764 = vmatprep.subr.mxu0 0.0
    %7765 = vmatpush1.msra.mxu0 0.0
    %7766 = vmatprep.subr.mxu0 0.0
    %7767 = vmatpush1.msra.mxu0 0.0
    %7768 = vmatprep.subr.mxu0 0.0
    %7769 = vmatpush1.msra.mxu0 0.0
    %7770 = vmatprep.subr.mxu0 0.0
    %7771 = vmatpush1.msra.mxu0 0.0
    %7772 = vmatprep.subr.mxu0 0.0
    %7773 = vmatpush1.msra.mxu0 0.0
    %7774 = vmatprep.subr.mxu0 0.0
    %7775 = vmatpush1.msra.mxu0 0.0
    %7776 = vmatprep.subr.mxu0 0.0
    %7777 = vmatpush1.msra.mxu0 0.0
    %7778 = vmatprep.subr.mxu0 0.0
    %7779 = vmatpush1.msra.mxu0 0.0
    %7780 = vmatprep.subr.mxu0 0.0
    %7781 = vmatpush1.msra.mxu0 0.0
    %7782 = vmatprep.subr.mxu0 0.0
    %7783 = vmatpush1.msra.mxu0 0.0
    %7784 = vmatprep.subr.mxu0 0.0
    %7785 = vmatpush1.msra.mxu0 0.0
    %7786 = vmatprep.subr.mxu0 0.0
    %7787 = vmatpush1.msra.mxu0 0.0
    %7788 = vmatprep.subr.mxu0 0.0
    %7789 = vmatpush1.msra.mxu0 0.0
    %7790 = vmatprep.subr.mxu0 0.0
    %7791 = vmatpush1.msra.mxu0 0.0
    %7792 = vmatprep.subr.mxu0 0.0
    %7793 = vmatpush1.msra.mxu0 0.0
    %7794 = vmatprep.subr.mxu0 0.0
    %7795 = vmatpush1.msra.mxu0 0.0
    %7796 = vmatprep.subr.mxu0 0.0
    %7797 = vmatpush1.msra.mxu0 0.0
    %7798 = vmatprep.subr.mxu0 0.0
    %7799 = vmatpush1.msra.mxu0 0.0
    %7800 = vmatprep.subr.mxu0 0.0
    %7801 = vmatpush1.msra.mxu0 0.0
    %7802 = vmatprep.subr.mxu0 0.0
    %7803 = vmatpush1.msra.mxu0 0.0
    %7804 = vmatprep.subr.mxu0 0.0
    %7805 = vmatpush1.msra.mxu0 0.0
    %7806 = vmatprep.subr.mxu0 0.0
    %7807 = vmatpush1.msra.mxu0 0.0
    %7808 = vmatprep.subr.mxu0 0.0
    %7809 = vmatpush1.msra.mxu0 0.0
    %7810 = vmatprep.subr.mxu0 0.0
    %7811 = vmatpush1.msra.mxu0 0.0
    %7812 = vmatprep.subr.mxu0 0.0
    %7813 = vmatpush1.msra.mxu0 0.0
    %7814 = vmatprep.subr.mxu0 0.0
    %7815 = vmatpush1.msra.mxu0 0.0
    %7816 = vmatprep.subr.mxu0 0.0
    %7817 = vmatpush1.msra.mxu0 0.0
    %7818 = vmatprep.subr.mxu0 0.0
    %7819 = vmatpush1.msra.mxu0 0.0
    %7820 = vmatprep.subr.mxu0 0.0
    %7821 = vmatpush1.msra.mxu0 0.0
    %7822 = vmatprep.mubr.f32.mxu0 0.0
    %7823 = vmatmul.mubr.f32.gmra.mrb[0].mxu0 %v7658
    %v7824 = vpop.f32.mrb[0].mxu0
    %v7825 = vadd.f32 0.0, %v7824
    %v7826 = vpop.f32.mrb[0].mxu0
    %v7827 = vadd.f32 0.0, %v7826
    %7828 = vmatprep.mubr.f32.mxu0 0.0
    %7829 = vmatmul.mubr.f32.gmra.mrb[0].mxu0 %v7661
    %v7830 = vpop.f32.mrb[0].mxu0
    %v7831 = vadd.f32 0.0, %v7830
    %v7832 = vpop.f32.mrb[0].mxu0
    %v7833 = vadd.f32 0.0, %v7832
    %7834 = vmatprep.mubr.f32.mxu0 0.0
    %7835 = vmatmul.mubr.f32.gmra.mrb[0].mxu0 %v7664
    %v7836 = vpop.f32.mrb[0].mxu0
    %v7837 = vadd.f32 0.0, %v7836
    %v7838 = vpop.f32.mrb[0].mxu0
    %v7839 = vadd.f32 0.0, %v7838
    %7840 = vmatprep.mubr.f32.mxu0 0.0
    %7841 = vmatmul.mubr.f32.gmra.mrb[0].mxu0 %v7667
    %v7842 = vpop.f32.mrb[0].mxu0
    %v7843 = vadd.f32 0.0, %v7842
    %v7844 = vpop.f32.mrb[0].mxu0
    %v7845 = vadd.f32 0.0, %v7844
    %7846 = vdwg.mxu0
    %7847 = vmatprep.subr.mxu0 %v7632
    %7848 = vmatpush1.msra.mxu0 %v7631
    %7849 = vmatprep.subr.mxu0 %v7639
    %7850 = vmatpush1.msra.mxu0 %v7638
    %7851 = vmatprep.subr.mxu0 0.0
    %7852 = vmatpush1.msra.mxu0 0.0
    %7853 = vmatprep.subr.mxu0 0.0
    %7854 = vmatpush1.msra.mxu0 0.0
    %7855 = vmatprep.subr.mxu0 0.0
    %7856 = vmatpush1.msra.mxu0 0.0
    %7857 = vmatprep.subr.mxu0 0.0
    %7858 = vmatpush1.msra.mxu0 0.0
    %7859 = vmatprep.subr.mxu0 0.0
    %7860 = vmatpush1.msra.mxu0 0.0
    %7861 = vmatprep.subr.mxu0 0.0
    %7862 = vmatpush1.msra.mxu0 0.0
    %7863 = vmatprep.subr.mxu0 0.0
    %7864 = vmatpush1.msra.mxu0 0.0
    %7865 = vmatprep.subr.mxu0 0.0
    %7866 = vmatpush1.msra.mxu0 0.0
    %7867 = vmatprep.subr.mxu0 0.0
    %7868 = vmatpush1.msra.mxu0 0.0
    %7869 = vmatprep.subr.mxu0 0.0
    %7870 = vmatpush1.msra.mxu0 0.0
    %7871 = vmatprep.subr.mxu0 0.0
    %7872 = vmatpush1.msra.mxu0 0.0
    %7873 = vmatprep.subr.mxu0 0.0
    %7874 = vmatpush1.msra.mxu0 0.0
    %7875 = vmatprep.subr.mxu0 0.0
    %7876 = vmatpush1.msra.mxu0 0.0
    %7877 = vmatprep.subr.mxu0 0.0
    %7878 = vmatpush1.msra.mxu0 0.0
    %7879 = vmatprep.subr.mxu0 0.0
    %7880 = vmatpush1.msra.mxu0 0.0
    %7881 = vmatprep.subr.mxu0 0.0
    %7882 = vmatpush1.msra.mxu0 0.0
    %7883 = vmatprep.subr.mxu0 0.0
    %7884 = vmatpush1.msra.mxu0 0.0
    %7885 = vmatprep.subr.mxu0 0.0
    %7886 = vmatpush1.msra.mxu0 0.0
    %7887 = vmatprep.subr.mxu0 0.0
    %7888 = vmatpush1.msra.mxu0 0.0
    %7889 = vmatprep.subr.mxu0 0.0
    %7890 = vmatpush1.msra.mxu0 0.0
    %7891 = vmatprep.subr.mxu0 0.0
    %7892 = vmatpush1.msra.mxu0 0.0
    %7893 = vmatprep.subr.mxu0 0.0
    %7894 = vmatpush1.msra.mxu0 0.0
    %7895 = vmatprep.subr.mxu0 0.0
    %7896 = vmatpush1.msra.mxu0 0.0
    %7897 = vmatprep.subr.mxu0 0.0
    %7898 = vmatpush1.msra.mxu0 0.0
    %7899 = vmatprep.subr.mxu0 0.0
    %7900 = vmatpush1.msra.mxu0 0.0
    %7901 = vmatprep.subr.mxu0 0.0
    %7902 = vmatpush1.msra.mxu0 0.0
    %7903 = vmatprep.subr.mxu0 0.0
    %7904 = vmatpush1.msra.mxu0 0.0
    %7905 = vmatprep.subr.mxu0 0.0
    %7906 = vmatpush1.msra.mxu0 0.0
    %7907 = vmatprep.subr.mxu0 0.0
    %7908 = vmatpush1.msra.mxu0 0.0
    %7909 = vmatprep.subr.mxu0 0.0
    %7910 = vmatpush1.msra.mxu0 0.0
    %7911 = vmatprep.mubr.f32.mxu0 0.0
    %7912 = vmatmul.mubr.f32.gmra.mrb[0].mxu0 %v7658
    %v7913 = vpop.f32.mrb[0].mxu0
    %v7914 = vadd.f32 0.0, %v7913
    %v7915 = vpop.f32.mrb[0].mxu0
    %v7916 = vadd.f32 0.0, %v7915
    %7917 = vmatprep.mubr.f32.mxu0 0.0
    %7918 = vmatmul.mubr.f32.gmra.mrb[0].mxu0 %v7661
    %v7919 = vpop.f32.mrb[0].mxu0
    %v7920 = vadd.f32 0.0, %v7919
    %v7921 = vpop.f32.mrb[0].mxu0
    %v7922 = vadd.f32 0.0, %v7921
    %7923 = vmatprep.mubr.f32.mxu0 0.0
    %7924 = vmatmul.mubr.f32.gmra.mrb[0].mxu0 %v7664
    %v7925 = vpop.f32.mrb[0].mxu0
    %v7926 = vadd.f32 0.0, %v7925
    %v7927 = vpop.f32.mrb[0].mxu0
    %v7928 = vadd.f32 0.0, %v7927
    %7929 = vmatprep.mubr.f32.mxu0 0.0
    %7930 = vmatmul.mubr.f32.gmra.mrb[0].mxu0 %v7667
    %v7931 = vpop.f32.mrb[0].mxu0
    %v7932 = vadd.f32 0.0, %v7931
    %v7933 = vpop.f32.mrb[0].mxu0
    %v7934 = vadd.f32 0.0, %v7933
    %7935 = vdwg.mxu0
    %7936 = vmatprep.subr.mxu0 %v7610
    %7937 = vmatpush1.msra.mxu0 %v7633
    %7938 = vmatprep.subr.mxu0 %v7626
    %7939 = vmatpush1.msra.mxu0 %v7640
    %7940 = vmatprep.subr.mxu0 0.0
    %7941 = vmatpush1.msra.mxu0 0.0
    %7942 = vmatprep.subr.mxu0 0.0
    %7943 = vmatpush1.msra.mxu0 0.0
    %7944 = vmatprep.subr.mxu0 0.0
    %7945 = vmatpush1.msra.mxu0 0.0
    %7946 = vmatprep.subr.mxu0 0.0
    %7947 = vmatpush1.msra.mxu0 0.0
    %7948 = vmatprep.subr.mxu0 0.0
    %7949 = vmatpush1.msra.mxu0 0.0
    %7950 = vmatprep.subr.mxu0 0.0
    %7951 = vmatpush1.msra.mxu0 0.0
    %7952 = vmatprep.subr.mxu0 0.0
    %7953 = vmatpush1.msra.mxu0 0.0
    %7954 = vmatprep.subr.mxu0 0.0
    %7955 = vmatpush1.msra.mxu0 0.0
    %7956 = vmatprep.subr.mxu0 0.0
    %7957 = vmatpush1.msra.mxu0 0.0
    %7958 = vmatprep.subr.mxu0 0.0
    %7959 = vmatpush1.msra.mxu0 0.0
    %7960 = vmatprep.subr.mxu0 0.0
    %7961 = vmatpush1.msra.mxu0 0.0
    %7962 = vmatprep.subr.mxu0 0.0
    %7963 = vmatpush1.msra.mxu0 0.0
    %7964 = vmatprep.subr.mxu0 0.0
    %7965 = vmatpush1.msra.mxu0 0.0
    %7966 = vmatprep.subr.mxu0 0.0
    %7967 = vmatpush1.msra.mxu0 0.0
    %7968 = vmatprep.subr.mxu0 0.0
    %7969 = vmatpush1.msra.mxu0 0.0
    %7970 = vmatprep.subr.mxu0 0.0
    %7971 = vmatpush1.msra.mxu0 0.0
    %7972 = vmatprep.subr.mxu0 0.0
    %7973 = vmatpush1.msra.mxu0 0.0
    %7974 = vmatprep.subr.mxu0 0.0
    %7975 = vmatpush1.msra.mxu0 0.0
    %7976 = vmatprep.subr.mxu0 0.0
    %7977 = vmatpush1.msra.mxu0 0.0
    %7978 = vmatprep.subr.mxu0 0.0
    %7979 = vmatpush1.msra.mxu0 0.0
    %7980 = vmatprep.subr.mxu0 0.0
    %7981 = vmatpush1.msra.mxu0 0.0
    %7982 = vmatprep.subr.mxu0 0.0
    %7983 = vmatpush1.msra.mxu0 0.0
    %7984 = vmatprep.subr.mxu0 0.0
    %7985 = vmatpush1.msra.mxu0 0.0
    %7986 = vmatprep.subr.mxu0 0.0
    %7987 = vmatpush1.msra.mxu0 0.0
    %7988 = vmatprep.subr.mxu0 0.0
    %7989 = vmatpush1.msra.mxu0 0.0
    %7990 = vmatprep.subr.mxu0 0.0
    %7991 = vmatpush1.msra.mxu0 0.0
    %7992 = vmatprep.subr.mxu0 0.0
    %7993 = vmatpush1.msra.mxu0 0.0
    %7994 = vmatprep.subr.mxu0 0.0
    %7995 = vmatpush1.msra.mxu0 0.0
    %7996 = vmatprep.subr.mxu0 0.0
    %7997 = vmatpush1.msra.mxu0 0.0
    %7998 = vmatprep.subr.mxu0 0.0
    %7999 = vmatpush1.msra.mxu0 0.0
    %8000 = vmatprep.mubr.f32.mxu0 0.0
    %8001 = vmatmul.mubr.f32.gmra.mrb[0].mxu0 %v7658
    %v8002 = vpop.f32.mrb[0].mxu0
    %v8003 = vadd.f32 0.0, %v8002
    %v8004 = vpop.f32.mrb[0].mxu0
    %v8005 = vadd.f32 0.0, %v8004
    %8006 = vmatprep.mubr.f32.mxu0 0.0
    %8007 = vmatmul.mubr.f32.gmra.mrb[0].mxu0 %v7661
    %v8008 = vpop.f32.mrb[0].mxu0
    %v8009 = vadd.f32 0.0, %v8008
    %v8010 = vpop.f32.mrb[0].mxu0
    %v8011 = vadd.f32 0.0, %v8010
    %8012 = vmatprep.mubr.f32.mxu0 0.0
    %8013 = vmatmul.mubr.f32.gmra.mrb[0].mxu0 %v7664
    %v8014 = vpop.f32.mrb[0].mxu0
    %v8015 = vadd.f32 0.0, %v8014
    %v8016 = vpop.f32.mrb[0].mxu0
    %v8017 = vadd.f32 0.0, %v8016
    %8018 = vmatprep.mubr.f32.mxu0 0.0
    %8019 = vmatmul.mubr.f32.gmra.mrb[0].mxu0 %v7667
    %v8020 = vpop.f32.mrb[0].mxu0
    %v8021 = vadd.f32 0.0, %v8020
    %v8022 = vpop.f32.mrb[0].mxu0
    %v8023 = vadd.f32 0.0, %v8022
    %8024 = vdwg.mxu0
    %v8025 = vadd.f32 %v7558, %v7736
    %v8026 = vadd.f32 %v7559, %v7738
    %v8027 = vadd.f32 %v7560, %v7825
    %v8028 = vadd.f32 %v7561, %v7827
    %v8029 = vadd.f32 %v7562, %v7914
    %v8030 = vadd.f32 %v7563, %v7916
    %v8031 = vadd.f32 %v7564, %v8003
    %v8032 = vadd.f32 %v7565, %v8005
    %v8033 = vadd.f32 %v7566, %v7742
    %v8034 = vadd.f32 %v7567, %v7744
    %v8035 = vadd.f32 %v7568, %v7831
    %v8036 = vadd.f32 %v7569, %v7833
    %v8037 = vadd.f32 %v7570, %v7920
    %v8038 = vadd.f32 %v7571, %v7922
    %v8039 = vadd.f32 %v7572, %v8009
    %v8040 = vadd.f32 %v7573, %v8011
    %v8041 = vadd.f32 %v7574, %v7748
    %v8042 = vadd.f32 %v7575, %v7750
    %v8043 = vadd.f32 %v7576, %v7837
    %v8044 = vadd.f32 %v7577, %v7839
    %v8045 = vadd.f32 %v7578, %v7926
    %v8046 = vadd.f32 %v7579, %v7928
    %v8047 = vadd.f32 %v7580, %v8015
    %v8048 = vadd.f32 %v7581, %v8017
    %v8049 = vadd.f32 %v7582, %v7754
    %v8050 = vadd.f32 %v7583, %v7756
    %v8051 = vadd.f32 %v7584, %v7843
    %v8052 = vadd.f32 %v7585, %v7845
    %v8053 = vadd.f32 %v7586, %v7932
    %v8054 = vadd.f32 %v7587, %v7934
    %v8055 = vadd.f32 %v7588, %v8021
    %v8056 = vadd.f32 %v7589, %v8023
    %v8057 = vld [vmem:[%s4] sm:$0xff]
    %v8058 = vld [vmem:[%s4 + $0x8] sm:$0xff]
    %v8059 = vld [vmem:[%s4 + $0x10] sm:$0xff]
    %v8060 = vld [vmem:[%s4 + $0x18] sm:$0xff]
    %8062 = vset.pattern.permute.xlu0 0
    %8063 = vperm.xlu0 %8062, %v8057
    %v8064 = vpop.permute.xlu0 %8063
    %8067 = vset.pattern.permute.xlu0 0
    %8068 = vperm.xlu0 %8067, %v8058
    %v8069 = vpop.permute.xlu0 %8068
    %8072 = vset.pattern.permute.xlu0 0
    %8073 = vperm.xlu0 %8072, %v8059
    %v8074 = vpop.permute.xlu0 %8073
    %8077 = vset.pattern.permute.xlu0 0
    %8078 = vperm.xlu0 %8077, %v8060
    %v8079 = vpop.permute.xlu0 %8078
    %v8081 = vadd.f32 %v8025, %v8064
    %v8082 = vadd.f32 %v8026, %v8064
    %v8083 = vadd.f32 %v8027, %v8064
    %v8084 = vadd.f32 %v8028, %v8064
    %v8085 = vadd.f32 %v8029, %v8064
    %v8086 = vadd.f32 %v8030, %v8064
    %v8087 = vadd.f32 %v8031, %v8064
    %v8088 = vadd.f32 %v8032, %v8064
    %v8089 = vadd.f32 %v8033, %v8069
    %v8090 = vadd.f32 %v8034, %v8069
    %v8091 = vadd.f32 %v8035, %v8069
    %v8092 = vadd.f32 %v8036, %v8069
    %v8093 = vadd.f32 %v8037, %v8069
    %v8094 = vadd.f32 %v8038, %v8069
    %v8095 = vadd.f32 %v8039, %v8069
    %v8096 = vadd.f32 %v8040, %v8069
    %v8097 = vadd.f32 %v8041, %v8074
    %v8098 = vadd.f32 %v8042, %v8074
    %v8099 = vadd.f32 %v8043, %v8074
    %v8100 = vadd.f32 %v8044, %v8074
    %v8101 = vadd.f32 %v8045, %v8074
    %v8102 = vadd.f32 %v8046, %v8074
    %v8103 = vadd.f32 %v8047, %v8074
    %v8104 = vadd.f32 %v8048, %v8074
    %v8105 = vadd.f32 %v8049, %v8079
    %v8106 = vadd.f32 %v8050, %v8079
    %v8107 = vadd.f32 %v8051, %v8079
    %v8108 = vadd.f32 %v8052, %v8079
    %v8109 = vadd.f32 %v8053, %v8079
    %v8110 = vadd.f32 %v8054, %v8079
    %v8111 = vadd.f32 %v8055, %v8079
    %v8112 = vadd.f32 %v8056, %v8079
    %v8113 = vmax.f32 %v8081, 0.0
    %v8114 = vmax.f32 %v8082, 0.0
    %v8115 = vmax.f32 %v8083, 0.0
    %v8116 = vmax.f32 %v8084, 0.0
    %v8117 = vmax.f32 %v8085, 0.0
    %v8118 = vmax.f32 %v8086, 0.0
    %v8119 = vmax.f32 %v8087, 0.0
    %v8120 = vmax.f32 %v8088, 0.0
    %v8121 = vmax.f32 %v8089, 0.0
    %v8122 = vmax.f32 %v8090, 0.0
    %v8123 = vmax.f32 %v8091, 0.0
    %v8124 = vmax.f32 %v8092, 0.0
    %v8125 = vmax.f32 %v8093, 0.0
    %v8126 = vmax.f32 %v8094, 0.0
    %v8127 = vmax.f32 %v8095, 0.0
    %v8128 = vmax.f32 %v8096, 0.0
    %v8129 = vmax.f32 %v8097, 0.0
    %v8130 = vmax.f32 %v8098, 0.0
    %v8131 = vmax.f32 %v8099, 0.0
    %v8132 = vmax.f32 %v8100, 0.0
    %v8133 = vmax.f32 %v8101, 0.0
    %v8134 = vmax.f32 %v8102, 0.0
    %v8135 = vmax.f32 %v8103, 0.0
    %v8136 = vmax.f32 %v8104, 0.0
    %v8137 = vmax.f32 %v8105, 0.0
    %v8138 = vmax.f32 %v8106, 0.0
    %v8139 = vmax.f32 %v8107, 0.0
    %v8140 = vmax.f32 %v8108, 0.0
    %v8141 = vmax.f32 %v8109, 0.0
    %v8142 = vmax.f32 %v8110, 0.0
    %v8143 = vmax.f32 %v8111, 0.0
    %v8144 = vmax.f32 %v8112, 0.0
    %v8145 = vld [vmem:[%s5] sm:$0xff]
    %v8146 = vld [vmem:[%s5 + $0x8] sm:$0xff]
    %v8147 = vld [vmem:[%s5 + $0x10] sm:$0xff]
    %v8148 = vld [vmem:[%s5 + $0x18] sm:$0xff]
    %8150 = vset.pattern.permute.xlu0 0
    %8151 = vperm.xlu0 %8150, %v8145
    %v8152 = vpop.permute.xlu0 %8151
    %8155 = vset.pattern.permute.xlu0 0
    %8156 = vperm.xlu0 %8155, %v8146
    %v8157 = vpop.permute.xlu0 %8156
    %8160 = vset.pattern.permute.xlu0 0
    %8161 = vperm.xlu0 %8160, %v8147
    %v8162 = vpop.permute.xlu0 %8161
    %8165 = vset.pattern.permute.xlu0 0
    %8166 = vperm.xlu0 %8165, %v8148
    %v8167 = vpop.permute.xlu0 %8166
    %v8169 = vmul.f32 %v8113, %v8152
    %v8170 = vmul.f32 %v8114, %v8152
    %v8171 = vmul.f32 %v8115, %v8152
    %v8172 = vmul.f32 %v8116, %v8152
    %v8173 = vmul.f32 %v8117, %v8152
    %v8174 = vmul.f32 %v8118, %v8152
    %v8175 = vmul.f32 %v8119, %v8152
    %v8176 = vmul.f32 %v8120, %v8152
    %v8177 = vmul.f32 %v8121, %v8157
    %v8178 = vmul.f32 %v8122, %v8157
    %v8179 = vmul.f32 %v8123, %v8157
    %v8180 = vmul.f32 %v8124, %v8157
    %v8181 = vmul.f32 %v8125, %v8157
    %v8182 = vmul.f32 %v8126, %v8157
    %v8183 = vmul.f32 %v8127, %v8157
    %v8184 = vmul.f32 %v8128, %v8157
    %v8185 = vmul.f32 %v8129, %v8162
    %v8186 = vmul.f32 %v8130, %v8162
    %v8187 = vmul.f32 %v8131, %v8162
    %v8188 = vmul.f32 %v8132, %v8162
    %v8189 = vmul.f32 %v8133, %v8162
    %v8190 = vmul.f32 %v8134, %v8162
    %v8191 = vmul.f32 %v8135, %v8162
    %v8192 = vmul.f32 %v8136, %v8162
    %v8193 = vmul.f32 %v8137, %v8167
    %v8194 = vmul.f32 %v8138, %v8167
    %v8195 = vmul.f32 %v8139, %v8167
    %v8196 = vmul.f32 %v8140, %v8167
    %v8197 = vmul.f32 %v8141, %v8167
    %v8198 = vmul.f32 %v8142, %v8167
    %v8199 = vmul.f32 %v8143, %v8167
    %v8200 = vmul.f32 %v8144, %v8167
    %v8201 = vld [vmem:[%s6] sm:$0xff]
    %v8202 = vld [vmem:[%s6 + $0x8] sm:$0xff]
    %v8203 = vld [vmem:[%s6 + $0x10] sm:$0xff]
    %v8204 = vld [vmem:[%s6 + $0x18] sm:$0xff]
    %8206 = vset.pattern.permute.xlu0 0
    %8207 = vperm.xlu0 %8206, %v8201
    %v8208 = vpop.permute.xlu0 %8207
    %8211 = vset.pattern.permute.xlu0 0
    %8212 = vperm.xlu0 %8211, %v8202
    %v8213 = vpop.permute.xlu0 %8212
    %8216 = vset.pattern.permute.xlu0 0
    %8217 = vperm.xlu0 %8216, %v8203
    %v8218 = vpop.permute.xlu0 %8217
    %8221 = vset.pattern.permute.xlu0 0
    %8222 = vperm.xlu0 %8221, %v8204
    %v8223 = vpop.permute.xlu0 %8222
    %v8225 = vadd.f32 %v8169, %v8208
    %v8226 = vadd.f32 %v8170, %v8208
    %v8227 = vadd.f32 %v8171, %v8208
    %v8228 = vadd.f32 %v8172, %v8208
    %v8229 = vadd.f32 %v8173, %v8208
    %v8230 = vadd.f32 %v8174, %v8208
    %v8231 = vadd.f32 %v8175, %v8208
    %v8232 = vadd.f32 %v8176, %v8208
    %v8233 = vadd.f32 %v8177, %v8213
    %v8234 = vadd.f32 %v8178, %v8213
    %v8235 = vadd.f32 %v8179, %v8213
    %v8236 = vadd.f32 %v8180, %v8213
    %v8237 = vadd.f32 %v8181, %v8213
    %v8238 = vadd.f32 %v8182, %v8213
    %v8239 = vadd.f32 %v8183, %v8213
    %v8240 = vadd.f32 %v8184, %v8213
    %v8241 = vadd.f32 %v8185, %v8218
    %v8242 = vadd.f32 %v8186, %v8218
    %v8243 = vadd.f32 %v8187, %v8218
    %v8244 = vadd.f32 %v8188, %v8218
    %v8245 = vadd.f32 %v8189, %v8218
    %v8246 = vadd.f32 %v8190, %v8218
    %v8247 = vadd.f32 %v8191, %v8218
    %v8248 = vadd.f32 %v8192, %v8218
    %v8249 = vadd.f32 %v8193, %v8223
    %v8250 = vadd.f32 %v8194, %v8223
    %v8251 = vadd.f32 %v8195, %v8223
    %v8252 = vadd.f32 %v8196, %v8223
    %v8253 = vadd.f32 %v8197, %v8223
    %v8254 = vadd.f32 %v8198, %v8223
    %v8255 = vadd.f32 %v8199, %v8223
    %v8256 = vadd.f32 %v8200, %v8223
    %8289 = vrot.lane.b32.xlu0 %v8225, 32
    %v8290 = vpop.permute.xlu0 %8289
    %8291 = vrot.lane.b32.xlu0 %v8226, 32
    %v8292 = vpop.permute.xlu0 %8291
    %8293 = vrot.lane.b32.xlu0 %v8227, 32
    %v8294 = vpop.permute.xlu0 %8293
    %8295 = vrot.lane.b32.xlu0 %v8228, 32
    %v8296 = vpop.permute.xlu0 %8295
    %8297 = vrot.lane.b32.xlu0 %v8229, 32
    %v8298 = vpop.permute.xlu0 %8297
    %8299 = vrot.lane.b32.xlu0 %v8230, 32
    %v8300 = vpop.permute.xlu0 %8299
    %8301 = vrot.lane.b32.xlu0 %v8231, 32
    %v8302 = vpop.permute.xlu0 %8301
    %8303 = vrot.lane.b32.xlu0 %v8232, 32
    %v8304 = vpop.permute.xlu0 %8303
    %8305 = vrot.lane.b32.xlu0 %v8233, 32
    %v8306 = vpop.permute.xlu0 %8305
    %8307 = vrot.lane.b32.xlu0 %v8234, 32
    %v8308 = vpop.permute.xlu0 %8307
    %8309 = vrot.lane.b32.xlu0 %v8235, 32
    %v8310 = vpop.permute.xlu0 %8309
    %8311 = vrot.lane.b32.xlu0 %v8236, 32
    %v8312 = vpop.permute.xlu0 %8311
    %8313 = vrot.lane.b32.xlu0 %v8237, 32
    %v8314 = vpop.permute.xlu0 %8313
    %8315 = vrot.lane.b32.xlu0 %v8238, 32
    %v8316 = vpop.permute.xlu0 %8315
    %8317 = vrot.lane.b32.xlu0 %v8239, 32
    %v8318 = vpop.permute.xlu0 %8317
    %8319 = vrot.lane.b32.xlu0 %v8240, 32
    %v8320 = vpop.permute.xlu0 %8319
    %8321 = vrot.lane.b32.xlu0 %v8241, 32
    %v8322 = vpop.permute.xlu0 %8321
    %8323 = vrot.lane.b32.xlu0 %v8242, 32
    %v8324 = vpop.permute.xlu0 %8323
    %8325 = vrot.lane.b32.xlu0 %v8243, 32
    %v8326 = vpop.permute.xlu0 %8325
    %8327 = vrot.lane.b32.xlu0 %v8244, 32
    %v8328 = vpop.permute.xlu0 %8327
    %8329 = vrot.lane.b32.xlu0 %v8245, 32
    %v8330 = vpop.permute.xlu0 %8329
    %8331 = vrot.lane.b32.xlu0 %v8246, 32
    %v8332 = vpop.permute.xlu0 %8331
    %8333 = vrot.lane.b32.xlu0 %v8247, 32
    %v8334 = vpop.permute.xlu0 %8333
    %8335 = vrot.lane.b32.xlu0 %v8248, 32
    %v8336 = vpop.permute.xlu0 %8335
    %8337 = vrot.lane.b32.xlu0 %v8249, 32
    %v8338 = vpop.permute.xlu0 %8337
    %8339 = vrot.lane.b32.xlu0 %v8250, 32
    %v8340 = vpop.permute.xlu0 %8339
    %8341 = vrot.lane.b32.xlu0 %v8251, 32
    %v8342 = vpop.permute.xlu0 %8341
    %8343 = vrot.lane.b32.xlu0 %v8252, 32
    %v8344 = vpop.permute.xlu0 %8343
    %8345 = vrot.lane.b32.xlu0 %v8253, 32
    %v8346 = vpop.permute.xlu0 %8345
    %8347 = vrot.lane.b32.xlu0 %v8254, 32
    %v8348 = vpop.permute.xlu0 %8347
    %8349 = vrot.lane.b32.xlu0 %v8255, 32
    %v8350 = vpop.permute.xlu0 %8349
    %8351 = vrot.lane.b32.xlu0 %v8256, 32
    %v8352 = vpop.permute.xlu0 %8351
    %v8353 = vsel %vm44, %v8290, %v8292
    %v8354 = vsel %vm44, %v8292, %v8294
    %v8355 = vsel %vm44, %v8294, %v8296
    %v8356 = vsel %vm44, %v8296, %v8298
    %v8357 = vsel %vm44, %v8298, %v8300
    %v8358 = vsel %vm44, %v8300, %v8302
    %v8359 = vsel %vm44, %v8302, %v8304
    %v8360 = vsel %vm44, %v8306, %v8308
    %v8361 = vsel %vm44, %v8308, %v8310
    %v8362 = vsel %vm44, %v8310, %v8312
    %v8363 = vsel %vm44, %v8312, %v8314
    %v8364 = vsel %vm44, %v8314, %v8316
    %v8365 = vsel %vm44, %v8316, %v8318
    %v8366 = vsel %vm44, %v8318, %v8320
    %v8367 = vsel %vm44, %v8322, %v8324
    %v8368 = vsel %vm44, %v8324, %v8326
    %v8369 = vsel %vm44, %v8326, %v8328
    %v8370 = vsel %vm44, %v8328, %v8330
    %v8371 = vsel %vm44, %v8330, %v8332
    %v8372 = vsel %vm44, %v8332, %v8334
    %v8373 = vsel %vm44, %v8334, %v8336
    %v8374 = vsel %vm44, %v8338, %v8340
    %v8375 = vsel %vm44, %v8340, %v8342
    %v8376 = vsel %vm44, %v8342, %v8344
    %v8377 = vsel %vm44, %v8344, %v8346
    %v8378 = vsel %vm44, %v8346, %v8348
    %v8379 = vsel %vm44, %v8348, %v8350
    %v8380 = vsel %vm44, %v8350, %v8352
    %8413 = vst.msk [vmem:[#allocation3] sm:$0xff] %vm3868, %v8290
    %8414 = vst [vmem:[#allocation3 + $0x8] sm:$0xff] %v8353
    %8415 = vst [vmem:[#allocation3 + $0x10] sm:$0xff] %v8354
    %8416 = vst [vmem:[#allocation3 + $0x18] sm:$0xff] %v8355
    %8417 = vst [vmem:[#allocation3 + $0x20] sm:$0xff] %v8356
    %8418 = vst [vmem:[#allocation3 + $0x28] sm:$0xff] %v8357
    %8419 = vst [vmem:[#allocation3 + $0x30] sm:$0xff] %v8358
    %8420 = vst.msk [vmem:[#allocation3 + $0x38] sm:$0xff] %vm3876, %v8359
    %8421 = vst.msk [vmem:[#allocation3 + $0x40] sm:$0xff] %vm3868, %v8306
    %8422 = vst [vmem:[#allocation3 + $0x48] sm:$0xff] %v8360
    %8423 = vst [vmem:[#allocation3 + $0x50] sm:$0xff] %v8361
    %8424 = vst [vmem:[#allocation3 + $0x58] sm:$0xff] %v8362
    %8425 = vst [vmem:[#allocation3 + $0x60] sm:$0xff] %v8363
    %8426 = vst [vmem:[#allocation3 + $0x68] sm:$0xff] %v8364
    %8427 = vst [vmem:[#allocation3 + $0x70] sm:$0xff] %v8365
    %8428 = vst.msk [vmem:[#allocation3 + $0x78] sm:$0xff] %vm3876, %v8366
    %8429 = vst.msk [vmem:[#allocation3 + $0x80] sm:$0xff] %vm3868, %v8322
    %8430 = vst [vmem:[#allocation3 + $0x88] sm:$0xff] %v8367
    %8431 = vst [vmem:[#allocation3 + $0x90] sm:$0xff] %v8368
    %8432 = vst [vmem:[#allocation3 + $0x98] sm:$0xff] %v8369
    %8433 = vst [vmem:[#allocation3 + $0xa0] sm:$0xff] %v8370
    %8434 = vst [vmem:[#allocation3 + $0xa8] sm:$0xff] %v8371
    %8435 = vst [vmem:[#allocation3 + $0xb0] sm:$0xff] %v8372
    %8436 = vst.msk [vmem:[#allocation3 + $0xb8] sm:$0xff] %vm3876, %v8373
    %8437 = vst.msk [vmem:[#allocation3 + $0xc0] sm:$0xff] %vm3868, %v8338
    %8438 = vst [vmem:[#allocation3 + $0xc8] sm:$0xff] %v8374
    %8439 = vst [vmem:[#allocation3 + $0xd0] sm:$0xff] %v8375
    %8440 = vst [vmem:[#allocation3 + $0xd8] sm:$0xff] %v8376
    %8441 = vst [vmem:[#allocation3 + $0xe0] sm:$0xff] %v8377
    %8442 = vst [vmem:[#allocation3 + $0xe8] sm:$0xff] %v8378
    %8443 = vst [vmem:[#allocation3 + $0xf0] sm:$0xff] %v8379
    %8444 = vst.msk [vmem:[#allocation3 + $0xf8] sm:$0xff] %vm3876, %v8380
    %v8445 = vld [vmem:[#allocation3] sm:$0xff]
    %v8446 = vld [vmem:[#allocation3 + $0x8] sm:$0xff]
    %v8447 = vld [vmem:[#allocation3 + $0x10] sm:$0xff]
    %v8448 = vld [vmem:[#allocation3 + $0x18] sm:$0xff]
    %v8449 = vld [vmem:[#allocation3 + $0x20] sm:$0xff]
    %v8450 = vld [vmem:[#allocation3 + $0x28] sm:$0xff]
    %v8451 = vld [vmem:[#allocation3 + $0x30] sm:$0xff]
    %v8452 = vld [vmem:[#allocation3 + $0x38] sm:$0xff]
    %v8453 = vld [vmem:[#allocation3 + $0x40] sm:$0xff]
    %v8454 = vld [vmem:[#allocation3 + $0x48] sm:$0xff]
    %v8455 = vld [vmem:[#allocation3 + $0x50] sm:$0xff]
    %v8456 = vld [vmem:[#allocation3 + $0x58] sm:$0xff]
    %v8457 = vld [vmem:[#allocation3 + $0x60] sm:$0xff]
    %v8458 = vld [vmem:[#allocation3 + $0x68] sm:$0xff]
    %v8459 = vld [vmem:[#allocation3 + $0x70] sm:$0xff]
    %v8460 = vld [vmem:[#allocation3 + $0x78] sm:$0xff]
    %v8461 = vld [vmem:[#allocation3 + $0x80] sm:$0xff]
    %v8462 = vld [vmem:[#allocation3 + $0x88] sm:$0xff]
    %v8463 = vld [vmem:[#allocation3 + $0x90] sm:$0xff]
    %v8464 = vld [vmem:[#allocation3 + $0x98] sm:$0xff]
    %v8465 = vld [vmem:[#allocation3 + $0xa0] sm:$0xff]
    %v8466 = vld [vmem:[#allocation3 + $0xa8] sm:$0xff]
    %v8467 = vld [vmem:[#allocation3 + $0xb0] sm:$0xff]
    %v8468 = vld [vmem:[#allocation3 + $0xb8] sm:$0xff]
    %v8469 = vld [vmem:[#allocation3 + $0xc0] sm:$0xff]
    %v8470 = vld [vmem:[#allocation3 + $0xc8] sm:$0xff]
    %v8471 = vld [vmem:[#allocation3 + $0xd0] sm:$0xff]
    %v8472 = vld [vmem:[#allocation3 + $0xd8] sm:$0xff]
    %v8473 = vld [vmem:[#allocation3 + $0xe0] sm:$0xff]
    %v8474 = vld [vmem:[#allocation3 + $0xe8] sm:$0xff]
    %v8475 = vld [vmem:[#allocation3 + $0xf0] sm:$0xff]
    %v8476 = vld [vmem:[#allocation3 + $0xf8] sm:$0xff]
    %8509 = vrot.lane.b32.xlu0 %v8445, 127
    %v8510 = vpop.permute.xlu0 %8509
    %8511 = vrot.lane.b32.xlu0 %v8446, 127
    %v8512 = vpop.permute.xlu0 %8511
    %8513 = vrot.lane.b32.xlu0 %v8447, 127
    %v8514 = vpop.permute.xlu0 %8513
    %8515 = vrot.lane.b32.xlu0 %v8448, 127
    %v8516 = vpop.permute.xlu0 %8515
    %8517 = vrot.lane.b32.xlu0 %v8449, 127
    %v8518 = vpop.permute.xlu0 %8517
    %8519 = vrot.lane.b32.xlu0 %v8450, 127
    %v8520 = vpop.permute.xlu0 %8519
    %8521 = vrot.lane.b32.xlu0 %v8451, 127
    %v8522 = vpop.permute.xlu0 %8521
    %8523 = vrot.lane.b32.xlu0 %v8452, 127
    %v8524 = vpop.permute.xlu0 %8523
    %8525 = vrot.lane.b32.xlu0 %v8453, 127
    %v8526 = vpop.permute.xlu0 %8525
    %8527 = vrot.lane.b32.xlu0 %v8454, 127
    %v8528 = vpop.permute.xlu0 %8527
    %8529 = vrot.lane.b32.xlu0 %v8455, 127
    %v8530 = vpop.permute.xlu0 %8529
    %8531 = vrot.lane.b32.xlu0 %v8456, 127
    %v8532 = vpop.permute.xlu0 %8531
    %8533 = vrot.lane.b32.xlu0 %v8457, 127
    %v8534 = vpop.permute.xlu0 %8533
    %8535 = vrot.lane.b32.xlu0 %v8458, 127
    %v8536 = vpop.permute.xlu0 %8535
    %8537 = vrot.lane.b32.xlu0 %v8459, 127
    %v8538 = vpop.permute.xlu0 %8537
    %8539 = vrot.lane.b32.xlu0 %v8460, 127
    %v8540 = vpop.permute.xlu0 %8539
    %8541 = vrot.lane.b32.xlu0 %v8461, 127
    %v8542 = vpop.permute.xlu0 %8541
    %8543 = vrot.lane.b32.xlu0 %v8462, 127
    %v8544 = vpop.permute.xlu0 %8543
    %8545 = vrot.lane.b32.xlu0 %v8463, 127
    %v8546 = vpop.permute.xlu0 %8545
    %8547 = vrot.lane.b32.xlu0 %v8464, 127
    %v8548 = vpop.permute.xlu0 %8547
    %8549 = vrot.lane.b32.xlu0 %v8465, 127
    %v8550 = vpop.permute.xlu0 %8549
    %8551 = vrot.lane.b32.xlu0 %v8466, 127
    %v8552 = vpop.permute.xlu0 %8551
    %8553 = vrot.lane.b32.xlu0 %v8467, 127
    %v8554 = vpop.permute.xlu0 %8553
    %8555 = vrot.lane.b32.xlu0 %v8468, 127
    %v8556 = vpop.permute.xlu0 %8555
    %8557 = vrot.lane.b32.xlu0 %v8469, 127
    %v8558 = vpop.permute.xlu0 %8557
    %8559 = vrot.lane.b32.xlu0 %v8470, 127
    %v8560 = vpop.permute.xlu0 %8559
    %8561 = vrot.lane.b32.xlu0 %v8471, 127
    %v8562 = vpop.permute.xlu0 %8561
    %8563 = vrot.lane.b32.xlu0 %v8472, 127
    %v8564 = vpop.permute.xlu0 %8563
    %8565 = vrot.lane.b32.xlu0 %v8473, 127
    %v8566 = vpop.permute.xlu0 %8565
    %8567 = vrot.lane.b32.xlu0 %v8474, 127
    %v8568 = vpop.permute.xlu0 %8567
    %8569 = vrot.lane.b32.xlu0 %v8475, 127
    %v8570 = vpop.permute.xlu0 %8569
    %8571 = vrot.lane.b32.xlu0 %v8476, 127
    %v8572 = vpop.permute.xlu0 %8571
    %v8573 = vsel %vm473, %v8510, %v8512
    %v8574 = vsel %vm473, %v8512, %v8514
    %v8575 = vsel %vm473, %v8514, %v8516
    %v8576 = vsel %vm473, %v8516, %v8518
    %v8577 = vsel %vm473, %v8518, %v8520
    %v8578 = vsel %vm473, %v8520, %v8522
    %v8579 = vsel %vm473, %v8522, %v8524
    %v8580 = vsel %vm473, %v8526, %v8528
    %v8581 = vsel %vm473, %v8528, %v8530
    %v8582 = vsel %vm473, %v8530, %v8532
    %v8583 = vsel %vm473, %v8532, %v8534
    %v8584 = vsel %vm473, %v8534, %v8536
    %v8585 = vsel %vm473, %v8536, %v8538
    %v8586 = vsel %vm473, %v8538, %v8540
    %v8587 = vsel %vm473, %v8542, %v8544
    %v8588 = vsel %vm473, %v8544, %v8546
    %v8589 = vsel %vm473, %v8546, %v8548
    %v8590 = vsel %vm473, %v8548, %v8550
    %v8591 = vsel %vm473, %v8550, %v8552
    %v8592 = vsel %vm473, %v8552, %v8554
    %v8593 = vsel %vm473, %v8554, %v8556
    %v8594 = vsel %vm473, %v8558, %v8560
    %v8595 = vsel %vm473, %v8560, %v8562
    %v8596 = vsel %vm473, %v8562, %v8564
    %v8597 = vsel %vm473, %v8564, %v8566
    %v8598 = vsel %vm473, %v8566, %v8568
    %v8599 = vsel %vm473, %v8568, %v8570
    %v8600 = vsel %vm473, %v8570, %v8572
    %v8633 = vmax.f32 %v8445, %v8573
    %v8634 = vmax.f32 %v8446, %v8574
    %v8635 = vmax.f32 %v8447, %v8575
    %v8636 = vmax.f32 %v8448, %v8576
    %v8637 = vmax.f32 %v8449, %v8577
    %v8638 = vmax.f32 %v8450, %v8578
    %v8639 = vmax.f32 %v8451, %v8579
    %v8640 = vmax.f32 %v8452, %v8524
    %v8641 = vmax.f32 %v8453, %v8580
    %v8642 = vmax.f32 %v8454, %v8581
    %v8643 = vmax.f32 %v8455, %v8582
    %v8644 = vmax.f32 %v8456, %v8583
    %v8645 = vmax.f32 %v8457, %v8584
    %v8646 = vmax.f32 %v8458, %v8585
    %v8647 = vmax.f32 %v8459, %v8586
    %v8648 = vmax.f32 %v8460, %v8540
    %v8649 = vmax.f32 %v8461, %v8587
    %v8650 = vmax.f32 %v8462, %v8588
    %v8651 = vmax.f32 %v8463, %v8589
    %v8652 = vmax.f32 %v8464, %v8590
    %v8653 = vmax.f32 %v8465, %v8591
    %v8654 = vmax.f32 %v8466, %v8592
    %v8655 = vmax.f32 %v8467, %v8593
    %v8656 = vmax.f32 %v8468, %v8556
    %v8657 = vmax.f32 %v8469, %v8594
    %v8658 = vmax.f32 %v8470, %v8595
    %v8659 = vmax.f32 %v8471, %v8596
    %v8660 = vmax.f32 %v8472, %v8597
    %v8661 = vmax.f32 %v8473, %v8598
    %v8662 = vmax.f32 %v8474, %v8599
    %v8663 = vmax.f32 %v8475, %v8600
    %v8664 = vmax.f32 %v8476, %v8572
    %8697 = vrot.lane.b32.xlu0 %v8633, 98
    %v8698 = vpop.permute.xlu0 %8697
    %8699 = vrot.lane.b32.xlu0 %v8634, 98
    %v8700 = vpop.permute.xlu0 %8699
    %8701 = vrot.lane.b32.xlu0 %v8635, 98
    %v8702 = vpop.permute.xlu0 %8701
    %8703 = vrot.lane.b32.xlu0 %v8636, 98
    %v8704 = vpop.permute.xlu0 %8703
    %8705 = vrot.lane.b32.xlu0 %v8637, 98
    %v8706 = vpop.permute.xlu0 %8705
    %8707 = vrot.lane.b32.xlu0 %v8638, 98
    %v8708 = vpop.permute.xlu0 %8707
    %8709 = vrot.lane.b32.xlu0 %v8639, 98
    %v8710 = vpop.permute.xlu0 %8709
    %8711 = vrot.lane.b32.xlu0 %v8640, 98
    %v8712 = vpop.permute.xlu0 %8711
    %8713 = vrot.lane.b32.xlu0 %v8641, 98
    %v8714 = vpop.permute.xlu0 %8713
    %8715 = vrot.lane.b32.xlu0 %v8642, 98
    %v8716 = vpop.permute.xlu0 %8715
    %8717 = vrot.lane.b32.xlu0 %v8643, 98
    %v8718 = vpop.permute.xlu0 %8717
    %8719 = vrot.lane.b32.xlu0 %v8644, 98
    %v8720 = vpop.permute.xlu0 %8719
    %8721 = vrot.lane.b32.xlu0 %v8645, 98
    %v8722 = vpop.permute.xlu0 %8721
    %8723 = vrot.lane.b32.xlu0 %v8646, 98
    %v8724 = vpop.permute.xlu0 %8723
    %8725 = vrot.lane.b32.xlu0 %v8647, 98
    %v8726 = vpop.permute.xlu0 %8725
    %8727 = vrot.lane.b32.xlu0 %v8648, 98
    %v8728 = vpop.permute.xlu0 %8727
    %8729 = vrot.lane.b32.xlu0 %v8649, 98
    %v8730 = vpop.permute.xlu0 %8729
    %8731 = vrot.lane.b32.xlu0 %v8650, 98
    %v8732 = vpop.permute.xlu0 %8731
    %8733 = vrot.lane.b32.xlu0 %v8651, 98
    %v8734 = vpop.permute.xlu0 %8733
    %8735 = vrot.lane.b32.xlu0 %v8652, 98
    %v8736 = vpop.permute.xlu0 %8735
    %8737 = vrot.lane.b32.xlu0 %v8653, 98
    %v8738 = vpop.permute.xlu0 %8737
    %8739 = vrot.lane.b32.xlu0 %v8654, 98
    %v8740 = vpop.permute.xlu0 %8739
    %8741 = vrot.lane.b32.xlu0 %v8655, 98
    %v8742 = vpop.permute.xlu0 %8741
    %8743 = vrot.lane.b32.xlu0 %v8656, 98
    %v8744 = vpop.permute.xlu0 %8743
    %8745 = vrot.lane.b32.xlu0 %v8657, 98
    %v8746 = vpop.permute.xlu0 %8745
    %8747 = vrot.lane.b32.xlu0 %v8658, 98
    %v8748 = vpop.permute.xlu0 %8747
    %8749 = vrot.lane.b32.xlu0 %v8659, 98
    %v8750 = vpop.permute.xlu0 %8749
    %8751 = vrot.lane.b32.xlu0 %v8660, 98
    %v8752 = vpop.permute.xlu0 %8751
    %8753 = vrot.lane.b32.xlu0 %v8661, 98
    %v8754 = vpop.permute.xlu0 %8753
    %8755 = vrot.lane.b32.xlu0 %v8662, 98
    %v8756 = vpop.permute.xlu0 %8755
    %8757 = vrot.lane.b32.xlu0 %v8663, 98
    %v8758 = vpop.permute.xlu0 %8757
    %8759 = vrot.lane.b32.xlu0 %v8664, 98
    %v8760 = vpop.permute.xlu0 %8759
    %vm8761 = vcmask 801792
    %v8762 = vsel %vm8761, %v8698, %v8700
    %v8763 = vsel %vm8761, %v8700, %v8702
    %v8764 = vsel %vm8761, %v8702, %v8704
    %v8765 = vsel %vm8761, %v8704, %v8706
    %v8766 = vsel %vm8761, %v8706, %v8708
    %v8767 = vsel %vm8761, %v8708, %v8710
    %v8768 = vsel %vm8761, %v8710, %v8712
    %v8769 = vsel %vm8761, %v8714, %v8716
    %v8770 = vsel %vm8761, %v8716, %v8718
    %v8771 = vsel %vm8761, %v8718, %v8720
    %v8772 = vsel %vm8761, %v8720, %v8722
    %v8773 = vsel %vm8761, %v8722, %v8724
    %v8774 = vsel %vm8761, %v8724, %v8726
    %v8775 = vsel %vm8761, %v8726, %v8728
    %v8776 = vsel %vm8761, %v8730, %v8732
    %v8777 = vsel %vm8761, %v8732, %v8734
    %v8778 = vsel %vm8761, %v8734, %v8736
    %v8779 = vsel %vm8761, %v8736, %v8738
    %v8780 = vsel %vm8761, %v8738, %v8740
    %v8781 = vsel %vm8761, %v8740, %v8742
    %v8782 = vsel %vm8761, %v8742, %v8744
    %v8783 = vsel %vm8761, %v8746, %v8748
    %v8784 = vsel %vm8761, %v8748, %v8750
    %v8785 = vsel %vm8761, %v8750, %v8752
    %v8786 = vsel %vm8761, %v8752, %v8754
    %v8787 = vsel %vm8761, %v8754, %v8756
    %v8788 = vsel %vm8761, %v8756, %v8758
    %v8789 = vsel %vm8761, %v8758, %v8760
    %v8822 = vmax.f32 %v8633, %v8762
    %v8823 = vmax.f32 %v8634, %v8763
    %v8824 = vmax.f32 %v8635, %v8764
    %v8825 = vmax.f32 %v8636, %v8765
    %v8826 = vmax.f32 %v8637, %v8766
    %v8827 = vmax.f32 %v8638, %v8767
    %v8828 = vmax.f32 %v8639, %v8768
    %v8829 = vmax.f32 %v8640, %v8712
    %v8830 = vmax.f32 %v8641, %v8769
    %v8831 = vmax.f32 %v8642, %v8770
    %v8832 = vmax.f32 %v8643, %v8771
    %v8833 = vmax.f32 %v8644, %v8772
    %v8834 = vmax.f32 %v8645, %v8773
    %v8835 = vmax.f32 %v8646, %v8774
    %v8836 = vmax.f32 %v8647, %v8775
    %v8837 = vmax.f32 %v8648, %v8728
    %v8838 = vmax.f32 %v8649, %v8776
    %v8839 = vmax.f32 %v8650, %v8777
    %v8840 = vmax.f32 %v8651, %v8778
    %v8841 = vmax.f32 %v8652, %v8779
    %v8842 = vmax.f32 %v8653, %v8780
    %v8843 = vmax.f32 %v8654, %v8781
    %v8844 = vmax.f32 %v8655, %v8782
    %v8845 = vmax.f32 %v8656, %v8744
    %v8846 = vmax.f32 %v8657, %v8783
    %v8847 = vmax.f32 %v8658, %v8784
    %v8848 = vmax.f32 %v8659, %v8785
    %v8849 = vmax.f32 %v8660, %v8786
    %v8850 = vmax.f32 %v8661, %v8787
    %v8851 = vmax.f32 %v8662, %v8788
    %v8852 = vmax.f32 %v8663, %v8789
    %v8853 = vmax.f32 %v8664, %v8760
    %v8854 = vld [vmem:[%s8] sm:$0xff]
    %v8855 = vld [vmem:[%s8 + $0x8] sm:$0xff]
    %v8856 = vld [vmem:[%s8 + $0x10] sm:$0xff]
    %v8857 = vld [vmem:[%s8 + $0x18] sm:$0xff]
    %v8858 = vld [vmem:[%s8 + $0x20] sm:$0xff]
    %v8859 = vld [vmem:[%s8 + $0x28] sm:$0xff]
    %v8860 = vld [vmem:[%s8 + $0x30] sm:$0xff]
    %v8861 = vld [vmem:[%s8 + $0x38] sm:$0xff]
    %v8862 = vld [vmem:[%s8 + $0x40] sm:$0xff]
    %v8863 = vld [vmem:[%s8 + $0x48] sm:$0xff]
    %v8864 = vld [vmem:[%s8 + $0x50] sm:$0xff]
    %v8865 = vld [vmem:[%s8 + $0x58] sm:$0xff]
    %v8866 = vld [vmem:[%s8 + $0x60] sm:$0xff]
    %v8867 = vld [vmem:[%s8 + $0x68] sm:$0xff]
    %v8868 = vld [vmem:[%s8 + $0x70] sm:$0xff]
    %v8869 = vld [vmem:[%s8 + $0x78] sm:$0xff]
    %v8870 = vld [vmem:[%s8 + $0x80] sm:$0xff]
    %v8871 = vld [vmem:[%s8 + $0x88] sm:$0xff]
    %v8872 = vld [vmem:[%s8 + $0x90] sm:$0xff]
    %v8873 = vld [vmem:[%s8 + $0x98] sm:$0xff]
    %v8874 = vld [vmem:[%s8 + $0xa0] sm:$0xff]
    %v8875 = vld [vmem:[%s8 + $0xa8] sm:$0xff]
    %v8876 = vld [vmem:[%s8 + $0xb0] sm:$0xff]
    %v8877 = vld [vmem:[%s8 + $0xb8] sm:$0xff]
    %v8878 = vld [vmem:[%s8 + $0xc0] sm:$0xff]
    %v8879 = vld [vmem:[%s8 + $0xc8] sm:$0xff]
    %v8880 = vld [vmem:[%s8 + $0xd0] sm:$0xff]
    %v8881 = vld [vmem:[%s8 + $0xd8] sm:$0xff]
    %v8882 = vld [vmem:[%s8 + $0xe0] sm:$0xff]
    %v8883 = vld [vmem:[%s8 + $0xe8] sm:$0xff]
    %v8884 = vld [vmem:[%s8 + $0xf0] sm:$0xff]
    %v8885 = vld [vmem:[%s8 + $0xf8] sm:$0xff]
    %v8886 = vld [vmem:[%s8 + $0x100] sm:$0xff]
    %v8887 = vld [vmem:[%s8 + $0x108] sm:$0xff]
    %v8888 = vld [vmem:[%s8 + $0x110] sm:$0xff]
    %v8889 = vld [vmem:[%s8 + $0x118] sm:$0xff]
    %v8890 = vld [vmem:[%s8 + $0x120] sm:$0xff]
    %v8891 = vld [vmem:[%s8 + $0x128] sm:$0xff]
    %v8892 = vld [vmem:[%s8 + $0x130] sm:$0xff]
    %v8893 = vld [vmem:[%s8 + $0x138] sm:$0xff]
    %v8894 = vld [vmem:[%s8 + $0x140] sm:$0xff]
    %v8895 = vld [vmem:[%s8 + $0x148] sm:$0xff]
    %v8896 = vld [vmem:[%s8 + $0x150] sm:$0xff]
    %v8897 = vld [vmem:[%s8 + $0x158] sm:$0xff]
    %v8898 = vld [vmem:[%s8 + $0x160] sm:$0xff]
    %v8899 = vld [vmem:[%s8 + $0x168] sm:$0xff]
    %v8900 = vld [vmem:[%s8 + $0x170] sm:$0xff]
    %v8901 = vld [vmem:[%s8 + $0x178] sm:$0xff]
    %v8902 = vld [vmem:[%s8 + $0x180] sm:$0xff]
    %v8903 = vld [vmem:[%s8 + $0x188] sm:$0xff]
    %v8904 = vld [vmem:[%s8 + $0x190] sm:$0xff]
    %v8905 = vld [vmem:[%s8 + $0x198] sm:$0xff]
    %v8906 = vld [vmem:[%s8 + $0x1a0] sm:$0xff]
    %v8907 = vld [vmem:[%s8 + $0x1a8] sm:$0xff]
    %v8908 = vld [vmem:[%s8 + $0x1b0] sm:$0xff]
    %v8909 = vld [vmem:[%s8 + $0x1b8] sm:$0xff]
    %v8910 = vld [vmem:[%s8 + $0x1c0] sm:$0xff]
    %v8911 = vld [vmem:[%s8 + $0x1c8] sm:$0xff]
    %v8912 = vld [vmem:[%s8 + $0x1d0] sm:$0xff]
    %v8913 = vld [vmem:[%s8 + $0x1d8] sm:$0xff]
    %v8914 = vld [vmem:[%s8 + $0x1e0] sm:$0xff]
    %v8915 = vld [vmem:[%s8 + $0x1e8] sm:$0xff]
    %v8916 = vld [vmem:[%s8 + $0x1f0] sm:$0xff]
    %v8917 = vld [vmem:[%s8 + $0x1f8] sm:$0xff]
    %v8918 = vld [vmem:[%s8 + $0x200] sm:$0xff]
    %v8919 = vld [vmem:[%s8 + $0x208] sm:$0xff]
    %v8920 = vld [vmem:[%s8 + $0x210] sm:$0xff]
    %v8921 = vld [vmem:[%s8 + $0x218] sm:$0xff]
    %v8922 = vld [vmem:[%s8 + $0x220] sm:$0xff]
    %v8923 = vld [vmem:[%s8 + $0x228] sm:$0xff]
    %v8924 = vld [vmem:[%s8 + $0x230] sm:$0xff]
    %v8925 = vld [vmem:[%s8 + $0x238] sm:$0xff]
    %v8926 = vld [vmem:[%s8 + $0x240] sm:$0xff]
    %v8927 = vld [vmem:[%s8 + $0x248] sm:$0xff]
    %v8928 = vld [vmem:[%s8 + $0x250] sm:$0xff]
    %v8929 = vld [vmem:[%s8 + $0x258] sm:$0xff]
    %v8930 = vld [vmem:[%s8 + $0x260] sm:$0xff]
    %v8931 = vld [vmem:[%s8 + $0x268] sm:$0xff]
    %v8932 = vld [vmem:[%s8 + $0x270] sm:$0xff]
    %v8933 = vld [vmem:[%s8 + $0x278] sm:$0xff]
    %v8934 = vld [vmem:[%s8 + $0x280] sm:$0xff]
    %v8935 = vld [vmem:[%s8 + $0x288] sm:$0xff]
    %v8936 = vld [vmem:[%s8 + $0x290] sm:$0xff]
    %v8937 = vld [vmem:[%s8 + $0x298] sm:$0xff]
    %v8938 = vld [vmem:[%s8 + $0x2a0] sm:$0xff]
    %v8939 = vld [vmem:[%s8 + $0x2a8] sm:$0xff]
    %v8940 = vld [vmem:[%s8 + $0x2b0] sm:$0xff]
    %v8941 = vld [vmem:[%s8 + $0x2b8] sm:$0xff]
    %v8942 = vld [vmem:[%s8 + $0x2c0] sm:$0xff]
    %v8943 = vld [vmem:[%s8 + $0x2c8] sm:$0xff]
    %v8944 = vld [vmem:[%s8 + $0x2d0] sm:$0xff]
    %v8945 = vld [vmem:[%s8 + $0x2d8] sm:$0xff]
    %v8946 = vld [vmem:[%s8 + $0x2e0] sm:$0xff]
    %v8947 = vld [vmem:[%s8 + $0x2e8] sm:$0xff]
    %v8948 = vld [vmem:[%s8 + $0x2f0] sm:$0xff]
    %v8949 = vld [vmem:[%s8 + $0x2f8] sm:$0xff]
    %v8950 = vld [vmem:[%s8 + $0x300] sm:$0xff]
    %v8951 = vld [vmem:[%s8 + $0x308] sm:$0xff]
    %v8952 = vld [vmem:[%s8 + $0x310] sm:$0xff]
    %v8953 = vld [vmem:[%s8 + $0x318] sm:$0xff]
    %v8954 = vld [vmem:[%s8 + $0x320] sm:$0xff]
    %v8955 = vld [vmem:[%s8 + $0x328] sm:$0xff]
    %v8956 = vld [vmem:[%s8 + $0x330] sm:$0xff]
    %v8957 = vld [vmem:[%s8 + $0x338] sm:$0xff]
    %v8958 = vld [vmem:[%s8 + $0x340] sm:$0xff]
    %v8959 = vld [vmem:[%s8 + $0x348] sm:$0xff]
    %v8960 = vld [vmem:[%s8 + $0x350] sm:$0xff]
    %v8961 = vld [vmem:[%s8 + $0x358] sm:$0xff]
    %v8962 = vld [vmem:[%s8 + $0x360] sm:$0xff]
    %v8963 = vld [vmem:[%s8 + $0x368] sm:$0xff]
    %v8964 = vld [vmem:[%s8 + $0x370] sm:$0xff]
    %v8965 = vld [vmem:[%s8 + $0x378] sm:$0xff]
    %v8966 = vld [vmem:[%s8 + $0x380] sm:$0xf]
    %8999 = vrot.lane.b32.xlu0 %v8822, 96
    %v9000 = vpop.permute.xlu0 %8999
    %9001 = vrot.lane.b32.xlu0 %v8823, 96
    %v9002 = vpop.permute.xlu0 %9001
    %9003 = vrot.lane.b32.xlu0 %v8824, 96
    %v9004 = vpop.permute.xlu0 %9003
    %9005 = vrot.lane.b32.xlu0 %v8825, 96
    %v9006 = vpop.permute.xlu0 %9005
    %9007 = vrot.lane.b32.xlu0 %v8826, 96
    %v9008 = vpop.permute.xlu0 %9007
    %9009 = vrot.lane.b32.xlu0 %v8827, 96
    %v9010 = vpop.permute.xlu0 %9009
    %9011 = vrot.lane.b32.xlu0 %v8828, 96
    %v9012 = vpop.permute.xlu0 %9011
    %9013 = vrot.lane.b32.xlu0 %v8829, 96
    %v9014 = vpop.permute.xlu0 %9013
    %9015 = vrot.lane.b32.xlu0 %v8830, 96
    %v9016 = vpop.permute.xlu0 %9015
    %9017 = vrot.lane.b32.xlu0 %v8831, 96
    %v9018 = vpop.permute.xlu0 %9017
    %9019 = vrot.lane.b32.xlu0 %v8832, 96
    %v9020 = vpop.permute.xlu0 %9019
    %9021 = vrot.lane.b32.xlu0 %v8833, 96
    %v9022 = vpop.permute.xlu0 %9021
    %9023 = vrot.lane.b32.xlu0 %v8834, 96
    %v9024 = vpop.permute.xlu0 %9023
    %9025 = vrot.lane.b32.xlu0 %v8835, 96
    %v9026 = vpop.permute.xlu0 %9025
    %9027 = vrot.lane.b32.xlu0 %v8836, 96
    %v9028 = vpop.permute.xlu0 %9027
    %9029 = vrot.lane.b32.xlu0 %v8837, 96
    %v9030 = vpop.permute.xlu0 %9029
    %9031 = vrot.lane.b32.xlu0 %v8838, 96
    %v9032 = vpop.permute.xlu0 %9031
    %9033 = vrot.lane.b32.xlu0 %v8839, 96
    %v9034 = vpop.permute.xlu0 %9033
    %9035 = vrot.lane.b32.xlu0 %v8840, 96
    %v9036 = vpop.permute.xlu0 %9035
    %9037 = vrot.lane.b32.xlu0 %v8841, 96
    %v9038 = vpop.permute.xlu0 %9037
    %9039 = vrot.lane.b32.xlu0 %v8842, 96
    %v9040 = vpop.permute.xlu0 %9039
    %9041 = vrot.lane.b32.xlu0 %v8843, 96
    %v9042 = vpop.permute.xlu0 %9041
    %9043 = vrot.lane.b32.xlu0 %v8844, 96
    %v9044 = vpop.permute.xlu0 %9043
    %9045 = vrot.lane.b32.xlu0 %v8845, 96
    %v9046 = vpop.permute.xlu0 %9045
    %9047 = vrot.lane.b32.xlu0 %v8846, 96
    %v9048 = vpop.permute.xlu0 %9047
    %9049 = vrot.lane.b32.xlu0 %v8847, 96
    %v9050 = vpop.permute.xlu0 %9049
    %9051 = vrot.lane.b32.xlu0 %v8848, 96
    %v9052 = vpop.permute.xlu0 %9051
    %9053 = vrot.lane.b32.xlu0 %v8849, 96
    %v9054 = vpop.permute.xlu0 %9053
    %9055 = vrot.lane.b32.xlu0 %v8850, 96
    %v9056 = vpop.permute.xlu0 %9055
    %9057 = vrot.lane.b32.xlu0 %v8851, 96
    %v9058 = vpop.permute.xlu0 %9057
    %9059 = vrot.lane.b32.xlu0 %v8852, 96
    %v9060 = vpop.permute.xlu0 %9059
    %9061 = vrot.lane.b32.xlu0 %v8853, 96
    %v9062 = vpop.permute.xlu0 %9061
    %v9063 = vsel %vm1690, %v9000, %v9002
    %v9064 = vsel %vm1690, %v9002, %v9004
    %v9065 = vsel %vm1690, %v9004, %v9006
    %v9066 = vsel %vm1690, %v9006, %v9008
    %v9067 = vsel %vm1690, %v9008, %v9010
    %v9068 = vsel %vm1690, %v9010, %v9012
    %v9069 = vsel %vm1690, %v9012, %v9014
    %v9070 = vsel %vm1690, %v9016, %v9018
    %v9071 = vsel %vm1690, %v9018, %v9020
    %v9072 = vsel %vm1690, %v9020, %v9022
    %v9073 = vsel %vm1690, %v9022, %v9024
    %v9074 = vsel %vm1690, %v9024, %v9026
    %v9075 = vsel %vm1690, %v9026, %v9028
    %v9076 = vsel %vm1690, %v9028, %v9030
    %v9077 = vsel %vm1690, %v9032, %v9034
    %v9078 = vsel %vm1690, %v9034, %v9036
    %v9079 = vsel %vm1690, %v9036, %v9038
    %v9080 = vsel %vm1690, %v9038, %v9040
    %v9081 = vsel %vm1690, %v9040, %v9042
    %v9082 = vsel %vm1690, %v9042, %v9044
    %v9083 = vsel %vm1690, %v9044, %v9046
    %v9084 = vsel %vm1690, %v9048, %v9050
    %v9085 = vsel %vm1690, %v9050, %v9052
    %v9086 = vsel %vm1690, %v9052, %v9054
    %v9087 = vsel %vm1690, %v9054, %v9056
    %v9088 = vsel %vm1690, %v9056, %v9058
    %v9089 = vsel %vm1690, %v9058, %v9060
    %v9090 = vsel %vm1690, %v9060, %v9062
    %vm9119 = vcmask 31744
    %v9120 = vsel %vm9119, %v9014, 0
    %v9122 = vsel %vm9119, %v9030, 0
    %v9124 = vsel %vm9119, %v9046, 0
    %v9126 = vsel %vm9119, %v9062, 0
    %vm9128 = vcmask 1043456
    %v9130 = vsel %vm9128, %v8966, 0
    %9132 = vmatprep.subr.mxu0 0.0
    %9133 = vmatpush1.msra.mxu0 %v8854
    %9134 = vmatprep.subr.mxu0 0.0
    %9135 = vmatpush1.msra.mxu0 %v8855
    %9136 = vmatprep.subr.mxu0 0.0
    %9137 = vmatpush1.msra.mxu0 %v8856
    %9138 = vmatprep.subr.mxu0 0.0
    %9139 = vmatpush1.msra.mxu0 %v8857
    %9140 = vmatprep.subr.mxu0 0.0
    %9141 = vmatpush1.msra.mxu0 %v8858
    %9142 = vmatprep.subr.mxu0 0.0
    %9143 = vmatpush1.msra.mxu0 %v8859
    %9144 = vmatprep.subr.mxu0 0.0
    %9145 = vmatpush1.msra.mxu0 %v8860
    %9146 = vmatprep.subr.mxu0 0.0
    %9147 = vmatpush1.msra.mxu0 %v8861
    %9148 = vmatprep.subr.mxu0 0.0
    %9149 = vmatpush1.msra.mxu0 %v8862
    %9150 = vmatprep.subr.mxu0 0.0
    %9151 = vmatpush1.msra.mxu0 %v8863
    %9152 = vmatprep.subr.mxu0 0.0
    %9153 = vmatpush1.msra.mxu0 %v8864
    %9154 = vmatprep.subr.mxu0 0.0
    %9155 = vmatpush1.msra.mxu0 %v8865
    %9156 = vmatprep.subr.mxu0 0.0
    %9157 = vmatpush1.msra.mxu0 %v8866
    %9158 = vmatprep.subr.mxu0 0.0
    %9159 = vmatpush1.msra.mxu0 %v8867
    %9160 = vmatprep.subr.mxu0 0.0
    %9161 = vmatpush1.msra.mxu0 %v8868
    %9162 = vmatprep.subr.mxu0 0.0
    %9163 = vmatpush1.msra.mxu0 %v8869
    %9164 = vmatprep.subr.mxu0 0.0
    %9165 = vmatpush1.msra.mxu0 %v8870
    %9166 = vmatprep.subr.mxu0 0.0
    %9167 = vmatpush1.msra.mxu0 %v8871
    %9168 = vmatprep.subr.mxu0 0.0
    %9169 = vmatpush1.msra.mxu0 %v8872
    %9170 = vmatprep.subr.mxu0 0.0
    %9171 = vmatpush1.msra.mxu0 %v8873
    %9172 = vmatprep.subr.mxu0 0.0
    %9173 = vmatpush1.msra.mxu0 %v8874
    %9174 = vmatprep.subr.mxu0 0.0
    %9175 = vmatpush1.msra.mxu0 %v8875
    %9176 = vmatprep.subr.mxu0 0.0
    %9177 = vmatpush1.msra.mxu0 %v8876
    %9178 = vmatprep.subr.mxu0 0.0
    %9179 = vmatpush1.msra.mxu0 %v8877
    %9180 = vmatprep.subr.mxu0 0.0
    %9181 = vmatpush1.msra.mxu0 %v8878
    %9182 = vmatprep.subr.mxu0 0.0
    %9183 = vmatpush1.msra.mxu0 %v8879
    %9184 = vmatprep.subr.mxu0 0.0
    %9185 = vmatpush1.msra.mxu0 %v8880
    %9186 = vmatprep.subr.mxu0 0.0
    %9187 = vmatpush1.msra.mxu0 %v8881
    %9188 = vmatprep.subr.mxu0 0.0
    %9189 = vmatpush1.msra.mxu0 %v8882
    %9190 = vmatprep.subr.mxu0 0.0
    %9191 = vmatpush1.msra.mxu0 %v8883
    %9192 = vmatprep.subr.mxu0 0.0
    %9193 = vmatpush1.msra.mxu0 %v8884
    %9194 = vmatprep.subr.mxu0 0.0
    %9195 = vmatpush1.msra.mxu0 %v8885
    %9196 = vmatprep.mubr.f32.mxu0 %v9064
    %9197 = vmatmul.mubr.f32.gmra.mrb[0].mxu0 %v9063
    %v9198 = vpop.f32.mrb[0].mxu0
    %v9199 = vadd.f32 0.0, %v9198
    %v9200 = vpop.f32.mrb[0].mxu0
    %9201 = vmatprep.mubr.f32.mxu0 %v9071
    %9202 = vmatmul.mubr.f32.gmra.mrb[0].mxu0 %v9070
    %v9203 = vpop.f32.mrb[0].mxu0
    %v9204 = vadd.f32 0.0, %v9203
    %v9205 = vpop.f32.mrb[0].mxu0
    %9206 = vmatprep.mubr.f32.mxu0 %v9078
    %9207 = vmatmul.mubr.f32.gmra.mrb[0].mxu0 %v9077
    %v9208 = vpop.f32.mrb[0].mxu0
    %v9209 = vadd.f32 0.0, %v9208
    %v9210 = vpop.f32.mrb[0].mxu0
    %9211 = vmatprep.mubr.f32.mxu0 %v9085
    %9212 = vmatmul.mubr.f32.gmra.mrb[0].mxu0 %v9084
    %v9213 = vpop.f32.mrb[0].mxu0
    %v9214 = vadd.f32 0.0, %v9213
    %v9215 = vpop.f32.mrb[0].mxu0
    %9216 = vdwg.mxu0
    %9217 = vmatprep.subr.mxu0 0.0
    %9218 = vmatpush1.msra.mxu0 %v8886
    %9219 = vmatprep.subr.mxu0 0.0
    %9220 = vmatpush1.msra.mxu0 %v8887
    %9221 = vmatprep.subr.mxu0 0.0
    %9222 = vmatpush1.msra.mxu0 %v8888
    %9223 = vmatprep.subr.mxu0 0.0
    %9224 = vmatpush1.msra.mxu0 %v8889
    %9225 = vmatprep.subr.mxu0 0.0
    %9226 = vmatpush1.msra.mxu0 %v8890
    %9227 = vmatprep.subr.mxu0 0.0
    %9228 = vmatpush1.msra.mxu0 %v8891
    %9229 = vmatprep.subr.mxu0 0.0
    %9230 = vmatpush1.msra.mxu0 %v8892
    %9231 = vmatprep.subr.mxu0 0.0
    %9232 = vmatpush1.msra.mxu0 %v8893
    %9233 = vmatprep.subr.mxu0 0.0
    %9234 = vmatpush1.msra.mxu0 %v8894
    %9235 = vmatprep.subr.mxu0 0.0
    %9236 = vmatpush1.msra.mxu0 %v8895
    %9237 = vmatprep.subr.mxu0 0.0
    %9238 = vmatpush1.msra.mxu0 %v8896
    %9239 = vmatprep.subr.mxu0 0.0
    %9240 = vmatpush1.msra.mxu0 %v8897
    %9241 = vmatprep.subr.mxu0 0.0
    %9242 = vmatpush1.msra.mxu0 %v8898
    %9243 = vmatprep.subr.mxu0 0.0
    %9244 = vmatpush1.msra.mxu0 %v8899
    %9245 = vmatprep.subr.mxu0 0.0
    %9246 = vmatpush1.msra.mxu0 %v8900
    %9247 = vmatprep.subr.mxu0 0.0
    %9248 = vmatpush1.msra.mxu0 %v8901
    %9249 = vmatprep.subr.mxu0 0.0
    %9250 = vmatpush1.msra.mxu0 %v8902
    %9251 = vmatprep.subr.mxu0 0.0
    %9252 = vmatpush1.msra.mxu0 %v8903
    %9253 = vmatprep.subr.mxu0 0.0
    %9254 = vmatpush1.msra.mxu0 %v8904
    %9255 = vmatprep.subr.mxu0 0.0
    %9256 = vmatpush1.msra.mxu0 %v8905
    %9257 = vmatprep.subr.mxu0 0.0
    %9258 = vmatpush1.msra.mxu0 %v8906
    %9259 = vmatprep.subr.mxu0 0.0
    %9260 = vmatpush1.msra.mxu0 %v8907
    %9261 = vmatprep.subr.mxu0 0.0
    %9262 = vmatpush1.msra.mxu0 %v8908
    %9263 = vmatprep.subr.mxu0 0.0
    %9264 = vmatpush1.msra.mxu0 %v8909
    %9265 = vmatprep.subr.mxu0 0.0
    %9266 = vmatpush1.msra.mxu0 %v8910
    %9267 = vmatprep.subr.mxu0 0.0
    %9268 = vmatpush1.msra.mxu0 %v8911
    %9269 = vmatprep.subr.mxu0 0.0
    %9270 = vmatpush1.msra.mxu0 %v8912
    %9271 = vmatprep.subr.mxu0 0.0
    %9272 = vmatpush1.msra.mxu0 %v8913
    %9273 = vmatprep.subr.mxu0 0.0
    %9274 = vmatpush1.msra.mxu0 %v8914
    %9275 = vmatprep.subr.mxu0 0.0
    %9276 = vmatpush1.msra.mxu0 %v8915
    %9277 = vmatprep.subr.mxu0 0.0
    %9278 = vmatpush1.msra.mxu0 %v8916
    %9279 = vmatprep.subr.mxu0 0.0
    %9280 = vmatpush1.msra.mxu0 %v8917
    %9281 = vmatprep.mubr.f32.mxu0 %v9066
    %9282 = vmatmul.mubr.f32.gmra.mrb[0].mxu0 %v9065
    %v9283 = vpop.f32.mrb[0].mxu0
    %v9284 = vadd.f32 %v9199, %v9283
    %v9285 = vpop.f32.mrb[0].mxu0
    %9286 = vmatprep.mubr.f32.mxu0 %v9073
    %9287 = vmatmul.mubr.f32.gmra.mrb[0].mxu0 %v9072
    %v9288 = vpop.f32.mrb[0].mxu0
    %v9289 = vadd.f32 %v9204, %v9288
    %v9290 = vpop.f32.mrb[0].mxu0
    %9291 = vmatprep.mubr.f32.mxu0 %v9080
    %9292 = vmatmul.mubr.f32.gmra.mrb[0].mxu0 %v9079
    %v9293 = vpop.f32.mrb[0].mxu0
    %v9294 = vadd.f32 %v9209, %v9293
    %v9295 = vpop.f32.mrb[0].mxu0
    %9296 = vmatprep.mubr.f32.mxu0 %v9087
    %9297 = vmatmul.mubr.f32.gmra.mrb[0].mxu0 %v9086
    %v9298 = vpop.f32.mrb[0].mxu0
    %v9299 = vadd.f32 %v9214, %v9298
    %v9300 = vpop.f32.mrb[0].mxu0
    %9301 = vdwg.mxu0
    %9302 = vmatprep.subr.mxu0 0.0
    %9303 = vmatpush1.msra.mxu0 %v8918
    %9304 = vmatprep.subr.mxu0 0.0
    %9305 = vmatpush1.msra.mxu0 %v8919
    %9306 = vmatprep.subr.mxu0 0.0
    %9307 = vmatpush1.msra.mxu0 %v8920
    %9308 = vmatprep.subr.mxu0 0.0
    %9309 = vmatpush1.msra.mxu0 %v8921
    %9310 = vmatprep.subr.mxu0 0.0
    %9311 = vmatpush1.msra.mxu0 %v8922
    %9312 = vmatprep.subr.mxu0 0.0
    %9313 = vmatpush1.msra.mxu0 %v8923
    %9314 = vmatprep.subr.mxu0 0.0
    %9315 = vmatpush1.msra.mxu0 %v8924
    %9316 = vmatprep.subr.mxu0 0.0
    %9317 = vmatpush1.msra.mxu0 %v8925
    %9318 = vmatprep.subr.mxu0 0.0
    %9319 = vmatpush1.msra.mxu0 %v8926
    %9320 = vmatprep.subr.mxu0 0.0
    %9321 = vmatpush1.msra.mxu0 %v8927
    %9322 = vmatprep.subr.mxu0 0.0
    %9323 = vmatpush1.msra.mxu0 %v8928
    %9324 = vmatprep.subr.mxu0 0.0
    %9325 = vmatpush1.msra.mxu0 %v8929
    %9326 = vmatprep.subr.mxu0 0.0
    %9327 = vmatpush1.msra.mxu0 %v8930
    %9328 = vmatprep.subr.mxu0 0.0
    %9329 = vmatpush1.msra.mxu0 %v8931
    %9330 = vmatprep.subr.mxu0 0.0
    %9331 = vmatpush1.msra.mxu0 %v8932
    %9332 = vmatprep.subr.mxu0 0.0
    %9333 = vmatpush1.msra.mxu0 %v8933
    %9334 = vmatprep.subr.mxu0 0.0
    %9335 = vmatpush1.msra.mxu0 %v8934
    %9336 = vmatprep.subr.mxu0 0.0
    %9337 = vmatpush1.msra.mxu0 %v8935
    %9338 = vmatprep.subr.mxu0 0.0
    %9339 = vmatpush1.msra.mxu0 %v8936
    %9340 = vmatprep.subr.mxu0 0.0
    %9341 = vmatpush1.msra.mxu0 %v8937
    %9342 = vmatprep.subr.mxu0 0.0
    %9343 = vmatpush1.msra.mxu0 %v8938
    %9344 = vmatprep.subr.mxu0 0.0
    %9345 = vmatpush1.msra.mxu0 %v8939
    %9346 = vmatprep.subr.mxu0 0.0
    %9347 = vmatpush1.msra.mxu0 %v8940
    %9348 = vmatprep.subr.mxu0 0.0
    %9349 = vmatpush1.msra.mxu0 %v8941
    %9350 = vmatprep.subr.mxu0 0.0
    %9351 = vmatpush1.msra.mxu0 %v8942
    %9352 = vmatprep.subr.mxu0 0.0
    %9353 = vmatpush1.msra.mxu0 %v8943
    %9354 = vmatprep.subr.mxu0 0.0
    %9355 = vmatpush1.msra.mxu0 %v8944
    %9356 = vmatprep.subr.mxu0 0.0
    %9357 = vmatpush1.msra.mxu0 %v8945
    %9358 = vmatprep.subr.mxu0 0.0
    %9359 = vmatpush1.msra.mxu0 %v8946
    %9360 = vmatprep.subr.mxu0 0.0
    %9361 = vmatpush1.msra.mxu0 %v8947
    %9362 = vmatprep.subr.mxu0 0.0
    %9363 = vmatpush1.msra.mxu0 %v8948
    %9364 = vmatprep.subr.mxu0 0.0
    %9365 = vmatpush1.msra.mxu0 %v8949
    %9366 = vmatprep.mubr.f32.mxu0 %v9068
    %9367 = vmatmul.mubr.f32.gmra.mrb[0].mxu0 %v9067
    %v9368 = vpop.f32.mrb[0].mxu0
    %v9369 = vadd.f32 %v9284, %v9368
    %v9370 = vpop.f32.mrb[0].mxu0
    %9371 = vmatprep.mubr.f32.mxu0 %v9075
    %9372 = vmatmul.mubr.f32.gmra.mrb[0].mxu0 %v9074
    %v9373 = vpop.f32.mrb[0].mxu0
    %v9374 = vadd.f32 %v9289, %v9373
    %v9375 = vpop.f32.mrb[0].mxu0
    %9376 = vmatprep.mubr.f32.mxu0 %v9082
    %9377 = vmatmul.mubr.f32.gmra.mrb[0].mxu0 %v9081
    %v9378 = vpop.f32.mrb[0].mxu0
    %v9379 = vadd.f32 %v9294, %v9378
    %v9380 = vpop.f32.mrb[0].mxu0
    %9381 = vmatprep.mubr.f32.mxu0 %v9089
    %9382 = vmatmul.mubr.f32.gmra.mrb[0].mxu0 %v9088
    %v9383 = vpop.f32.mrb[0].mxu0
    %v9384 = vadd.f32 %v9299, %v9383
    %v9385 = vpop.f32.mrb[0].mxu0
    %9386 = vdwg.mxu0
    %9387 = vmatprep.subr.mxu0 0.0
    %9388 = vmatpush1.msra.mxu0 %v8950
    %9389 = vmatprep.subr.mxu0 0.0
    %9390 = vmatpush1.msra.mxu0 %v8951
    %9391 = vmatprep.subr.mxu0 0.0
    %9392 = vmatpush1.msra.mxu0 %v8952
    %9393 = vmatprep.subr.mxu0 0.0
    %9394 = vmatpush1.msra.mxu0 %v8953
    %9395 = vmatprep.subr.mxu0 0.0
    %9396 = vmatpush1.msra.mxu0 %v8954
    %9397 = vmatprep.subr.mxu0 0.0
    %9398 = vmatpush1.msra.mxu0 %v8955
    %9399 = vmatprep.subr.mxu0 0.0
    %9400 = vmatpush1.msra.mxu0 %v8956
    %9401 = vmatprep.subr.mxu0 0.0
    %9402 = vmatpush1.msra.mxu0 %v8957
    %9403 = vmatprep.subr.mxu0 0.0
    %9404 = vmatpush1.msra.mxu0 %v8958
    %9405 = vmatprep.subr.mxu0 0.0
    %9406 = vmatpush1.msra.mxu0 %v8959
    %9407 = vmatprep.subr.mxu0 0.0
    %9408 = vmatpush1.msra.mxu0 %v8960
    %9409 = vmatprep.subr.mxu0 0.0
    %9410 = vmatpush1.msra.mxu0 %v8961
    %9411 = vmatprep.subr.mxu0 0.0
    %9412 = vmatpush1.msra.mxu0 %v8962
    %9413 = vmatprep.subr.mxu0 0.0
    %9414 = vmatpush1.msra.mxu0 %v8963
    %9415 = vmatprep.subr.mxu0 0.0
    %9416 = vmatpush1.msra.mxu0 %v8964
    %9417 = vmatprep.subr.mxu0 0.0
    %9418 = vmatpush1.msra.mxu0 %v8965
    %9419 = vmatprep.subr.mxu0 0.0
    %9420 = vmatpush1.msra.mxu0 %v9130
    %9421 = vmatprep.subr.mxu0 0.0
    %9422 = vmatpush1.msra.mxu0 0.0
    %9423 = vmatprep.subr.mxu0 0.0
    %9424 = vmatpush1.msra.mxu0 0.0
    %9425 = vmatprep.subr.mxu0 0.0
    %9426 = vmatpush1.msra.mxu0 0.0
    %9427 = vmatprep.subr.mxu0 0.0
    %9428 = vmatpush1.msra.mxu0 0.0
    %9429 = vmatprep.subr.mxu0 0.0
    %9430 = vmatpush1.msra.mxu0 0.0
    %9431 = vmatprep.subr.mxu0 0.0
    %9432 = vmatpush1.msra.mxu0 0.0
    %9433 = vmatprep.subr.mxu0 0.0
    %9434 = vmatpush1.msra.mxu0 0.0
    %9435 = vmatprep.subr.mxu0 0.0
    %9436 = vmatpush1.msra.mxu0 0.0
    %9437 = vmatprep.subr.mxu0 0.0
    %9438 = vmatpush1.msra.mxu0 0.0
    %9439 = vmatprep.subr.mxu0 0.0
    %9440 = vmatpush1.msra.mxu0 0.0
    %9441 = vmatprep.subr.mxu0 0.0
    %9442 = vmatpush1.msra.mxu0 0.0
    %9443 = vmatprep.subr.mxu0 0.0
    %9444 = vmatpush1.msra.mxu0 0.0
    %9445 = vmatprep.subr.mxu0 0.0
    %9446 = vmatpush1.msra.mxu0 0.0
    %9447 = vmatprep.subr.mxu0 0.0
    %9448 = vmatpush1.msra.mxu0 0.0
    %9449 = vmatprep.subr.mxu0 0.0
    %9450 = vmatpush1.msra.mxu0 0.0
    %9451 = vmatprep.mubr.f32.mxu0 %v9120
    %9452 = vmatmul.mubr.f32.gmra.mrb[0].mxu0 %v9069
    %v9453 = vpop.f32.mrb[0].mxu0
    %v9454 = vadd.f32 %v9369, %v9453
    %v9455 = vpop.f32.mrb[0].mxu0
    %9456 = vmatprep.mubr.f32.mxu0 %v9122
    %9457 = vmatmul.mubr.f32.gmra.mrb[0].mxu0 %v9076
    %v9458 = vpop.f32.mrb[0].mxu0
    %v9459 = vadd.f32 %v9374, %v9458
    %v9460 = vpop.f32.mrb[0].mxu0
    %9461 = vmatprep.mubr.f32.mxu0 %v9124
    %9462 = vmatmul.mubr.f32.gmra.mrb[0].mxu0 %v9083
    %v9463 = vpop.f32.mrb[0].mxu0
    %v9464 = vadd.f32 %v9379, %v9463
    %v9465 = vpop.f32.mrb[0].mxu0
    %9466 = vmatprep.mubr.f32.mxu0 %v9126
    %9467 = vmatmul.mubr.f32.gmra.mrb[0].mxu0 %v9090
    %v9468 = vpop.f32.mrb[0].mxu0
    %v9469 = vadd.f32 %v9384, %v9468
    %v9470 = vpop.f32.mrb[0].mxu0
    %9471 = vdwg.mxu0
    %9472 = vst [vmem:[%s9] sm:$0xff] %v9454
    %9473 = vst [vmem:[%s9 + $0x8] sm:$0xff] %v9459
    %9474 = vst [vmem:[%s9 + $0x10] sm:$0xff] %v9464
    %9475 = vst [vmem:[%s9 + $0x18] sm:$0xff] %v9469
    // Predicated region
    $region42: #{conv2_forward.2} parent=1 // pred_check
      _
    $region43: #{conv2_forward.2} parent=1 // pred_check_branch
      %9477 = sbr.rel (0) target = $region45
    $region44: #{conv2_forward.2} parent=1 // pred_region
      _
    $region45: #{conv2_forward.2} parent=1 // pred_fallthru
      _
    // Predicated region
    $region46: #{conv2_forward.2} parent=1 // pred_check
      _
    $region47: #{conv2_forward.2} parent=1 // pred_check_branch
      %9479 = sbr.rel (0) target = $region49
    $region48: #{conv2_forward.2} parent=1 // pred_region
      _
    $region49: #{conv2_forward.2} parent=1 // pred_fallthru
      _
    %9480 = vsyncpa [#allocation5], 1

</llo_original>
